<compile_context>
chip_gen: v6e
topology: v6e:2x2x1
jax: 0.10.0
libtpu: 0.0.40
codegen_flags: <defaults>
</compile_context>

<pallas_src>
import functools
from collections import OrderedDict

import jax
import jax.numpy as jnp
from jax.experimental import pallas as pl
from jax.experimental.pallas import tpu as pltpu

_VMEM_LIMIT = 32 * 1024 * 1024  # conservative: <= physical VMEM on v5e/v6e/v7x


def _round_up(x, m):
    return ((x + m - 1) // m) * m


# ----------------------------------------------------------------------------
# Kernel 1: M-tiled fused matmul + bias (+ReLU).  Used for every 1x1 conv.
#   A:[TM, K] f32 (cast to bf16 in-kernel), B:[K, Cp] bf16 (VMEM-resident),
#   bias:[1, Cp] f32  ->  out:[TM, Cp] f32 with Cp a multiple of 128 (lane-dense).
# ----------------------------------------------------------------------------
def _matmul_bias_kernel(a_ref, b_ref, bias_ref, o_ref, *, apply_relu):
    acc = jnp.dot(a_ref[...].astype(jnp.bfloat16), b_ref[...],
                  preferred_element_type=jnp.float32)
    acc = acc + bias_ref[...]                      # (1, Cp) broadcasts over TM rows
    if apply_relu:
        acc = jnp.maximum(acc, 0.0)
    o_ref[...] = acc


def conv1x1_nhwc(x, w, b, relu=False):
    # x: [N, H, W, Cin], w: [1, 1, Cin, Cout] (or [Cin, Cout]), b: [Cout]
    N, H, W, Cin = x.shape
    Cout = w.shape[-1]
    Cp = _round_up(Cout, 128)

    wm = jnp.pad(w.reshape(Cin, Cout), ((0, 0), (0, Cp - Cout))).astype(jnp.bfloat16)
    bp = jnp.pad(b, (0, Cp - Cout)).reshape(1, Cp).astype(jnp.float32)

    M = N * H * W
    a = x.reshape(M, Cin)
    TM = min(512, _round_up(M, 8))                 # tile rows; TM multiple of 8
    Mp = _round_up(M, TM)
    if Mp != M:
        a = jnp.pad(a, ((0, Mp - M), (0, 0)))

    out = pl.pallas_call(
        functools.partial(_matmul_bias_kernel, apply_relu=relu),
        out_shape=jax.ShapeDtypeStruct((Mp, Cp), jnp.float32),
        grid=(Mp // TM,),
        in_specs=[
            pl.BlockSpec((TM, Cin), lambda i: (i, 0)),     # streamed A tiles
            pl.BlockSpec((Cin, Cp), lambda i: (0, 0)),     # weights stay resident
            pl.BlockSpec((1, Cp), lambda i: (0, 0)),       # bias stays resident
        ],
        out_specs=pl.BlockSpec((TM, Cp), lambda i: (i, 0)),
        compiler_params=pltpu.CompilerParams(
            dimension_semantics=("parallel",),
            vmem_limit_bytes=_VMEM_LIMIT,
        ),
    )(a, wm, bp)
    return out[:M, :Cout].reshape(N, H, W, Cout)


# ----------------------------------------------------------------------------
# Kernel 2: 3x3 conv (stride 1 or 2, padding 1) with in-kernel tap accumulation.
#   x_ref: (P, L, Cin)  -- P = stride^2 phases of the spatially-padded input of ONE
#                          batch element, each flattened to 1-D spatial (L rows).
#   w_ref: (KH*KW, Cin, Cp) bf16, b_ref: (1, Cp) f32, o_ref: (1, M, Cp) f32.
#   M = Ho * Wph rows are computed; the columns >= Wo wrap into the next output row
#   and are discarded by the wrapper (small, keeps every tap a contiguous 2-D slice).
# ----------------------------------------------------------------------------
def _conv_tap_kernel(x_ref, w_ref, b_ref, o_ref, *, taps, apply_relu):
    M = o_ref.shape[1]
    Cp = o_ref.shape[2]
    acc = jnp.zeros((M, Cp), jnp.float32)
    for t, (ph, off) in enumerate(taps):
        patch = x_ref[ph, pl.ds(off, M), :].astype(jnp.bfloat16)     # (M, Cin)
        acc = acc + jnp.dot(patch, w_ref[t], preferred_element_type=jnp.float32)
    acc = acc + b_ref[...]
    if apply_relu:
        acc = jnp.maximum(acc, 0.0)
    o_ref[0] = acc


def conv3x3_nhwc(x, w, b, stride=1, relu=True):
    # x: [N, H, W, Cin], w: [3, 3, Cin, Cout], b: [Cout]; padding = 1.
    N, H, W, Cin = x.shape
    KH, KW, _, Cout = w.shape
    pad = 1
    S = stride
    Ho = (H + 2 * pad - KH) // S + 1
    Wo = (W + 2 * pad - KW) // S + 1
    Cp = _round_up(Cout, 128)

    wp = jnp.pad(w, ((0, 0), (0, 0), (0, 0), (0, Cp - Cout)))
    wp = wp.reshape(KH * KW, Cin, Cp).astype(jnp.bfloat16)
    bp = jnp.pad(b, (0, Cp - Cout)).reshape(1, Cp).astype(jnp.float32)

    # Spatial zero-pad + stride-phase decomposition (pure data movement, ~1x input).
    xp = jnp.pad(x, ((0, 0), (pad, pad), (pad, pad), (0, 0)))
    Hp, Wp = H + 2 * pad, W + 2 * pad
    Hp2, Wp2 = _round_up(Hp, S), _round_up(Wp, S)
    if (Hp2, Wp2) != (Hp, Wp):
        xp = jnp.pad(xp, ((0, 0), (0, Hp2 - Hp), (0, Wp2 - Wp), (0, 0)))
    Hph, Wph = Hp2 // S, Wp2 // S
    P = S * S
    phases = (xp.reshape(N, Hph, S, Wph, S, Cin)
                .transpose(0, 2, 4, 1, 3, 5)                  # (N, ph_h, ph_w, h, w, c)
                .reshape(N * P, Hph * Wph, Cin))

    # Static tap table: phase index + flattened spatial offset per (kh, kw).
    taps = []
    for kh in range(KH):
        for kw in range(KW):
            ph = (kh % S) * S + (kw % S)
            off = (kh // S) * Wph + (kw // S)
            taps.append((ph, off))

    M = Ho * Wph                                   # includes Wph - Wo garbage columns
    L = Hph * Wph
    Lpad = max(L, max(off for _, off in taps) + M)  # keep every tap slice in-bounds
    if Lpad > L:
        phases = jnp.pad(phases, ((0, 0), (0, Lpad - L), (0, 0)))

    kernel = functools.partial(_conv_tap_kernel, taps=tuple(taps), apply_relu=relu)
    out = pl.pallas_call(
        kernel,
        out_shape=jax.ShapeDtypeStruct((N, M, Cp), jnp.float32),
        grid=(N,),                                  # pipelined & megacore-shardable
        in_specs=[
            pl.BlockSpec((P, Lpad, Cin), lambda n: (n, 0, 0)),     # one image's phases
            pl.BlockSpec((KH * KW, Cin, Cp), lambda n: (0, 0, 0)),  # weights resident
            pl.BlockSpec((1, Cp), lambda n: (0, 0)),                # bias resident
        ],
        out_specs=pl.BlockSpec((1, M, Cp), lambda n: (n, 0, 0)),
        compiler_params=pltpu.CompilerParams(
            dimension_semantics=("parallel",),
            vmem_limit_bytes=_VMEM_LIMIT,
        ),
    )(phases, wp, bp)

    out = out.reshape(N, Ho, Wph, Cp)[:, :, :Wo, :Cout]
    return out


# ----------------------------------------------------------------------------
# Resizing (glue: pure gather / data movement, matches torch F.interpolate)
# ----------------------------------------------------------------------------
def interpolate_nearest_nhwc(x, size):
    # torch 'nearest': src = floor(dst * in / out)
    N, H, W, C = x.shape
    Ho, Wo = size
    hi = (jnp.arange(Ho) * H) // Ho
    wi = (jnp.arange(Wo) * W) // Wo
    return x[:, hi][:, :, wi]


def interpolate_bilinear_nhwc(x, size):
    # torch 'bilinear', align_corners=False: src = (dst+0.5)*in/out - 0.5, clamped.
    N, H, W, C = x.shape
    Ho, Wo = size

    def coords(n_out, n_in):
        c = (jnp.arange(n_out, dtype=jnp.float32) + 0.5) * (n_in / n_out) - 0.5
        c = jnp.clip(c, 0.0, float(n_in - 1))
        lo = jnp.floor(c).astype(jnp.int32)
        hi = jnp.minimum(lo + 1, n_in - 1)
        frac = (c - lo.astype(jnp.float32)).astype(x.dtype)
        return lo, hi, frac

    h0, h1, hf = coords(Ho, H)
    w0, w1, wf = coords(Wo, W)
    hf_ = hf[None, :, None, None]
    wf_ = wf[None, None, :, None]
    rows = x[:, h0] * (1.0 - hf_) + x[:, h1] * hf_           # 2 row gathers, reused
    return rows[:, :, w0] * (1.0 - wf_) + rows[:, :, w1] * wf_


# ----------------------------------------------------------------------------
# Deterministic parameter construction
# ----------------------------------------------------------------------------
def _conv_params(key, kh, kw, cin, cout):
    kw_, kb_ = jax.random.split(key)
    fan_in = kh * kw * cin
    bound = (3.0 / fan_in) ** 0.5              # kaiming_uniform_(a=1)
    w = jax.random.uniform(kw_, (kh, kw, cin, cout), jnp.float32, -bound, bound)
    b = jax.random.uniform(kb_, (cout,), jnp.float32, -0.01, 0.01)
    return w, b


def make_params(in_channels, in_channels_list, out_channels, key):
    keys = iter(jax.random.split(key, 64))
    params = {"backbone": [], "inner": {}, "layer": {}}

    # Backbone: 3 stages of conv3x3 stride-2 + ReLU  (4->8->16->32 channels)
    cin = in_channels
    for c in in_channels_list:
        params["backbone"].append(_conv_params(next(keys), 3, 3, cin, c))
        cin = c

    # GeneralizedUNet inner/layer blocks
    for j, cin_j in enumerate(in_channels_list):
        oc = out_channels if j <= 0 else in_channels_list[j - 1]
        params["inner"][j] = _conv_params(next(keys), 1, 1, cin_j, oc)     # Conv2d(cin, oc, 1)
        if j > 0:
            # block(cin_j, oc): two 3x3 conv + ReLU (TwoConvRelu-style block)
            params["layer"][j] = (
                _conv_params(next(keys), 3, 3, cin_j, oc),
                _conv_params(next(keys), 3, 3, oc, oc),
            )
    return params


# ----------------------------------------------------------------------------
# Forward passes
# ----------------------------------------------------------------------------
def backbone_forward(params, x_nhwc):
    feats = OrderedDict()
    h = x_nhwc
    for i, (w, b) in enumerate(params["backbone"]):
        h = conv3x3_nhwc(h, w, b, stride=2, relu=True)
        feats[str(i)] = h
    return feats


def layer_block_forward(params_block, x):
    (w1, b1), (w2, b2) = params_block
    x = conv3x3_nhwc(x, w1, b1, stride=1, relu=True)
    x = conv3x3_nhwc(x, w2, b2, stride=1, relu=True)
    return x


def unet_forward(params, feats, size):
    names = list(feats.keys())
    xs = list(feats.values())
    last_inner = xs[-1]
    results = [last_inner]
    idx = -1
    for idx in range(len(xs) - 2, -1, -1):
        inner_lateral = xs[idx]
        feat_size = inner_lateral.shape[1:3]                       # NHWC spatial
        wi, bi = params["inner"][idx + 1]
        # 1x1 conv on the low-res map, then nearest-upsample (commutes exactly).
        td = conv1x1_nhwc(last_inner, wi, bi, relu=False)
        inner_top_down = interpolate_nearest_nhwc(td, feat_size)
        x_cat = jnp.concatenate([inner_lateral, inner_top_down], axis=-1)
        # TODO(synk): fuse this concat into the first block conv via split-K matmuls.
        last_inner = layer_block_forward(params["layer"][idx + 1], x_cat)
        results.insert(0, last_inner)

    wf, bf = params["inner"][idx if idx >= 0 else 0]
    # 1x1 conv before bilinear upsample (bilinear weights sum to 1 -> commutes,
    # identical up to f32 reassociation) -> upsample a 2-channel tensor instead of 8.
    final_small = conv1x1_nhwc(results[0], wf, bf, relu=False)
    if size is None:
        final = final_small
    else:
        final = interpolate_bilinear_nhwc(final_small, size)
    results.insert(0, final)
    names.insert(0, "out")
    return OrderedDict(zip(names, results))


def backbone_as_unet_forward(params, inputs_nchw):
    x = jnp.transpose(inputs_nchw, (0, 2, 3, 1))                   # NCHW -> NHWC
    feats = backbone_forward(params, x)
    out = unet_forward(params, feats, size=inputs_nchw.shape[-2:])
    # return in PyTorch NCHW convention
    return OrderedDict((k, jnp.transpose(v, (0, 3, 1, 2))) for k, v in out.items())


# ----------------------------------------------------------------------------
if __name__ == "__main__":
    key = jax.random.PRNGKey(0)
    k_in, k_par = jax.random.split(key)

    N, C, H, W = 2, 4, 16, 16
    in_channels_list = [8, 16, 32]
    out_channels = 2

    inputs = jax.random.normal(k_in, (N, C, H, W), jnp.float32)
    params = make_params(C, in_channels_list, out_channels, k_par)

    fwd = jax.jit(backbone_as_unet_forward)
    out = fwd(params, inputs)
    out = jax.tree_util.tree_map(jax.block_until_ready, out)

    expected = {
        "out": (N, out_channels, H, W),
        "0": (N, 8, 8, 8),
        "1": (N, 16, 4, 4),
        "2": (N, 32, 2, 2),
    }
    for k, shp in expected.items():
        assert out[k].shape == shp, (k, out[k].shape, shp)
        assert bool(jnp.all(jnp.isfinite(out[k])))

    print("KERNEL_OK")
</pallas_src>

<mosaic_0001>
module attributes {stable_mosaic.version = 11 : i64} {
  func.func @_conv_tap_kernel(%arg0: i32, %arg1: memref<4x82x4xf32, #tpu.memory_space<vmem>>, %arg2: memref<9x4x128xbf16, #tpu.memory_space<vmem>>, %arg3: memref<1x128xf32, #tpu.memory_space<vmem>>, %arg4: memref<1x72x128xf32, #tpu.memory_space<vmem>>) attributes {dimension_semantics = [#tpu.dimension_semantics<parallel>], iteration_bounds = array<i64: 2>, scalar_prefetch = 0 : i64, scratch_operands = 0 : i64, tpu.core_type = #tpu.core_type<tc>, window_params = [{transform_indices = @transform_0, window_bounds = array<i64: 4, 82, 4>}, {pipeline_mode = #tpu.pipeline_mode<synchronous>, transform_indices = @transform_1, window_bounds = array<i64: 9, 4, 128>}, {pipeline_mode = #tpu.pipeline_mode<synchronous>, transform_indices = @transform_2, window_bounds = array<i64: 1, 128>}, {transform_indices = @transform_3, window_bounds = array<i64: 1, 72, 128>}]} {
    %cst = arith.constant 0.000000e+00 : f32
    %0 = vector.broadcast %cst : f32 to vector<72x128xf32>
    %c0 = arith.constant 0 : index
    %c0_0 = arith.constant 0 : index
    %c0_1 = arith.constant 0 : index
    %1 = vector.load %arg1[%c0, %c0_0, %c0_1] : memref<4x82x4xf32, #tpu.memory_space<vmem>>, vector<1x72x4xf32>
    %2 = vector.shape_cast %1 : vector<1x72x4xf32> to vector<72x4xf32>
    %3 = arith.truncf %2 : vector<72x4xf32> to vector<72x4xbf16>
    %c0_2 = arith.constant 0 : index
    %c0_3 = arith.constant 0 : index
    %c0_4 = arith.constant 0 : index
    %4 = vector.load %arg2[%c0_2, %c0_3, %c0_4] : memref<9x4x128xbf16, #tpu.memory_space<vmem>>, vector<1x4x128xbf16>
    %5 = vector.shape_cast %4 : vector<1x4x128xbf16> to vector<4x128xbf16>
    %cst_5 = arith.constant dense<0.000000e+00> : vector<72x128xf32>
    %6 = tpu.matmul %3, %5, %cst_5 {dimension_numbers = #tpu.dot_dimension_numbers<[1], [0], [0], [1], [0, 0, 1, 1], [], []>} : vector<72x4xbf16>, vector<4x128xbf16>, vector<72x128xf32> -> vector<72x128xf32>
    %7 = arith.addf %0, %6 : vector<72x128xf32>
    %c1 = arith.constant 1 : index
    %c0_6 = arith.constant 0 : index
    %c0_7 = arith.constant 0 : index
    %8 = vector.load %arg1[%c1, %c0_6, %c0_7] : memref<4x82x4xf32, #tpu.memory_space<vmem>>, vector<1x72x4xf32>
    %9 = vector.shape_cast %8 : vector<1x72x4xf32> to vector<72x4xf32>
    %10 = arith.truncf %9 : vector<72x4xf32> to vector<72x4xbf16>
    %c1_8 = arith.constant 1 : index
    %c0_9 = arith.constant 0 : index
    %c0_10 = arith.constant 0 : index
    %11 = vector.load %arg2[%c1_8, %c0_9, %c0_10] : memref<9x4x128xbf16, #tpu.memory_space<vmem>>, vector<1x4x128xbf16>
    %12 = vector.shape_cast %11 : vector<1x4x128xbf16> to vector<4x128xbf16>
    %cst_11 = arith.constant dense<0.000000e+00> : vector<72x128xf32>
    %13 = tpu.matmul %10, %12, %cst_11 {dimension_numbers = #tpu.dot_dimension_numbers<[1], [0], [0], [1], [0, 0, 1, 1], [], []>} : vector<72x4xbf16>, vector<4x128xbf16>, vector<72x128xf32> -> vector<72x128xf32>
    %14 = arith.addf %7, %13 : vector<72x128xf32>
    %c0_12 = arith.constant 0 : index
    %c1_13 = arith.constant 1 : index
    %c0_14 = arith.constant 0 : index
    %15 = vector.load %arg1[%c0_12, %c1_13, %c0_14] : memref<4x82x4xf32, #tpu.memory_space<vmem>>, vector<1x72x4xf32>
    %16 = vector.shape_cast %15 : vector<1x72x4xf32> to vector<72x4xf32>
    %17 = arith.truncf %16 : vector<72x4xf32> to vector<72x4xbf16>
    %c2 = arith.constant 2 : index
    %c0_15 = arith.constant 0 : index
    %c0_16 = arith.constant 0 : index
    %18 = vector.load %arg2[%c2, %c0_15, %c0_16] : memref<9x4x128xbf16, #tpu.memory_space<vmem>>, vector<1x4x128xbf16>
    %19 = vector.shape_cast %18 : vector<1x4x128xbf16> to vector<4x128xbf16>
    %cst_17 = arith.constant dense<0.000000e+00> : vector<72x128xf32>
    %20 = tpu.matmul %17, %19, %cst_17 {dimension_numbers = #tpu.dot_dimension_numbers<[1], [0], [0], [1], [0, 0, 1, 1], [], []>} : vector<72x4xbf16>, vector<4x128xbf16>, vector<72x128xf32> -> vector<72x128xf32>
    %21 = arith.addf %14, %20 : vector<72x128xf32>
    %c2_18 = arith.constant 2 : index
    %c0_19 = arith.constant 0 : index
    %c0_20 = arith.constant 0 : index
    %22 = vector.load %arg1[%c2_18, %c0_19, %c0_20] : memref<4x82x4xf32, #tpu.memory_space<vmem>>, vector<1x72x4xf32>
    %23 = vector.shape_cast %22 : vector<1x72x4xf32> to vector<72x4xf32>
    %24 = arith.truncf %23 : vector<72x4xf32> to vector<72x4xbf16>
    %c3 = arith.constant 3 : index
    %c0_21 = arith.constant 0 : index
    %c0_22 = arith.constant 0 : index
    %25 = vector.load %arg2[%c3, %c0_21, %c0_22] : memref<9x4x128xbf16, #tpu.memory_space<vmem>>, vector<1x4x128xbf16>
    %26 = vector.shape_cast %25 : vector<1x4x128xbf16> to vector<4x128xbf16>
    %cst_23 = arith.constant dense<0.000000e+00> : vector<72x128xf32>
    %27 = tpu.matmul %24, %26, %cst_23 {dimension_numbers = #tpu.dot_dimension_numbers<[1], [0], [0], [1], [0, 0, 1, 1], [], []>} : vector<72x4xbf16>, vector<4x128xbf16>, vector<72x128xf32> -> vector<72x128xf32>
    %28 = arith.addf %21, %27 : vector<72x128xf32>
    %c3_24 = arith.constant 3 : index
    %c0_25 = arith.constant 0 : index
    %c0_26 = arith.constant 0 : index
    %29 = vector.load %arg1[%c3_24, %c0_25, %c0_26] : memref<4x82x4xf32, #tpu.memory_space<vmem>>, vector<1x72x4xf32>
    %30 = vector.shape_cast %29 : vector<1x72x4xf32> to vector<72x4xf32>
    %31 = arith.truncf %30 : vector<72x4xf32> to vector<72x4xbf16>
    %c4 = arith.constant 4 : index
    %c0_27 = arith.constant 0 : index
    %c0_28 = arith.constant 0 : index
    %32 = vector.load %arg2[%c4, %c0_27, %c0_28] : memref<9x4x128xbf16, #tpu.memory_space<vmem>>, vector<1x4x128xbf16>
    %33 = vector.shape_cast %32 : vector<1x4x128xbf16> to vector<4x128xbf16>
    %cst_29 = arith.constant dense<0.000000e+00> : vector<72x128xf32>
    %34 = tpu.matmul %31, %33, %cst_29 {dimension_numbers = #tpu.dot_dimension_numbers<[1], [0], [0], [1], [0, 0, 1, 1], [], []>} : vector<72x4xbf16>, vector<4x128xbf16>, vector<72x128xf32> -> vector<72x128xf32>
    %35 = arith.addf %28, %34 : vector<72x128xf32>
    %c2_30 = arith.constant 2 : index
    %c1_31 = arith.constant 1 : index
    %c0_32 = arith.constant 0 : index
    %36 = vector.load %arg1[%c2_30, %c1_31, %c0_32] : memref<4x82x4xf32, #tpu.memory_space<vmem>>, vector<1x72x4xf32>
    %37 = vector.shape_cast %36 : vector<1x72x4xf32> to vector<72x4xf32>
    %38 = arith.truncf %37 : vector<72x4xf32> to vector<72x4xbf16>
    %c5 = arith.constant 5 : index
    %c0_33 = arith.constant 0 : index
    %c0_34 = arith.constant 0 : index
    %39 = vector.load %arg2[%c5, %c0_33, %c0_34] : memref<9x4x128xbf16, #tpu.memory_space<vmem>>, vector<1x4x128xbf16>
    %40 = vector.shape_cast %39 : vector<1x4x128xbf16> to vector<4x128xbf16>
    %cst_35 = arith.constant dense<0.000000e+00> : vector<72x128xf32>
    %41 = tpu.matmul %38, %40, %cst_35 {dimension_numbers = #tpu.dot_dimension_numbers<[1], [0], [0], [1], [0, 0, 1, 1], [], []>} : vector<72x4xbf16>, vector<4x128xbf16>, vector<72x128xf32> -> vector<72x128xf32>
    %42 = arith.addf %35, %41 : vector<72x128xf32>
    %c0_36 = arith.constant 0 : index
    %c9 = arith.constant 9 : index
    %c0_37 = arith.constant 0 : index
    %43 = vector.load %arg1[%c0_36, %c9, %c0_37] : memref<4x82x4xf32, #tpu.memory_space<vmem>>, vector<1x72x4xf32>
    %44 = vector.shape_cast %43 : vector<1x72x4xf32> to vector<72x4xf32>
    %45 = arith.truncf %44 : vector<72x4xf32> to vector<72x4xbf16>
    %c6 = arith.constant 6 : index
    %c0_38 = arith.constant 0 : index
    %c0_39 = arith.constant 0 : index
    %46 = vector.load %arg2[%c6, %c0_38, %c0_39] : memref<9x4x128xbf16, #tpu.memory_space<vmem>>, vector<1x4x128xbf16>
    %47 = vector.shape_cast %46 : vector<1x4x128xbf16> to vector<4x128xbf16>
    %cst_40 = arith.constant dense<0.000000e+00> : vector<72x128xf32>
    %48 = tpu.matmul %45, %47, %cst_40 {dimension_numbers = #tpu.dot_dimension_numbers<[1], [0], [0], [1], [0, 0, 1, 1], [], []>} : vector<72x4xbf16>, vector<4x128xbf16>, vector<72x128xf32> -> vector<72x128xf32>
    %49 = arith.addf %42, %48 : vector<72x128xf32>
    %c1_41 = arith.constant 1 : index
    %c9_42 = arith.constant 9 : index
    %c0_43 = arith.constant 0 : index
    %50 = vector.load %arg1[%c1_41, %c9_42, %c0_43] : memref<4x82x4xf32, #tpu.memory_space<vmem>>, vector<1x72x4xf32>
    %51 = vector.shape_cast %50 : vector<1x72x4xf32> to vector<72x4xf32>
    %52 = arith.truncf %51 : vector<72x4xf32> to vector<72x4xbf16>
    %c7 = arith.constant 7 : index
    %c0_44 = arith.constant 0 : index
    %c0_45 = arith.constant 0 : index
    %53 = vector.load %arg2[%c7, %c0_44, %c0_45] : memref<9x4x128xbf16, #tpu.memory_space<vmem>>, vector<1x4x128xbf16>
    %54 = vector.shape_cast %53 : vector<1x4x128xbf16> to vector<4x128xbf16>
    %cst_46 = arith.constant dense<0.000000e+00> : vector<72x128xf32>
    %55 = tpu.matmul %52, %54, %cst_46 {dimension_numbers = #tpu.dot_dimension_numbers<[1], [0], [0], [1], [0, 0, 1, 1], [], []>} : vector<72x4xbf16>, vector<4x128xbf16>, vector<72x128xf32> -> vector<72x128xf32>
    %56 = arith.addf %49, %55 : vector<72x128xf32>
    %c0_47 = arith.constant 0 : index
    %c10 = arith.constant 10 : index
    %c0_48 = arith.constant 0 : index
    %57 = vector.load %arg1[%c0_47, %c10, %c0_48] : memref<4x82x4xf32, #tpu.memory_space<vmem>>, vector<1x72x4xf32>
    %58 = vector.shape_cast %57 : vector<1x72x4xf32> to vector<72x4xf32>
    %59 = arith.truncf %58 : vector<72x4xf32> to vector<72x4xbf16>
    %c8 = arith.constant 8 : index
    %c0_49 = arith.constant 0 : index
    %c0_50 = arith.constant 0 : index
    %60 = vector.load %arg2[%c8, %c0_49, %c0_50] : memref<9x4x128xbf16, #tpu.memory_space<vmem>>, vector<1x4x128xbf16>
    %61 = vector.shape_cast %60 : vector<1x4x128xbf16> to vector<4x128xbf16>
    %cst_51 = arith.constant dense<0.000000e+00> : vector<72x128xf32>
    %62 = tpu.matmul %59, %61, %cst_51 {dimension_numbers = #tpu.dot_dimension_numbers<[1], [0], [0], [1], [0, 0, 1, 1], [], []>} : vector<72x4xbf16>, vector<4x128xbf16>, vector<72x128xf32> -> vector<72x128xf32>
    %63 = arith.addf %56, %62 : vector<72x128xf32>
    %c0_52 = arith.constant 0 : index
    %c0_53 = arith.constant 0 : index
    %64 = vector.load %arg3[%c0_52, %c0_53] : memref<1x128xf32, #tpu.memory_space<vmem>>, vector<1x128xf32>
    %65 = vector.broadcast %64 : vector<1x128xf32> to vector<72x128xf32>
    %66 = arith.addf %63, %65 : vector<72x128xf32>
    %cst_54 = arith.constant 0.000000e+00 : f32
    %67 = vector.broadcast %cst_54 : f32 to vector<72x128xf32>
    %68 = arith.maximumf %66, %67 : vector<72x128xf32>
    %c0_55 = arith.constant 0 : index
    %c0_56 = arith.constant 0 : index
    %c0_57 = arith.constant 0 : index
    %69 = vector.load %arg4[%c0_55, %c0_56, %c0_57] : memref<1x72x128xf32, #tpu.memory_space<vmem>>, vector<1x72x128xf32>
    %70 = vector.shape_cast %69 : vector<1x72x128xf32> to vector<72x128xf32>
    %71 = vector.shape_cast %68 : vector<72x128xf32> to vector<1x72x128xf32>
    tpu.vector_store %arg4[%c0_55, %c0_56, %c0_57], %71 {strides = array<i32>} : memref<1x72x128xf32, #tpu.memory_space<vmem>>, vector<1x72x128xf32>,
    return
  }
  func.func @transform_0(%arg0: i32) -> (i32, i32, i32) {
    %c0_i32 = arith.constant 0 : i32
    %c0_i32_0 = arith.constant 0 : i32
    %c0_i32_1 = arith.constant 0 : i32
    return %arg0, %c0_i32, %c0_i32_0 : i32, i32, i32
  }
  func.func @transform_1(%arg0: i32) -> (i32, i32, i32) {
    %c0_i32 = arith.constant 0 : i32
    %c0_i32_0 = arith.constant 0 : i32
    %c0_i32_1 = arith.constant 0 : i32
    %c0_i32_2 = arith.constant 0 : i32
    return %c0_i32, %c0_i32_0, %c0_i32_1 : i32, i32, i32
  }
  func.func @transform_2(%arg0: i32) -> (i32, i32) {
    %c0_i32 = arith.constant 0 : i32
    %c0_i32_0 = arith.constant 0 : i32
    %c0_i32_1 = arith.constant 0 : i32
    return %c0_i32, %c0_i32_0 : i32, i32
  }
  func.func @transform_3(%arg0: i32) -> (i32, i32, i32) {
    %c0_i32 = arith.constant 0 : i32
    %c0_i32_0 = arith.constant 0 : i32
    %c0_i32_1 = arith.constant 0 : i32
    return %arg0, %c0_i32, %c0_i32_0 : i32, i32, i32
  }
}

module attributes {stable_mosaic.version = 11 : i64} {
  func.func @_conv_tap_kernel(%arg0: i32, %arg1: memref<4x26x8xf32, #tpu.memory_space<vmem>>, %arg2: memref<9x8x128xbf16, #tpu.memory_space<vmem>>, %arg3: memref<1x128xf32, #tpu.memory_space<vmem>>, %arg4: memref<1x20x128xf32, #tpu.memory_space<vmem>>) attributes {dimension_semantics = [#tpu.dimension_semantics<parallel>], iteration_bounds = array<i64: 2>, scalar_prefetch = 0 : i64, scratch_operands = 0 : i64, tpu.core_type = #tpu.core_type<tc>, window_params = [{transform_indices = @transform_0, window_bounds = array<i64: 4, 26, 8>}, {pipeline_mode = #tpu.pipeline_mode<synchronous>, transform_indices = @transform_1, window_bounds = array<i64: 9, 8, 128>}, {pipeline_mode = #tpu.pipeline_mode<synchronous>, transform_indices = @transform_2, window_bounds = array<i64: 1, 128>}, {transform_indices = @transform_3, window_bounds = array<i64: 1, 20, 128>}]} {
    %cst = arith.constant 0.000000e+00 : f32
    %0 = vector.broadcast %cst : f32 to vector<20x128xf32>
    %c0 = arith.constant 0 : index
    %c0_0 = arith.constant 0 : index
    %c0_1 = arith.constant 0 : index
    %1 = vector.load %arg1[%c0, %c0_0, %c0_1] : memref<4x26x8xf32, #tpu.memory_space<vmem>>, vector<1x20x8xf32>
    %2 = vector.shape_cast %1 : vector<1x20x8xf32> to vector<20x8xf32>
    %3 = arith.truncf %2 : vector<20x8xf32> to vector<20x8xbf16>
    %c0_2 = arith.constant 0 : index
    %c0_3 = arith.constant 0 : index
    %c0_4 = arith.constant 0 : index
    %4 = vector.load %arg2[%c0_2, %c0_3, %c0_4] : memref<9x8x128xbf16, #tpu.memory_space<vmem>>, vector<1x8x128xbf16>
    %5 = vector.shape_cast %4 : vector<1x8x128xbf16> to vector<8x128xbf16>
    %cst_5 = arith.constant dense<0.000000e+00> : vector<20x128xf32>
    %6 = tpu.matmul %3, %5, %cst_5 {dimension_numbers = #tpu.dot_dimension_numbers<[1], [0], [0], [1], [0, 0, 1, 1], [], []>} : vector<20x8xbf16>, vector<8x128xbf16>, vector<20x128xf32> -> vector<20x128xf32>
    %7 = arith.addf %0, %6 : vector<20x128xf32>
    %c1 = arith.constant 1 : index
    %c0_6 = arith.constant 0 : index
    %c0_7 = arith.constant 0 : index
    %8 = vector.load %arg1[%c1, %c0_6, %c0_7] : memref<4x26x8xf32, #tpu.memory_space<vmem>>, vector<1x20x8xf32>
    %9 = vector.shape_cast %8 : vector<1x20x8xf32> to vector<20x8xf32>
    %10 = arith.truncf %9 : vector<20x8xf32> to vector<20x8xbf16>
    %c1_8 = arith.constant 1 : index
    %c0_9 = arith.constant 0 : index
    %c0_10 = arith.constant 0 : index
    %11 = vector.load %arg2[%c1_8, %c0_9, %c0_10] : memref<9x8x128xbf16, #tpu.memory_space<vmem>>, vector<1x8x128xbf16>
    %12 = vector.shape_cast %11 : vector<1x8x128xbf16> to vector<8x128xbf16>
    %cst_11 = arith.constant dense<0.000000e+00> : vector<20x128xf32>
    %13 = tpu.matmul %10, %12, %cst_11 {dimension_numbers = #tpu.dot_dimension_numbers<[1], [0], [0], [1], [0, 0, 1, 1], [], []>} : vector<20x8xbf16>, vector<8x128xbf16>, vector<20x128xf32> -> vector<20x128xf32>
    %14 = arith.addf %7, %13 : vector<20x128xf32>
    %c0_12 = arith.constant 0 : index
    %c1_13 = arith.constant 1 : index
    %c0_14 = arith.constant 0 : index
    %15 = vector.load %arg1[%c0_12, %c1_13, %c0_14] : memref<4x26x8xf32, #tpu.memory_space<vmem>>, vector<1x20x8xf32>
    %16 = vector.shape_cast %15 : vector<1x20x8xf32> to vector<20x8xf32>
    %17 = arith.truncf %16 : vector<20x8xf32> to vector<20x8xbf16>
    %c2 = arith.constant 2 : index
    %c0_15 = arith.constant 0 : index
    %c0_16 = arith.constant 0 : index
    %18 = vector.load %arg2[%c2, %c0_15, %c0_16] : memref<9x8x128xbf16, #tpu.memory_space<vmem>>, vector<1x8x128xbf16>
    %19 = vector.shape_cast %18 : vector<1x8x128xbf16> to vector<8x128xbf16>
    %cst_17 = arith.constant dense<0.000000e+00> : vector<20x128xf32>
    %20 = tpu.matmul %17, %19, %cst_17 {dimension_numbers = #tpu.dot_dimension_numbers<[1], [0], [0], [1], [0, 0, 1, 1], [], []>} : vector<20x8xbf16>, vector<8x128xbf16>, vector<20x128xf32> -> vector<20x128xf32>
    %21 = arith.addf %14, %20 : vector<20x128xf32>
    %c2_18 = arith.constant 2 : index
    %c0_19 = arith.constant 0 : index
    %c0_20 = arith.constant 0 : index
    %22 = vector.load %arg1[%c2_18, %c0_19, %c0_20] : memref<4x26x8xf32, #tpu.memory_space<vmem>>, vector<1x20x8xf32>
    %23 = vector.shape_cast %22 : vector<1x20x8xf32> to vector<20x8xf32>
    %24 = arith.truncf %23 : vector<20x8xf32> to vector<20x8xbf16>
    %c3 = arith.constant 3 : index
    %c0_21 = arith.constant 0 : index
    %c0_22 = arith.constant 0 : index
    %25 = vector.load %arg2[%c3, %c0_21, %c0_22] : memref<9x8x128xbf16, #tpu.memory_space<vmem>>, vector<1x8x128xbf16>
    %26 = vector.shape_cast %25 : vector<1x8x128xbf16> to vector<8x128xbf16>
    %cst_23 = arith.constant dense<0.000000e+00> : vector<20x128xf32>
    %27 = tpu.matmul %24, %26, %cst_23 {dimension_numbers = #tpu.dot_dimension_numbers<[1], [0], [0], [1], [0, 0, 1, 1], [], []>} : vector<20x8xbf16>, vector<8x128xbf16>, vector<20x128xf32> -> vector<20x128xf32>
    %28 = arith.addf %21, %27 : vector<20x128xf32>
    %c3_24 = arith.constant 3 : index
    %c0_25 = arith.constant 0 : index
    %c0_26 = arith.constant 0 : index
    %29 = vector.load %arg1[%c3_24, %c0_25, %c0_26] : memref<4x26x8xf32, #tpu.memory_space<vmem>>, vector<1x20x8xf32>
    %30 = vector.shape_cast %29 : vector<1x20x8xf32> to vector<20x8xf32>
    %31 = arith.truncf %30 : vector<20x8xf32> to vector<20x8xbf16>
    %c4 = arith.constant 4 : index
    %c0_27 = arith.constant 0 : index
    %c0_28 = arith.constant 0 : index
    %32 = vector.load %arg2[%c4, %c0_27, %c0_28] : memref<9x8x128xbf16, #tpu.memory_space<vmem>>, vector<1x8x128xbf16>
    %33 = vector.shape_cast %32 : vector<1x8x128xbf16> to vector<8x128xbf16>
    %cst_29 = arith.constant dense<0.000000e+00> : vector<20x128xf32>
    %34 = tpu.matmul %31, %33, %cst_29 {dimension_numbers = #tpu.dot_dimension_numbers<[1], [0], [0], [1], [0, 0, 1, 1], [], []>} : vector<20x8xbf16>, vector<8x128xbf16>, vector<20x128xf32> -> vector<20x128xf32>
    %35 = arith.addf %28, %34 : vector<20x128xf32>
    %c2_30 = arith.constant 2 : index
    %c1_31 = arith.constant 1 : index
    %c0_32 = arith.constant 0 : index
    %36 = vector.load %arg1[%c2_30, %c1_31, %c0_32] : memref<4x26x8xf32, #tpu.memory_space<vmem>>, vector<1x20x8xf32>
    %37 = vector.shape_cast %36 : vector<1x20x8xf32> to vector<20x8xf32>
    %38 = arith.truncf %37 : vector<20x8xf32> to vector<20x8xbf16>
    %c5 = arith.constant 5 : index
    %c0_33 = arith.constant 0 : index
    %c0_34 = arith.constant 0 : index
    %39 = vector.load %arg2[%c5, %c0_33, %c0_34] : memref<9x8x128xbf16, #tpu.memory_space<vmem>>, vector<1x8x128xbf16>
    %40 = vector.shape_cast %39 : vector<1x8x128xbf16> to vector<8x128xbf16>
    %cst_35 = arith.constant dense<0.000000e+00> : vector<20x128xf32>
    %41 = tpu.matmul %38, %40, %cst_35 {dimension_numbers = #tpu.dot_dimension_numbers<[1], [0], [0], [1], [0, 0, 1, 1], [], []>} : vector<20x8xbf16>, vector<8x128xbf16>, vector<20x128xf32> -> vector<20x128xf32>
    %42 = arith.addf %35, %41 : vector<20x128xf32>
    %c0_36 = arith.constant 0 : index
    %c5_37 = arith.constant 5 : index
    %c0_38 = arith.constant 0 : index
    %43 = vector.load %arg1[%c0_36, %c5_37, %c0_38] : memref<4x26x8xf32, #tpu.memory_space<vmem>>, vector<1x20x8xf32>
    %44 = vector.shape_cast %43 : vector<1x20x8xf32> to vector<20x8xf32>
    %45 = arith.truncf %44 : vector<20x8xf32> to vector<20x8xbf16>
    %c6 = arith.constant 6 : index
    %c0_39 = arith.constant 0 : index
    %c0_40 = arith.constant 0 : index
    %46 = vector.load %arg2[%c6, %c0_39, %c0_40] : memref<9x8x128xbf16, #tpu.memory_space<vmem>>, vector<1x8x128xbf16>
    %47 = vector.shape_cast %46 : vector<1x8x128xbf16> to vector<8x128xbf16>
    %cst_41 = arith.constant dense<0.000000e+00> : vector<20x128xf32>
    %48 = tpu.matmul %45, %47, %cst_41 {dimension_numbers = #tpu.dot_dimension_numbers<[1], [0], [0], [1], [0, 0, 1, 1], [], []>} : vector<20x8xbf16>, vector<8x128xbf16>, vector<20x128xf32> -> vector<20x128xf32>
    %49 = arith.addf %42, %48 : vector<20x128xf32>
    %c1_42 = arith.constant 1 : index
    %c5_43 = arith.constant 5 : index
    %c0_44 = arith.constant 0 : index
    %50 = vector.load %arg1[%c1_42, %c5_43, %c0_44] : memref<4x26x8xf32, #tpu.memory_space<vmem>>, vector<1x20x8xf32>
    %51 = vector.shape_cast %50 : vector<1x20x8xf32> to vector<20x8xf32>
    %52 = arith.truncf %51 : vector<20x8xf32> to vector<20x8xbf16>
    %c7 = arith.constant 7 : index
    %c0_45 = arith.constant 0 : index
    %c0_46 = arith.constant 0 : index
    %53 = vector.load %arg2[%c7, %c0_45, %c0_46] : memref<9x8x128xbf16, #tpu.memory_space<vmem>>, vector<1x8x128xbf16>
    %54 = vector.shape_cast %53 : vector<1x8x128xbf16> to vector<8x128xbf16>
    %cst_47 = arith.constant dense<0.000000e+00> : vector<20x128xf32>
    %55 = tpu.matmul %52, %54, %cst_47 {dimension_numbers = #tpu.dot_dimension_numbers<[1], [0], [0], [1], [0, 0, 1, 1], [], []>} : vector<20x8xbf16>, vector<8x128xbf16>, vector<20x128xf32> -> vector<20x128xf32>
    %56 = arith.addf %49, %55 : vector<20x128xf32>
    %c0_48 = arith.constant 0 : index
    %c6_49 = arith.constant 6 : index
    %c0_50 = arith.constant 0 : index
    %57 = vector.load %arg1[%c0_48, %c6_49, %c0_50] : memref<4x26x8xf32, #tpu.memory_space<vmem>>, vector<1x20x8xf32>
    %58 = vector.shape_cast %57 : vector<1x20x8xf32> to vector<20x8xf32>
    %59 = arith.truncf %58 : vector<20x8xf32> to vector<20x8xbf16>
    %c8 = arith.constant 8 : index
    %c0_51 = arith.constant 0 : index
    %c0_52 = arith.constant 0 : index
    %60 = vector.load %arg2[%c8, %c0_51, %c0_52] : memref<9x8x128xbf16, #tpu.memory_space<vmem>>, vector<1x8x128xbf16>
    %61 = vector.shape_cast %60 : vector<1x8x128xbf16> to vector<8x128xbf16>
    %cst_53 = arith.constant dense<0.000000e+00> : vector<20x128xf32>
    %62 = tpu.matmul %59, %61, %cst_53 {dimension_numbers = #tpu.dot_dimension_numbers<[1], [0], [0], [1], [0, 0, 1, 1], [], []>} : vector<20x8xbf16>, vector<8x128xbf16>, vector<20x128xf32> -> vector<20x128xf32>
    %63 = arith.addf %56, %62 : vector<20x128xf32>
    %c0_54 = arith.constant 0 : index
    %c0_55 = arith.constant 0 : index
    %64 = vector.load %arg3[%c0_54, %c0_55] : memref<1x128xf32, #tpu.memory_space<vmem>>, vector<1x128xf32>
    %65 = vector.broadcast %64 : vector<1x128xf32> to vector<20x128xf32>
    %66 = arith.addf %63, %65 : vector<20x128xf32>
    %cst_56 = arith.constant 0.000000e+00 : f32
    %67 = vector.broadcast %cst_56 : f32 to vector<20x128xf32>
    %68 = arith.maximumf %66, %67 : vector<20x128xf32>
    %c0_57 = arith.constant 0 : index
    %c0_58 = arith.constant 0 : index
    %c0_59 = arith.constant 0 : index
    %69 = vector.load %arg4[%c0_57, %c0_58, %c0_59] : memref<1x20x128xf32, #tpu.memory_space<vmem>>, vector<1x20x128xf32>
    %70 = vector.shape_cast %69 : vector<1x20x128xf32> to vector<20x128xf32>
    %71 = vector.shape_cast %68 : vector<20x128xf32> to vector<1x20x128xf32>
    tpu.vector_store %arg4[%c0_57, %c0_58, %c0_59], %71 {strides = array<i32>} : memref<1x20x128xf32, #tpu.memory_space<vmem>>, vector<1x20x128xf32>,
    return
  }
  func.func @transform_0(%arg0: i32) -> (i32, i32, i32) {
    %c0_i32 = arith.constant 0 : i32
    %c0_i32_0 = arith.constant 0 : i32
    %c0_i32_1 = arith.constant 0 : i32
    return %arg0, %c0_i32, %c0_i32_0 : i32, i32, i32
  }
  func.func @transform_1(%arg0: i32) -> (i32, i32, i32) {
    %c0_i32 = arith.constant 0 : i32
    %c0_i32_0 = arith.constant 0 : i32
    %c0_i32_1 = arith.constant 0 : i32
    %c0_i32_2 = arith.constant 0 : i32
    return %c0_i32, %c0_i32_0, %c0_i32_1 : i32, i32, i32
  }
  func.func @transform_2(%arg0: i32) -> (i32, i32) {
    %c0_i32 = arith.constant 0 : i32
    %c0_i32_0 = arith.constant 0 : i32
    %c0_i32_1 = arith.constant 0 : i32
    return %c0_i32, %c0_i32_0 : i32, i32
  }
  func.func @transform_3(%arg0: i32) -> (i32, i32, i32) {
    %c0_i32 = arith.constant 0 : i32
    %c0_i32_0 = arith.constant 0 : i32
    %c0_i32_1 = arith.constant 0 : i32
    return %arg0, %c0_i32, %c0_i32_0 : i32, i32, i32
  }
}

module attributes {stable_mosaic.version = 11 : i64} {
  func.func @_conv_tap_kernel(%arg0: i32, %arg1: memref<4x10x16xf32, #tpu.memory_space<vmem>>, %arg2: memref<9x16x128xbf16, #tpu.memory_space<vmem>>, %arg3: memref<1x128xf32, #tpu.memory_space<vmem>>, %arg4: memref<1x6x128xf32, #tpu.memory_space<vmem>>) attributes {dimension_semantics = [#tpu.dimension_semantics<parallel>], iteration_bounds = array<i64: 2>, scalar_prefetch = 0 : i64, scratch_operands = 0 : i64, tpu.core_type = #tpu.core_type<tc>, window_params = [{transform_indices = @transform_0, window_bounds = array<i64: 4, 10, 16>}, {pipeline_mode = #tpu.pipeline_mode<synchronous>, transform_indices = @transform_1, window_bounds = array<i64: 9, 16, 128>}, {pipeline_mode = #tpu.pipeline_mode<synchronous>, transform_indices = @transform_2, window_bounds = array<i64: 1, 128>}, {transform_indices = @transform_3, window_bounds = array<i64: 1, 6, 128>}]} {
    %cst = arith.constant 0.000000e+00 : f32
    %0 = vector.broadcast %cst : f32 to vector<6x128xf32>
    %c0 = arith.constant 0 : index
    %c0_0 = arith.constant 0 : index
    %c0_1 = arith.constant 0 : index
    %1 = vector.load %arg1[%c0, %c0_0, %c0_1] : memref<4x10x16xf32, #tpu.memory_space<vmem>>, vector<1x6x16xf32>
    %2 = vector.shape_cast %1 : vector<1x6x16xf32> to vector<6x16xf32>
    %3 = arith.truncf %2 : vector<6x16xf32> to vector<6x16xbf16>
    %c0_2 = arith.constant 0 : index
    %c0_3 = arith.constant 0 : index
    %c0_4 = arith.constant 0 : index
    %4 = vector.load %arg2[%c0_2, %c0_3, %c0_4] : memref<9x16x128xbf16, #tpu.memory_space<vmem>>, vector<1x16x128xbf16>
    %5 = vector.shape_cast %4 : vector<1x16x128xbf16> to vector<16x128xbf16>
    %cst_5 = arith.constant dense<0.000000e+00> : vector<6x128xf32>
    %6 = tpu.matmul %3, %5, %cst_5 {dimension_numbers = #tpu.dot_dimension_numbers<[1], [0], [0], [1], [0, 0, 1, 1], [], []>} : vector<6x16xbf16>, vector<16x128xbf16>, vector<6x128xf32> -> vector<6x128xf32>
    %7 = arith.addf %0, %6 : vector<6x128xf32>
    %c1 = arith.constant 1 : index
    %c0_6 = arith.constant 0 : index
    %c0_7 = arith.constant 0 : index
    %8 = vector.load %arg1[%c1, %c0_6, %c0_7] : memref<4x10x16xf32, #tpu.memory_space<vmem>>, vector<1x6x16xf32>
    %9 = vector.shape_cast %8 : vector<1x6x16xf32> to vector<6x16xf32>
    %10 = arith.truncf %9 : vector<6x16xf32> to vector<6x16xbf16>
    %c1_8 = arith.constant 1 : index
    %c0_9 = arith.constant 0 : index
    %c0_10 = arith.constant 0 : index
    %11 = vector.load %arg2[%c1_8, %c0_9, %c0_10] : memref<9x16x128xbf16, #tpu.memory_space<vmem>>, vector<1x16x128xbf16>
    %12 = vector.shape_cast %11 : vector<1x16x128xbf16> to vector<16x128xbf16>
    %cst_11 = arith.constant dense<0.000000e+00> : vector<6x128xf32>
    %13 = tpu.matmul %10, %12, %cst_11 {dimension_numbers = #tpu.dot_dimension_numbers<[1], [0], [0], [1], [0, 0, 1, 1], [], []>} : vector<6x16xbf16>, vector<16x128xbf16>, vector<6x128xf32> -> vector<6x128xf32>
    %14 = arith.addf %7, %13 : vector<6x128xf32>
    %c0_12 = arith.constant 0 : index
    %c1_13 = arith.constant 1 : index
    %c0_14 = arith.constant 0 : index
    %15 = vector.load %arg1[%c0_12, %c1_13, %c0_14] : memref<4x10x16xf32, #tpu.memory_space<vmem>>, vector<1x6x16xf32>
    %16 = vector.shape_cast %15 : vector<1x6x16xf32> to vector<6x16xf32>
    %17 = arith.truncf %16 : vector<6x16xf32> to vector<6x16xbf16>
    %c2 = arith.constant 2 : index
    %c0_15 = arith.constant 0 : index
    %c0_16 = arith.constant 0 : index
    %18 = vector.load %arg2[%c2, %c0_15, %c0_16] : memref<9x16x128xbf16, #tpu.memory_space<vmem>>, vector<1x16x128xbf16>
    %19 = vector.shape_cast %18 : vector<1x16x128xbf16> to vector<16x128xbf16>
    %cst_17 = arith.constant dense<0.000000e+00> : vector<6x128xf32>
    %20 = tpu.matmul %17, %19, %cst_17 {dimension_numbers = #tpu.dot_dimension_numbers<[1], [0], [0], [1], [0, 0, 1, 1], [], []>} : vector<6x16xbf16>, vector<16x128xbf16>, vector<6x128xf32> -> vector<6x128xf32>
    %21 = arith.addf %14, %20 : vector<6x128xf32>
    %c2_18 = arith.constant 2 : index
    %c0_19 = arith.constant 0 : index
    %c0_20 = arith.constant 0 : index
    %22 = vector.load %arg1[%c2_18, %c0_19, %c0_20] : memref<4x10x16xf32, #tpu.memory_space<vmem>>, vector<1x6x16xf32>
    %23 = vector.shape_cast %22 : vector<1x6x16xf32> to vector<6x16xf32>
    %24 = arith.truncf %23 : vector<6x16xf32> to vector<6x16xbf16>
    %c3 = arith.constant 3 : index
    %c0_21 = arith.constant 0 : index
    %c0_22 = arith.constant 0 : index
    %25 = vector.load %arg2[%c3, %c0_21, %c0_22] : memref<9x16x128xbf16, #tpu.memory_space<vmem>>, vector<1x16x128xbf16>
    %26 = vector.shape_cast %25 : vector<1x16x128xbf16> to vector<16x128xbf16>
    %cst_23 = arith.constant dense<0.000000e+00> : vector<6x128xf32>
    %27 = tpu.matmul %24, %26, %cst_23 {dimension_numbers = #tpu.dot_dimension_numbers<[1], [0], [0], [1], [0, 0, 1, 1], [], []>} : vector<6x16xbf16>, vector<16x128xbf16>, vector<6x128xf32> -> vector<6x128xf32>
    %28 = arith.addf %21, %27 : vector<6x128xf32>
    %c3_24 = arith.constant 3 : index
    %c0_25 = arith.constant 0 : index
    %c0_26 = arith.constant 0 : index
    %29 = vector.load %arg1[%c3_24, %c0_25, %c0_26] : memref<4x10x16xf32, #tpu.memory_space<vmem>>, vector<1x6x16xf32>
    %30 = vector.shape_cast %29 : vector<1x6x16xf32> to vector<6x16xf32>
    %31 = arith.truncf %30 : vector<6x16xf32> to vector<6x16xbf16>
    %c4 = arith.constant 4 : index
    %c0_27 = arith.constant 0 : index
    %c0_28 = arith.constant 0 : index
    %32 = vector.load %arg2[%c4, %c0_27, %c0_28] : memref<9x16x128xbf16, #tpu.memory_space<vmem>>, vector<1x16x128xbf16>
    %33 = vector.shape_cast %32 : vector<1x16x128xbf16> to vector<16x128xbf16>
    %cst_29 = arith.constant dense<0.000000e+00> : vector<6x128xf32>
    %34 = tpu.matmul %31, %33, %cst_29 {dimension_numbers = #tpu.dot_dimension_numbers<[1], [0], [0], [1], [0, 0, 1, 1], [], []>} : vector<6x16xbf16>, vector<16x128xbf16>, vector<6x128xf32> -> vector<6x128xf32>
    %35 = arith.addf %28, %34 : vector<6x128xf32>
    %c2_30 = arith.constant 2 : index
    %c1_31 = arith.constant 1 : index
    %c0_32 = arith.constant 0 : index
    %36 = vector.load %arg1[%c2_30, %c1_31, %c0_32] : memref<4x10x16xf32, #tpu.memory_space<vmem>>, vector<1x6x16xf32>
    %37 = vector.shape_cast %36 : vector<1x6x16xf32> to vector<6x16xf32>
    %38 = arith.truncf %37 : vector<6x16xf32> to vector<6x16xbf16>
    %c5 = arith.constant 5 : index
    %c0_33 = arith.constant 0 : index
    %c0_34 = arith.constant 0 : index
    %39 = vector.load %arg2[%c5, %c0_33, %c0_34] : memref<9x16x128xbf16, #tpu.memory_space<vmem>>, vector<1x16x128xbf16>
    %40 = vector.shape_cast %39 : vector<1x16x128xbf16> to vector<16x128xbf16>
    %cst_35 = arith.constant dense<0.000000e+00> : vector<6x128xf32>
    %41 = tpu.matmul %38, %40, %cst_35 {dimension_numbers = #tpu.dot_dimension_numbers<[1], [0], [0], [1], [0, 0, 1, 1], [], []>} : vector<6x16xbf16>, vector<16x128xbf16>, vector<6x128xf32> -> vector<6x128xf32>
    %42 = arith.addf %35, %41 : vector<6x128xf32>
    %c0_36 = arith.constant 0 : index
    %c3_37 = arith.constant 3 : index
    %c0_38 = arith.constant 0 : index
    %43 = vector.load %arg1[%c0_36, %c3_37, %c0_38] : memref<4x10x16xf32, #tpu.memory_space<vmem>>, vector<1x6x16xf32>
    %44 = vector.shape_cast %43 : vector<1x6x16xf32> to vector<6x16xf32>
    %45 = arith.truncf %44 : vector<6x16xf32> to vector<6x16xbf16>
    %c6 = arith.constant 6 : index
    %c0_39 = arith.constant 0 : index
    %c0_40 = arith.constant 0 : index
    %46 = vector.load %arg2[%c6, %c0_39, %c0_40] : memref<9x16x128xbf16, #tpu.memory_space<vmem>>, vector<1x16x128xbf16>
    %47 = vector.shape_cast %46 : vector<1x16x128xbf16> to vector<16x128xbf16>
    %cst_41 = arith.constant dense<0.000000e+00> : vector<6x128xf32>
    %48 = tpu.matmul %45, %47, %cst_41 {dimension_numbers = #tpu.dot_dimension_numbers<[1], [0], [0], [1], [0, 0, 1, 1], [], []>} : vector<6x16xbf16>, vector<16x128xbf16>, vector<6x128xf32> -> vector<6x128xf32>
    %49 = arith.addf %42, %48 : vector<6x128xf32>
    %c1_42 = arith.constant 1 : index
    %c3_43 = arith.constant 3 : index
    %c0_44 = arith.constant 0 : index
    %50 = vector.load %arg1[%c1_42, %c3_43, %c0_44] : memref<4x10x16xf32, #tpu.memory_space<vmem>>, vector<1x6x16xf32>
    %51 = vector.shape_cast %50 : vector<1x6x16xf32> to vector<6x16xf32>
    %52 = arith.truncf %51 : vector<6x16xf32> to vector<6x16xbf16>
    %c7 = arith.constant 7 : index
    %c0_45 = arith.constant 0 : index
    %c0_46 = arith.constant 0 : index
    %53 = vector.load %arg2[%c7, %c0_45, %c0_46] : memref<9x16x128xbf16, #tpu.memory_space<vmem>>, vector<1x16x128xbf16>
    %54 = vector.shape_cast %53 : vector<1x16x128xbf16> to vector<16x128xbf16>
    %cst_47 = arith.constant dense<0.000000e+00> : vector<6x128xf32>
    %55 = tpu.matmul %52, %54, %cst_47 {dimension_numbers = #tpu.dot_dimension_numbers<[1], [0], [0], [1], [0, 0, 1, 1], [], []>} : vector<6x16xbf16>, vector<16x128xbf16>, vector<6x128xf32> -> vector<6x128xf32>
    %56 = arith.addf %49, %55 : vector<6x128xf32>
    %c0_48 = arith.constant 0 : index
    %c4_49 = arith.constant 4 : index
    %c0_50 = arith.constant 0 : index
    %57 = vector.load %arg1[%c0_48, %c4_49, %c0_50] : memref<4x10x16xf32, #tpu.memory_space<vmem>>, vector<1x6x16xf32>
    %58 = vector.shape_cast %57 : vector<1x6x16xf32> to vector<6x16xf32>
    %59 = arith.truncf %58 : vector<6x16xf32> to vector<6x16xbf16>
    %c8 = arith.constant 8 : index
    %c0_51 = arith.constant 0 : index
    %c0_52 = arith.constant 0 : index
    %60 = vector.load %arg2[%c8, %c0_51, %c0_52] : memref<9x16x128xbf16, #tpu.memory_space<vmem>>, vector<1x16x128xbf16>
    %61 = vector.shape_cast %60 : vector<1x16x128xbf16> to vector<16x128xbf16>
    %cst_53 = arith.constant dense<0.000000e+00> : vector<6x128xf32>
    %62 = tpu.matmul %59, %61, %cst_53 {dimension_numbers = #tpu.dot_dimension_numbers<[1], [0], [0], [1], [0, 0, 1, 1], [], []>} : vector<6x16xbf16>, vector<16x128xbf16>, vector<6x128xf32> -> vector<6x128xf32>
    %63 = arith.addf %56, %62 : vector<6x128xf32>
    %c0_54 = arith.constant 0 : index
    %c0_55 = arith.constant 0 : index
    %64 = vector.load %arg3[%c0_54, %c0_55] : memref<1x128xf32, #tpu.memory_space<vmem>>, vector<1x128xf32>
    %65 = vector.broadcast %64 : vector<1x128xf32> to vector<6x128xf32>
    %66 = arith.addf %63, %65 : vector<6x128xf32>
    %cst_56 = arith.constant 0.000000e+00 : f32
    %67 = vector.broadcast %cst_56 : f32 to vector<6x128xf32>
    %68 = arith.maximumf %66, %67 : vector<6x128xf32>
    %c0_57 = arith.constant 0 : index
    %c0_58 = arith.constant 0 : index
    %c0_59 = arith.constant 0 : index
    %69 = vector.load %arg4[%c0_57, %c0_58, %c0_59] : memref<1x6x128xf32, #tpu.memory_space<vmem>>, vector<1x6x128xf32>
    %70 = vector.shape_cast %69 : vector<1x6x128xf32> to vector<6x128xf32>
    %71 = vector.shape_cast %68 : vector<6x128xf32> to vector<1x6x128xf32>
    tpu.vector_store %arg4[%c0_57, %c0_58, %c0_59], %71 {strides = array<i32>} : memref<1x6x128xf32, #tpu.memory_space<vmem>>, vector<1x6x128xf32>,
    return
  }
  func.func @transform_0(%arg0: i32) -> (i32, i32, i32) {
    %c0_i32 = arith.constant 0 : i32
    %c0_i32_0 = arith.constant 0 : i32
    %c0_i32_1 = arith.constant 0 : i32
    return %arg0, %c0_i32, %c0_i32_0 : i32, i32, i32
  }
  func.func @transform_1(%arg0: i32) -> (i32, i32, i32) {
    %c0_i32 = arith.constant 0 : i32
    %c0_i32_0 = arith.constant 0 : i32
    %c0_i32_1 = arith.constant 0 : i32
    %c0_i32_2 = arith.constant 0 : i32
    return %c0_i32, %c0_i32_0, %c0_i32_1 : i32, i32, i32
  }
  func.func @transform_2(%arg0: i32) -> (i32, i32) {
    %c0_i32 = arith.constant 0 : i32
    %c0_i32_0 = arith.constant 0 : i32
    %c0_i32_1 = arith.constant 0 : i32
    return %c0_i32, %c0_i32_0 : i32, i32
  }
  func.func @transform_3(%arg0: i32) -> (i32, i32, i32) {
    %c0_i32 = arith.constant 0 : i32
    %c0_i32_0 = arith.constant 0 : i32
    %c0_i32_1 = arith.constant 0 : i32
    return %arg0, %c0_i32, %c0_i32_0 : i32, i32, i32
  }
}

module attributes {stable_mosaic.version = 11 : i64} {
  func.func @_matmul_bias_kernel(%arg0: i32, %arg1: memref<8x32xf32, #tpu.memory_space<vmem>>, %arg2: memref<32x128xbf16, #tpu.memory_space<vmem>>, %arg3: memref<1x128xf32, #tpu.memory_space<vmem>>, %arg4: memref<8x128xf32, #tpu.memory_space<vmem>>) attributes {dimension_semantics = [#tpu.dimension_semantics<parallel>], iteration_bounds = array<i64: 1>, scalar_prefetch = 0 : i64, scratch_operands = 0 : i64, tpu.core_type = #tpu.core_type<tc>, window_params = [{transform_indices = @transform_0, window_bounds = array<i64: 8, 32>}, {pipeline_mode = #tpu.pipeline_mode<synchronous>, transform_indices = @transform_1, window_bounds = array<i64: 32, 128>}, {pipeline_mode = #tpu.pipeline_mode<synchronous>, transform_indices = @transform_2, window_bounds = array<i64: 1, 128>}, {transform_indices = @transform_3, window_bounds = array<i64: 8, 128>}]} {
    %c0 = arith.constant 0 : index
    %c0_0 = arith.constant 0 : index
    %0 = vector.load %arg1[%c0, %c0_0] : memref<8x32xf32, #tpu.memory_space<vmem>>, vector<8x32xf32>
    %1 = arith.truncf %0 : vector<8x32xf32> to vector<8x32xbf16>
    %c0_1 = arith.constant 0 : index
    %c0_2 = arith.constant 0 : index
    %2 = vector.load %arg2[%c0_1, %c0_2] : memref<32x128xbf16, #tpu.memory_space<vmem>>, vector<32x128xbf16>
    %cst = arith.constant dense<0.000000e+00> : vector<8x128xf32>
    %3 = tpu.matmul %1, %2, %cst {dimension_numbers = #tpu.dot_dimension_numbers<[1], [0], [0], [1], [0, 0, 1, 1], [], []>} : vector<8x32xbf16>, vector<32x128xbf16>, vector<8x128xf32> -> vector<8x128xf32>
    %c0_3 = arith.constant 0 : index
    %c0_4 = arith.constant 0 : index
    %4 = vector.load %arg3[%c0_3, %c0_4] : memref<1x128xf32, #tpu.memory_space<vmem>>, vector<1x128xf32>
    %5 = vector.broadcast %4 : vector<1x128xf32> to vector<8x128xf32>
    %6 = arith.addf %3, %5 : vector<8x128xf32>
    %c0_5 = arith.constant 0 : index
    %c0_6 = arith.constant 0 : index
    %7 = vector.load %arg4[%c0_5, %c0_6] : memref<8x128xf32, #tpu.memory_space<vmem>>, vector<8x128xf32>
    tpu.vector_store %arg4[%c0_5, %c0_6], %6 {strides = array<i32>} : memref<8x128xf32, #tpu.memory_space<vmem>>, vector<8x128xf32>,
    return
  }
  func.func @transform_0(%arg0: i32) -> (i32, i32) {
    %c0_i32 = arith.constant 0 : i32
    %c0_i32_0 = arith.constant 0 : i32
    return %arg0, %c0_i32 : i32, i32
  }
  func.func @transform_1(%arg0: i32) -> (i32, i32) {
    %c0_i32 = arith.constant 0 : i32
    %c0_i32_0 = arith.constant 0 : i32
    %c0_i32_1 = arith.constant 0 : i32
    return %c0_i32, %c0_i32_0 : i32, i32
  }
  func.func @transform_2(%arg0: i32) -> (i32, i32) {
    %c0_i32 = arith.constant 0 : i32
    %c0_i32_0 = arith.constant 0 : i32
    %c0_i32_1 = arith.constant 0 : i32
    return %c0_i32, %c0_i32_0 : i32, i32
  }
  func.func @transform_3(%arg0: i32) -> (i32, i32) {
    %c0_i32 = arith.constant 0 : i32
    %c0_i32_0 = arith.constant 0 : i32
    return %arg0, %c0_i32 : i32, i32
  }
}

module attributes {stable_mosaic.version = 11 : i64} {
  func.func @_conv_tap_kernel(%arg0: i32, %arg1: memref<1x38x32xf32, #tpu.memory_space<vmem>>, %arg2: memref<9x32x128xbf16, #tpu.memory_space<vmem>>, %arg3: memref<1x128xf32, #tpu.memory_space<vmem>>, %arg4: memref<1x24x128xf32, #tpu.memory_space<vmem>>) attributes {dimension_semantics = [#tpu.dimension_semantics<parallel>], iteration_bounds = array<i64: 2>, scalar_prefetch = 0 : i64, scratch_operands = 0 : i64, tpu.core_type = #tpu.core_type<tc>, window_params = [{transform_indices = @transform_0, window_bounds = array<i64: 1, 38, 32>}, {pipeline_mode = #tpu.pipeline_mode<synchronous>, transform_indices = @transform_1, window_bounds = array<i64: 9, 32, 128>}, {pipeline_mode = #tpu.pipeline_mode<synchronous>, transform_indices = @transform_2, window_bounds = array<i64: 1, 128>}, {transform_indices = @transform_3, window_bounds = array<i64: 1, 24, 128>}]} {
    %cst = arith.constant 0.000000e+00 : f32
    %0 = vector.broadcast %cst : f32 to vector<24x128xf32>
    %c0 = arith.constant 0 : index
    %c0_0 = arith.constant 0 : index
    %c0_1 = arith.constant 0 : index
    %1 = vector.load %arg1[%c0, %c0_0, %c0_1] : memref<1x38x32xf32, #tpu.memory_space<vmem>>, vector<1x24x32xf32>
    %2 = vector.shape_cast %1 : vector<1x24x32xf32> to vector<24x32xf32>
    %3 = arith.truncf %2 : vector<24x32xf32> to vector<24x32xbf16>
    %c0_2 = arith.constant 0 : index
    %c0_3 = arith.constant 0 : index
    %c0_4 = arith.constant 0 : index
    %4 = vector.load %arg2[%c0_2, %c0_3, %c0_4] : memref<9x32x128xbf16, #tpu.memory_space<vmem>>, vector<1x32x128xbf16>
    %5 = vector.shape_cast %4 : vector<1x32x128xbf16> to vector<32x128xbf16>
    %cst_5 = arith.constant dense<0.000000e+00> : vector<24x128xf32>
    %6 = tpu.matmul %3, %5, %cst_5 {dimension_numbers = #tpu.dot_dimension_numbers<[1], [0], [0], [1], [0, 0, 1, 1], [], []>} : vector<24x32xbf16>, vector<32x128xbf16>, vector<24x128xf32> -> vector<24x128xf32>
    %7 = arith.addf %0, %6 : vector<24x128xf32>
    %c0_6 = arith.constant 0 : index
    %c1 = arith.constant 1 : index
    %c0_7 = arith.constant 0 : index
    %8 = vector.load %arg1[%c0_6, %c1, %c0_7] : memref<1x38x32xf32, #tpu.memory_space<vmem>>, vector<1x24x32xf32>
    %9 = vector.shape_cast %8 : vector<1x24x32xf32> to vector<24x32xf32>
    %10 = arith.truncf %9 : vector<24x32xf32> to vector<24x32xbf16>
    %c1_8 = arith.constant 1 : index
    %c0_9 = arith.constant 0 : index
    %c0_10 = arith.constant 0 : index
    %11 = vector.load %arg2[%c1_8, %c0_9, %c0_10] : memref<9x32x128xbf16, #tpu.memory_space<vmem>>, vector<1x32x128xbf16>
    %12 = vector.shape_cast %11 : vector<1x32x128xbf16> to vector<32x128xbf16>
    %cst_11 = arith.constant dense<0.000000e+00> : vector<24x128xf32>
    %13 = tpu.matmul %10, %12, %cst_11 {dimension_numbers = #tpu.dot_dimension_numbers<[1], [0], [0], [1], [0, 0, 1, 1], [], []>} : vector<24x32xbf16>, vector<32x128xbf16>, vector<24x128xf32> -> vector<24x128xf32>
    %14 = arith.addf %7, %13 : vector<24x128xf32>
    %c0_12 = arith.constant 0 : index
    %c2 = arith.constant 2 : index
    %c0_13 = arith.constant 0 : index
    %15 = vector.load %arg1[%c0_12, %c2, %c0_13] : memref<1x38x32xf32, #tpu.memory_space<vmem>>, vector<1x24x32xf32>
    %16 = vector.shape_cast %15 : vector<1x24x32xf32> to vector<24x32xf32>
    %17 = arith.truncf %16 : vector<24x32xf32> to vector<24x32xbf16>
    %c2_14 = arith.constant 2 : index
    %c0_15 = arith.constant 0 : index
    %c0_16 = arith.constant 0 : index
    %18 = vector.load %arg2[%c2_14, %c0_15, %c0_16] : memref<9x32x128xbf16, #tpu.memory_space<vmem>>, vector<1x32x128xbf16>
    %19 = vector.shape_cast %18 : vector<1x32x128xbf16> to vector<32x128xbf16>
    %cst_17 = arith.constant dense<0.000000e+00> : vector<24x128xf32>
    %20 = tpu.matmul %17, %19, %cst_17 {dimension_numbers = #tpu.dot_dimension_numbers<[1], [0], [0], [1], [0, 0, 1, 1], [], []>} : vector<24x32xbf16>, vector<32x128xbf16>, vector<24x128xf32> -> vector<24x128xf32>
    %21 = arith.addf %14, %20 : vector<24x128xf32>
    %c0_18 = arith.constant 0 : index
    %c6 = arith.constant 6 : index
    %c0_19 = arith.constant 0 : index
    %22 = vector.load %arg1[%c0_18, %c6, %c0_19] : memref<1x38x32xf32, #tpu.memory_space<vmem>>, vector<1x24x32xf32>
    %23 = vector.shape_cast %22 : vector<1x24x32xf32> to vector<24x32xf32>
    %24 = arith.truncf %23 : vector<24x32xf32> to vector<24x32xbf16>
    %c3 = arith.constant 3 : index
    %c0_20 = arith.constant 0 : index
    %c0_21 = arith.constant 0 : index
    %25 = vector.load %arg2[%c3, %c0_20, %c0_21] : memref<9x32x128xbf16, #tpu.memory_space<vmem>>, vector<1x32x128xbf16>
    %26 = vector.shape_cast %25 : vector<1x32x128xbf16> to vector<32x128xbf16>
    %cst_22 = arith.constant dense<0.000000e+00> : vector<24x128xf32>
    %27 = tpu.matmul %24, %26, %cst_22 {dimension_numbers = #tpu.dot_dimension_numbers<[1], [0], [0], [1], [0, 0, 1, 1], [], []>} : vector<24x32xbf16>, vector<32x128xbf16>, vector<24x128xf32> -> vector<24x128xf32>
    %28 = arith.addf %21, %27 : vector<24x128xf32>
    %c0_23 = arith.constant 0 : index
    %c7 = arith.constant 7 : index
    %c0_24 = arith.constant 0 : index
    %29 = vector.load %arg1[%c0_23, %c7, %c0_24] : memref<1x38x32xf32, #tpu.memory_space<vmem>>, vector<1x24x32xf32>
    %30 = vector.shape_cast %29 : vector<1x24x32xf32> to vector<24x32xf32>
    %31 = arith.truncf %30 : vector<24x32xf32> to vector<24x32xbf16>
    %c4 = arith.constant 4 : index
    %c0_25 = arith.constant 0 : index
    %c0_26 = arith.constant 0 : index
    %32 = vector.load %arg2[%c4, %c0_25, %c0_26] : memref<9x32x128xbf16, #tpu.memory_space<vmem>>, vector<1x32x128xbf16>
    %33 = vector.shape_cast %32 : vector<1x32x128xbf16> to vector<32x128xbf16>
    %cst_27 = arith.constant dense<0.000000e+00> : vector<24x128xf32>
    %34 = tpu.matmul %31, %33, %cst_27 {dimension_numbers = #tpu.dot_dimension_numbers<[1], [0], [0], [1], [0, 0, 1, 1], [], []>} : vector<24x32xbf16>, vector<32x128xbf16>, vector<24x128xf32> -> vector<24x128xf32>
    %35 = arith.addf %28, %34 : vector<24x128xf32>
    %c0_28 = arith.constant 0 : index
    %c8 = arith.constant 8 : index
    %c0_29 = arith.constant 0 : index
    %36 = vector.load %arg1[%c0_28, %c8, %c0_29] : memref<1x38x32xf32, #tpu.memory_space<vmem>>, vector<1x24x32xf32>
    %37 = vector.shape_cast %36 : vector<1x24x32xf32> to vector<24x32xf32>
    %38 = arith.truncf %37 : vector<24x32xf32> to vector<24x32xbf16>
    %c5 = arith.constant 5 : index
    %c0_30 = arith.constant 0 : index
    %c0_31 = arith.constant 0 : index
    %39 = vector.load %arg2[%c5, %c0_30, %c0_31] : memref<9x32x128xbf16, #tpu.memory_space<vmem>>, vector<1x32x128xbf16>
    %40 = vector.shape_cast %39 : vector<1x32x128xbf16> to vector<32x128xbf16>
    %cst_32 = arith.constant dense<0.000000e+00> : vector<24x128xf32>
    %41 = tpu.matmul %38, %40, %cst_32 {dimension_numbers = #tpu.dot_dimension_numbers<[1], [0], [0], [1], [0, 0, 1, 1], [], []>} : vector<24x32xbf16>, vector<32x128xbf16>, vector<24x128xf32> -> vector<24x128xf32>
    %42 = arith.addf %35, %41 : vector<24x128xf32>
    %c0_33 = arith.constant 0 : index
    %c12 = arith.constant 12 : index
    %c0_34 = arith.constant 0 : index
    %43 = vector.load %arg1[%c0_33, %c12, %c0_34] : memref<1x38x32xf32, #tpu.memory_space<vmem>>, vector<1x24x32xf32>
    %44 = vector.shape_cast %43 : vector<1x24x32xf32> to vector<24x32xf32>
    %45 = arith.truncf %44 : vector<24x32xf32> to vector<24x32xbf16>
    %c6_35 = arith.constant 6 : index
    %c0_36 = arith.constant 0 : index
    %c0_37 = arith.constant 0 : index
    %46 = vector.load %arg2[%c6_35, %c0_36, %c0_37] : memref<9x32x128xbf16, #tpu.memory_space<vmem>>, vector<1x32x128xbf16>
    %47 = vector.shape_cast %46 : vector<1x32x128xbf16> to vector<32x128xbf16>
    %cst_38 = arith.constant dense<0.000000e+00> : vector<24x128xf32>
    %48 = tpu.matmul %45, %47, %cst_38 {dimension_numbers = #tpu.dot_dimension_numbers<[1], [0], [0], [1], [0, 0, 1, 1], [], []>} : vector<24x32xbf16>, vector<32x128xbf16>, vector<24x128xf32> -> vector<24x128xf32>
    %49 = arith.addf %42, %48 : vector<24x128xf32>
    %c0_39 = arith.constant 0 : index
    %c13 = arith.constant 13 : index
    %c0_40 = arith.constant 0 : index
    %50 = vector.load %arg1[%c0_39, %c13, %c0_40] : memref<1x38x32xf32, #tpu.memory_space<vmem>>, vector<1x24x32xf32>
    %51 = vector.shape_cast %50 : vector<1x24x32xf32> to vector<24x32xf32>
    %52 = arith.truncf %51 : vector<24x32xf32> to vector<24x32xbf16>
    %c7_41 = arith.constant 7 : index
    %c0_42 = arith.constant 0 : index
    %c0_43 = arith.constant 0 : index
    %53 = vector.load %arg2[%c7_41, %c0_42, %c0_43] : memref<9x32x128xbf16, #tpu.memory_space<vmem>>, vector<1x32x128xbf16>
    %54 = vector.shape_cast %53 : vector<1x32x128xbf16> to vector<32x128xbf16>
    %cst_44 = arith.constant dense<0.000000e+00> : vector<24x128xf32>
    %55 = tpu.matmul %52, %54, %cst_44 {dimension_numbers = #tpu.dot_dimension_numbers<[1], [0], [0], [1], [0, 0, 1, 1], [], []>} : vector<24x32xbf16>, vector<32x128xbf16>, vector<24x128xf32> -> vector<24x128xf32>
    %56 = arith.addf %49, %55 : vector<24x128xf32>
    %c0_45 = arith.constant 0 : index
    %c14 = arith.constant 14 : index
    %c0_46 = arith.constant 0 : index
    %57 = vector.load %arg1[%c0_45, %c14, %c0_46] : memref<1x38x32xf32, #tpu.memory_space<vmem>>, vector<1x24x32xf32>
    %58 = vector.shape_cast %57 : vector<1x24x32xf32> to vector<24x32xf32>
    %59 = arith.truncf %58 : vector<24x32xf32> to vector<24x32xbf16>
    %c8_47 = arith.constant 8 : index
    %c0_48 = arith.constant 0 : index
    %c0_49 = arith.constant 0 : index
    %60 = vector.load %arg2[%c8_47, %c0_48, %c0_49] : memref<9x32x128xbf16, #tpu.memory_space<vmem>>, vector<1x32x128xbf16>
    %61 = vector.shape_cast %60 : vector<1x32x128xbf16> to vector<32x128xbf16>
    %cst_50 = arith.constant dense<0.000000e+00> : vector<24x128xf32>
    %62 = tpu.matmul %59, %61, %cst_50 {dimension_numbers = #tpu.dot_dimension_numbers<[1], [0], [0], [1], [0, 0, 1, 1], [], []>} : vector<24x32xbf16>, vector<32x128xbf16>, vector<24x128xf32> -> vector<24x128xf32>
    %63 = arith.addf %56, %62 : vector<24x128xf32>
    %c0_51 = arith.constant 0 : index
    %c0_52 = arith.constant 0 : index
    %64 = vector.load %arg3[%c0_51, %c0_52] : memref<1x128xf32, #tpu.memory_space<vmem>>, vector<1x128xf32>
    %65 = vector.broadcast %64 : vector<1x128xf32> to vector<24x128xf32>
    %66 = arith.addf %63, %65 : vector<24x128xf32>
    %cst_53 = arith.constant 0.000000e+00 : f32
    %67 = vector.broadcast %cst_53 : f32 to vector<24x128xf32>
    %68 = arith.maximumf %66, %67 : vector<24x128xf32>
    %c0_54 = arith.constant 0 : index
    %c0_55 = arith.constant 0 : index
    %c0_56 = arith.constant 0 : index
    %69 = vector.load %arg4[%c0_54, %c0_55, %c0_56] : memref<1x24x128xf32, #tpu.memory_space<vmem>>, vector<1x24x128xf32>
    %70 = vector.shape_cast %69 : vector<1x24x128xf32> to vector<24x128xf32>
    %71 = vector.shape_cast %68 : vector<24x128xf32> to vector<1x24x128xf32>
    tpu.vector_store %arg4[%c0_54, %c0_55, %c0_56], %71 {strides = array<i32>} : memref<1x24x128xf32, #tpu.memory_space<vmem>>, vector<1x24x128xf32>,
    return
  }
  func.func @transform_0(%arg0: i32) -> (i32, i32, i32) {
    %c0_i32 = arith.constant 0 : i32
    %c0_i32_0 = arith.constant 0 : i32
    %c0_i32_1 = arith.constant 0 : i32
    return %arg0, %c0_i32, %c0_i32_0 : i32, i32, i32
  }
  func.func @transform_1(%arg0: i32) -> (i32, i32, i32) {
    %c0_i32 = arith.constant 0 : i32
    %c0_i32_0 = arith.constant 0 : i32
    %c0_i32_1 = arith.constant 0 : i32
    %c0_i32_2 = arith.constant 0 : i32
    return %c0_i32, %c0_i32_0, %c0_i32_1 : i32, i32, i32
  }
  func.func @transform_2(%arg0: i32) -> (i32, i32) {
    %c0_i32 = arith.constant 0 : i32
    %c0_i32_0 = arith.constant 0 : i32
    %c0_i32_1 = arith.constant 0 : i32
    return %c0_i32, %c0_i32_0 : i32, i32
  }
  func.func @transform_3(%arg0: i32) -> (i32, i32, i32) {
    %c0_i32 = arith.constant 0 : i32
    %c0_i32_0 = arith.constant 0 : i32
    %c0_i32_1 = arith.constant 0 : i32
    return %arg0, %c0_i32, %c0_i32_0 : i32, i32, i32
  }
}

module attributes {stable_mosaic.version = 11 : i64} {
  func.func @_conv_tap_kernel(%arg0: i32, %arg1: memref<1x38x16xf32, #tpu.memory_space<vmem>>, %arg2: memref<9x16x128xbf16, #tpu.memory_space<vmem>>, %arg3: memref<1x128xf32, #tpu.memory_space<vmem>>, %arg4: memref<1x24x128xf32, #tpu.memory_space<vmem>>) attributes {dimension_semantics = [#tpu.dimension_semantics<parallel>], iteration_bounds = array<i64: 2>, scalar_prefetch = 0 : i64, scratch_operands = 0 : i64, tpu.core_type = #tpu.core_type<tc>, window_params = [{transform_indices = @transform_0, window_bounds = array<i64: 1, 38, 16>}, {pipeline_mode = #tpu.pipeline_mode<synchronous>, transform_indices = @transform_1, window_bounds = array<i64: 9, 16, 128>}, {pipeline_mode = #tpu.pipeline_mode<synchronous>, transform_indices = @transform_2, window_bounds = array<i64: 1, 128>}, {transform_indices = @transform_3, window_bounds = array<i64: 1, 24, 128>}]} {
    %cst = arith.constant 0.000000e+00 : f32
    %0 = vector.broadcast %cst : f32 to vector<24x128xf32>
    %c0 = arith.constant 0 : index
    %c0_0 = arith.constant 0 : index
    %c0_1 = arith.constant 0 : index
    %1 = vector.load %arg1[%c0, %c0_0, %c0_1] : memref<1x38x16xf32, #tpu.memory_space<vmem>>, vector<1x24x16xf32>
    %2 = vector.shape_cast %1 : vector<1x24x16xf32> to vector<24x16xf32>
    %3 = arith.truncf %2 : vector<24x16xf32> to vector<24x16xbf16>
    %c0_2 = arith.constant 0 : index
    %c0_3 = arith.constant 0 : index
    %c0_4 = arith.constant 0 : index
    %4 = vector.load %arg2[%c0_2, %c0_3, %c0_4] : memref<9x16x128xbf16, #tpu.memory_space<vmem>>, vector<1x16x128xbf16>
    %5 = vector.shape_cast %4 : vector<1x16x128xbf16> to vector<16x128xbf16>
    %cst_5 = arith.constant dense<0.000000e+00> : vector<24x128xf32>
    %6 = tpu.matmul %3, %5, %cst_5 {dimension_numbers = #tpu.dot_dimension_numbers<[1], [0], [0], [1], [0, 0, 1, 1], [], []>} : vector<24x16xbf16>, vector<16x128xbf16>, vector<24x128xf32> -> vector<24x128xf32>
    %7 = arith.addf %0, %6 : vector<24x128xf32>
    %c0_6 = arith.constant 0 : index
    %c1 = arith.constant 1 : index
    %c0_7 = arith.constant 0 : index
    %8 = vector.load %arg1[%c0_6, %c1, %c0_7] : memref<1x38x16xf32, #tpu.memory_space<vmem>>, vector<1x24x16xf32>
    %9 = vector.shape_cast %8 : vector<1x24x16xf32> to vector<24x16xf32>
    %10 = arith.truncf %9 : vector<24x16xf32> to vector<24x16xbf16>
    %c1_8 = arith.constant 1 : index
    %c0_9 = arith.constant 0 : index
    %c0_10 = arith.constant 0 : index
    %11 = vector.load %arg2[%c1_8, %c0_9, %c0_10] : memref<9x16x128xbf16, #tpu.memory_space<vmem>>, vector<1x16x128xbf16>
    %12 = vector.shape_cast %11 : vector<1x16x128xbf16> to vector<16x128xbf16>
    %cst_11 = arith.constant dense<0.000000e+00> : vector<24x128xf32>
    %13 = tpu.matmul %10, %12, %cst_11 {dimension_numbers = #tpu.dot_dimension_numbers<[1], [0], [0], [1], [0, 0, 1, 1], [], []>} : vector<24x16xbf16>, vector<16x128xbf16>, vector<24x128xf32> -> vector<24x128xf32>
    %14 = arith.addf %7, %13 : vector<24x128xf32>
    %c0_12 = arith.constant 0 : index
    %c2 = arith.constant 2 : index
    %c0_13 = arith.constant 0 : index
    %15 = vector.load %arg1[%c0_12, %c2, %c0_13] : memref<1x38x16xf32, #tpu.memory_space<vmem>>, vector<1x24x16xf32>
    %16 = vector.shape_cast %15 : vector<1x24x16xf32> to vector<24x16xf32>
    %17 = arith.truncf %16 : vector<24x16xf32> to vector<24x16xbf16>
    %c2_14 = arith.constant 2 : index
    %c0_15 = arith.constant 0 : index
    %c0_16 = arith.constant 0 : index
    %18 = vector.load %arg2[%c2_14, %c0_15, %c0_16] : memref<9x16x128xbf16, #tpu.memory_space<vmem>>, vector<1x16x128xbf16>
    %19 = vector.shape_cast %18 : vector<1x16x128xbf16> to vector<16x128xbf16>
    %cst_17 = arith.constant dense<0.000000e+00> : vector<24x128xf32>
    %20 = tpu.matmul %17, %19, %cst_17 {dimension_numbers = #tpu.dot_dimension_numbers<[1], [0], [0], [1], [0, 0, 1, 1], [], []>} : vector<24x16xbf16>, vector<16x128xbf16>, vector<24x128xf32> -> vector<24x128xf32>
    %21 = arith.addf %14, %20 : vector<24x128xf32>
    %c0_18 = arith.constant 0 : index
    %c6 = arith.constant 6 : index
    %c0_19 = arith.constant 0 : index
    %22 = vector.load %arg1[%c0_18, %c6, %c0_19] : memref<1x38x16xf32, #tpu.memory_space<vmem>>, vector<1x24x16xf32>
    %23 = vector.shape_cast %22 : vector<1x24x16xf32> to vector<24x16xf32>
    %24 = arith.truncf %23 : vector<24x16xf32> to vector<24x16xbf16>
    %c3 = arith.constant 3 : index
    %c0_20 = arith.constant 0 : index
    %c0_21 = arith.constant 0 : index
    %25 = vector.load %arg2[%c3, %c0_20, %c0_21] : memref<9x16x128xbf16, #tpu.memory_space<vmem>>, vector<1x16x128xbf16>
    %26 = vector.shape_cast %25 : vector<1x16x128xbf16> to vector<16x128xbf16>
    %cst_22 = arith.constant dense<0.000000e+00> : vector<24x128xf32>
    %27 = tpu.matmul %24, %26, %cst_22 {dimension_numbers = #tpu.dot_dimension_numbers<[1], [0], [0], [1], [0, 0, 1, 1], [], []>} : vector<24x16xbf16>, vector<16x128xbf16>, vector<24x128xf32> -> vector<24x128xf32>
    %28 = arith.addf %21, %27 : vector<24x128xf32>
    %c0_23 = arith.constant 0 : index
    %c7 = arith.constant 7 : index
    %c0_24 = arith.constant 0 : index
    %29 = vector.load %arg1[%c0_23, %c7, %c0_24] : memref<1x38x16xf32, #tpu.memory_space<vmem>>, vector<1x24x16xf32>
    %30 = vector.shape_cast %29 : vector<1x24x16xf32> to vector<24x16xf32>
    %31 = arith.truncf %30 : vector<24x16xf32> to vector<24x16xbf16>
    %c4 = arith.constant 4 : index
    %c0_25 = arith.constant 0 : index
    %c0_26 = arith.constant 0 : index
    %32 = vector.load %arg2[%c4, %c0_25, %c0_26] : memref<9x16x128xbf16, #tpu.memory_space<vmem>>, vector<1x16x128xbf16>
    %33 = vector.shape_cast %32 : vector<1x16x128xbf16> to vector<16x128xbf16>
    %cst_27 = arith.constant dense<0.000000e+00> : vector<24x128xf32>
    %34 = tpu.matmul %31, %33, %cst_27 {dimension_numbers = #tpu.dot_dimension_numbers<[1], [0], [0], [1], [0, 0, 1, 1], [], []>} : vector<24x16xbf16>, vector<16x128xbf16>, vector<24x128xf32> -> vector<24x128xf32>
    %35 = arith.addf %28, %34 : vector<24x128xf32>
    %c0_28 = arith.constant 0 : index
    %c8 = arith.constant 8 : index
    %c0_29 = arith.constant 0 : index
    %36 = vector.load %arg1[%c0_28, %c8, %c0_29] : memref<1x38x16xf32, #tpu.memory_space<vmem>>, vector<1x24x16xf32>
    %37 = vector.shape_cast %36 : vector<1x24x16xf32> to vector<24x16xf32>
    %38 = arith.truncf %37 : vector<24x16xf32> to vector<24x16xbf16>
    %c5 = arith.constant 5 : index
    %c0_30 = arith.constant 0 : index
    %c0_31 = arith.constant 0 : index
    %39 = vector.load %arg2[%c5, %c0_30, %c0_31] : memref<9x16x128xbf16, #tpu.memory_space<vmem>>, vector<1x16x128xbf16>
    %40 = vector.shape_cast %39 : vector<1x16x128xbf16> to vector<16x128xbf16>
    %cst_32 = arith.constant dense<0.000000e+00> : vector<24x128xf32>
    %41 = tpu.matmul %38, %40, %cst_32 {dimension_numbers = #tpu.dot_dimension_numbers<[1], [0], [0], [1], [0, 0, 1, 1], [], []>} : vector<24x16xbf16>, vector<16x128xbf16>, vector<24x128xf32> -> vector<24x128xf32>
    %42 = arith.addf %35, %41 : vector<24x128xf32>
    %c0_33 = arith.constant 0 : index
    %c12 = arith.constant 12 : index
    %c0_34 = arith.constant 0 : index
    %43 = vector.load %arg1[%c0_33, %c12, %c0_34] : memref<1x38x16xf32, #tpu.memory_space<vmem>>, vector<1x24x16xf32>
    %44 = vector.shape_cast %43 : vector<1x24x16xf32> to vector<24x16xf32>
    %45 = arith.truncf %44 : vector<24x16xf32> to vector<24x16xbf16>
    %c6_35 = arith.constant 6 : index
    %c0_36 = arith.constant 0 : index
    %c0_37 = arith.constant 0 : index
    %46 = vector.load %arg2[%c6_35, %c0_36, %c0_37] : memref<9x16x128xbf16, #tpu.memory_space<vmem>>, vector<1x16x128xbf16>
    %47 = vector.shape_cast %46 : vector<1x16x128xbf16> to vector<16x128xbf16>
    %cst_38 = arith.constant dense<0.000000e+00> : vector<24x128xf32>
    %48 = tpu.matmul %45, %47, %cst_38 {dimension_numbers = #tpu.dot_dimension_numbers<[1], [0], [0], [1], [0, 0, 1, 1], [], []>} : vector<24x16xbf16>, vector<16x128xbf16>, vector<24x128xf32> -> vector<24x128xf32>
    %49 = arith.addf %42, %48 : vector<24x128xf32>
    %c0_39 = arith.constant 0 : index
    %c13 = arith.constant 13 : index
    %c0_40 = arith.constant 0 : index
    %50 = vector.load %arg1[%c0_39, %c13, %c0_40] : memref<1x38x16xf32, #tpu.memory_space<vmem>>, vector<1x24x16xf32>
    %51 = vector.shape_cast %50 : vector<1x24x16xf32> to vector<24x16xf32>
    %52 = arith.truncf %51 : vector<24x16xf32> to vector<24x16xbf16>
    %c7_41 = arith.constant 7 : index
    %c0_42 = arith.constant 0 : index
    %c0_43 = arith.constant 0 : index
    %53 = vector.load %arg2[%c7_41, %c0_42, %c0_43] : memref<9x16x128xbf16, #tpu.memory_space<vmem>>, vector<1x16x128xbf16>
    %54 = vector.shape_cast %53 : vector<1x16x128xbf16> to vector<16x128xbf16>
    %cst_44 = arith.constant dense<0.000000e+00> : vector<24x128xf32>
    %55 = tpu.matmul %52, %54, %cst_44 {dimension_numbers = #tpu.dot_dimension_numbers<[1], [0], [0], [1], [0, 0, 1, 1], [], []>} : vector<24x16xbf16>, vector<16x128xbf16>, vector<24x128xf32> -> vector<24x128xf32>
    %56 = arith.addf %49, %55 : vector<24x128xf32>
    %c0_45 = arith.constant 0 : index
    %c14 = arith.constant 14 : index
    %c0_46 = arith.constant 0 : index
    %57 = vector.load %arg1[%c0_45, %c14, %c0_46] : memref<1x38x16xf32, #tpu.memory_space<vmem>>, vector<1x24x16xf32>
    %58 = vector.shape_cast %57 : vector<1x24x16xf32> to vector<24x16xf32>
    %59 = arith.truncf %58 : vector<24x16xf32> to vector<24x16xbf16>
    %c8_47 = arith.constant 8 : index
    %c0_48 = arith.constant 0 : index
    %c0_49 = arith.constant 0 : index
    %60 = vector.load %arg2[%c8_47, %c0_48, %c0_49] : memref<9x16x128xbf16, #tpu.memory_space<vmem>>, vector<1x16x128xbf16>
    %61 = vector.shape_cast %60 : vector<1x16x128xbf16> to vector<16x128xbf16>
    %cst_50 = arith.constant dense<0.000000e+00> : vector<24x128xf32>
    %62 = tpu.matmul %59, %61, %cst_50 {dimension_numbers = #tpu.dot_dimension_numbers<[1], [0], [0], [1], [0, 0, 1, 1], [], []>} : vector<24x16xbf16>, vector<16x128xbf16>, vector<24x128xf32> -> vector<24x128xf32>
    %63 = arith.addf %56, %62 : vector<24x128xf32>
    %c0_51 = arith.constant 0 : index
    %c0_52 = arith.constant 0 : index
    %64 = vector.load %arg3[%c0_51, %c0_52] : memref<1x128xf32, #tpu.memory_space<vmem>>, vector<1x128xf32>
    %65 = vector.broadcast %64 : vector<1x128xf32> to vector<24x128xf32>
    %66 = arith.addf %63, %65 : vector<24x128xf32>
    %cst_53 = arith.constant 0.000000e+00 : f32
    %67 = vector.broadcast %cst_53 : f32 to vector<24x128xf32>
    %68 = arith.maximumf %66, %67 : vector<24x128xf32>
    %c0_54 = arith.constant 0 : index
    %c0_55 = arith.constant 0 : index
    %c0_56 = arith.constant 0 : index
    %69 = vector.load %arg4[%c0_54, %c0_55, %c0_56] : memref<1x24x128xf32, #tpu.memory_space<vmem>>, vector<1x24x128xf32>
    %70 = vector.shape_cast %69 : vector<1x24x128xf32> to vector<24x128xf32>
    %71 = vector.shape_cast %68 : vector<24x128xf32> to vector<1x24x128xf32>
    tpu.vector_store %arg4[%c0_54, %c0_55, %c0_56], %71 {strides = array<i32>} : memref<1x24x128xf32, #tpu.memory_space<vmem>>, vector<1x24x128xf32>,
    return
  }
  func.func @transform_0(%arg0: i32) -> (i32, i32, i32) {
    %c0_i32 = arith.constant 0 : i32
    %c0_i32_0 = arith.constant 0 : i32
    %c0_i32_1 = arith.constant 0 : i32
    return %arg0, %c0_i32, %c0_i32_0 : i32, i32, i32
  }
  func.func @transform_1(%arg0: i32) -> (i32, i32, i32) {
    %c0_i32 = arith.constant 0 : i32
    %c0_i32_0 = arith.constant 0 : i32
    %c0_i32_1 = arith.constant 0 : i32
    %c0_i32_2 = arith.constant 0 : i32
    return %c0_i32, %c0_i32_0, %c0_i32_1 : i32, i32, i32
  }
  func.func @transform_2(%arg0: i32) -> (i32, i32) {
    %c0_i32 = arith.constant 0 : i32
    %c0_i32_0 = arith.constant 0 : i32
    %c0_i32_1 = arith.constant 0 : i32
    return %c0_i32, %c0_i32_0 : i32, i32
  }
  func.func @transform_3(%arg0: i32) -> (i32, i32, i32) {
    %c0_i32 = arith.constant 0 : i32
    %c0_i32_0 = arith.constant 0 : i32
    %c0_i32_1 = arith.constant 0 : i32
    return %arg0, %c0_i32, %c0_i32_0 : i32, i32, i32
  }
}

module attributes {stable_mosaic.version = 11 : i64} {
  func.func @_matmul_bias_kernel(%arg0: i32, %arg1: memref<32x16xf32, #tpu.memory_space<vmem>>, %arg2: memref<16x128xbf16, #tpu.memory_space<vmem>>, %arg3: memref<1x128xf32, #tpu.memory_space<vmem>>, %arg4: memref<32x128xf32, #tpu.memory_space<vmem>>) attributes {dimension_semantics = [#tpu.dimension_semantics<parallel>], iteration_bounds = array<i64: 1>, scalar_prefetch = 0 : i64, scratch_operands = 0 : i64, tpu.core_type = #tpu.core_type<tc>, window_params = [{transform_indices = @transform_0, window_bounds = array<i64: 32, 16>}, {pipeline_mode = #tpu.pipeline_mode<synchronous>, transform_indices = @transform_1, window_bounds = array<i64: 16, 128>}, {pipeline_mode = #tpu.pipeline_mode<synchronous>, transform_indices = @transform_2, window_bounds = array<i64: 1, 128>}, {transform_indices = @transform_3, window_bounds = array<i64: 32, 128>}]} {
    %c0 = arith.constant 0 : index
    %c0_0 = arith.constant 0 : index
    %0 = vector.load %arg1[%c0, %c0_0] : memref<32x16xf32, #tpu.memory_space<vmem>>, vector<32x16xf32>
    %1 = arith.truncf %0 : vector<32x16xf32> to vector<32x16xbf16>
    %c0_1 = arith.constant 0 : index
    %c0_2 = arith.constant 0 : index
    %2 = vector.load %arg2[%c0_1, %c0_2] : memref<16x128xbf16, #tpu.memory_space<vmem>>, vector<16x128xbf16>
    %cst = arith.constant dense<0.000000e+00> : vector<32x128xf32>
    %3 = tpu.matmul %1, %2, %cst {dimension_numbers = #tpu.dot_dimension_numbers<[1], [0], [0], [1], [0, 0, 1, 1], [], []>} : vector<32x16xbf16>, vector<16x128xbf16>, vector<32x128xf32> -> vector<32x128xf32>
    %c0_3 = arith.constant 0 : index
    %c0_4 = arith.constant 0 : index
    %4 = vector.load %arg3[%c0_3, %c0_4] : memref<1x128xf32, #tpu.memory_space<vmem>>, vector<1x128xf32>
    %5 = vector.broadcast %4 : vector<1x128xf32> to vector<32x128xf32>
    %6 = arith.addf %3, %5 : vector<32x128xf32>
    %c0_5 = arith.constant 0 : index
    %c0_6 = arith.constant 0 : index
    %7 = vector.load %arg4[%c0_5, %c0_6] : memref<32x128xf32, #tpu.memory_space<vmem>>, vector<32x128xf32>
    tpu.vector_store %arg4[%c0_5, %c0_6], %6 {strides = array<i32>} : memref<32x128xf32, #tpu.memory_space<vmem>>, vector<32x128xf32>,
    return
  }
  func.func @transform_0(%arg0: i32) -> (i32, i32) {
    %c0_i32 = arith.constant 0 : i32
    %c0_i32_0 = arith.constant 0 : i32
    return %arg0, %c0_i32 : i32, i32
  }
  func.func @transform_1(%arg0: i32) -> (i32, i32) {
    %c0_i32 = arith.constant 0 : i32
    %c0_i32_0 = arith.constant 0 : i32
    %c0_i32_1 = arith.constant 0 : i32
    return %c0_i32, %c0_i32_0 : i32, i32
  }
  func.func @transform_2(%arg0: i32) -> (i32, i32) {
    %c0_i32 = arith.constant 0 : i32
    %c0_i32_0 = arith.constant 0 : i32
    %c0_i32_1 = arith.constant 0 : i32
    return %c0_i32, %c0_i32_0 : i32, i32
  }
  func.func @transform_3(%arg0: i32) -> (i32, i32) {
    %c0_i32 = arith.constant 0 : i32
    %c0_i32_0 = arith.constant 0 : i32
    return %arg0, %c0_i32 : i32, i32
  }
}

module attributes {stable_mosaic.version = 11 : i64} {
  func.func @_conv_tap_kernel(%arg0: i32, %arg1: memref<1x102x16xf32, #tpu.memory_space<vmem>>, %arg2: memref<9x16x128xbf16, #tpu.memory_space<vmem>>, %arg3: memref<1x128xf32, #tpu.memory_space<vmem>>, %arg4: memref<1x80x128xf32, #tpu.memory_space<vmem>>) attributes {dimension_semantics = [#tpu.dimension_semantics<parallel>], iteration_bounds = array<i64: 2>, scalar_prefetch = 0 : i64, scratch_operands = 0 : i64, tpu.core_type = #tpu.core_type<tc>, window_params = [{transform_indices = @transform_0, window_bounds = array<i64: 1, 102, 16>}, {pipeline_mode = #tpu.pipeline_mode<synchronous>, transform_indices = @transform_1, window_bounds = array<i64: 9, 16, 128>}, {pipeline_mode = #tpu.pipeline_mode<synchronous>, transform_indices = @transform_2, window_bounds = array<i64: 1, 128>}, {transform_indices = @transform_3, window_bounds = array<i64: 1, 80, 128>}]} {
    %cst = arith.constant 0.000000e+00 : f32
    %0 = vector.broadcast %cst : f32 to vector<80x128xf32>
    %c0 = arith.constant 0 : index
    %c0_0 = arith.constant 0 : index
    %c0_1 = arith.constant 0 : index
    %1 = vector.load %arg1[%c0, %c0_0, %c0_1] : memref<1x102x16xf32, #tpu.memory_space<vmem>>, vector<1x80x16xf32>
    %2 = vector.shape_cast %1 : vector<1x80x16xf32> to vector<80x16xf32>
    %3 = arith.truncf %2 : vector<80x16xf32> to vector<80x16xbf16>
    %c0_2 = arith.constant 0 : index
    %c0_3 = arith.constant 0 : index
    %c0_4 = arith.constant 0 : index
    %4 = vector.load %arg2[%c0_2, %c0_3, %c0_4] : memref<9x16x128xbf16, #tpu.memory_space<vmem>>, vector<1x16x128xbf16>
    %5 = vector.shape_cast %4 : vector<1x16x128xbf16> to vector<16x128xbf16>
    %cst_5 = arith.constant dense<0.000000e+00> : vector<80x128xf32>
    %6 = tpu.matmul %3, %5, %cst_5 {dimension_numbers = #tpu.dot_dimension_numbers<[1], [0], [0], [1], [0, 0, 1, 1], [], []>} : vector<80x16xbf16>, vector<16x128xbf16>, vector<80x128xf32> -> vector<80x128xf32>
    %7 = arith.addf %0, %6 : vector<80x128xf32>
    %c0_6 = arith.constant 0 : index
    %c1 = arith.constant 1 : index
    %c0_7 = arith.constant 0 : index
    %8 = vector.load %arg1[%c0_6, %c1, %c0_7] : memref<1x102x16xf32, #tpu.memory_space<vmem>>, vector<1x80x16xf32>
    %9 = vector.shape_cast %8 : vector<1x80x16xf32> to vector<80x16xf32>
    %10 = arith.truncf %9 : vector<80x16xf32> to vector<80x16xbf16>
    %c1_8 = arith.constant 1 : index
    %c0_9 = arith.constant 0 : index
    %c0_10 = arith.constant 0 : index
    %11 = vector.load %arg2[%c1_8, %c0_9, %c0_10] : memref<9x16x128xbf16, #tpu.memory_space<vmem>>, vector<1x16x128xbf16>
    %12 = vector.shape_cast %11 : vector<1x16x128xbf16> to vector<16x128xbf16>
    %cst_11 = arith.constant dense<0.000000e+00> : vector<80x128xf32>
    %13 = tpu.matmul %10, %12, %cst_11 {dimension_numbers = #tpu.dot_dimension_numbers<[1], [0], [0], [1], [0, 0, 1, 1], [], []>} : vector<80x16xbf16>, vector<16x128xbf16>, vector<80x128xf32> -> vector<80x128xf32>
    %14 = arith.addf %7, %13 : vector<80x128xf32>
    %c0_12 = arith.constant 0 : index
    %c2 = arith.constant 2 : index
    %c0_13 = arith.constant 0 : index
    %15 = vector.load %arg1[%c0_12, %c2, %c0_13] : memref<1x102x16xf32, #tpu.memory_space<vmem>>, vector<1x80x16xf32>
    %16 = vector.shape_cast %15 : vector<1x80x16xf32> to vector<80x16xf32>
    %17 = arith.truncf %16 : vector<80x16xf32> to vector<80x16xbf16>
    %c2_14 = arith.constant 2 : index
    %c0_15 = arith.constant 0 : index
    %c0_16 = arith.constant 0 : index
    %18 = vector.load %arg2[%c2_14, %c0_15, %c0_16] : memref<9x16x128xbf16, #tpu.memory_space<vmem>>, vector<1x16x128xbf16>
    %19 = vector.shape_cast %18 : vector<1x16x128xbf16> to vector<16x128xbf16>
    %cst_17 = arith.constant dense<0.000000e+00> : vector<80x128xf32>
    %20 = tpu.matmul %17, %19, %cst_17 {dimension_numbers = #tpu.dot_dimension_numbers<[1], [0], [0], [1], [0, 0, 1, 1], [], []>} : vector<80x16xbf16>, vector<16x128xbf16>, vector<80x128xf32> -> vector<80x128xf32>
    %21 = arith.addf %14, %20 : vector<80x128xf32>
    %c0_18 = arith.constant 0 : index
    %c10 = arith.constant 10 : index
    %c0_19 = arith.constant 0 : index
    %22 = vector.load %arg1[%c0_18, %c10, %c0_19] : memref<1x102x16xf32, #tpu.memory_space<vmem>>, vector<1x80x16xf32>
    %23 = vector.shape_cast %22 : vector<1x80x16xf32> to vector<80x16xf32>
    %24 = arith.truncf %23 : vector<80x16xf32> to vector<80x16xbf16>
    %c3 = arith.constant 3 : index
    %c0_20 = arith.constant 0 : index
    %c0_21 = arith.constant 0 : index
    %25 = vector.load %arg2[%c3, %c0_20, %c0_21] : memref<9x16x128xbf16, #tpu.memory_space<vmem>>, vector<1x16x128xbf16>
    %26 = vector.shape_cast %25 : vector<1x16x128xbf16> to vector<16x128xbf16>
    %cst_22 = arith.constant dense<0.000000e+00> : vector<80x128xf32>
    %27 = tpu.matmul %24, %26, %cst_22 {dimension_numbers = #tpu.dot_dimension_numbers<[1], [0], [0], [1], [0, 0, 1, 1], [], []>} : vector<80x16xbf16>, vector<16x128xbf16>, vector<80x128xf32> -> vector<80x128xf32>
    %28 = arith.addf %21, %27 : vector<80x128xf32>
    %c0_23 = arith.constant 0 : index
    %c11 = arith.constant 11 : index
    %c0_24 = arith.constant 0 : index
    %29 = vector.load %arg1[%c0_23, %c11, %c0_24] : memref<1x102x16xf32, #tpu.memory_space<vmem>>, vector<1x80x16xf32>
    %30 = vector.shape_cast %29 : vector<1x80x16xf32> to vector<80x16xf32>
    %31 = arith.truncf %30 : vector<80x16xf32> to vector<80x16xbf16>
    %c4 = arith.constant 4 : index
    %c0_25 = arith.constant 0 : index
    %c0_26 = arith.constant 0 : index
    %32 = vector.load %arg2[%c4, %c0_25, %c0_26] : memref<9x16x128xbf16, #tpu.memory_space<vmem>>, vector<1x16x128xbf16>
    %33 = vector.shape_cast %32 : vector<1x16x128xbf16> to vector<16x128xbf16>
    %cst_27 = arith.constant dense<0.000000e+00> : vector<80x128xf32>
    %34 = tpu.matmul %31, %33, %cst_27 {dimension_numbers = #tpu.dot_dimension_numbers<[1], [0], [0], [1], [0, 0, 1, 1], [], []>} : vector<80x16xbf16>, vector<16x128xbf16>, vector<80x128xf32> -> vector<80x128xf32>
    %35 = arith.addf %28, %34 : vector<80x128xf32>
    %c0_28 = arith.constant 0 : index
    %c12 = arith.constant 12 : index
    %c0_29 = arith.constant 0 : index
    %36 = vector.load %arg1[%c0_28, %c12, %c0_29] : memref<1x102x16xf32, #tpu.memory_space<vmem>>, vector<1x80x16xf32>
    %37 = vector.shape_cast %36 : vector<1x80x16xf32> to vector<80x16xf32>
    %38 = arith.truncf %37 : vector<80x16xf32> to vector<80x16xbf16>
    %c5 = arith.constant 5 : index
    %c0_30 = arith.constant 0 : index
    %c0_31 = arith.constant 0 : index
    %39 = vector.load %arg2[%c5, %c0_30, %c0_31] : memref<9x16x128xbf16, #tpu.memory_space<vmem>>, vector<1x16x128xbf16>
    %40 = vector.shape_cast %39 : vector<1x16x128xbf16> to vector<16x128xbf16>
    %cst_32 = arith.constant dense<0.000000e+00> : vector<80x128xf32>
    %41 = tpu.matmul %38, %40, %cst_32 {dimension_numbers = #tpu.dot_dimension_numbers<[1], [0], [0], [1], [0, 0, 1, 1], [], []>} : vector<80x16xbf16>, vector<16x128xbf16>, vector<80x128xf32> -> vector<80x128xf32>
    %42 = arith.addf %35, %41 : vector<80x128xf32>
    %c0_33 = arith.constant 0 : index
    %c20 = arith.constant 20 : index
    %c0_34 = arith.constant 0 : index
    %43 = vector.load %arg1[%c0_33, %c20, %c0_34] : memref<1x102x16xf32, #tpu.memory_space<vmem>>, vector<1x80x16xf32>
    %44 = vector.shape_cast %43 : vector<1x80x16xf32> to vector<80x16xf32>
    %45 = arith.truncf %44 : vector<80x16xf32> to vector<80x16xbf16>
    %c6 = arith.constant 6 : index
    %c0_35 = arith.constant 0 : index
    %c0_36 = arith.constant 0 : index
    %46 = vector.load %arg2[%c6, %c0_35, %c0_36] : memref<9x16x128xbf16, #tpu.memory_space<vmem>>, vector<1x16x128xbf16>
    %47 = vector.shape_cast %46 : vector<1x16x128xbf16> to vector<16x128xbf16>
    %cst_37 = arith.constant dense<0.000000e+00> : vector<80x128xf32>
    %48 = tpu.matmul %45, %47, %cst_37 {dimension_numbers = #tpu.dot_dimension_numbers<[1], [0], [0], [1], [0, 0, 1, 1], [], []>} : vector<80x16xbf16>, vector<16x128xbf16>, vector<80x128xf32> -> vector<80x128xf32>
    %49 = arith.addf %42, %48 : vector<80x128xf32>
    %c0_38 = arith.constant 0 : index
    %c21 = arith.constant 21 : index
    %c0_39 = arith.constant 0 : index
    %50 = vector.load %arg1[%c0_38, %c21, %c0_39] : memref<1x102x16xf32, #tpu.memory_space<vmem>>, vector<1x80x16xf32>
    %51 = vector.shape_cast %50 : vector<1x80x16xf32> to vector<80x16xf32>
    %52 = arith.truncf %51 : vector<80x16xf32> to vector<80x16xbf16>
    %c7 = arith.constant 7 : index
    %c0_40 = arith.constant 0 : index
    %c0_41 = arith.constant 0 : index
    %53 = vector.load %arg2[%c7, %c0_40, %c0_41] : memref<9x16x128xbf16, #tpu.memory_space<vmem>>, vector<1x16x128xbf16>
    %54 = vector.shape_cast %53 : vector<1x16x128xbf16> to vector<16x128xbf16>
    %cst_42 = arith.constant dense<0.000000e+00> : vector<80x128xf32>
    %55 = tpu.matmul %52, %54, %cst_42 {dimension_numbers = #tpu.dot_dimension_numbers<[1], [0], [0], [1], [0, 0, 1, 1], [], []>} : vector<80x16xbf16>, vector<16x128xbf16>, vector<80x128xf32> -> vector<80x128xf32>
    %56 = arith.addf %49, %55 : vector<80x128xf32>
    %c0_43 = arith.constant 0 : index
    %c22 = arith.constant 22 : index
    %c0_44 = arith.constant 0 : index
    %57 = vector.load %arg1[%c0_43, %c22, %c0_44] : memref<1x102x16xf32, #tpu.memory_space<vmem>>, vector<1x80x16xf32>
    %58 = vector.shape_cast %57 : vector<1x80x16xf32> to vector<80x16xf32>
    %59 = arith.truncf %58 : vector<80x16xf32> to vector<80x16xbf16>
    %c8 = arith.constant 8 : index
    %c0_45 = arith.constant 0 : index
    %c0_46 = arith.constant 0 : index
    %60 = vector.load %arg2[%c8, %c0_45, %c0_46] : memref<9x16x128xbf16, #tpu.memory_space<vmem>>, vector<1x16x128xbf16>
    %61 = vector.shape_cast %60 : vector<1x16x128xbf16> to vector<16x128xbf16>
    %cst_47 = arith.constant dense<0.000000e+00> : vector<80x128xf32>
    %62 = tpu.matmul %59, %61, %cst_47 {dimension_numbers = #tpu.dot_dimension_numbers<[1], [0], [0], [1], [0, 0, 1, 1], [], []>} : vector<80x16xbf16>, vector<16x128xbf16>, vector<80x128xf32> -> vector<80x128xf32>
    %63 = arith.addf %56, %62 : vector<80x128xf32>
    %c0_48 = arith.constant 0 : index
    %c0_49 = arith.constant 0 : index
    %64 = vector.load %arg3[%c0_48, %c0_49] : memref<1x128xf32, #tpu.memory_space<vmem>>, vector<1x128xf32>
    %65 = vector.broadcast %64 : vector<1x128xf32> to vector<80x128xf32>
    %66 = arith.addf %63, %65 : vector<80x128xf32>
    %cst_50 = arith.constant 0.000000e+00 : f32
    %67 = vector.broadcast %cst_50 : f32 to vector<80x128xf32>
    %68 = arith.maximumf %66, %67 : vector<80x128xf32>
    %c0_51 = arith.constant 0 : index
    %c0_52 = arith.constant 0 : index
    %c0_53 = arith.constant 0 : index
    %69 = vector.load %arg4[%c0_51, %c0_52, %c0_53] : memref<1x80x128xf32, #tpu.memory_space<vmem>>, vector<1x80x128xf32>
    %70 = vector.shape_cast %69 : vector<1x80x128xf32> to vector<80x128xf32>
    %71 = vector.shape_cast %68 : vector<80x128xf32> to vector<1x80x128xf32>
    tpu.vector_store %arg4[%c0_51, %c0_52, %c0_53], %71 {strides = array<i32>} : memref<1x80x128xf32, #tpu.memory_space<vmem>>, vector<1x80x128xf32>,
    return
  }
  func.func @transform_0(%arg0: i32) -> (i32, i32, i32) {
    %c0_i32 = arith.constant 0 : i32
    %c0_i32_0 = arith.constant 0 : i32
    %c0_i32_1 = arith.constant 0 : i32
    return %arg0, %c0_i32, %c0_i32_0 : i32, i32, i32
  }
  func.func @transform_1(%arg0: i32) -> (i32, i32, i32) {
    %c0_i32 = arith.constant 0 : i32
    %c0_i32_0 = arith.constant 0 : i32
    %c0_i32_1 = arith.constant 0 : i32
    %c0_i32_2 = arith.constant 0 : i32
    return %c0_i32, %c0_i32_0, %c0_i32_1 : i32, i32, i32
  }
  func.func @transform_2(%arg0: i32) -> (i32, i32) {
    %c0_i32 = arith.constant 0 : i32
    %c0_i32_0 = arith.constant 0 : i32
    %c0_i32_1 = arith.constant 0 : i32
    return %c0_i32, %c0_i32_0 : i32, i32
  }
  func.func @transform_3(%arg0: i32) -> (i32, i32, i32) {
    %c0_i32 = arith.constant 0 : i32
    %c0_i32_0 = arith.constant 0 : i32
    %c0_i32_1 = arith.constant 0 : i32
    return %arg0, %c0_i32, %c0_i32_0 : i32, i32, i32
  }
}

module attributes {stable_mosaic.version = 11 : i64} {
  func.func @_conv_tap_kernel(%arg0: i32, %arg1: memref<1x102x8xf32, #tpu.memory_space<vmem>>, %arg2: memref<9x8x128xbf16, #tpu.memory_space<vmem>>, %arg3: memref<1x128xf32, #tpu.memory_space<vmem>>, %arg4: memref<1x80x128xf32, #tpu.memory_space<vmem>>) attributes {dimension_semantics = [#tpu.dimension_semantics<parallel>], iteration_bounds = array<i64: 2>, scalar_prefetch = 0 : i64, scratch_operands = 0 : i64, tpu.core_type = #tpu.core_type<tc>, window_params = [{transform_indices = @transform_0, window_bounds = array<i64: 1, 102, 8>}, {pipeline_mode = #tpu.pipeline_mode<synchronous>, transform_indices = @transform_1, window_bounds = array<i64: 9, 8, 128>}, {pipeline_mode = #tpu.pipeline_mode<synchronous>, transform_indices = @transform_2, window_bounds = array<i64: 1, 128>}, {transform_indices = @transform_3, window_bounds = array<i64: 1, 80, 128>}]} {
    %cst = arith.constant 0.000000e+00 : f32
    %0 = vector.broadcast %cst : f32 to vector<80x128xf32>
    %c0 = arith.constant 0 : index
    %c0_0 = arith.constant 0 : index
    %c0_1 = arith.constant 0 : index
    %1 = vector.load %arg1[%c0, %c0_0, %c0_1] : memref<1x102x8xf32, #tpu.memory_space<vmem>>, vector<1x80x8xf32>
    %2 = vector.shape_cast %1 : vector<1x80x8xf32> to vector<80x8xf32>
    %3 = arith.truncf %2 : vector<80x8xf32> to vector<80x8xbf16>
    %c0_2 = arith.constant 0 : index
    %c0_3 = arith.constant 0 : index
    %c0_4 = arith.constant 0 : index
    %4 = vector.load %arg2[%c0_2, %c0_3, %c0_4] : memref<9x8x128xbf16, #tpu.memory_space<vmem>>, vector<1x8x128xbf16>
    %5 = vector.shape_cast %4 : vector<1x8x128xbf16> to vector<8x128xbf16>
    %cst_5 = arith.constant dense<0.000000e+00> : vector<80x128xf32>
    %6 = tpu.matmul %3, %5, %cst_5 {dimension_numbers = #tpu.dot_dimension_numbers<[1], [0], [0], [1], [0, 0, 1, 1], [], []>} : vector<80x8xbf16>, vector<8x128xbf16>, vector<80x128xf32> -> vector<80x128xf32>
    %7 = arith.addf %0, %6 : vector<80x128xf32>
    %c0_6 = arith.constant 0 : index
    %c1 = arith.constant 1 : index
    %c0_7 = arith.constant 0 : index
    %8 = vector.load %arg1[%c0_6, %c1, %c0_7] : memref<1x102x8xf32, #tpu.memory_space<vmem>>, vector<1x80x8xf32>
    %9 = vector.shape_cast %8 : vector<1x80x8xf32> to vector<80x8xf32>
    %10 = arith.truncf %9 : vector<80x8xf32> to vector<80x8xbf16>
    %c1_8 = arith.constant 1 : index
    %c0_9 = arith.constant 0 : index
    %c0_10 = arith.constant 0 : index
    %11 = vector.load %arg2[%c1_8, %c0_9, %c0_10] : memref<9x8x128xbf16, #tpu.memory_space<vmem>>, vector<1x8x128xbf16>
    %12 = vector.shape_cast %11 : vector<1x8x128xbf16> to vector<8x128xbf16>
    %cst_11 = arith.constant dense<0.000000e+00> : vector<80x128xf32>
    %13 = tpu.matmul %10, %12, %cst_11 {dimension_numbers = #tpu.dot_dimension_numbers<[1], [0], [0], [1], [0, 0, 1, 1], [], []>} : vector<80x8xbf16>, vector<8x128xbf16>, vector<80x128xf32> -> vector<80x128xf32>
    %14 = arith.addf %7, %13 : vector<80x128xf32>
    %c0_12 = arith.constant 0 : index
    %c2 = arith.constant 2 : index
    %c0_13 = arith.constant 0 : index
    %15 = vector.load %arg1[%c0_12, %c2, %c0_13] : memref<1x102x8xf32, #tpu.memory_space<vmem>>, vector<1x80x8xf32>
    %16 = vector.shape_cast %15 : vector<1x80x8xf32> to vector<80x8xf32>
    %17 = arith.truncf %16 : vector<80x8xf32> to vector<80x8xbf16>
    %c2_14 = arith.constant 2 : index
    %c0_15 = arith.constant 0 : index
    %c0_16 = arith.constant 0 : index
    %18 = vector.load %arg2[%c2_14, %c0_15, %c0_16] : memref<9x8x128xbf16, #tpu.memory_space<vmem>>, vector<1x8x128xbf16>
    %19 = vector.shape_cast %18 : vector<1x8x128xbf16> to vector<8x128xbf16>
    %cst_17 = arith.constant dense<0.000000e+00> : vector<80x128xf32>
    %20 = tpu.matmul %17, %19, %cst_17 {dimension_numbers = #tpu.dot_dimension_numbers<[1], [0], [0], [1], [0, 0, 1, 1], [], []>} : vector<80x8xbf16>, vector<8x128xbf16>, vector<80x128xf32> -> vector<80x128xf32>
    %21 = arith.addf %14, %20 : vector<80x128xf32>
    %c0_18 = arith.constant 0 : index
    %c10 = arith.constant 10 : index
    %c0_19 = arith.constant 0 : index
    %22 = vector.load %arg1[%c0_18, %c10, %c0_19] : memref<1x102x8xf32, #tpu.memory_space<vmem>>, vector<1x80x8xf32>
    %23 = vector.shape_cast %22 : vector<1x80x8xf32> to vector<80x8xf32>
    %24 = arith.truncf %23 : vector<80x8xf32> to vector<80x8xbf16>
    %c3 = arith.constant 3 : index
    %c0_20 = arith.constant 0 : index
    %c0_21 = arith.constant 0 : index
    %25 = vector.load %arg2[%c3, %c0_20, %c0_21] : memref<9x8x128xbf16, #tpu.memory_space<vmem>>, vector<1x8x128xbf16>
    %26 = vector.shape_cast %25 : vector<1x8x128xbf16> to vector<8x128xbf16>
    %cst_22 = arith.constant dense<0.000000e+00> : vector<80x128xf32>
    %27 = tpu.matmul %24, %26, %cst_22 {dimension_numbers = #tpu.dot_dimension_numbers<[1], [0], [0], [1], [0, 0, 1, 1], [], []>} : vector<80x8xbf16>, vector<8x128xbf16>, vector<80x128xf32> -> vector<80x128xf32>
    %28 = arith.addf %21, %27 : vector<80x128xf32>
    %c0_23 = arith.constant 0 : index
    %c11 = arith.constant 11 : index
    %c0_24 = arith.constant 0 : index
    %29 = vector.load %arg1[%c0_23, %c11, %c0_24] : memref<1x102x8xf32, #tpu.memory_space<vmem>>, vector<1x80x8xf32>
    %30 = vector.shape_cast %29 : vector<1x80x8xf32> to vector<80x8xf32>
    %31 = arith.truncf %30 : vector<80x8xf32> to vector<80x8xbf16>
    %c4 = arith.constant 4 : index
    %c0_25 = arith.constant 0 : index
    %c0_26 = arith.constant 0 : index
    %32 = vector.load %arg2[%c4, %c0_25, %c0_26] : memref<9x8x128xbf16, #tpu.memory_space<vmem>>, vector<1x8x128xbf16>
    %33 = vector.shape_cast %32 : vector<1x8x128xbf16> to vector<8x128xbf16>
    %cst_27 = arith.constant dense<0.000000e+00> : vector<80x128xf32>
    %34 = tpu.matmul %31, %33, %cst_27 {dimension_numbers = #tpu.dot_dimension_numbers<[1], [0], [0], [1], [0, 0, 1, 1], [], []>} : vector<80x8xbf16>, vector<8x128xbf16>, vector<80x128xf32> -> vector<80x128xf32>
    %35 = arith.addf %28, %34 : vector<80x128xf32>
    %c0_28 = arith.constant 0 : index
    %c12 = arith.constant 12 : index
    %c0_29 = arith.constant 0 : index
    %36 = vector.load %arg1[%c0_28, %c12, %c0_29] : memref<1x102x8xf32, #tpu.memory_space<vmem>>, vector<1x80x8xf32>
    %37 = vector.shape_cast %36 : vector<1x80x8xf32> to vector<80x8xf32>
    %38 = arith.truncf %37 : vector<80x8xf32> to vector<80x8xbf16>
    %c5 = arith.constant 5 : index
    %c0_30 = arith.constant 0 : index
    %c0_31 = arith.constant 0 : index
    %39 = vector.load %arg2[%c5, %c0_30, %c0_31] : memref<9x8x128xbf16, #tpu.memory_space<vmem>>, vector<1x8x128xbf16>
    %40 = vector.shape_cast %39 : vector<1x8x128xbf16> to vector<8x128xbf16>
    %cst_32 = arith.constant dense<0.000000e+00> : vector<80x128xf32>
    %41 = tpu.matmul %38, %40, %cst_32 {dimension_numbers = #tpu.dot_dimension_numbers<[1], [0], [0], [1], [0, 0, 1, 1], [], []>} : vector<80x8xbf16>, vector<8x128xbf16>, vector<80x128xf32> -> vector<80x128xf32>
    %42 = arith.addf %35, %41 : vector<80x128xf32>
    %c0_33 = arith.constant 0 : index
    %c20 = arith.constant 20 : index
    %c0_34 = arith.constant 0 : index
    %43 = vector.load %arg1[%c0_33, %c20, %c0_34] : memref<1x102x8xf32, #tpu.memory_space<vmem>>, vector<1x80x8xf32>
    %44 = vector.shape_cast %43 : vector<1x80x8xf32> to vector<80x8xf32>
    %45 = arith.truncf %44 : vector<80x8xf32> to vector<80x8xbf16>
    %c6 = arith.constant 6 : index
    %c0_35 = arith.constant 0 : index
    %c0_36 = arith.constant 0 : index
    %46 = vector.load %arg2[%c6, %c0_35, %c0_36] : memref<9x8x128xbf16, #tpu.memory_space<vmem>>, vector<1x8x128xbf16>
    %47 = vector.shape_cast %46 : vector<1x8x128xbf16> to vector<8x128xbf16>
    %cst_37 = arith.constant dense<0.000000e+00> : vector<80x128xf32>
    %48 = tpu.matmul %45, %47, %cst_37 {dimension_numbers = #tpu.dot_dimension_numbers<[1], [0], [0], [1], [0, 0, 1, 1], [], []>} : vector<80x8xbf16>, vector<8x128xbf16>, vector<80x128xf32> -> vector<80x128xf32>
    %49 = arith.addf %42, %48 : vector<80x128xf32>
    %c0_38 = arith.constant 0 : index
    %c21 = arith.constant 21 : index
    %c0_39 = arith.constant 0 : index
    %50 = vector.load %arg1[%c0_38, %c21, %c0_39] : memref<1x102x8xf32, #tpu.memory_space<vmem>>, vector<1x80x8xf32>
    %51 = vector.shape_cast %50 : vector<1x80x8xf32> to vector<80x8xf32>
    %52 = arith.truncf %51 : vector<80x8xf32> to vector<80x8xbf16>
    %c7 = arith.constant 7 : index
    %c0_40 = arith.constant 0 : index
    %c0_41 = arith.constant 0 : index
    %53 = vector.load %arg2[%c7, %c0_40, %c0_41] : memref<9x8x128xbf16, #tpu.memory_space<vmem>>, vector<1x8x128xbf16>
    %54 = vector.shape_cast %53 : vector<1x8x128xbf16> to vector<8x128xbf16>
    %cst_42 = arith.constant dense<0.000000e+00> : vector<80x128xf32>
    %55 = tpu.matmul %52, %54, %cst_42 {dimension_numbers = #tpu.dot_dimension_numbers<[1], [0], [0], [1], [0, 0, 1, 1], [], []>} : vector<80x8xbf16>, vector<8x128xbf16>, vector<80x128xf32> -> vector<80x128xf32>
    %56 = arith.addf %49, %55 : vector<80x128xf32>
    %c0_43 = arith.constant 0 : index
    %c22 = arith.constant 22 : index
    %c0_44 = arith.constant 0 : index
    %57 = vector.load %arg1[%c0_43, %c22, %c0_44] : memref<1x102x8xf32, #tpu.memory_space<vmem>>, vector<1x80x8xf32>
    %58 = vector.shape_cast %57 : vector<1x80x8xf32> to vector<80x8xf32>
    %59 = arith.truncf %58 : vector<80x8xf32> to vector<80x8xbf16>
    %c8 = arith.constant 8 : index
    %c0_45 = arith.constant 0 : index
    %c0_46 = arith.constant 0 : index
    %60 = vector.load %arg2[%c8, %c0_45, %c0_46] : memref<9x8x128xbf16, #tpu.memory_space<vmem>>, vector<1x8x128xbf16>
    %61 = vector.shape_cast %60 : vector<1x8x128xbf16> to vector<8x128xbf16>
    %cst_47 = arith.constant dense<0.000000e+00> : vector<80x128xf32>
    %62 = tpu.matmul %59, %61, %cst_47 {dimension_numbers = #tpu.dot_dimension_numbers<[1], [0], [0], [1], [0, 0, 1, 1], [], []>} : vector<80x8xbf16>, vector<8x128xbf16>, vector<80x128xf32> -> vector<80x128xf32>
    %63 = arith.addf %56, %62 : vector<80x128xf32>
    %c0_48 = arith.constant 0 : index
    %c0_49 = arith.constant 0 : index
    %64 = vector.load %arg3[%c0_48, %c0_49] : memref<1x128xf32, #tpu.memory_space<vmem>>, vector<1x128xf32>
    %65 = vector.broadcast %64 : vector<1x128xf32> to vector<80x128xf32>
    %66 = arith.addf %63, %65 : vector<80x128xf32>
    %cst_50 = arith.constant 0.000000e+00 : f32
    %67 = vector.broadcast %cst_50 : f32 to vector<80x128xf32>
    %68 = arith.maximumf %66, %67 : vector<80x128xf32>
    %c0_51 = arith.constant 0 : index
    %c0_52 = arith.constant 0 : index
    %c0_53 = arith.constant 0 : index
    %69 = vector.load %arg4[%c0_51, %c0_52, %c0_53] : memref<1x80x128xf32, #tpu.memory_space<vmem>>, vector<1x80x128xf32>
    %70 = vector.shape_cast %69 : vector<1x80x128xf32> to vector<80x128xf32>
    %71 = vector.shape_cast %68 : vector<80x128xf32> to vector<1x80x128xf32>
    tpu.vector_store %arg4[%c0_51, %c0_52, %c0_53], %71 {strides = array<i32>} : memref<1x80x128xf32, #tpu.memory_space<vmem>>, vector<1x80x128xf32>,
    return
  }
  func.func @transform_0(%arg0: i32) -> (i32, i32, i32) {
    %c0_i32 = arith.constant 0 : i32
    %c0_i32_0 = arith.constant 0 : i32
    %c0_i32_1 = arith.constant 0 : i32
    return %arg0, %c0_i32, %c0_i32_0 : i32, i32, i32
  }
  func.func @transform_1(%arg0: i32) -> (i32, i32, i32) {
    %c0_i32 = arith.constant 0 : i32
    %c0_i32_0 = arith.constant 0 : i32
    %c0_i32_1 = arith.constant 0 : i32
    %c0_i32_2 = arith.constant 0 : i32
    return %c0_i32, %c0_i32_0, %c0_i32_1 : i32, i32, i32
  }
  func.func @transform_2(%arg0: i32) -> (i32, i32) {
    %c0_i32 = arith.constant 0 : i32
    %c0_i32_0 = arith.constant 0 : i32
    %c0_i32_1 = arith.constant 0 : i32
    return %c0_i32, %c0_i32_0 : i32, i32
  }
  func.func @transform_3(%arg0: i32) -> (i32, i32, i32) {
    %c0_i32 = arith.constant 0 : i32
    %c0_i32_0 = arith.constant 0 : i32
    %c0_i32_1 = arith.constant 0 : i32
    return %arg0, %c0_i32, %c0_i32_0 : i32, i32, i32
  }
}

module attributes {stable_mosaic.version = 11 : i64} {
  func.func @_matmul_bias_kernel(%arg0: i32, %arg1: memref<128x8xf32, #tpu.memory_space<vmem>>, %arg2: memref<8x128xbf16, #tpu.memory_space<vmem>>, %arg3: memref<1x128xf32, #tpu.memory_space<vmem>>, %arg4: memref<128x128xf32, #tpu.memory_space<vmem>>) attributes {dimension_semantics = [#tpu.dimension_semantics<parallel>], iteration_bounds = array<i64: 1>, scalar_prefetch = 0 : i64, scratch_operands = 0 : i64, tpu.core_type = #tpu.core_type<tc>, window_params = [{transform_indices = @transform_0, window_bounds = array<i64: 128, 8>}, {pipeline_mode = #tpu.pipeline_mode<synchronous>, transform_indices = @transform_1, window_bounds = array<i64: 8, 128>}, {pipeline_mode = #tpu.pipeline_mode<synchronous>, transform_indices = @transform_2, window_bounds = array<i64: 1, 128>}, {transform_indices = @transform_3, window_bounds = array<i64: 128, 128>}]} {
    %c0 = arith.constant 0 : index
    %c0_0 = arith.constant 0 : index
    %0 = vector.load %arg1[%c0, %c0_0] : memref<128x8xf32, #tpu.memory_space<vmem>>, vector<128x8xf32>
    %1 = arith.truncf %0 : vector<128x8xf32> to vector<128x8xbf16>
    %c0_1 = arith.constant 0 : index
    %c0_2 = arith.constant 0 : index
    %2 = vector.load %arg2[%c0_1, %c0_2] : memref<8x128xbf16, #tpu.memory_space<vmem>>, vector<8x128xbf16>
    %cst = arith.constant dense<0.000000e+00> : vector<128x128xf32>
    %3 = tpu.matmul %1, %2, %cst {dimension_numbers = #tpu.dot_dimension_numbers<[1], [0], [0], [1], [0, 0, 1, 1], [], []>} : vector<128x8xbf16>, vector<8x128xbf16>, vector<128x128xf32> -> vector<128x128xf32>
    %c0_3 = arith.constant 0 : index
    %c0_4 = arith.constant 0 : index
    %4 = vector.load %arg3[%c0_3, %c0_4] : memref<1x128xf32, #tpu.memory_space<vmem>>, vector<1x128xf32>
    %5 = vector.broadcast %4 : vector<1x128xf32> to vector<128x128xf32>
    %6 = arith.addf %3, %5 : vector<128x128xf32>
    %c0_5 = arith.constant 0 : index
    %c0_6 = arith.constant 0 : index
    %7 = vector.load %arg4[%c0_5, %c0_6] : memref<128x128xf32, #tpu.memory_space<vmem>>, vector<128x128xf32>
    tpu.vector_store %arg4[%c0_5, %c0_6], %6 {strides = array<i32>} : memref<128x128xf32, #tpu.memory_space<vmem>>, vector<128x128xf32>,
    return
  }
  func.func @transform_0(%arg0: i32) -> (i32, i32) {
    %c0_i32 = arith.constant 0 : i32
    %c0_i32_0 = arith.constant 0 : i32
    return %arg0, %c0_i32 : i32, i32
  }
  func.func @transform_1(%arg0: i32) -> (i32, i32) {
    %c0_i32 = arith.constant 0 : i32
    %c0_i32_0 = arith.constant 0 : i32
    %c0_i32_1 = arith.constant 0 : i32
    return %c0_i32, %c0_i32_0 : i32, i32
  }
  func.func @transform_2(%arg0: i32) -> (i32, i32) {
    %c0_i32 = arith.constant 0 : i32
    %c0_i32_0 = arith.constant 0 : i32
    %c0_i32_1 = arith.constant 0 : i32
    return %c0_i32, %c0_i32_0 : i32, i32
  }
  func.func @transform_3(%arg0: i32) -> (i32, i32) {
    %c0_i32 = arith.constant 0 : i32
    %c0_i32_0 = arith.constant 0 : i32
    return %arg0, %c0_i32 : i32, i32
  }
}

</mosaic_0001>

<llo_original>
// kernel: backbone_as_unet_forward.10
$region0: #{backbone_as_unet_forward.10}
  #allocation0 [shape = 'u32[]', space=smem, size = 0x4, offset = 0x4, fixed_abs, tag = 'smem constant byte address 0x4 - core index']
  #allocation1 [shape = 'u32[144,128]{1,0:T(1,128)}', space=vmem, size = 0x12000, scoped, tag = 'internal scratch']
  %s0 = inlined_call_operand.vmem [shape: f32[8,82,4], index: 0, kind: input, shape index: {}]
  %s1 = inlined_call_operand.vmem [shape: bf16[9,4,128], index: 1, kind: input, shape index: {}]
  %s2 = inlined_call_operand.vmem [shape: f32[1,128], index: 2, kind: input, shape index: {}]
  %s3 = inlined_call_operand.vmem [shape: f32[2,72,128], index: 3, kind: output, shape index: {}]
  %s4 = sld [smem:[#allocation0]]
  $region45: #{backbone_as_unet_forward.10} parent=0
    _
  %s6 = ssub.s32 1, %s4
  %s7 = scalar_select 0, %s6, %s4
  loop: start=0, step=1, limit=4
  $region2: #{backbone_as_unet_forward.10} parent=0 // loop_pre_header
    _
  $region3: #{backbone_as_unet_forward.10} parent=0 // loop_header
    %s9 = sphi 0, %s13
    %p10 = scmp.ge.s32.totalorder %s9, 4
    %s19 = sphi 0, %s21
    %s22 = sphi 0, %s19
    %s23 = sphi 0, %s22
    %s39 = sphi 0, %s23
    %s43 = sphi 0, %s43
    %s45 = sphi 0, %s43
    %s46 = sphi 0, %s45
    %s60 = sphi 0, %s46
    %s64 = sphi 0, %s64
    %s66 = sphi 0, %s64
    %s67 = sphi 0, %s66
    %s81 = sphi 0, %s67
    %s87 = sphi 0, %s89
    %s90 = sphi 0, %s87
    %s91 = sphi 0, %s90
    %s107 = sphi 0, %s91
  $region4: #{backbone_as_unet_forward.10} parent=0 // loop_header_branch
    %12 = sbr.rel (%p10) target = $region8
  $region5: #{backbone_as_unet_forward.10} parent=0 // loop_body
    %s14 = ssub.s32 %s9, 1
    %s15 = ssub.s32 %s9, 2
    %s16 = sadd.s32 %s9, 1
    %s17 = ssub.s32 %s9, %s16
    %p18 = scmp.eq.s32.totalorder %s17, 0
    %s20 = sadd.s32 %s19, 1
    %s21 = scalar_select %p18, %s19, %s20
    %p24 = pneg %p18
    %p25 = scmp.eq.s32.totalorder %s9, 1
    %p26 = por %p24, %p25
    %p27 = scmp.ne.s32.totalorder %s19, %s22
    %p28 = scmp.eq.s32.totalorder %s9, 0
    %p29 = por %p27, %p28
    %p30 = scmp.ne.s32.totalorder %s19, %s22
    %p31 = scmp.eq.s32.totalorder %s14, 1
    %p32 = por %p30, %p31
    %p33 = scmp.ne.s32.totalorder %s22, %s23
    %p34 = scmp.eq.s32.totalorder %s14, 0
    %p35 = por %p33, %p34
    %p36 = scmp.ne.s32.totalorder %s22, %s23
    %p37 = scmp.eq.s32.totalorder %s15, 1
    %p38 = por %p36, %p37
    %p40 = scmp.ne.s32.totalorder %s23, %s39
    %p41 = scmp.eq.s32.totalorder %s15, 0
    %p42 = por %p40, %p41
    %s44 = sadd.s32 %s43, 1
    %p47 = scmp.eq.s32.totalorder %s9, 1
    %p48 = scmp.ne.s32.totalorder %s43, %s45
    %p49 = scmp.eq.s32.totalorder %s9, 0
    %p50 = por %p48, %p49
    %p51 = scmp.ne.s32.totalorder %s43, %s45
    %p52 = scmp.eq.s32.totalorder %s14, 1
    %p53 = por %p51, %p52
    %p54 = scmp.ne.s32.totalorder %s45, %s46
    %p55 = scmp.eq.s32.totalorder %s14, 0
    %p56 = por %p54, %p55
    %p57 = scmp.ne.s32.totalorder %s45, %s46
    %p58 = scmp.eq.s32.totalorder %s15, 1
    %p59 = por %p57, %p58
    %p61 = scmp.ne.s32.totalorder %s46, %s60
    %p62 = scmp.eq.s32.totalorder %s15, 0
    %p63 = por %p61, %p62
    %s65 = sadd.s32 %s64, 1
    %p68 = scmp.eq.s32.totalorder %s9, 1
    %p69 = scmp.ne.s32.totalorder %s64, %s66
    %p70 = scmp.eq.s32.totalorder %s9, 0
    %p71 = por %p69, %p70
    %p72 = scmp.ne.s32.totalorder %s64, %s66
    %p73 = scmp.eq.s32.totalorder %s14, 1
    %p74 = por %p72, %p73
    %p75 = scmp.ne.s32.totalorder %s66, %s67
    %p76 = scmp.eq.s32.totalorder %s14, 0
    %p77 = por %p75, %p76
    %p78 = scmp.ne.s32.totalorder %s66, %s67
    %p79 = scmp.eq.s32.totalorder %s15, 1
    %p80 = por %p78, %p79
    %p82 = scmp.ne.s32.totalorder %s67, %s81
    %p83 = scmp.eq.s32.totalorder %s15, 0
    %p84 = por %p82, %p83
    %s85 = ssub.s32 %s9, %s16
    %p86 = scmp.eq.s32.totalorder %s85, 0
    %s88 = sadd.s32 %s87, 1
    %s89 = scalar_select %p86, %s87, %s88
    %p92 = pneg %p86
    %p93 = scmp.eq.s32.totalorder %s9, 1
    %p94 = por %p92, %p93
    %p95 = scmp.ne.s32.totalorder %s87, %s90
    %p96 = scmp.eq.s32.totalorder %s9, 0
    %p97 = por %p95, %p96
    %p98 = scmp.ne.s32.totalorder %s87, %s90
    %p99 = scmp.eq.s32.totalorder %s14, 1
    %p100 = por %p98, %p99
    %p101 = scmp.ne.s32.totalorder %s90, %s91
    %p102 = scmp.eq.s32.totalorder %s14, 0
    %p103 = por %p101, %p102
    %p104 = scmp.ne.s32.totalorder %s90, %s91
    %p105 = scmp.eq.s32.totalorder %s15, 1
    %p106 = por %p104, %p105
    %p108 = scmp.ne.s32.totalorder %s91, %s107
    %p109 = scmp.eq.s32.totalorder %s15, 0
    %p110 = por %p108, %p109
    %p111 = scmp.le.s32.totalorder 1, %s9
    %p112 = scmp.lt.s32.totalorder %s9, 3
    %p113 = pnand %p111, %p112
    %p114 = pneg %p113
    // Predicated region
    $region9: #{backbone_as_unet_forward.10} parent=5 // pred_check
      _
    $region10: #{backbone_as_unet_forward.10} parent=5 // pred_check_branch
      %116 = sbr.rel (%p113) target = $region12
    $region11: #{backbone_as_unet_forward.10} parent=5 // pred_region
      %s117 = ssub.s32 %s9, 1
      // Predicated region
      $region13: #{backbone_as_unet_forward.10} parent=11 // pred_check
        %p118 = pneg %p56
      $region14: #{backbone_as_unet_forward.10} parent=11 // pred_check_branch
        %120 = sbr.rel (%p118) target = $region16
      $region15: #{backbone_as_unet_forward.10} parent=11 // pred_region
        _
      $region16: #{backbone_as_unet_forward.10} parent=11 // pred_fallthru
        _
      // Predicated region
      $region17: #{backbone_as_unet_forward.10} parent=11 // pred_check
        %p121 = pneg %p77
      $region18: #{backbone_as_unet_forward.10} parent=11 // pred_check_branch
        %123 = sbr.rel (%p121) target = $region20
      $region19: #{backbone_as_unet_forward.10} parent=11 // pred_region
        _
      $region20: #{backbone_as_unet_forward.10} parent=11 // pred_fallthru
        _
    $region12: #{backbone_as_unet_forward.10} parent=5 // pred_fallthru
      _
    %p124 = scmp.lt.s32.totalorder %s9, 2
    // Predicated region
    $region21: #{backbone_as_unet_forward.10} parent=5 // pred_check
      %p125 = pneg %p124
    $region22: #{backbone_as_unet_forward.10} parent=5 // pred_check_branch
      %127 = sbr.rel (%p125) target = $region24
    $region23: #{backbone_as_unet_forward.10} parent=5 // pred_region
      // Predicated region
      $region25: #{backbone_as_unet_forward.10} parent=23 // pred_check
        %p128 = pneg %p29
      $region26: #{backbone_as_unet_forward.10} parent=23 // pred_check_branch
        %130 = sbr.rel (%p128) target = $region28
      $region27: #{backbone_as_unet_forward.10} parent=23 // pred_region
        %s131 = smul.u32 4, %s9
        %p132 = scmp.lt.s32.totalorder %s131, 7
        %s133 = scalar_select %p132, %s131, 7
        %s134 = smul.addr %s133, 11
        %s135 = smul.addr %s134, 8
        %s136 = scalar_lea.vmem %s0, %s135
        %s137 = smul.u32 4, %s9
      $region28: #{backbone_as_unet_forward.10} parent=23 // pred_fallthru
        _
    $region24: #{backbone_as_unet_forward.10} parent=5 // pred_fallthru
      _
    %p138 = scmp.le.s32.totalorder 1, %s9
    %p139 = scmp.lt.s32.totalorder %s9, 3
    %p140 = pnand %p138, %p139
    %p141 = pneg %p140
    // Predicated region
    $region29: #{backbone_as_unet_forward.10} parent=5 // pred_check
      _
    $region30: #{backbone_as_unet_forward.10} parent=5 // pred_check_branch
      %143 = sbr.rel (%p140) target = $region32
    $region31: #{backbone_as_unet_forward.10} parent=5 // pred_region
      %s144 = ssub.s32 %s9, 1
      %s145 = smul.u32 4, %s14
      %p146 = scmp.lt.s32.totalorder %s145, 7
      %s147 = scalar_select %p146, %s145, 7
      %s148 = smul.addr %s147, 11
      %s149 = smul.addr %s148, 8
      %s150 = scalar_lea.vmem %s0, %s149
      %p151 = pneg %p35
      %p152 = pneg %p32
      %p153 = pneg %p56
      %p154 = pneg %p53
      %p155 = pneg %p77
      %p156 = pneg %p74
      %p157 = pneg %p103
      %p158 = pneg %p100
      %p159 = scmp.lt.s32.totalorder %s14, 1
      %s160 = scalar_select %p159, %s14, 1
      %s161 = smul.addr %s160, 9
      %s162 = smul.addr %s161, 8
      %s163 = scalar_lea.vmem %s3, %s162
      %s164 = smul.u32 4, %s14
      %p165 = scmp.lt.s32.totalorder %s164, 7
      %s166 = scalar_select %p165, %s164, 7
      %s167 = smul.addr %s166, 11
      %s168 = smul.addr %s167, 8
      %s169 = scalar_lea.vmem %s0, %s168
      %s170 = smul.u32 4, %s14
      %p171 = scmp.lt.s32.totalorder %s14, 1
      %s172 = scalar_select %p171, %s14, 1
      %s173 = smul.addr %s172, 9
      %s174 = smul.addr %s173, 8
      %s175 = scalar_lea.vmem %s3, %s174
      %v177 = vld [vmem:[%s169] sm:$0xff]
      %v178 = vld [vmem:[%s169 + $0x8] sm:$0xff]
      %v179 = vld [vmem:[%s169 + $0x10] sm:$0xff]
      %v180 = vld [vmem:[%s169 + $0x18] sm:$0xff]
      %v181 = vld [vmem:[%s169 + $0x20] sm:$0xff]
      %v182 = vld [vmem:[%s169 + $0x28] sm:$0xff]
      %v183 = vld [vmem:[%s169 + $0x30] sm:$0xff]
      %v184 = vld [vmem:[%s169 + $0x38] sm:$0xff]
      %v185 = vld [vmem:[%s169 + $0x40] sm:$0xff]
      %v186 = vpack.c.bf16 %v178, %v177
      %v187 = vpack.c.bf16 %v180, %v179
      %v188 = vpack.c.bf16 %v182, %v181
      %v189 = vpack.c.bf16 %v184, %v183
      %v190 = vpack.c.bf16 %v185, %v185
      %v191 = vld [vmem:[%s1] sm:$0x3]
      %s192 = scalar_lea.vmem %s169, 88
      %v193 = vld [vmem:[%s192] sm:$0xff]
      %v194 = vld [vmem:[%s192 + $0x8] sm:$0xff]
      %v195 = vld [vmem:[%s192 + $0x10] sm:$0xff]
      %v196 = vld [vmem:[%s192 + $0x18] sm:$0xff]
      %v197 = vld [vmem:[%s192 + $0x20] sm:$0xff]
      %v198 = vld [vmem:[%s192 + $0x28] sm:$0xff]
      %v199 = vld [vmem:[%s192 + $0x30] sm:$0xff]
      %v200 = vld [vmem:[%s192 + $0x38] sm:$0xff]
      %v201 = vld [vmem:[%s192 + $0x40] sm:$0xff]
      %v202 = vpack.c.bf16 %v194, %v193
      %v203 = vpack.c.bf16 %v196, %v195
      %v204 = vpack.c.bf16 %v198, %v197
      %v205 = vpack.c.bf16 %v200, %v199
      %v206 = vpack.c.bf16 %v201, %v201
      %s207 = scalar_lea.vmem %s1, 2
      %v208 = vld [vmem:[%s207] sm:$0x3]
      %vm209 = vcmask 31744
      %v211 = vsel %vm209, %v202, 0
      %v214 = vsel %vm209, %v203, 0
      %v217 = vsel %vm209, %v204, 0
      %v220 = vsel %vm209, %v205, 0
      %v223 = vsel %vm209, %v206, 0
      %vm225 = vcmask 1041408
      %v227 = vsel %vm225, %v208, 0
      %229 = vmatprep.subr.bf16.mxu0 0
      %230 = vmatpush1.bf16.msra.mxu0 0
      %231 = vmatprep.subr.bf16.mxu0 0
      %232 = vmatpush1.bf16.msra.mxu0 0
      %233 = vmatprep.subr.bf16.mxu0 0
      %234 = vmatpush1.bf16.msra.mxu0 0
      %235 = vmatprep.subr.bf16.mxu0 0
      %236 = vmatpush1.bf16.msra.mxu0 0
      %237 = vmatprep.subr.bf16.mxu0 0
      %238 = vmatpush1.bf16.msra.mxu0 0
      %239 = vmatprep.subr.bf16.mxu0 0
      %240 = vmatpush1.bf16.msra.mxu0 0
      %241 = vmatprep.subr.bf16.mxu0 0
      %242 = vmatpush1.bf16.msra.mxu0 0
      %243 = vmatprep.subr.bf16.mxu0 0
      %244 = vmatpush1.bf16.msra.mxu0 %v227
      %245 = vmatprep.subr.bf16.mxu0 0
      %246 = vmatpush2.bf16.msra.mxu0 0
      %247 = vmatprep.subr.bf16.mxu0 0
      %248 = vmatpush2.bf16.msra.mxu0 0
      %249 = vmatprep.subr.bf16.mxu0 0
      %250 = vmatpush2.bf16.msra.mxu0 0
      %251 = vmatprep.subr.bf16.mxu0 0
      %252 = vmatpush2.bf16.msra.mxu0 0
      %253 = vmatprep.subr.bf16.mxu0 0
      %254 = vmatpush2.bf16.msra.mxu0 0
      %255 = vmatprep.subr.bf16.mxu0 0
      %256 = vmatpush2.bf16.msra.mxu0 0
      %257 = vmatprep.subr.bf16.mxu0 0
      %258 = vmatpush2.bf16.msra.mxu0 0
      %259 = vmatprep.subr.bf16.mxu0 0
      %260 = vmatpush2.bf16.msra.mxu0 0
      %261 = vmatprep.mubr.bf16.mxu0 0
      %262 = vmatmul.mubr.bf16.gmra.mxu0 %v211
      %v263 = vpop.f32.mrf.mxu0
      %v264 = vadd.f32 0.0, %v263
      %v265 = vpop.f32.mrf.mxu0
      %v266 = vpop.f32.mrf.mxu0
      %v267 = vadd.f32 0.0, %v266
      %v268 = vpop.f32.mrf.mxu0
      %269 = vmatprep.mubr.bf16.mxu0 0
      %270 = vmatmul.mubr.bf16.gmra.mxu0 %v214
      %v271 = vpop.f32.mrf.mxu0
      %v272 = vadd.f32 0.0, %v271
      %v273 = vpop.f32.mrf.mxu0
      %v274 = vpop.f32.mrf.mxu0
      %v275 = vadd.f32 0.0, %v274
      %v276 = vpop.f32.mrf.mxu0
      %277 = vmatprep.mubr.bf16.mxu0 0
      %278 = vmatmul.mubr.bf16.gmra.mxu0 %v217
      %v279 = vpop.f32.mrf.mxu0
      %v280 = vadd.f32 0.0, %v279
      %v281 = vpop.f32.mrf.mxu0
      %v282 = vpop.f32.mrf.mxu0
      %v283 = vadd.f32 0.0, %v282
      %v284 = vpop.f32.mrf.mxu0
      %285 = vmatprep.mubr.bf16.mxu0 0
      %286 = vmatmul.mubr.bf16.gmra.mxu0 %v220
      %v287 = vpop.f32.mrf.mxu0
      %v288 = vadd.f32 0.0, %v287
      %v289 = vpop.f32.mrf.mxu0
      %v290 = vpop.f32.mrf.mxu0
      %v291 = vadd.f32 0.0, %v290
      %v292 = vpop.f32.mrf.mxu0
      %293 = vmatprep.mubr.bf16.mxu0 0
      %294 = vmatmul.mubr.bf16.gmra.mxu0 %v223
      %v295 = vpop.f32.mrf.mxu0
      %v296 = vadd.f32 0.0, %v295
      %v297 = vpop.f32.mrf.mxu0
      %v298 = vpop.f32.mrf.mxu0
      %v299 = vpop.f32.mrf.mxu0
      %300 = vdwg.mxu0
      %v302 = vsel %vm209, %v186, 0
      %v305 = vsel %vm209, %v187, 0
      %v308 = vsel %vm209, %v188, 0
      %v311 = vsel %vm209, %v189, 0
      %v314 = vsel %vm209, %v190, 0
      %v317 = vsel %vm225, %v191, 0
      %319 = vmatprep.subr.bf16.mxu0 0
      %320 = vmatpush1.bf16.msra.mxu0 0
      %321 = vmatprep.subr.bf16.mxu0 0
      %322 = vmatpush1.bf16.msra.mxu0 0
      %323 = vmatprep.subr.bf16.mxu0 0
      %324 = vmatpush1.bf16.msra.mxu0 0
      %325 = vmatprep.subr.bf16.mxu0 0
      %326 = vmatpush1.bf16.msra.mxu0 0
      %327 = vmatprep.subr.bf16.mxu0 0
      %328 = vmatpush1.bf16.msra.mxu0 0
      %329 = vmatprep.subr.bf16.mxu0 0
      %330 = vmatpush1.bf16.msra.mxu0 0
      %331 = vmatprep.subr.bf16.mxu0 0
      %332 = vmatpush1.bf16.msra.mxu0 0
      %333 = vmatprep.subr.bf16.mxu0 0
      %334 = vmatpush1.bf16.msra.mxu0 %v317
      %335 = vmatprep.subr.bf16.mxu0 0
      %336 = vmatpush2.bf16.msra.mxu0 0
      %337 = vmatprep.subr.bf16.mxu0 0
      %338 = vmatpush2.bf16.msra.mxu0 0
      %339 = vmatprep.subr.bf16.mxu0 0
      %340 = vmatpush2.bf16.msra.mxu0 0
      %341 = vmatprep.subr.bf16.mxu0 0
      %342 = vmatpush2.bf16.msra.mxu0 0
      %343 = vmatprep.subr.bf16.mxu0 0
      %344 = vmatpush2.bf16.msra.mxu0 0
      %345 = vmatprep.subr.bf16.mxu0 0
      %346 = vmatpush2.bf16.msra.mxu0 0
      %347 = vmatprep.subr.bf16.mxu0 0
      %348 = vmatpush2.bf16.msra.mxu0 0
      %349 = vmatprep.subr.bf16.mxu0 0
      %350 = vmatpush2.bf16.msra.mxu0 0
      %351 = vmatprep.mubr.bf16.mxu0 0
      %352 = vmatmul.mubr.bf16.gmra.mxu0 %v302
      %v353 = vpop.f32.mrf.mxu0
      %v354 = vadd.f32 %v264, %v353
      %v355 = vpop.f32.mrf.mxu0
      %v356 = vpop.f32.mrf.mxu0
      %v357 = vadd.f32 %v267, %v356
      %v358 = vpop.f32.mrf.mxu0
      %359 = vmatprep.mubr.bf16.mxu0 0
      %360 = vmatmul.mubr.bf16.gmra.mxu0 %v305
      %v361 = vpop.f32.mrf.mxu0
      %v362 = vadd.f32 %v272, %v361
      %v363 = vpop.f32.mrf.mxu0
      %v364 = vpop.f32.mrf.mxu0
      %v365 = vadd.f32 %v275, %v364
      %v366 = vpop.f32.mrf.mxu0
      %367 = vmatprep.mubr.bf16.mxu0 0
      %368 = vmatmul.mubr.bf16.gmra.mxu0 %v308
      %v369 = vpop.f32.mrf.mxu0
      %v370 = vadd.f32 %v280, %v369
      %v371 = vpop.f32.mrf.mxu0
      %v372 = vpop.f32.mrf.mxu0
      %v373 = vadd.f32 %v283, %v372
      %v374 = vpop.f32.mrf.mxu0
      %375 = vmatprep.mubr.bf16.mxu0 0
      %376 = vmatmul.mubr.bf16.gmra.mxu0 %v311
      %v377 = vpop.f32.mrf.mxu0
      %v378 = vadd.f32 %v288, %v377
      %v379 = vpop.f32.mrf.mxu0
      %v380 = vpop.f32.mrf.mxu0
      %v381 = vadd.f32 %v291, %v380
      %v382 = vpop.f32.mrf.mxu0
      %383 = vmatprep.mubr.bf16.mxu0 0
      %384 = vmatmul.mubr.bf16.gmra.mxu0 %v314
      %v385 = vpop.f32.mrf.mxu0
      %v386 = vadd.f32 %v296, %v385
      %v387 = vpop.f32.mrf.mxu0
      %v388 = vpop.f32.mrf.mxu0
      %v389 = vpop.f32.mrf.mxu0
      %390 = vdwg.mxu0
      %v391 = vld [vmem:[%s169 + $0x1] sm:$0xff]
      %v392 = vld [vmem:[%s169 + $0x9] sm:$0xff]
      %v393 = vld [vmem:[%s169 + $0x11] sm:$0xff]
      %v394 = vld [vmem:[%s169 + $0x19] sm:$0xff]
      %v395 = vld [vmem:[%s169 + $0x21] sm:$0xff]
      %v396 = vld [vmem:[%s169 + $0x29] sm:$0xff]
      %v397 = vld [vmem:[%s169 + $0x31] sm:$0xff]
      %v398 = vld [vmem:[%s169 + $0x39] sm:$0xff]
      %v399 = vld [vmem:[%s169 + $0x41] sm:$0xff]
      %v400 = vpack.c.bf16 %v392, %v391
      %v401 = vpack.c.bf16 %v394, %v393
      %v402 = vpack.c.bf16 %v396, %v395
      %v403 = vpack.c.bf16 %v398, %v397
      %v404 = vpack.c.bf16 %v399, %v399
      %s405 = scalar_lea.vmem %s1, 4
      %v406 = vld [vmem:[%s405] sm:$0x3]
      %v408 = vsel %vm209, %v400, 0
      %v411 = vsel %vm209, %v401, 0
      %v414 = vsel %vm209, %v402, 0
      %v417 = vsel %vm209, %v403, 0
      %v420 = vsel %vm209, %v404, 0
      %v423 = vsel %vm225, %v406, 0
      %425 = vmatprep.subr.bf16.mxu0 0
      %426 = vmatpush1.bf16.msra.mxu0 0
      %427 = vmatprep.subr.bf16.mxu0 0
      %428 = vmatpush1.bf16.msra.mxu0 0
      %429 = vmatprep.subr.bf16.mxu0 0
      %430 = vmatpush1.bf16.msra.mxu0 0
      %431 = vmatprep.subr.bf16.mxu0 0
      %432 = vmatpush1.bf16.msra.mxu0 0
      %433 = vmatprep.subr.bf16.mxu0 0
      %434 = vmatpush1.bf16.msra.mxu0 0
      %435 = vmatprep.subr.bf16.mxu0 0
      %436 = vmatpush1.bf16.msra.mxu0 0
      %437 = vmatprep.subr.bf16.mxu0 0
      %438 = vmatpush1.bf16.msra.mxu0 0
      %439 = vmatprep.subr.bf16.mxu0 0
      %440 = vmatpush1.bf16.msra.mxu0 %v423
      %441 = vmatprep.subr.bf16.mxu0 0
      %442 = vmatpush2.bf16.msra.mxu0 0
      %443 = vmatprep.subr.bf16.mxu0 0
      %444 = vmatpush2.bf16.msra.mxu0 0
      %445 = vmatprep.subr.bf16.mxu0 0
      %446 = vmatpush2.bf16.msra.mxu0 0
      %447 = vmatprep.subr.bf16.mxu0 0
      %448 = vmatpush2.bf16.msra.mxu0 0
      %449 = vmatprep.subr.bf16.mxu0 0
      %450 = vmatpush2.bf16.msra.mxu0 0
      %451 = vmatprep.subr.bf16.mxu0 0
      %452 = vmatpush2.bf16.msra.mxu0 0
      %453 = vmatprep.subr.bf16.mxu0 0
      %454 = vmatpush2.bf16.msra.mxu0 0
      %455 = vmatprep.subr.bf16.mxu0 0
      %456 = vmatpush2.bf16.msra.mxu0 0
      %457 = vmatprep.mubr.bf16.mxu0 0
      %458 = vmatmul.mubr.bf16.gmra.mxu0 %v408
      %v459 = vpop.f32.mrf.mxu0
      %v460 = vadd.f32 0.0, %v459
      %v461 = vpop.f32.mrf.mxu0
      %v462 = vpop.f32.mrf.mxu0
      %v463 = vadd.f32 0.0, %v462
      %v464 = vpop.f32.mrf.mxu0
      %465 = vmatprep.mubr.bf16.mxu0 0
      %466 = vmatmul.mubr.bf16.gmra.mxu0 %v411
      %v467 = vpop.f32.mrf.mxu0
      %v468 = vadd.f32 0.0, %v467
      %v469 = vpop.f32.mrf.mxu0
      %v470 = vpop.f32.mrf.mxu0
      %v471 = vadd.f32 0.0, %v470
      %v472 = vpop.f32.mrf.mxu0
      %473 = vmatprep.mubr.bf16.mxu0 0
      %474 = vmatmul.mubr.bf16.gmra.mxu0 %v414
      %v475 = vpop.f32.mrf.mxu0
      %v476 = vadd.f32 0.0, %v475
      %v477 = vpop.f32.mrf.mxu0
      %v478 = vpop.f32.mrf.mxu0
      %v479 = vadd.f32 0.0, %v478
      %v480 = vpop.f32.mrf.mxu0
      %481 = vmatprep.mubr.bf16.mxu0 0
      %482 = vmatmul.mubr.bf16.gmra.mxu0 %v417
      %v483 = vpop.f32.mrf.mxu0
      %v484 = vadd.f32 0.0, %v483
      %v485 = vpop.f32.mrf.mxu0
      %v486 = vpop.f32.mrf.mxu0
      %v487 = vadd.f32 0.0, %v486
      %v488 = vpop.f32.mrf.mxu0
      %489 = vmatprep.mubr.bf16.mxu0 0
      %490 = vmatmul.mubr.bf16.gmra.mxu0 %v420
      %v491 = vpop.f32.mrf.mxu0
      %v492 = vadd.f32 0.0, %v491
      %v493 = vpop.f32.mrf.mxu0
      %v494 = vpop.f32.mrf.mxu0
      %v495 = vpop.f32.mrf.mxu0
      %496 = vdwg.mxu0
      %v497 = vadd.f32 %v354, %v460
      %v498 = vadd.f32 %v357, %v463
      %v499 = vadd.f32 %v362, %v468
      %v500 = vadd.f32 %v365, %v471
      %v501 = vadd.f32 %v370, %v476
      %v502 = vadd.f32 %v373, %v479
      %v503 = vadd.f32 %v378, %v484
      %v504 = vadd.f32 %v381, %v487
      %v505 = vadd.f32 %v386, %v492
      %s506 = scalar_lea.vmem %s169, 176
      %v507 = vld [vmem:[%s506] sm:$0xff]
      %v508 = vld [vmem:[%s506 + $0x8] sm:$0xff]
      %v509 = vld [vmem:[%s506 + $0x10] sm:$0xff]
      %v510 = vld [vmem:[%s506 + $0x18] sm:$0xff]
      %v511 = vld [vmem:[%s506 + $0x20] sm:$0xff]
      %v512 = vld [vmem:[%s506 + $0x28] sm:$0xff]
      %v513 = vld [vmem:[%s506 + $0x30] sm:$0xff]
      %v514 = vld [vmem:[%s506 + $0x38] sm:$0xff]
      %v515 = vld [vmem:[%s506 + $0x40] sm:$0xff]
      %v516 = vpack.c.bf16 %v508, %v507
      %v517 = vpack.c.bf16 %v510, %v509
      %v518 = vpack.c.bf16 %v512, %v511
      %v519 = vpack.c.bf16 %v514, %v513
      %v520 = vpack.c.bf16 %v515, %v515
      %s521 = scalar_lea.vmem %s1, 6
      %v522 = vld [vmem:[%s521] sm:$0x3]
      %v524 = vsel %vm209, %v516, 0
      %v527 = vsel %vm209, %v517, 0
      %v530 = vsel %vm209, %v518, 0
      %v533 = vsel %vm209, %v519, 0
      %v536 = vsel %vm209, %v520, 0
      %v539 = vsel %vm225, %v522, 0
      %541 = vmatprep.subr.bf16.mxu0 0
      %542 = vmatpush1.bf16.msra.mxu0 0
      %543 = vmatprep.subr.bf16.mxu0 0
      %544 = vmatpush1.bf16.msra.mxu0 0
      %545 = vmatprep.subr.bf16.mxu0 0
      %546 = vmatpush1.bf16.msra.mxu0 0
      %547 = vmatprep.subr.bf16.mxu0 0
      %548 = vmatpush1.bf16.msra.mxu0 0
      %549 = vmatprep.subr.bf16.mxu0 0
      %550 = vmatpush1.bf16.msra.mxu0 0
      %551 = vmatprep.subr.bf16.mxu0 0
      %552 = vmatpush1.bf16.msra.mxu0 0
      %553 = vmatprep.subr.bf16.mxu0 0
      %554 = vmatpush1.bf16.msra.mxu0 0
      %555 = vmatprep.subr.bf16.mxu0 0
      %556 = vmatpush1.bf16.msra.mxu0 %v539
      %557 = vmatprep.subr.bf16.mxu0 0
      %558 = vmatpush2.bf16.msra.mxu0 0
      %559 = vmatprep.subr.bf16.mxu0 0
      %560 = vmatpush2.bf16.msra.mxu0 0
      %561 = vmatprep.subr.bf16.mxu0 0
      %562 = vmatpush2.bf16.msra.mxu0 0
      %563 = vmatprep.subr.bf16.mxu0 0
      %564 = vmatpush2.bf16.msra.mxu0 0
      %565 = vmatprep.subr.bf16.mxu0 0
      %566 = vmatpush2.bf16.msra.mxu0 0
      %567 = vmatprep.subr.bf16.mxu0 0
      %568 = vmatpush2.bf16.msra.mxu0 0
      %569 = vmatprep.subr.bf16.mxu0 0
      %570 = vmatpush2.bf16.msra.mxu0 0
      %571 = vmatprep.subr.bf16.mxu0 0
      %572 = vmatpush2.bf16.msra.mxu0 0
      %573 = vmatprep.mubr.bf16.mxu0 0
      %574 = vmatmul.mubr.bf16.gmra.mxu0 %v524
      %v575 = vpop.f32.mrf.mxu0
      %v576 = vadd.f32 0.0, %v575
      %v577 = vpop.f32.mrf.mxu0
      %v578 = vpop.f32.mrf.mxu0
      %v579 = vadd.f32 0.0, %v578
      %v580 = vpop.f32.mrf.mxu0
      %581 = vmatprep.mubr.bf16.mxu0 0
      %582 = vmatmul.mubr.bf16.gmra.mxu0 %v527
      %v583 = vpop.f32.mrf.mxu0
      %v584 = vadd.f32 0.0, %v583
      %v585 = vpop.f32.mrf.mxu0
      %v586 = vpop.f32.mrf.mxu0
      %v587 = vadd.f32 0.0, %v586
      %v588 = vpop.f32.mrf.mxu0
      %589 = vmatprep.mubr.bf16.mxu0 0
      %590 = vmatmul.mubr.bf16.gmra.mxu0 %v530
      %v591 = vpop.f32.mrf.mxu0
      %v592 = vadd.f32 0.0, %v591
      %v593 = vpop.f32.mrf.mxu0
      %v594 = vpop.f32.mrf.mxu0
      %v595 = vadd.f32 0.0, %v594
      %v596 = vpop.f32.mrf.mxu0
      %597 = vmatprep.mubr.bf16.mxu0 0
      %598 = vmatmul.mubr.bf16.gmra.mxu0 %v533
      %v599 = vpop.f32.mrf.mxu0
      %v600 = vadd.f32 0.0, %v599
      %v601 = vpop.f32.mrf.mxu0
      %v602 = vpop.f32.mrf.mxu0
      %v603 = vadd.f32 0.0, %v602
      %v604 = vpop.f32.mrf.mxu0
      %605 = vmatprep.mubr.bf16.mxu0 0
      %606 = vmatmul.mubr.bf16.gmra.mxu0 %v536
      %v607 = vpop.f32.mrf.mxu0
      %v608 = vadd.f32 0.0, %v607
      %v609 = vpop.f32.mrf.mxu0
      %v610 = vpop.f32.mrf.mxu0
      %v611 = vpop.f32.mrf.mxu0
      %612 = vdwg.mxu0
      %v613 = vadd.f32 %v497, %v576
      %v614 = vadd.f32 %v498, %v579
      %v615 = vadd.f32 %v499, %v584
      %v616 = vadd.f32 %v500, %v587
      %v617 = vadd.f32 %v501, %v592
      %v618 = vadd.f32 %v502, %v595
      %v619 = vadd.f32 %v503, %v600
      %v620 = vadd.f32 %v504, %v603
      %v621 = vadd.f32 %v505, %v608
      %s622 = scalar_lea.vmem %s169, 264
      %v623 = vld [vmem:[%s622] sm:$0xff]
      %v624 = vld [vmem:[%s622 + $0x8] sm:$0xff]
      %v625 = vld [vmem:[%s622 + $0x10] sm:$0xff]
      %v626 = vld [vmem:[%s622 + $0x18] sm:$0xff]
      %v627 = vld [vmem:[%s622 + $0x20] sm:$0xff]
      %v628 = vld [vmem:[%s622 + $0x28] sm:$0xff]
      %v629 = vld [vmem:[%s622 + $0x30] sm:$0xff]
      %v630 = vld [vmem:[%s622 + $0x38] sm:$0xff]
      %v631 = vld [vmem:[%s622 + $0x40] sm:$0xff]
      %v632 = vpack.c.bf16 %v624, %v623
      %v633 = vpack.c.bf16 %v626, %v625
      %v634 = vpack.c.bf16 %v628, %v627
      %v635 = vpack.c.bf16 %v630, %v629
      %v636 = vpack.c.bf16 %v631, %v631
      %s637 = scalar_lea.vmem %s1, 8
      %v638 = vld [vmem:[%s637] sm:$0x3]
      %v640 = vsel %vm209, %v632, 0
      %v643 = vsel %vm209, %v633, 0
      %v646 = vsel %vm209, %v634, 0
      %v649 = vsel %vm209, %v635, 0
      %v652 = vsel %vm209, %v636, 0
      %v655 = vsel %vm225, %v638, 0
      %657 = vmatprep.subr.bf16.mxu0 0
      %658 = vmatpush1.bf16.msra.mxu0 0
      %659 = vmatprep.subr.bf16.mxu0 0
      %660 = vmatpush1.bf16.msra.mxu0 0
      %661 = vmatprep.subr.bf16.mxu0 0
      %662 = vmatpush1.bf16.msra.mxu0 0
      %663 = vmatprep.subr.bf16.mxu0 0
      %664 = vmatpush1.bf16.msra.mxu0 0
      %665 = vmatprep.subr.bf16.mxu0 0
      %666 = vmatpush1.bf16.msra.mxu0 0
      %667 = vmatprep.subr.bf16.mxu0 0
      %668 = vmatpush1.bf16.msra.mxu0 0
      %669 = vmatprep.subr.bf16.mxu0 0
      %670 = vmatpush1.bf16.msra.mxu0 0
      %671 = vmatprep.subr.bf16.mxu0 0
      %672 = vmatpush1.bf16.msra.mxu0 %v655
      %673 = vmatprep.subr.bf16.mxu0 0
      %674 = vmatpush2.bf16.msra.mxu0 0
      %675 = vmatprep.subr.bf16.mxu0 0
      %676 = vmatpush2.bf16.msra.mxu0 0
      %677 = vmatprep.subr.bf16.mxu0 0
      %678 = vmatpush2.bf16.msra.mxu0 0
      %679 = vmatprep.subr.bf16.mxu0 0
      %680 = vmatpush2.bf16.msra.mxu0 0
      %681 = vmatprep.subr.bf16.mxu0 0
      %682 = vmatpush2.bf16.msra.mxu0 0
      %683 = vmatprep.subr.bf16.mxu0 0
      %684 = vmatpush2.bf16.msra.mxu0 0
      %685 = vmatprep.subr.bf16.mxu0 0
      %686 = vmatpush2.bf16.msra.mxu0 0
      %687 = vmatprep.subr.bf16.mxu0 0
      %688 = vmatpush2.bf16.msra.mxu0 0
      %689 = vmatprep.mubr.bf16.mxu0 0
      %690 = vmatmul.mubr.bf16.gmra.mxu0 %v640
      %v691 = vpop.f32.mrf.mxu0
      %v692 = vadd.f32 0.0, %v691
      %v693 = vpop.f32.mrf.mxu0
      %v694 = vpop.f32.mrf.mxu0
      %v695 = vadd.f32 0.0, %v694
      %v696 = vpop.f32.mrf.mxu0
      %697 = vmatprep.mubr.bf16.mxu0 0
      %698 = vmatmul.mubr.bf16.gmra.mxu0 %v643
      %v699 = vpop.f32.mrf.mxu0
      %v700 = vadd.f32 0.0, %v699
      %v701 = vpop.f32.mrf.mxu0
      %v702 = vpop.f32.mrf.mxu0
      %v703 = vadd.f32 0.0, %v702
      %v704 = vpop.f32.mrf.mxu0
      %705 = vmatprep.mubr.bf16.mxu0 0
      %706 = vmatmul.mubr.bf16.gmra.mxu0 %v646
      %v707 = vpop.f32.mrf.mxu0
      %v708 = vadd.f32 0.0, %v707
      %v709 = vpop.f32.mrf.mxu0
      %v710 = vpop.f32.mrf.mxu0
      %v711 = vadd.f32 0.0, %v710
      %v712 = vpop.f32.mrf.mxu0
      %713 = vmatprep.mubr.bf16.mxu0 0
      %714 = vmatmul.mubr.bf16.gmra.mxu0 %v649
      %v715 = vpop.f32.mrf.mxu0
      %v716 = vadd.f32 0.0, %v715
      %v717 = vpop.f32.mrf.mxu0
      %v718 = vpop.f32.mrf.mxu0
      %v719 = vadd.f32 0.0, %v718
      %v720 = vpop.f32.mrf.mxu0
      %721 = vmatprep.mubr.bf16.mxu0 0
      %722 = vmatmul.mubr.bf16.gmra.mxu0 %v652
      %v723 = vpop.f32.mrf.mxu0
      %v724 = vadd.f32 0.0, %v723
      %v725 = vpop.f32.mrf.mxu0
      %v726 = vpop.f32.mrf.mxu0
      %v727 = vpop.f32.mrf.mxu0
      %728 = vdwg.mxu0
      %v729 = vadd.f32 %v613, %v692
      %v730 = vadd.f32 %v614, %v695
      %v731 = vadd.f32 %v615, %v700
      %v732 = vadd.f32 %v616, %v703
      %v733 = vadd.f32 %v617, %v708
      %v734 = vadd.f32 %v618, %v711
      %v735 = vadd.f32 %v619, %v716
      %v736 = vadd.f32 %v620, %v719
      %v737 = vadd.f32 %v621, %v724
      %v738 = vld [vmem:[%s506 + $0x1] sm:$0xff]
      %v739 = vld [vmem:[%s506 + $0x9] sm:$0xff]
      %v740 = vld [vmem:[%s506 + $0x11] sm:$0xff]
      %v741 = vld [vmem:[%s506 + $0x19] sm:$0xff]
      %v742 = vld [vmem:[%s506 + $0x21] sm:$0xff]
      %v743 = vld [vmem:[%s506 + $0x29] sm:$0xff]
      %v744 = vld [vmem:[%s506 + $0x31] sm:$0xff]
      %v745 = vld [vmem:[%s506 + $0x39] sm:$0xff]
      %v746 = vld [vmem:[%s506 + $0x41] sm:$0xff]
      %v747 = vpack.c.bf16 %v739, %v738
      %v748 = vpack.c.bf16 %v741, %v740
      %v749 = vpack.c.bf16 %v743, %v742
      %v750 = vpack.c.bf16 %v745, %v744
      %v751 = vpack.c.bf16 %v746, %v746
      %s752 = scalar_lea.vmem %s1, 10
      %v753 = vld [vmem:[%s752] sm:$0x3]
      %v755 = vsel %vm209, %v747, 0
      %v758 = vsel %vm209, %v748, 0
      %v761 = vsel %vm209, %v749, 0
      %v764 = vsel %vm209, %v750, 0
      %v767 = vsel %vm209, %v751, 0
      %v770 = vsel %vm225, %v753, 0
      %772 = vmatprep.subr.bf16.mxu0 0
      %773 = vmatpush1.bf16.msra.mxu0 0
      %774 = vmatprep.subr.bf16.mxu0 0
      %775 = vmatpush1.bf16.msra.mxu0 0
      %776 = vmatprep.subr.bf16.mxu0 0
      %777 = vmatpush1.bf16.msra.mxu0 0
      %778 = vmatprep.subr.bf16.mxu0 0
      %779 = vmatpush1.bf16.msra.mxu0 0
      %780 = vmatprep.subr.bf16.mxu0 0
      %781 = vmatpush1.bf16.msra.mxu0 0
      %782 = vmatprep.subr.bf16.mxu0 0
      %783 = vmatpush1.bf16.msra.mxu0 0
      %784 = vmatprep.subr.bf16.mxu0 0
      %785 = vmatpush1.bf16.msra.mxu0 0
      %786 = vmatprep.subr.bf16.mxu0 0
      %787 = vmatpush1.bf16.msra.mxu0 %v770
      %788 = vmatprep.subr.bf16.mxu0 0
      %789 = vmatpush2.bf16.msra.mxu0 0
      %790 = vmatprep.subr.bf16.mxu0 0
      %791 = vmatpush2.bf16.msra.mxu0 0
      %792 = vmatprep.subr.bf16.mxu0 0
      %793 = vmatpush2.bf16.msra.mxu0 0
      %794 = vmatprep.subr.bf16.mxu0 0
      %795 = vmatpush2.bf16.msra.mxu0 0
      %796 = vmatprep.subr.bf16.mxu0 0
      %797 = vmatpush2.bf16.msra.mxu0 0
      %798 = vmatprep.subr.bf16.mxu0 0
      %799 = vmatpush2.bf16.msra.mxu0 0
      %800 = vmatprep.subr.bf16.mxu0 0
      %801 = vmatpush2.bf16.msra.mxu0 0
      %802 = vmatprep.subr.bf16.mxu0 0
      %803 = vmatpush2.bf16.msra.mxu0 0
      %804 = vmatprep.mubr.bf16.mxu0 0
      %805 = vmatmul.mubr.bf16.gmra.mxu0 %v755
      %v806 = vpop.f32.mrf.mxu0
      %v807 = vadd.f32 0.0, %v806
      %v808 = vpop.f32.mrf.mxu0
      %v809 = vpop.f32.mrf.mxu0
      %v810 = vadd.f32 0.0, %v809
      %v811 = vpop.f32.mrf.mxu0
      %812 = vmatprep.mubr.bf16.mxu0 0
      %813 = vmatmul.mubr.bf16.gmra.mxu0 %v758
      %v814 = vpop.f32.mrf.mxu0
      %v815 = vadd.f32 0.0, %v814
      %v816 = vpop.f32.mrf.mxu0
      %v817 = vpop.f32.mrf.mxu0
      %v818 = vadd.f32 0.0, %v817
      %v819 = vpop.f32.mrf.mxu0
      %820 = vmatprep.mubr.bf16.mxu0 0
      %821 = vmatmul.mubr.bf16.gmra.mxu0 %v761
      %v822 = vpop.f32.mrf.mxu0
      %v823 = vadd.f32 0.0, %v822
      %v824 = vpop.f32.mrf.mxu0
      %v825 = vpop.f32.mrf.mxu0
      %v826 = vadd.f32 0.0, %v825
      %v827 = vpop.f32.mrf.mxu0
      %828 = vmatprep.mubr.bf16.mxu0 0
      %829 = vmatmul.mubr.bf16.gmra.mxu0 %v764
      %v830 = vpop.f32.mrf.mxu0
      %v831 = vadd.f32 0.0, %v830
      %v832 = vpop.f32.mrf.mxu0
      %v833 = vpop.f32.mrf.mxu0
      %v834 = vadd.f32 0.0, %v833
      %v835 = vpop.f32.mrf.mxu0
      %836 = vmatprep.mubr.bf16.mxu0 0
      %837 = vmatmul.mubr.bf16.gmra.mxu0 %v767
      %v838 = vpop.f32.mrf.mxu0
      %v839 = vadd.f32 0.0, %v838
      %v840 = vpop.f32.mrf.mxu0
      %v841 = vpop.f32.mrf.mxu0
      %v842 = vpop.f32.mrf.mxu0
      %843 = vdwg.mxu0
      %v844 = vadd.f32 %v729, %v807
      %v845 = vadd.f32 %v730, %v810
      %v846 = vadd.f32 %v731, %v815
      %v847 = vadd.f32 %v732, %v818
      %v848 = vadd.f32 %v733, %v823
      %v849 = vadd.f32 %v734, %v826
      %v850 = vadd.f32 %v735, %v831
      %v851 = vadd.f32 %v736, %v834
      %v852 = vadd.f32 %v737, %v839
      %v853 = vld [vmem:[%s169 + $0x9] sm:$0xff]
      %v854 = vld [vmem:[%s169 + $0x11] sm:$0xff]
      %v855 = vld [vmem:[%s169 + $0x19] sm:$0xff]
      %v856 = vld [vmem:[%s169 + $0x21] sm:$0xff]
      %v857 = vld [vmem:[%s169 + $0x29] sm:$0xff]
      %v858 = vld [vmem:[%s169 + $0x31] sm:$0xff]
      %v859 = vld [vmem:[%s169 + $0x39] sm:$0xff]
      %v860 = vld [vmem:[%s169 + $0x41] sm:$0xff]
      %v861 = vld [vmem:[%s169 + $0x49] sm:$0xff]
      %v862 = vpack.c.bf16 %v854, %v853
      %v863 = vpack.c.bf16 %v856, %v855
      %v864 = vpack.c.bf16 %v858, %v857
      %v865 = vpack.c.bf16 %v860, %v859
      %v866 = vpack.c.bf16 %v861, %v861
      %s867 = scalar_lea.vmem %s1, 12
      %v868 = vld [vmem:[%s867] sm:$0x3]
      %v870 = vsel %vm209, %v862, 0
      %v873 = vsel %vm209, %v863, 0
      %v876 = vsel %vm209, %v864, 0
      %v879 = vsel %vm209, %v865, 0
      %v882 = vsel %vm209, %v866, 0
      %v885 = vsel %vm225, %v868, 0
      %887 = vmatprep.subr.bf16.mxu0 0
      %888 = vmatpush1.bf16.msra.mxu0 0
      %889 = vmatprep.subr.bf16.mxu0 0
      %890 = vmatpush1.bf16.msra.mxu0 0
      %891 = vmatprep.subr.bf16.mxu0 0
      %892 = vmatpush1.bf16.msra.mxu0 0
      %893 = vmatprep.subr.bf16.mxu0 0
      %894 = vmatpush1.bf16.msra.mxu0 0
      %895 = vmatprep.subr.bf16.mxu0 0
      %896 = vmatpush1.bf16.msra.mxu0 0
      %897 = vmatprep.subr.bf16.mxu0 0
      %898 = vmatpush1.bf16.msra.mxu0 0
      %899 = vmatprep.subr.bf16.mxu0 0
      %900 = vmatpush1.bf16.msra.mxu0 0
      %901 = vmatprep.subr.bf16.mxu0 0
      %902 = vmatpush1.bf16.msra.mxu0 %v885
      %903 = vmatprep.subr.bf16.mxu0 0
      %904 = vmatpush2.bf16.msra.mxu0 0
      %905 = vmatprep.subr.bf16.mxu0 0
      %906 = vmatpush2.bf16.msra.mxu0 0
      %907 = vmatprep.subr.bf16.mxu0 0
      %908 = vmatpush2.bf16.msra.mxu0 0
      %909 = vmatprep.subr.bf16.mxu0 0
      %910 = vmatpush2.bf16.msra.mxu0 0
      %911 = vmatprep.subr.bf16.mxu0 0
      %912 = vmatpush2.bf16.msra.mxu0 0
      %913 = vmatprep.subr.bf16.mxu0 0
      %914 = vmatpush2.bf16.msra.mxu0 0
      %915 = vmatprep.subr.bf16.mxu0 0
      %916 = vmatpush2.bf16.msra.mxu0 0
      %917 = vmatprep.subr.bf16.mxu0 0
      %918 = vmatpush2.bf16.msra.mxu0 0
      %919 = vmatprep.mubr.bf16.mxu0 0
      %920 = vmatmul.mubr.bf16.gmra.mxu0 %v870
      %v921 = vpop.f32.mrf.mxu0
      %v922 = vadd.f32 0.0, %v921
      %v923 = vpop.f32.mrf.mxu0
      %v924 = vpop.f32.mrf.mxu0
      %v925 = vadd.f32 0.0, %v924
      %v926 = vpop.f32.mrf.mxu0
      %927 = vmatprep.mubr.bf16.mxu0 0
      %928 = vmatmul.mubr.bf16.gmra.mxu0 %v873
      %v929 = vpop.f32.mrf.mxu0
      %v930 = vadd.f32 0.0, %v929
      %v931 = vpop.f32.mrf.mxu0
      %v932 = vpop.f32.mrf.mxu0
      %v933 = vadd.f32 0.0, %v932
      %v934 = vpop.f32.mrf.mxu0
      %935 = vmatprep.mubr.bf16.mxu0 0
      %936 = vmatmul.mubr.bf16.gmra.mxu0 %v876
      %v937 = vpop.f32.mrf.mxu0
      %v938 = vadd.f32 0.0, %v937
      %v939 = vpop.f32.mrf.mxu0
      %v940 = vpop.f32.mrf.mxu0
      %v941 = vadd.f32 0.0, %v940
      %v942 = vpop.f32.mrf.mxu0
      %943 = vmatprep.mubr.bf16.mxu0 0
      %944 = vmatmul.mubr.bf16.gmra.mxu0 %v879
      %v945 = vpop.f32.mrf.mxu0
      %v946 = vadd.f32 0.0, %v945
      %v947 = vpop.f32.mrf.mxu0
      %v948 = vpop.f32.mrf.mxu0
      %v949 = vadd.f32 0.0, %v948
      %v950 = vpop.f32.mrf.mxu0
      %951 = vmatprep.mubr.bf16.mxu0 0
      %952 = vmatmul.mubr.bf16.gmra.mxu0 %v882
      %v953 = vpop.f32.mrf.mxu0
      %v954 = vadd.f32 0.0, %v953
      %v955 = vpop.f32.mrf.mxu0
      %v956 = vpop.f32.mrf.mxu0
      %v957 = vpop.f32.mrf.mxu0
      %958 = vdwg.mxu0
      %v959 = vadd.f32 %v844, %v922
      %v960 = vadd.f32 %v845, %v925
      %v961 = vadd.f32 %v846, %v930
      %v962 = vadd.f32 %v847, %v933
      %v963 = vadd.f32 %v848, %v938
      %v964 = vadd.f32 %v849, %v941
      %v965 = vadd.f32 %v850, %v946
      %v966 = vadd.f32 %v851, %v949
      %v967 = vadd.f32 %v852, %v954
      %v968 = vld [vmem:[%s192 + $0x9] sm:$0xff]
      %v969 = vld [vmem:[%s192 + $0x11] sm:$0xff]
      %v970 = vld [vmem:[%s192 + $0x19] sm:$0xff]
      %v971 = vld [vmem:[%s192 + $0x21] sm:$0xff]
      %v972 = vld [vmem:[%s192 + $0x29] sm:$0xff]
      %v973 = vld [vmem:[%s192 + $0x31] sm:$0xff]
      %v974 = vld [vmem:[%s192 + $0x39] sm:$0xff]
      %v975 = vld [vmem:[%s192 + $0x41] sm:$0xff]
      %v976 = vld [vmem:[%s192 + $0x49] sm:$0xff]
      %v977 = vpack.c.bf16 %v969, %v968
      %v978 = vpack.c.bf16 %v971, %v970
      %v979 = vpack.c.bf16 %v973, %v972
      %v980 = vpack.c.bf16 %v975, %v974
      %v981 = vpack.c.bf16 %v976, %v976
      %s982 = scalar_lea.vmem %s1, 14
      %v983 = vld [vmem:[%s982] sm:$0x3]
      %v985 = vsel %vm209, %v977, 0
      %v988 = vsel %vm209, %v978, 0
      %v991 = vsel %vm209, %v979, 0
      %v994 = vsel %vm209, %v980, 0
      %v997 = vsel %vm209, %v981, 0
      %v1000 = vsel %vm225, %v983, 0
      %1002 = vmatprep.subr.bf16.mxu0 0
      %1003 = vmatpush1.bf16.msra.mxu0 0
      %1004 = vmatprep.subr.bf16.mxu0 0
      %1005 = vmatpush1.bf16.msra.mxu0 0
      %1006 = vmatprep.subr.bf16.mxu0 0
      %1007 = vmatpush1.bf16.msra.mxu0 0
      %1008 = vmatprep.subr.bf16.mxu0 0
      %1009 = vmatpush1.bf16.msra.mxu0 0
      %1010 = vmatprep.subr.bf16.mxu0 0
      %1011 = vmatpush1.bf16.msra.mxu0 0
      %1012 = vmatprep.subr.bf16.mxu0 0
      %1013 = vmatpush1.bf16.msra.mxu0 0
      %1014 = vmatprep.subr.bf16.mxu0 0
      %1015 = vmatpush1.bf16.msra.mxu0 0
      %1016 = vmatprep.subr.bf16.mxu0 0
      %1017 = vmatpush1.bf16.msra.mxu0 %v1000
      %1018 = vmatprep.subr.bf16.mxu0 0
      %1019 = vmatpush2.bf16.msra.mxu0 0
      %1020 = vmatprep.subr.bf16.mxu0 0
      %1021 = vmatpush2.bf16.msra.mxu0 0
      %1022 = vmatprep.subr.bf16.mxu0 0
      %1023 = vmatpush2.bf16.msra.mxu0 0
      %1024 = vmatprep.subr.bf16.mxu0 0
      %1025 = vmatpush2.bf16.msra.mxu0 0
      %1026 = vmatprep.subr.bf16.mxu0 0
      %1027 = vmatpush2.bf16.msra.mxu0 0
      %1028 = vmatprep.subr.bf16.mxu0 0
      %1029 = vmatpush2.bf16.msra.mxu0 0
      %1030 = vmatprep.subr.bf16.mxu0 0
      %1031 = vmatpush2.bf16.msra.mxu0 0
      %1032 = vmatprep.subr.bf16.mxu0 0
      %1033 = vmatpush2.bf16.msra.mxu0 0
      %1034 = vmatprep.mubr.bf16.mxu0 0
      %1035 = vmatmul.mubr.bf16.gmra.mxu0 %v985
      %v1036 = vpop.f32.mrf.mxu0
      %v1037 = vadd.f32 0.0, %v1036
      %v1038 = vpop.f32.mrf.mxu0
      %v1039 = vpop.f32.mrf.mxu0
      %v1040 = vadd.f32 0.0, %v1039
      %v1041 = vpop.f32.mrf.mxu0
      %1042 = vmatprep.mubr.bf16.mxu0 0
      %1043 = vmatmul.mubr.bf16.gmra.mxu0 %v988
      %v1044 = vpop.f32.mrf.mxu0
      %v1045 = vadd.f32 0.0, %v1044
      %v1046 = vpop.f32.mrf.mxu0
      %v1047 = vpop.f32.mrf.mxu0
      %v1048 = vadd.f32 0.0, %v1047
      %v1049 = vpop.f32.mrf.mxu0
      %1050 = vmatprep.mubr.bf16.mxu0 0
      %1051 = vmatmul.mubr.bf16.gmra.mxu0 %v991
      %v1052 = vpop.f32.mrf.mxu0
      %v1053 = vadd.f32 0.0, %v1052
      %v1054 = vpop.f32.mrf.mxu0
      %v1055 = vpop.f32.mrf.mxu0
      %v1056 = vadd.f32 0.0, %v1055
      %v1057 = vpop.f32.mrf.mxu0
      %1058 = vmatprep.mubr.bf16.mxu0 0
      %1059 = vmatmul.mubr.bf16.gmra.mxu0 %v994
      %v1060 = vpop.f32.mrf.mxu0
      %v1061 = vadd.f32 0.0, %v1060
      %v1062 = vpop.f32.mrf.mxu0
      %v1063 = vpop.f32.mrf.mxu0
      %v1064 = vadd.f32 0.0, %v1063
      %v1065 = vpop.f32.mrf.mxu0
      %1066 = vmatprep.mubr.bf16.mxu0 0
      %1067 = vmatmul.mubr.bf16.gmra.mxu0 %v997
      %v1068 = vpop.f32.mrf.mxu0
      %v1069 = vadd.f32 0.0, %v1068
      %v1070 = vpop.f32.mrf.mxu0
      %v1071 = vpop.f32.mrf.mxu0
      %v1072 = vpop.f32.mrf.mxu0
      %1073 = vdwg.mxu0
      %v1074 = vadd.f32 %v959, %v1037
      %v1075 = vadd.f32 %v960, %v1040
      %v1076 = vadd.f32 %v961, %v1045
      %v1077 = vadd.f32 %v962, %v1048
      %v1078 = vadd.f32 %v963, %v1053
      %v1079 = vadd.f32 %v964, %v1056
      %v1080 = vadd.f32 %v965, %v1061
      %v1081 = vadd.f32 %v966, %v1064
      %v1082 = vadd.f32 %v967, %v1069
      %v1083 = vld [vmem:[%s169 + $0xa] sm:$0xff]
      %v1084 = vld [vmem:[%s169 + $0x12] sm:$0xff]
      %v1085 = vld [vmem:[%s169 + $0x1a] sm:$0xff]
      %v1086 = vld [vmem:[%s169 + $0x22] sm:$0xff]
      %v1087 = vld [vmem:[%s169 + $0x2a] sm:$0xff]
      %v1088 = vld [vmem:[%s169 + $0x32] sm:$0xff]
      %v1089 = vld [vmem:[%s169 + $0x3a] sm:$0xff]
      %v1090 = vld [vmem:[%s169 + $0x42] sm:$0xff]
      %v1091 = vld [vmem:[%s169 + $0x4a] sm:$0xff]
      %v1092 = vpack.c.bf16 %v1084, %v1083
      %v1093 = vpack.c.bf16 %v1086, %v1085
      %v1094 = vpack.c.bf16 %v1088, %v1087
      %v1095 = vpack.c.bf16 %v1090, %v1089
      %v1096 = vpack.c.bf16 %v1091, %v1091
      %s1097 = scalar_lea.vmem %s1, 16
      %v1098 = vld [vmem:[%s1097] sm:$0x3]
      %v1100 = vsel %vm209, %v1092, 0
      %v1103 = vsel %vm209, %v1093, 0
      %v1106 = vsel %vm209, %v1094, 0
      %v1109 = vsel %vm209, %v1095, 0
      %v1112 = vsel %vm209, %v1096, 0
      %v1115 = vsel %vm225, %v1098, 0
      %1117 = vmatprep.subr.bf16.mxu0 0
      %1118 = vmatpush1.bf16.msra.mxu0 0
      %1119 = vmatprep.subr.bf16.mxu0 0
      %1120 = vmatpush1.bf16.msra.mxu0 0
      %1121 = vmatprep.subr.bf16.mxu0 0
      %1122 = vmatpush1.bf16.msra.mxu0 0
      %1123 = vmatprep.subr.bf16.mxu0 0
      %1124 = vmatpush1.bf16.msra.mxu0 0
      %1125 = vmatprep.subr.bf16.mxu0 0
      %1126 = vmatpush1.bf16.msra.mxu0 0
      %1127 = vmatprep.subr.bf16.mxu0 0
      %1128 = vmatpush1.bf16.msra.mxu0 0
      %1129 = vmatprep.subr.bf16.mxu0 0
      %1130 = vmatpush1.bf16.msra.mxu0 0
      %1131 = vmatprep.subr.bf16.mxu0 0
      %1132 = vmatpush1.bf16.msra.mxu0 %v1115
      %1133 = vmatprep.subr.bf16.mxu0 0
      %1134 = vmatpush2.bf16.msra.mxu0 0
      %1135 = vmatprep.subr.bf16.mxu0 0
      %1136 = vmatpush2.bf16.msra.mxu0 0
      %1137 = vmatprep.subr.bf16.mxu0 0
      %1138 = vmatpush2.bf16.msra.mxu0 0
      %1139 = vmatprep.subr.bf16.mxu0 0
      %1140 = vmatpush2.bf16.msra.mxu0 0
      %1141 = vmatprep.subr.bf16.mxu0 0
      %1142 = vmatpush2.bf16.msra.mxu0 0
      %1143 = vmatprep.subr.bf16.mxu0 0
      %1144 = vmatpush2.bf16.msra.mxu0 0
      %1145 = vmatprep.subr.bf16.mxu0 0
      %1146 = vmatpush2.bf16.msra.mxu0 0
      %1147 = vmatprep.subr.bf16.mxu0 0
      %1148 = vmatpush2.bf16.msra.mxu0 0
      %1149 = vmatprep.mubr.bf16.mxu0 0
      %1150 = vmatmul.mubr.bf16.gmra.mxu0 %v1100
      %v1151 = vpop.f32.mrf.mxu0
      %v1152 = vadd.f32 0.0, %v1151
      %v1153 = vpop.f32.mrf.mxu0
      %v1154 = vpop.f32.mrf.mxu0
      %v1155 = vadd.f32 0.0, %v1154
      %v1156 = vpop.f32.mrf.mxu0
      %1157 = vmatprep.mubr.bf16.mxu0 0
      %1158 = vmatmul.mubr.bf16.gmra.mxu0 %v1103
      %v1159 = vpop.f32.mrf.mxu0
      %v1160 = vadd.f32 0.0, %v1159
      %v1161 = vpop.f32.mrf.mxu0
      %v1162 = vpop.f32.mrf.mxu0
      %v1163 = vadd.f32 0.0, %v1162
      %v1164 = vpop.f32.mrf.mxu0
      %1165 = vmatprep.mubr.bf16.mxu0 0
      %1166 = vmatmul.mubr.bf16.gmra.mxu0 %v1106
      %v1167 = vpop.f32.mrf.mxu0
      %v1168 = vadd.f32 0.0, %v1167
      %v1169 = vpop.f32.mrf.mxu0
      %v1170 = vpop.f32.mrf.mxu0
      %v1171 = vadd.f32 0.0, %v1170
      %v1172 = vpop.f32.mrf.mxu0
      %1173 = vmatprep.mubr.bf16.mxu0 0
      %1174 = vmatmul.mubr.bf16.gmra.mxu0 %v1109
      %v1175 = vpop.f32.mrf.mxu0
      %v1176 = vadd.f32 0.0, %v1175
      %v1177 = vpop.f32.mrf.mxu0
      %v1178 = vpop.f32.mrf.mxu0
      %v1179 = vadd.f32 0.0, %v1178
      %v1180 = vpop.f32.mrf.mxu0
      %1181 = vmatprep.mubr.bf16.mxu0 0
      %1182 = vmatmul.mubr.bf16.gmra.mxu0 %v1112
      %v1183 = vpop.f32.mrf.mxu0
      %v1184 = vadd.f32 0.0, %v1183
      %v1185 = vpop.f32.mrf.mxu0
      %v1186 = vpop.f32.mrf.mxu0
      %v1187 = vpop.f32.mrf.mxu0
      %1188 = vdwg.mxu0
      %v1189 = vadd.f32 %v1074, %v1152
      %v1190 = vadd.f32 %v1075, %v1155
      %v1191 = vadd.f32 %v1076, %v1160
      %v1192 = vadd.f32 %v1077, %v1163
      %v1193 = vadd.f32 %v1078, %v1168
      %v1194 = vadd.f32 %v1079, %v1171
      %v1195 = vadd.f32 %v1080, %v1176
      %v1196 = vadd.f32 %v1081, %v1179
      %v1197 = vadd.f32 %v1082, %v1184
      %v1198 = vld [vmem:[%s2] sm:$0x1]
      %v1200 = vlaneseq
      %v1201 = vshrl.u32 %v1200, 7
      %v1202 = vsub.s32 0, %v1201
      %v1203 = vrot.slane %v1198, %v1202
      %v1205 = vadd.f32 %v1189, %v1203
      %v1206 = vadd.f32 %v1190, %v1203
      %v1207 = vadd.f32 %v1191, %v1203
      %v1208 = vadd.f32 %v1192, %v1203
      %v1209 = vadd.f32 %v1193, %v1203
      %v1210 = vadd.f32 %v1194, %v1203
      %v1211 = vadd.f32 %v1195, %v1203
      %v1212 = vadd.f32 %v1196, %v1203
      %v1213 = vadd.f32 %v1197, %v1203
      %v1214 = vmax.f32 %v1205, 0.0
      %v1215 = vmax.f32 %v1206, 0.0
      %v1216 = vmax.f32 %v1207, 0.0
      %v1217 = vmax.f32 %v1208, 0.0
      %v1218 = vmax.f32 %v1209, 0.0
      %v1219 = vmax.f32 %v1210, 0.0
      %v1220 = vmax.f32 %v1211, 0.0
      %v1221 = vmax.f32 %v1212, 0.0
      %v1222 = vmax.f32 %v1213, 0.0
      %1223 = vst [vmem:[%s175] sm:$0xff] %v1214
      %1224 = vst [vmem:[%s175 + $0x8] sm:$0xff] %v1215
      %1225 = vst [vmem:[%s175 + $0x10] sm:$0xff] %v1216
      %1226 = vst [vmem:[%s175 + $0x18] sm:$0xff] %v1217
      %1227 = vst [vmem:[%s175 + $0x20] sm:$0xff] %v1218
      %1228 = vst [vmem:[%s175 + $0x28] sm:$0xff] %v1219
      %1229 = vst [vmem:[%s175 + $0x30] sm:$0xff] %v1220
      %1230 = vst [vmem:[%s175 + $0x38] sm:$0xff] %v1221
      %1231 = vst [vmem:[%s175 + $0x40] sm:$0xff] %v1222
      %p1232 = scmp.lt.s32.totalorder %s14, 1
      %s1233 = scalar_select %p1232, %s14, 1
      %s1234 = smul.addr %s1233, 9
      %s1235 = smul.addr %s1234, 8
      %s1236 = scalar_lea.vmem %s3, %s1235
      // Predicated region
      $region33: #{backbone_as_unet_forward.10} parent=31 // pred_check
        %p1237 = pneg %p100
      $region34: #{backbone_as_unet_forward.10} parent=31 // pred_check_branch
        %1239 = sbr.rel (%p1237) target = $region36
      $region35: #{backbone_as_unet_forward.10} parent=31 // pred_region
        _
      $region36: #{backbone_as_unet_forward.10} parent=31 // pred_fallthru
        _
    $region32: #{backbone_as_unet_forward.10} parent=5 // pred_fallthru
      _
    %p1240 = scmp.le.s32.totalorder 2, %s9
    // Predicated region
    $region37: #{backbone_as_unet_forward.10} parent=5 // pred_check
      %p1241 = pneg %p1240
    $region38: #{backbone_as_unet_forward.10} parent=5 // pred_check_branch
      %1243 = sbr.rel (%p1241) target = $region40
    $region39: #{backbone_as_unet_forward.10} parent=5 // pred_region
      %s1244 = ssub.s32 %s9, 2
      // Predicated region
      $region41: #{backbone_as_unet_forward.10} parent=39 // pred_check
        %p1245 = pneg %p106
      $region42: #{backbone_as_unet_forward.10} parent=39 // pred_check_branch
        %1247 = sbr.rel (%p1245) target = $region44
      $region43: #{backbone_as_unet_forward.10} parent=39 // pred_region
        %p1248 = scmp.lt.s32.totalorder %s15, 1
        %s1249 = scalar_select %p1248, %s15, 1
        %s1250 = smul.addr %s1249, 9
        %s1251 = smul.addr %s1250, 8
        %s1252 = scalar_lea.vmem %s3, %s1251
      $region44: #{backbone_as_unet_forward.10} parent=39 // pred_fallthru
        _
    $region40: #{backbone_as_unet_forward.10} parent=5 // pred_fallthru
      _
  $region6: #{backbone_as_unet_forward.10} parent=0 // loop_footer
    %s13 = sadd.s32 1, %s9
  $region7: #{backbone_as_unet_forward.10} parent=0 // loop_footer_branch
    %8 = sbr.rel target = $region3
  $region8: #{backbone_as_unet_forward.10} parent=0 // loop_exit
    _

// kernel: backbone_as_unet_forward.11
$region0: #{backbone_as_unet_forward.11}
  #allocation0 [shape = 'u32[]', space=smem, size = 0x4, offset = 0x4, fixed_abs, tag = 'smem constant byte address 0x4 - core index']
  #allocation1 [shape = 'u32[144,128]{1,0:T(1,128)}', space=vmem, size = 0x12000, scoped, tag = 'internal scratch']
  %s0 = inlined_call_operand.vmem [shape: f32[8,26,8], index: 0, kind: input, shape index: {}]
  %s1 = inlined_call_operand.vmem [shape: bf16[9,8,128], index: 1, kind: input, shape index: {}]
  %s2 = inlined_call_operand.vmem [shape: f32[1,128], index: 2, kind: input, shape index: {}]
  %s3 = inlined_call_operand.vmem [shape: f32[2,20,128], index: 3, kind: output, shape index: {}]
  %s4 = sld [smem:[#allocation0]]
  $region45: #{backbone_as_unet_forward.11} parent=0
    _
  %s6 = ssub.s32 1, %s4
  %s7 = scalar_select 0, %s6, %s4
  loop: start=0, step=1, limit=4
  $region2: #{backbone_as_unet_forward.11} parent=0 // loop_pre_header
    _
  $region3: #{backbone_as_unet_forward.11} parent=0 // loop_header
    %s9 = sphi 0, %s13
    %p10 = scmp.ge.s32.totalorder %s9, 4
    %s19 = sphi 0, %s21
    %s22 = sphi 0, %s19
    %s23 = sphi 0, %s22
    %s39 = sphi 0, %s23
    %s43 = sphi 0, %s43
    %s45 = sphi 0, %s43
    %s46 = sphi 0, %s45
    %s60 = sphi 0, %s46
    %s64 = sphi 0, %s64
    %s66 = sphi 0, %s64
    %s67 = sphi 0, %s66
    %s81 = sphi 0, %s67
    %s87 = sphi 0, %s89
    %s90 = sphi 0, %s87
    %s91 = sphi 0, %s90
    %s107 = sphi 0, %s91
  $region4: #{backbone_as_unet_forward.11} parent=0 // loop_header_branch
    %12 = sbr.rel (%p10) target = $region8
  $region5: #{backbone_as_unet_forward.11} parent=0 // loop_body
    %s14 = ssub.s32 %s9, 1
    %s15 = ssub.s32 %s9, 2
    %s16 = sadd.s32 %s9, 1
    %s17 = ssub.s32 %s9, %s16
    %p18 = scmp.eq.s32.totalorder %s17, 0
    %s20 = sadd.s32 %s19, 1
    %s21 = scalar_select %p18, %s19, %s20
    %p24 = pneg %p18
    %p25 = scmp.eq.s32.totalorder %s9, 1
    %p26 = por %p24, %p25
    %p27 = scmp.ne.s32.totalorder %s19, %s22
    %p28 = scmp.eq.s32.totalorder %s9, 0
    %p29 = por %p27, %p28
    %p30 = scmp.ne.s32.totalorder %s19, %s22
    %p31 = scmp.eq.s32.totalorder %s14, 1
    %p32 = por %p30, %p31
    %p33 = scmp.ne.s32.totalorder %s22, %s23
    %p34 = scmp.eq.s32.totalorder %s14, 0
    %p35 = por %p33, %p34
    %p36 = scmp.ne.s32.totalorder %s22, %s23
    %p37 = scmp.eq.s32.totalorder %s15, 1
    %p38 = por %p36, %p37
    %p40 = scmp.ne.s32.totalorder %s23, %s39
    %p41 = scmp.eq.s32.totalorder %s15, 0
    %p42 = por %p40, %p41
    %s44 = sadd.s32 %s43, 1
    %p47 = scmp.eq.s32.totalorder %s9, 1
    %p48 = scmp.ne.s32.totalorder %s43, %s45
    %p49 = scmp.eq.s32.totalorder %s9, 0
    %p50 = por %p48, %p49
    %p51 = scmp.ne.s32.totalorder %s43, %s45
    %p52 = scmp.eq.s32.totalorder %s14, 1
    %p53 = por %p51, %p52
    %p54 = scmp.ne.s32.totalorder %s45, %s46
    %p55 = scmp.eq.s32.totalorder %s14, 0
    %p56 = por %p54, %p55
    %p57 = scmp.ne.s32.totalorder %s45, %s46
    %p58 = scmp.eq.s32.totalorder %s15, 1
    %p59 = por %p57, %p58
    %p61 = scmp.ne.s32.totalorder %s46, %s60
    %p62 = scmp.eq.s32.totalorder %s15, 0
    %p63 = por %p61, %p62
    %s65 = sadd.s32 %s64, 1
    %p68 = scmp.eq.s32.totalorder %s9, 1
    %p69 = scmp.ne.s32.totalorder %s64, %s66
    %p70 = scmp.eq.s32.totalorder %s9, 0
    %p71 = por %p69, %p70
    %p72 = scmp.ne.s32.totalorder %s64, %s66
    %p73 = scmp.eq.s32.totalorder %s14, 1
    %p74 = por %p72, %p73
    %p75 = scmp.ne.s32.totalorder %s66, %s67
    %p76 = scmp.eq.s32.totalorder %s14, 0
    %p77 = por %p75, %p76
    %p78 = scmp.ne.s32.totalorder %s66, %s67
    %p79 = scmp.eq.s32.totalorder %s15, 1
    %p80 = por %p78, %p79
    %p82 = scmp.ne.s32.totalorder %s67, %s81
    %p83 = scmp.eq.s32.totalorder %s15, 0
    %p84 = por %p82, %p83
    %s85 = ssub.s32 %s9, %s16
    %p86 = scmp.eq.s32.totalorder %s85, 0
    %s88 = sadd.s32 %s87, 1
    %s89 = scalar_select %p86, %s87, %s88
    %p92 = pneg %p86
    %p93 = scmp.eq.s32.totalorder %s9, 1
    %p94 = por %p92, %p93
    %p95 = scmp.ne.s32.totalorder %s87, %s90
    %p96 = scmp.eq.s32.totalorder %s9, 0
    %p97 = por %p95, %p96
    %p98 = scmp.ne.s32.totalorder %s87, %s90
    %p99 = scmp.eq.s32.totalorder %s14, 1
    %p100 = por %p98, %p99
    %p101 = scmp.ne.s32.totalorder %s90, %s91
    %p102 = scmp.eq.s32.totalorder %s14, 0
    %p103 = por %p101, %p102
    %p104 = scmp.ne.s32.totalorder %s90, %s91
    %p105 = scmp.eq.s32.totalorder %s15, 1
    %p106 = por %p104, %p105
    %p108 = scmp.ne.s32.totalorder %s91, %s107
    %p109 = scmp.eq.s32.totalorder %s15, 0
    %p110 = por %p108, %p109
    %p111 = scmp.le.s32.totalorder 1, %s9
    %p112 = scmp.lt.s32.totalorder %s9, 3
    %p113 = pnand %p111, %p112
    %p114 = pneg %p113
    // Predicated region
    $region9: #{backbone_as_unet_forward.11} parent=5 // pred_check
      _
    $region10: #{backbone_as_unet_forward.11} parent=5 // pred_check_branch
      %116 = sbr.rel (%p113) target = $region12
    $region11: #{backbone_as_unet_forward.11} parent=5 // pred_region
      %s117 = ssub.s32 %s9, 1
      // Predicated region
      $region13: #{backbone_as_unet_forward.11} parent=11 // pred_check
        %p118 = pneg %p56
      $region14: #{backbone_as_unet_forward.11} parent=11 // pred_check_branch
        %120 = sbr.rel (%p118) target = $region16
      $region15: #{backbone_as_unet_forward.11} parent=11 // pred_region
        _
      $region16: #{backbone_as_unet_forward.11} parent=11 // pred_fallthru
        _
      // Predicated region
      $region17: #{backbone_as_unet_forward.11} parent=11 // pred_check
        %p121 = pneg %p77
      $region18: #{backbone_as_unet_forward.11} parent=11 // pred_check_branch
        %123 = sbr.rel (%p121) target = $region20
      $region19: #{backbone_as_unet_forward.11} parent=11 // pred_region
        _
      $region20: #{backbone_as_unet_forward.11} parent=11 // pred_fallthru
        _
    $region12: #{backbone_as_unet_forward.11} parent=5 // pred_fallthru
      _
    %p124 = scmp.lt.s32.totalorder %s9, 2
    // Predicated region
    $region21: #{backbone_as_unet_forward.11} parent=5 // pred_check
      %p125 = pneg %p124
    $region22: #{backbone_as_unet_forward.11} parent=5 // pred_check_branch
      %127 = sbr.rel (%p125) target = $region24
    $region23: #{backbone_as_unet_forward.11} parent=5 // pred_region
      // Predicated region
      $region25: #{backbone_as_unet_forward.11} parent=23 // pred_check
        %p128 = pneg %p29
      $region26: #{backbone_as_unet_forward.11} parent=23 // pred_check_branch
        %130 = sbr.rel (%p128) target = $region28
      $region27: #{backbone_as_unet_forward.11} parent=23 // pred_region
        %s131 = smul.u32 4, %s9
        %p132 = scmp.lt.s32.totalorder %s131, 7
        %s133 = scalar_select %p132, %s131, 7
        %s134 = smul.addr %s133, 4
        %s135 = smul.addr %s134, 8
        %s136 = scalar_lea.vmem %s0, %s135
        %s137 = smul.u32 4, %s9
      $region28: #{backbone_as_unet_forward.11} parent=23 // pred_fallthru
        _
    $region24: #{backbone_as_unet_forward.11} parent=5 // pred_fallthru
      _
    %p138 = scmp.le.s32.totalorder 1, %s9
    %p139 = scmp.lt.s32.totalorder %s9, 3
    %p140 = pnand %p138, %p139
    %p141 = pneg %p140
    // Predicated region
    $region29: #{backbone_as_unet_forward.11} parent=5 // pred_check
      _
    $region30: #{backbone_as_unet_forward.11} parent=5 // pred_check_branch
      %143 = sbr.rel (%p140) target = $region32
    $region31: #{backbone_as_unet_forward.11} parent=5 // pred_region
      %s144 = ssub.s32 %s9, 1
      %s145 = smul.u32 4, %s14
      %p146 = scmp.lt.s32.totalorder %s145, 7
      %s147 = scalar_select %p146, %s145, 7
      %s148 = smul.addr %s147, 4
      %s149 = smul.addr %s148, 8
      %s150 = scalar_lea.vmem %s0, %s149
      %p151 = pneg %p35
      %p152 = pneg %p32
      %p153 = pneg %p56
      %p154 = pneg %p53
      %p155 = pneg %p77
      %p156 = pneg %p74
      %p157 = pneg %p103
      %p158 = pneg %p100
      %p159 = scmp.lt.s32.totalorder %s14, 1
      %s160 = scalar_select %p159, %s14, 1
      %s161 = smul.addr %s160, 3
      %s162 = smul.addr %s161, 8
      %s163 = scalar_lea.vmem %s3, %s162
      %s164 = smul.u32 4, %s14
      %p165 = scmp.lt.s32.totalorder %s164, 7
      %s166 = scalar_select %p165, %s164, 7
      %s167 = smul.addr %s166, 4
      %s168 = smul.addr %s167, 8
      %s169 = scalar_lea.vmem %s0, %s168
      %s170 = smul.u32 4, %s14
      %p171 = scmp.lt.s32.totalorder %s14, 1
      %s172 = scalar_select %p171, %s14, 1
      %s173 = smul.addr %s172, 3
      %s174 = smul.addr %s173, 8
      %s175 = scalar_lea.vmem %s3, %s174
      %v177 = vld [vmem:[%s169] sm:$0xff]
      %v178 = vld [vmem:[%s169 + $0x8] sm:$0xff]
      %v179 = vld [vmem:[%s169 + $0x10] sm:$0xf]
      %v180 = vpack.c.bf16 %v178, %v177
      %v181 = vpack.c.bf16 %v179, %v179
      %v182 = vld [vmem:[%s1] sm:$0xf]
      %s183 = scalar_lea.vmem %s169, 32
      %v184 = vld [vmem:[%s183] sm:$0xff]
      %v185 = vld [vmem:[%s183 + $0x8] sm:$0xff]
      %v186 = vld [vmem:[%s183 + $0x10] sm:$0xf]
      %v187 = vpack.c.bf16 %v185, %v184
      %v188 = vpack.c.bf16 %v186, %v186
      %s189 = scalar_lea.vmem %s1, 4
      %v190 = vld [vmem:[%s189] sm:$0xf]
      %vm191 = vcmask 64512
      %v193 = vsel %vm191, %v187, 0
      %v196 = vsel %vm191, %v188, 0
      %vm198 = vcmask 1043456
      %v200 = vsel %vm198, %v190, 0
      %202 = vmatprep.subr.bf16.mxu0 0
      %203 = vmatpush1.bf16.msra.mxu0 0
      %204 = vmatprep.subr.bf16.mxu0 0
      %205 = vmatpush1.bf16.msra.mxu0 0
      %206 = vmatprep.subr.bf16.mxu0 0
      %207 = vmatpush1.bf16.msra.mxu0 0
      %208 = vmatprep.subr.bf16.mxu0 0
      %209 = vmatpush1.bf16.msra.mxu0 0
      %210 = vmatprep.subr.bf16.mxu0 0
      %211 = vmatpush1.bf16.msra.mxu0 0
      %212 = vmatprep.subr.bf16.mxu0 0
      %213 = vmatpush1.bf16.msra.mxu0 0
      %214 = vmatprep.subr.bf16.mxu0 0
      %215 = vmatpush1.bf16.msra.mxu0 0
      %216 = vmatprep.subr.bf16.mxu0 0
      %217 = vmatpush1.bf16.msra.mxu0 %v200
      %218 = vmatprep.subr.bf16.mxu0 0
      %219 = vmatpush2.bf16.msra.mxu0 0
      %220 = vmatprep.subr.bf16.mxu0 0
      %221 = vmatpush2.bf16.msra.mxu0 0
      %222 = vmatprep.subr.bf16.mxu0 0
      %223 = vmatpush2.bf16.msra.mxu0 0
      %224 = vmatprep.subr.bf16.mxu0 0
      %225 = vmatpush2.bf16.msra.mxu0 0
      %226 = vmatprep.subr.bf16.mxu0 0
      %227 = vmatpush2.bf16.msra.mxu0 0
      %228 = vmatprep.subr.bf16.mxu0 0
      %229 = vmatpush2.bf16.msra.mxu0 0
      %230 = vmatprep.subr.bf16.mxu0 0
      %231 = vmatpush2.bf16.msra.mxu0 0
      %232 = vmatprep.subr.bf16.mxu0 0
      %233 = vmatpush2.bf16.msra.mxu0 0
      %234 = vmatprep.mubr.bf16.mxu0 0
      %235 = vmatmul.mubr.bf16.gmra.mxu0 %v193
      %v236 = vpop.f32.mrf.mxu0
      %v237 = vadd.f32 0.0, %v236
      %v238 = vpop.f32.mrf.mxu0
      %v239 = vpop.f32.mrf.mxu0
      %v240 = vadd.f32 0.0, %v239
      %v241 = vpop.f32.mrf.mxu0
      %242 = vmatprep.mubr.bf16.mxu0 0
      %243 = vmatmul.mubr.bf16.gmra.mxu0 %v196
      %v244 = vpop.f32.mrf.mxu0
      %v245 = vadd.f32 0.0, %v244
      %v246 = vpop.f32.mrf.mxu0
      %v247 = vpop.f32.mrf.mxu0
      %v248 = vpop.f32.mrf.mxu0
      %249 = vdwg.mxu0
      %v251 = vsel %vm191, %v180, 0
      %v254 = vsel %vm191, %v181, 0
      %v257 = vsel %vm198, %v182, 0
      %259 = vmatprep.subr.bf16.mxu0 0
      %260 = vmatpush1.bf16.msra.mxu0 0
      %261 = vmatprep.subr.bf16.mxu0 0
      %262 = vmatpush1.bf16.msra.mxu0 0
      %263 = vmatprep.subr.bf16.mxu0 0
      %264 = vmatpush1.bf16.msra.mxu0 0
      %265 = vmatprep.subr.bf16.mxu0 0
      %266 = vmatpush1.bf16.msra.mxu0 0
      %267 = vmatprep.subr.bf16.mxu0 0
      %268 = vmatpush1.bf16.msra.mxu0 0
      %269 = vmatprep.subr.bf16.mxu0 0
      %270 = vmatpush1.bf16.msra.mxu0 0
      %271 = vmatprep.subr.bf16.mxu0 0
      %272 = vmatpush1.bf16.msra.mxu0 0
      %273 = vmatprep.subr.bf16.mxu0 0
      %274 = vmatpush1.bf16.msra.mxu0 %v257
      %275 = vmatprep.subr.bf16.mxu0 0
      %276 = vmatpush2.bf16.msra.mxu0 0
      %277 = vmatprep.subr.bf16.mxu0 0
      %278 = vmatpush2.bf16.msra.mxu0 0
      %279 = vmatprep.subr.bf16.mxu0 0
      %280 = vmatpush2.bf16.msra.mxu0 0
      %281 = vmatprep.subr.bf16.mxu0 0
      %282 = vmatpush2.bf16.msra.mxu0 0
      %283 = vmatprep.subr.bf16.mxu0 0
      %284 = vmatpush2.bf16.msra.mxu0 0
      %285 = vmatprep.subr.bf16.mxu0 0
      %286 = vmatpush2.bf16.msra.mxu0 0
      %287 = vmatprep.subr.bf16.mxu0 0
      %288 = vmatpush2.bf16.msra.mxu0 0
      %289 = vmatprep.subr.bf16.mxu0 0
      %290 = vmatpush2.bf16.msra.mxu0 0
      %291 = vmatprep.mubr.bf16.mxu0 0
      %292 = vmatmul.mubr.bf16.gmra.mxu0 %v251
      %v293 = vpop.f32.mrf.mxu0
      %v294 = vadd.f32 %v237, %v293
      %v295 = vpop.f32.mrf.mxu0
      %v296 = vpop.f32.mrf.mxu0
      %v297 = vadd.f32 %v240, %v296
      %v298 = vpop.f32.mrf.mxu0
      %299 = vmatprep.mubr.bf16.mxu0 0
      %300 = vmatmul.mubr.bf16.gmra.mxu0 %v254
      %v301 = vpop.f32.mrf.mxu0
      %v302 = vadd.f32 %v245, %v301
      %v303 = vpop.f32.mrf.mxu0
      %v304 = vpop.f32.mrf.mxu0
      %v305 = vpop.f32.mrf.mxu0
      %306 = vdwg.mxu0
      %v307 = vld [vmem:[%s169 + $0x1] sm:$0xff]
      %v308 = vld [vmem:[%s169 + $0x9] sm:$0xff]
      %v309 = vld [vmem:[%s169 + $0x11] sm:$0xf]
      %v310 = vpack.c.bf16 %v308, %v307
      %v311 = vpack.c.bf16 %v309, %v309
      %s312 = scalar_lea.vmem %s1, 8
      %v313 = vld [vmem:[%s312] sm:$0xf]
      %v315 = vsel %vm191, %v310, 0
      %v318 = vsel %vm191, %v311, 0
      %v321 = vsel %vm198, %v313, 0
      %323 = vmatprep.subr.bf16.mxu0 0
      %324 = vmatpush1.bf16.msra.mxu0 0
      %325 = vmatprep.subr.bf16.mxu0 0
      %326 = vmatpush1.bf16.msra.mxu0 0
      %327 = vmatprep.subr.bf16.mxu0 0
      %328 = vmatpush1.bf16.msra.mxu0 0
      %329 = vmatprep.subr.bf16.mxu0 0
      %330 = vmatpush1.bf16.msra.mxu0 0
      %331 = vmatprep.subr.bf16.mxu0 0
      %332 = vmatpush1.bf16.msra.mxu0 0
      %333 = vmatprep.subr.bf16.mxu0 0
      %334 = vmatpush1.bf16.msra.mxu0 0
      %335 = vmatprep.subr.bf16.mxu0 0
      %336 = vmatpush1.bf16.msra.mxu0 0
      %337 = vmatprep.subr.bf16.mxu0 0
      %338 = vmatpush1.bf16.msra.mxu0 %v321
      %339 = vmatprep.subr.bf16.mxu0 0
      %340 = vmatpush2.bf16.msra.mxu0 0
      %341 = vmatprep.subr.bf16.mxu0 0
      %342 = vmatpush2.bf16.msra.mxu0 0
      %343 = vmatprep.subr.bf16.mxu0 0
      %344 = vmatpush2.bf16.msra.mxu0 0
      %345 = vmatprep.subr.bf16.mxu0 0
      %346 = vmatpush2.bf16.msra.mxu0 0
      %347 = vmatprep.subr.bf16.mxu0 0
      %348 = vmatpush2.bf16.msra.mxu0 0
      %349 = vmatprep.subr.bf16.mxu0 0
      %350 = vmatpush2.bf16.msra.mxu0 0
      %351 = vmatprep.subr.bf16.mxu0 0
      %352 = vmatpush2.bf16.msra.mxu0 0
      %353 = vmatprep.subr.bf16.mxu0 0
      %354 = vmatpush2.bf16.msra.mxu0 0
      %355 = vmatprep.mubr.bf16.mxu0 0
      %356 = vmatmul.mubr.bf16.gmra.mxu0 %v315
      %v357 = vpop.f32.mrf.mxu0
      %v358 = vadd.f32 0.0, %v357
      %v359 = vpop.f32.mrf.mxu0
      %v360 = vpop.f32.mrf.mxu0
      %v361 = vadd.f32 0.0, %v360
      %v362 = vpop.f32.mrf.mxu0
      %363 = vmatprep.mubr.bf16.mxu0 0
      %364 = vmatmul.mubr.bf16.gmra.mxu0 %v318
      %v365 = vpop.f32.mrf.mxu0
      %v366 = vadd.f32 0.0, %v365
      %v367 = vpop.f32.mrf.mxu0
      %v368 = vpop.f32.mrf.mxu0
      %v369 = vpop.f32.mrf.mxu0
      %370 = vdwg.mxu0
      %v371 = vadd.f32 %v294, %v358
      %v372 = vadd.f32 %v297, %v361
      %v373 = vadd.f32 %v302, %v366
      %s374 = scalar_lea.vmem %s169, 64
      %v375 = vld [vmem:[%s374] sm:$0xff]
      %v376 = vld [vmem:[%s374 + $0x8] sm:$0xff]
      %v377 = vld [vmem:[%s374 + $0x10] sm:$0xf]
      %v378 = vpack.c.bf16 %v376, %v375
      %v379 = vpack.c.bf16 %v377, %v377
      %s380 = scalar_lea.vmem %s1, 12
      %v381 = vld [vmem:[%s380] sm:$0xf]
      %v383 = vsel %vm191, %v378, 0
      %v386 = vsel %vm191, %v379, 0
      %v389 = vsel %vm198, %v381, 0
      %391 = vmatprep.subr.bf16.mxu0 0
      %392 = vmatpush1.bf16.msra.mxu0 0
      %393 = vmatprep.subr.bf16.mxu0 0
      %394 = vmatpush1.bf16.msra.mxu0 0
      %395 = vmatprep.subr.bf16.mxu0 0
      %396 = vmatpush1.bf16.msra.mxu0 0
      %397 = vmatprep.subr.bf16.mxu0 0
      %398 = vmatpush1.bf16.msra.mxu0 0
      %399 = vmatprep.subr.bf16.mxu0 0
      %400 = vmatpush1.bf16.msra.mxu0 0
      %401 = vmatprep.subr.bf16.mxu0 0
      %402 = vmatpush1.bf16.msra.mxu0 0
      %403 = vmatprep.subr.bf16.mxu0 0
      %404 = vmatpush1.bf16.msra.mxu0 0
      %405 = vmatprep.subr.bf16.mxu0 0
      %406 = vmatpush1.bf16.msra.mxu0 %v389
      %407 = vmatprep.subr.bf16.mxu0 0
      %408 = vmatpush2.bf16.msra.mxu0 0
      %409 = vmatprep.subr.bf16.mxu0 0
      %410 = vmatpush2.bf16.msra.mxu0 0
      %411 = vmatprep.subr.bf16.mxu0 0
      %412 = vmatpush2.bf16.msra.mxu0 0
      %413 = vmatprep.subr.bf16.mxu0 0
      %414 = vmatpush2.bf16.msra.mxu0 0
      %415 = vmatprep.subr.bf16.mxu0 0
      %416 = vmatpush2.bf16.msra.mxu0 0
      %417 = vmatprep.subr.bf16.mxu0 0
      %418 = vmatpush2.bf16.msra.mxu0 0
      %419 = vmatprep.subr.bf16.mxu0 0
      %420 = vmatpush2.bf16.msra.mxu0 0
      %421 = vmatprep.subr.bf16.mxu0 0
      %422 = vmatpush2.bf16.msra.mxu0 0
      %423 = vmatprep.mubr.bf16.mxu0 0
      %424 = vmatmul.mubr.bf16.gmra.mxu0 %v383
      %v425 = vpop.f32.mrf.mxu0
      %v426 = vadd.f32 0.0, %v425
      %v427 = vpop.f32.mrf.mxu0
      %v428 = vpop.f32.mrf.mxu0
      %v429 = vadd.f32 0.0, %v428
      %v430 = vpop.f32.mrf.mxu0
      %431 = vmatprep.mubr.bf16.mxu0 0
      %432 = vmatmul.mubr.bf16.gmra.mxu0 %v386
      %v433 = vpop.f32.mrf.mxu0
      %v434 = vadd.f32 0.0, %v433
      %v435 = vpop.f32.mrf.mxu0
      %v436 = vpop.f32.mrf.mxu0
      %v437 = vpop.f32.mrf.mxu0
      %438 = vdwg.mxu0
      %v439 = vadd.f32 %v371, %v426
      %v440 = vadd.f32 %v372, %v429
      %v441 = vadd.f32 %v373, %v434
      %s442 = scalar_lea.vmem %s169, 96
      %v443 = vld [vmem:[%s442] sm:$0xff]
      %v444 = vld [vmem:[%s442 + $0x8] sm:$0xff]
      %v445 = vld [vmem:[%s442 + $0x10] sm:$0xf]
      %v446 = vpack.c.bf16 %v444, %v443
      %v447 = vpack.c.bf16 %v445, %v445
      %s448 = scalar_lea.vmem %s1, 16
      %v449 = vld [vmem:[%s448] sm:$0xf]
      %v451 = vsel %vm191, %v446, 0
      %v454 = vsel %vm191, %v447, 0
      %v457 = vsel %vm198, %v449, 0
      %459 = vmatprep.subr.bf16.mxu0 0
      %460 = vmatpush1.bf16.msra.mxu0 0
      %461 = vmatprep.subr.bf16.mxu0 0
      %462 = vmatpush1.bf16.msra.mxu0 0
      %463 = vmatprep.subr.bf16.mxu0 0
      %464 = vmatpush1.bf16.msra.mxu0 0
      %465 = vmatprep.subr.bf16.mxu0 0
      %466 = vmatpush1.bf16.msra.mxu0 0
      %467 = vmatprep.subr.bf16.mxu0 0
      %468 = vmatpush1.bf16.msra.mxu0 0
      %469 = vmatprep.subr.bf16.mxu0 0
      %470 = vmatpush1.bf16.msra.mxu0 0
      %471 = vmatprep.subr.bf16.mxu0 0
      %472 = vmatpush1.bf16.msra.mxu0 0
      %473 = vmatprep.subr.bf16.mxu0 0
      %474 = vmatpush1.bf16.msra.mxu0 %v457
      %475 = vmatprep.subr.bf16.mxu0 0
      %476 = vmatpush2.bf16.msra.mxu0 0
      %477 = vmatprep.subr.bf16.mxu0 0
      %478 = vmatpush2.bf16.msra.mxu0 0
      %479 = vmatprep.subr.bf16.mxu0 0
      %480 = vmatpush2.bf16.msra.mxu0 0
      %481 = vmatprep.subr.bf16.mxu0 0
      %482 = vmatpush2.bf16.msra.mxu0 0
      %483 = vmatprep.subr.bf16.mxu0 0
      %484 = vmatpush2.bf16.msra.mxu0 0
      %485 = vmatprep.subr.bf16.mxu0 0
      %486 = vmatpush2.bf16.msra.mxu0 0
      %487 = vmatprep.subr.bf16.mxu0 0
      %488 = vmatpush2.bf16.msra.mxu0 0
      %489 = vmatprep.subr.bf16.mxu0 0
      %490 = vmatpush2.bf16.msra.mxu0 0
      %491 = vmatprep.mubr.bf16.mxu0 0
      %492 = vmatmul.mubr.bf16.gmra.mxu0 %v451
      %v493 = vpop.f32.mrf.mxu0
      %v494 = vadd.f32 0.0, %v493
      %v495 = vpop.f32.mrf.mxu0
      %v496 = vpop.f32.mrf.mxu0
      %v497 = vadd.f32 0.0, %v496
      %v498 = vpop.f32.mrf.mxu0
      %499 = vmatprep.mubr.bf16.mxu0 0
      %500 = vmatmul.mubr.bf16.gmra.mxu0 %v454
      %v501 = vpop.f32.mrf.mxu0
      %v502 = vadd.f32 0.0, %v501
      %v503 = vpop.f32.mrf.mxu0
      %v504 = vpop.f32.mrf.mxu0
      %v505 = vpop.f32.mrf.mxu0
      %506 = vdwg.mxu0
      %v507 = vadd.f32 %v439, %v494
      %v508 = vadd.f32 %v440, %v497
      %v509 = vadd.f32 %v441, %v502
      %v510 = vld [vmem:[%s374 + $0x1] sm:$0xff]
      %v511 = vld [vmem:[%s374 + $0x9] sm:$0xff]
      %v512 = vld [vmem:[%s374 + $0x11] sm:$0xf]
      %v513 = vpack.c.bf16 %v511, %v510
      %v514 = vpack.c.bf16 %v512, %v512
      %s515 = scalar_lea.vmem %s1, 20
      %v516 = vld [vmem:[%s515] sm:$0xf]
      %v518 = vsel %vm191, %v513, 0
      %v521 = vsel %vm191, %v514, 0
      %v524 = vsel %vm198, %v516, 0
      %526 = vmatprep.subr.bf16.mxu0 0
      %527 = vmatpush1.bf16.msra.mxu0 0
      %528 = vmatprep.subr.bf16.mxu0 0
      %529 = vmatpush1.bf16.msra.mxu0 0
      %530 = vmatprep.subr.bf16.mxu0 0
      %531 = vmatpush1.bf16.msra.mxu0 0
      %532 = vmatprep.subr.bf16.mxu0 0
      %533 = vmatpush1.bf16.msra.mxu0 0
      %534 = vmatprep.subr.bf16.mxu0 0
      %535 = vmatpush1.bf16.msra.mxu0 0
      %536 = vmatprep.subr.bf16.mxu0 0
      %537 = vmatpush1.bf16.msra.mxu0 0
      %538 = vmatprep.subr.bf16.mxu0 0
      %539 = vmatpush1.bf16.msra.mxu0 0
      %540 = vmatprep.subr.bf16.mxu0 0
      %541 = vmatpush1.bf16.msra.mxu0 %v524
      %542 = vmatprep.subr.bf16.mxu0 0
      %543 = vmatpush2.bf16.msra.mxu0 0
      %544 = vmatprep.subr.bf16.mxu0 0
      %545 = vmatpush2.bf16.msra.mxu0 0
      %546 = vmatprep.subr.bf16.mxu0 0
      %547 = vmatpush2.bf16.msra.mxu0 0
      %548 = vmatprep.subr.bf16.mxu0 0
      %549 = vmatpush2.bf16.msra.mxu0 0
      %550 = vmatprep.subr.bf16.mxu0 0
      %551 = vmatpush2.bf16.msra.mxu0 0
      %552 = vmatprep.subr.bf16.mxu0 0
      %553 = vmatpush2.bf16.msra.mxu0 0
      %554 = vmatprep.subr.bf16.mxu0 0
      %555 = vmatpush2.bf16.msra.mxu0 0
      %556 = vmatprep.subr.bf16.mxu0 0
      %557 = vmatpush2.bf16.msra.mxu0 0
      %558 = vmatprep.mubr.bf16.mxu0 0
      %559 = vmatmul.mubr.bf16.gmra.mxu0 %v518
      %v560 = vpop.f32.mrf.mxu0
      %v561 = vadd.f32 0.0, %v560
      %v562 = vpop.f32.mrf.mxu0
      %v563 = vpop.f32.mrf.mxu0
      %v564 = vadd.f32 0.0, %v563
      %v565 = vpop.f32.mrf.mxu0
      %566 = vmatprep.mubr.bf16.mxu0 0
      %567 = vmatmul.mubr.bf16.gmra.mxu0 %v521
      %v568 = vpop.f32.mrf.mxu0
      %v569 = vadd.f32 0.0, %v568
      %v570 = vpop.f32.mrf.mxu0
      %v571 = vpop.f32.mrf.mxu0
      %v572 = vpop.f32.mrf.mxu0
      %573 = vdwg.mxu0
      %v574 = vadd.f32 %v507, %v561
      %v575 = vadd.f32 %v508, %v564
      %v576 = vadd.f32 %v509, %v569
      %v577 = vld [vmem:[%s169 + $0x5] sm:$0xff]
      %v578 = vld [vmem:[%s169 + $0xd] sm:$0xff]
      %v579 = vld [vmem:[%s169 + $0x15] sm:$0xf]
      %v580 = vpack.c.bf16 %v578, %v577
      %v581 = vpack.c.bf16 %v579, %v579
      %s582 = scalar_lea.vmem %s1, 24
      %v583 = vld [vmem:[%s582] sm:$0xf]
      %v585 = vsel %vm191, %v580, 0
      %v588 = vsel %vm191, %v581, 0
      %v591 = vsel %vm198, %v583, 0
      %593 = vmatprep.subr.bf16.mxu0 0
      %594 = vmatpush1.bf16.msra.mxu0 0
      %595 = vmatprep.subr.bf16.mxu0 0
      %596 = vmatpush1.bf16.msra.mxu0 0
      %597 = vmatprep.subr.bf16.mxu0 0
      %598 = vmatpush1.bf16.msra.mxu0 0
      %599 = vmatprep.subr.bf16.mxu0 0
      %600 = vmatpush1.bf16.msra.mxu0 0
      %601 = vmatprep.subr.bf16.mxu0 0
      %602 = vmatpush1.bf16.msra.mxu0 0
      %603 = vmatprep.subr.bf16.mxu0 0
      %604 = vmatpush1.bf16.msra.mxu0 0
      %605 = vmatprep.subr.bf16.mxu0 0
      %606 = vmatpush1.bf16.msra.mxu0 0
      %607 = vmatprep.subr.bf16.mxu0 0
      %608 = vmatpush1.bf16.msra.mxu0 %v591
      %609 = vmatprep.subr.bf16.mxu0 0
      %610 = vmatpush2.bf16.msra.mxu0 0
      %611 = vmatprep.subr.bf16.mxu0 0
      %612 = vmatpush2.bf16.msra.mxu0 0
      %613 = vmatprep.subr.bf16.mxu0 0
      %614 = vmatpush2.bf16.msra.mxu0 0
      %615 = vmatprep.subr.bf16.mxu0 0
      %616 = vmatpush2.bf16.msra.mxu0 0
      %617 = vmatprep.subr.bf16.mxu0 0
      %618 = vmatpush2.bf16.msra.mxu0 0
      %619 = vmatprep.subr.bf16.mxu0 0
      %620 = vmatpush2.bf16.msra.mxu0 0
      %621 = vmatprep.subr.bf16.mxu0 0
      %622 = vmatpush2.bf16.msra.mxu0 0
      %623 = vmatprep.subr.bf16.mxu0 0
      %624 = vmatpush2.bf16.msra.mxu0 0
      %625 = vmatprep.mubr.bf16.mxu0 0
      %626 = vmatmul.mubr.bf16.gmra.mxu0 %v585
      %v627 = vpop.f32.mrf.mxu0
      %v628 = vadd.f32 0.0, %v627
      %v629 = vpop.f32.mrf.mxu0
      %v630 = vpop.f32.mrf.mxu0
      %v631 = vadd.f32 0.0, %v630
      %v632 = vpop.f32.mrf.mxu0
      %633 = vmatprep.mubr.bf16.mxu0 0
      %634 = vmatmul.mubr.bf16.gmra.mxu0 %v588
      %v635 = vpop.f32.mrf.mxu0
      %v636 = vadd.f32 0.0, %v635
      %v637 = vpop.f32.mrf.mxu0
      %v638 = vpop.f32.mrf.mxu0
      %v639 = vpop.f32.mrf.mxu0
      %640 = vdwg.mxu0
      %v641 = vadd.f32 %v574, %v628
      %v642 = vadd.f32 %v575, %v631
      %v643 = vadd.f32 %v576, %v636
      %v644 = vld [vmem:[%s183 + $0x5] sm:$0xff]
      %v645 = vld [vmem:[%s183 + $0xd] sm:$0xff]
      %v646 = vld [vmem:[%s183 + $0x15] sm:$0xf]
      %v647 = vpack.c.bf16 %v645, %v644
      %v648 = vpack.c.bf16 %v646, %v646
      %s649 = scalar_lea.vmem %s1, 28
      %v650 = vld [vmem:[%s649] sm:$0xf]
      %v652 = vsel %vm191, %v647, 0
      %v655 = vsel %vm191, %v648, 0
      %v658 = vsel %vm198, %v650, 0
      %660 = vmatprep.subr.bf16.mxu0 0
      %661 = vmatpush1.bf16.msra.mxu0 0
      %662 = vmatprep.subr.bf16.mxu0 0
      %663 = vmatpush1.bf16.msra.mxu0 0
      %664 = vmatprep.subr.bf16.mxu0 0
      %665 = vmatpush1.bf16.msra.mxu0 0
      %666 = vmatprep.subr.bf16.mxu0 0
      %667 = vmatpush1.bf16.msra.mxu0 0
      %668 = vmatprep.subr.bf16.mxu0 0
      %669 = vmatpush1.bf16.msra.mxu0 0
      %670 = vmatprep.subr.bf16.mxu0 0
      %671 = vmatpush1.bf16.msra.mxu0 0
      %672 = vmatprep.subr.bf16.mxu0 0
      %673 = vmatpush1.bf16.msra.mxu0 0
      %674 = vmatprep.subr.bf16.mxu0 0
      %675 = vmatpush1.bf16.msra.mxu0 %v658
      %676 = vmatprep.subr.bf16.mxu0 0
      %677 = vmatpush2.bf16.msra.mxu0 0
      %678 = vmatprep.subr.bf16.mxu0 0
      %679 = vmatpush2.bf16.msra.mxu0 0
      %680 = vmatprep.subr.bf16.mxu0 0
      %681 = vmatpush2.bf16.msra.mxu0 0
      %682 = vmatprep.subr.bf16.mxu0 0
      %683 = vmatpush2.bf16.msra.mxu0 0
      %684 = vmatprep.subr.bf16.mxu0 0
      %685 = vmatpush2.bf16.msra.mxu0 0
      %686 = vmatprep.subr.bf16.mxu0 0
      %687 = vmatpush2.bf16.msra.mxu0 0
      %688 = vmatprep.subr.bf16.mxu0 0
      %689 = vmatpush2.bf16.msra.mxu0 0
      %690 = vmatprep.subr.bf16.mxu0 0
      %691 = vmatpush2.bf16.msra.mxu0 0
      %692 = vmatprep.mubr.bf16.mxu0 0
      %693 = vmatmul.mubr.bf16.gmra.mxu0 %v652
      %v694 = vpop.f32.mrf.mxu0
      %v695 = vadd.f32 0.0, %v694
      %v696 = vpop.f32.mrf.mxu0
      %v697 = vpop.f32.mrf.mxu0
      %v698 = vadd.f32 0.0, %v697
      %v699 = vpop.f32.mrf.mxu0
      %700 = vmatprep.mubr.bf16.mxu0 0
      %701 = vmatmul.mubr.bf16.gmra.mxu0 %v655
      %v702 = vpop.f32.mrf.mxu0
      %v703 = vadd.f32 0.0, %v702
      %v704 = vpop.f32.mrf.mxu0
      %v705 = vpop.f32.mrf.mxu0
      %v706 = vpop.f32.mrf.mxu0
      %707 = vdwg.mxu0
      %v708 = vadd.f32 %v641, %v695
      %v709 = vadd.f32 %v642, %v698
      %v710 = vadd.f32 %v643, %v703
      %v711 = vld [vmem:[%s169 + $0x6] sm:$0xff]
      %v712 = vld [vmem:[%s169 + $0xe] sm:$0xff]
      %v713 = vld [vmem:[%s169 + $0x16] sm:$0xf]
      %v714 = vpack.c.bf16 %v712, %v711
      %v715 = vpack.c.bf16 %v713, %v713
      %s716 = scalar_lea.vmem %s1, 32
      %v717 = vld [vmem:[%s716] sm:$0xf]
      %v719 = vsel %vm191, %v714, 0
      %v722 = vsel %vm191, %v715, 0
      %v725 = vsel %vm198, %v717, 0
      %727 = vmatprep.subr.bf16.mxu0 0
      %728 = vmatpush1.bf16.msra.mxu0 0
      %729 = vmatprep.subr.bf16.mxu0 0
      %730 = vmatpush1.bf16.msra.mxu0 0
      %731 = vmatprep.subr.bf16.mxu0 0
      %732 = vmatpush1.bf16.msra.mxu0 0
      %733 = vmatprep.subr.bf16.mxu0 0
      %734 = vmatpush1.bf16.msra.mxu0 0
      %735 = vmatprep.subr.bf16.mxu0 0
      %736 = vmatpush1.bf16.msra.mxu0 0
      %737 = vmatprep.subr.bf16.mxu0 0
      %738 = vmatpush1.bf16.msra.mxu0 0
      %739 = vmatprep.subr.bf16.mxu0 0
      %740 = vmatpush1.bf16.msra.mxu0 0
      %741 = vmatprep.subr.bf16.mxu0 0
      %742 = vmatpush1.bf16.msra.mxu0 %v725
      %743 = vmatprep.subr.bf16.mxu0 0
      %744 = vmatpush2.bf16.msra.mxu0 0
      %745 = vmatprep.subr.bf16.mxu0 0
      %746 = vmatpush2.bf16.msra.mxu0 0
      %747 = vmatprep.subr.bf16.mxu0 0
      %748 = vmatpush2.bf16.msra.mxu0 0
      %749 = vmatprep.subr.bf16.mxu0 0
      %750 = vmatpush2.bf16.msra.mxu0 0
      %751 = vmatprep.subr.bf16.mxu0 0
      %752 = vmatpush2.bf16.msra.mxu0 0
      %753 = vmatprep.subr.bf16.mxu0 0
      %754 = vmatpush2.bf16.msra.mxu0 0
      %755 = vmatprep.subr.bf16.mxu0 0
      %756 = vmatpush2.bf16.msra.mxu0 0
      %757 = vmatprep.subr.bf16.mxu0 0
      %758 = vmatpush2.bf16.msra.mxu0 0
      %759 = vmatprep.mubr.bf16.mxu0 0
      %760 = vmatmul.mubr.bf16.gmra.mxu0 %v719
      %v761 = vpop.f32.mrf.mxu0
      %v762 = vadd.f32 0.0, %v761
      %v763 = vpop.f32.mrf.mxu0
      %v764 = vpop.f32.mrf.mxu0
      %v765 = vadd.f32 0.0, %v764
      %v766 = vpop.f32.mrf.mxu0
      %767 = vmatprep.mubr.bf16.mxu0 0
      %768 = vmatmul.mubr.bf16.gmra.mxu0 %v722
      %v769 = vpop.f32.mrf.mxu0
      %v770 = vadd.f32 0.0, %v769
      %v771 = vpop.f32.mrf.mxu0
      %v772 = vpop.f32.mrf.mxu0
      %v773 = vpop.f32.mrf.mxu0
      %774 = vdwg.mxu0
      %v775 = vadd.f32 %v708, %v762
      %v776 = vadd.f32 %v709, %v765
      %v777 = vadd.f32 %v710, %v770
      %v778 = vld [vmem:[%s2] sm:$0x1]
      %v780 = vlaneseq
      %v781 = vshrl.u32 %v780, 7
      %v782 = vsub.s32 0, %v781
      %v783 = vrot.slane %v778, %v782
      %v785 = vadd.f32 %v775, %v783
      %v786 = vadd.f32 %v776, %v783
      %v787 = vadd.f32 %v777, %v783
      %v788 = vmax.f32 %v785, 0.0
      %v789 = vmax.f32 %v786, 0.0
      %v790 = vmax.f32 %v787, 0.0
      %791 = vst [vmem:[%s175] sm:$0xff] %v788
      %792 = vst [vmem:[%s175 + $0x8] sm:$0xff] %v789
      %793 = vst [vmem:[%s175 + $0x10] sm:$0xf] %v790
      %p794 = scmp.lt.s32.totalorder %s14, 1
      %s795 = scalar_select %p794, %s14, 1
      %s796 = smul.addr %s795, 3
      %s797 = smul.addr %s796, 8
      %s798 = scalar_lea.vmem %s3, %s797
      // Predicated region
      $region33: #{backbone_as_unet_forward.11} parent=31 // pred_check
        %p799 = pneg %p100
      $region34: #{backbone_as_unet_forward.11} parent=31 // pred_check_branch
        %801 = sbr.rel (%p799) target = $region36
      $region35: #{backbone_as_unet_forward.11} parent=31 // pred_region
        _
      $region36: #{backbone_as_unet_forward.11} parent=31 // pred_fallthru
        _
    $region32: #{backbone_as_unet_forward.11} parent=5 // pred_fallthru
      _
    %p802 = scmp.le.s32.totalorder 2, %s9
    // Predicated region
    $region37: #{backbone_as_unet_forward.11} parent=5 // pred_check
      %p803 = pneg %p802
    $region38: #{backbone_as_unet_forward.11} parent=5 // pred_check_branch
      %805 = sbr.rel (%p803) target = $region40
    $region39: #{backbone_as_unet_forward.11} parent=5 // pred_region
      %s806 = ssub.s32 %s9, 2
      // Predicated region
      $region41: #{backbone_as_unet_forward.11} parent=39 // pred_check
        %p807 = pneg %p106
      $region42: #{backbone_as_unet_forward.11} parent=39 // pred_check_branch
        %809 = sbr.rel (%p807) target = $region44
      $region43: #{backbone_as_unet_forward.11} parent=39 // pred_region
        %p810 = scmp.lt.s32.totalorder %s15, 1
        %s811 = scalar_select %p810, %s15, 1
        %s812 = smul.addr %s811, 3
        %s813 = smul.addr %s812, 8
        %s814 = scalar_lea.vmem %s3, %s813
      $region44: #{backbone_as_unet_forward.11} parent=39 // pred_fallthru
        _
    $region40: #{backbone_as_unet_forward.11} parent=5 // pred_fallthru
      _
  $region6: #{backbone_as_unet_forward.11} parent=0 // loop_footer
    %s13 = sadd.s32 1, %s9
  $region7: #{backbone_as_unet_forward.11} parent=0 // loop_footer_branch
    %8 = sbr.rel target = $region3
  $region8: #{backbone_as_unet_forward.11} parent=0 // loop_exit
    _

// kernel: backbone_as_unet_forward.12
$region0: #{backbone_as_unet_forward.12}
  #allocation0 [shape = 'u32[]', space=smem, size = 0x4, offset = 0x4, fixed_abs, tag = 'smem constant byte address 0x4 - core index']
  #allocation1 [shape = 'u32[144,128]{1,0:T(1,128)}', space=vmem, size = 0x12000, scoped, tag = 'internal scratch']
  %s0 = inlined_call_operand.vmem [shape: f32[8,10,16], index: 0, kind: input, shape index: {}]
  %s1 = inlined_call_operand.vmem [shape: bf16[9,16,128], index: 1, kind: input, shape index: {}]
  %s2 = inlined_call_operand.vmem [shape: f32[1,128], index: 2, kind: input, shape index: {}]
  %s3 = inlined_call_operand.vmem [shape: f32[2,6,128], index: 3, kind: output, shape index: {}]
  %s4 = sld [smem:[#allocation0]]
  $region45: #{backbone_as_unet_forward.12} parent=0
    _
  %s6 = ssub.s32 1, %s4
  %s7 = scalar_select 0, %s6, %s4
  loop: start=0, step=1, limit=4
  $region2: #{backbone_as_unet_forward.12} parent=0 // loop_pre_header
    _
  $region3: #{backbone_as_unet_forward.12} parent=0 // loop_header
    %s9 = sphi 0, %s13
    %p10 = scmp.ge.s32.totalorder %s9, 4
    %s19 = sphi 0, %s21
    %s22 = sphi 0, %s19
    %s23 = sphi 0, %s22
    %s39 = sphi 0, %s23
    %s43 = sphi 0, %s43
    %s45 = sphi 0, %s43
    %s46 = sphi 0, %s45
    %s60 = sphi 0, %s46
    %s64 = sphi 0, %s64
    %s66 = sphi 0, %s64
    %s67 = sphi 0, %s66
    %s81 = sphi 0, %s67
    %s87 = sphi 0, %s89
    %s90 = sphi 0, %s87
    %s91 = sphi 0, %s90
    %s107 = sphi 0, %s91
  $region4: #{backbone_as_unet_forward.12} parent=0 // loop_header_branch
    %12 = sbr.rel (%p10) target = $region8
  $region5: #{backbone_as_unet_forward.12} parent=0 // loop_body
    %s14 = ssub.s32 %s9, 1
    %s15 = ssub.s32 %s9, 2
    %s16 = sadd.s32 %s9, 1
    %s17 = ssub.s32 %s9, %s16
    %p18 = scmp.eq.s32.totalorder %s17, 0
    %s20 = sadd.s32 %s19, 1
    %s21 = scalar_select %p18, %s19, %s20
    %p24 = pneg %p18
    %p25 = scmp.eq.s32.totalorder %s9, 1
    %p26 = por %p24, %p25
    %p27 = scmp.ne.s32.totalorder %s19, %s22
    %p28 = scmp.eq.s32.totalorder %s9, 0
    %p29 = por %p27, %p28
    %p30 = scmp.ne.s32.totalorder %s19, %s22
    %p31 = scmp.eq.s32.totalorder %s14, 1
    %p32 = por %p30, %p31
    %p33 = scmp.ne.s32.totalorder %s22, %s23
    %p34 = scmp.eq.s32.totalorder %s14, 0
    %p35 = por %p33, %p34
    %p36 = scmp.ne.s32.totalorder %s22, %s23
    %p37 = scmp.eq.s32.totalorder %s15, 1
    %p38 = por %p36, %p37
    %p40 = scmp.ne.s32.totalorder %s23, %s39
    %p41 = scmp.eq.s32.totalorder %s15, 0
    %p42 = por %p40, %p41
    %s44 = sadd.s32 %s43, 1
    %p47 = scmp.eq.s32.totalorder %s9, 1
    %p48 = scmp.ne.s32.totalorder %s43, %s45
    %p49 = scmp.eq.s32.totalorder %s9, 0
    %p50 = por %p48, %p49
    %p51 = scmp.ne.s32.totalorder %s43, %s45
    %p52 = scmp.eq.s32.totalorder %s14, 1
    %p53 = por %p51, %p52
    %p54 = scmp.ne.s32.totalorder %s45, %s46
    %p55 = scmp.eq.s32.totalorder %s14, 0
    %p56 = por %p54, %p55
    %p57 = scmp.ne.s32.totalorder %s45, %s46
    %p58 = scmp.eq.s32.totalorder %s15, 1
    %p59 = por %p57, %p58
    %p61 = scmp.ne.s32.totalorder %s46, %s60
    %p62 = scmp.eq.s32.totalorder %s15, 0
    %p63 = por %p61, %p62
    %s65 = sadd.s32 %s64, 1
    %p68 = scmp.eq.s32.totalorder %s9, 1
    %p69 = scmp.ne.s32.totalorder %s64, %s66
    %p70 = scmp.eq.s32.totalorder %s9, 0
    %p71 = por %p69, %p70
    %p72 = scmp.ne.s32.totalorder %s64, %s66
    %p73 = scmp.eq.s32.totalorder %s14, 1
    %p74 = por %p72, %p73
    %p75 = scmp.ne.s32.totalorder %s66, %s67
    %p76 = scmp.eq.s32.totalorder %s14, 0
    %p77 = por %p75, %p76
    %p78 = scmp.ne.s32.totalorder %s66, %s67
    %p79 = scmp.eq.s32.totalorder %s15, 1
    %p80 = por %p78, %p79
    %p82 = scmp.ne.s32.totalorder %s67, %s81
    %p83 = scmp.eq.s32.totalorder %s15, 0
    %p84 = por %p82, %p83
    %s85 = ssub.s32 %s9, %s16
    %p86 = scmp.eq.s32.totalorder %s85, 0
    %s88 = sadd.s32 %s87, 1
    %s89 = scalar_select %p86, %s87, %s88
    %p92 = pneg %p86
    %p93 = scmp.eq.s32.totalorder %s9, 1
    %p94 = por %p92, %p93
    %p95 = scmp.ne.s32.totalorder %s87, %s90
    %p96 = scmp.eq.s32.totalorder %s9, 0
    %p97 = por %p95, %p96
    %p98 = scmp.ne.s32.totalorder %s87, %s90
    %p99 = scmp.eq.s32.totalorder %s14, 1
    %p100 = por %p98, %p99
    %p101 = scmp.ne.s32.totalorder %s90, %s91
    %p102 = scmp.eq.s32.totalorder %s14, 0
    %p103 = por %p101, %p102
    %p104 = scmp.ne.s32.totalorder %s90, %s91
    %p105 = scmp.eq.s32.totalorder %s15, 1
    %p106 = por %p104, %p105
    %p108 = scmp.ne.s32.totalorder %s91, %s107
    %p109 = scmp.eq.s32.totalorder %s15, 0
    %p110 = por %p108, %p109
    %p111 = scmp.le.s32.totalorder 1, %s9
    %p112 = scmp.lt.s32.totalorder %s9, 3
    %p113 = pnand %p111, %p112
    %p114 = pneg %p113
    // Predicated region
    $region9: #{backbone_as_unet_forward.12} parent=5 // pred_check
      _
    $region10: #{backbone_as_unet_forward.12} parent=5 // pred_check_branch
      %116 = sbr.rel (%p113) target = $region12
    $region11: #{backbone_as_unet_forward.12} parent=5 // pred_region
      %s117 = ssub.s32 %s9, 1
      // Predicated region
      $region13: #{backbone_as_unet_forward.12} parent=11 // pred_check
        %p118 = pneg %p56
      $region14: #{backbone_as_unet_forward.12} parent=11 // pred_check_branch
        %120 = sbr.rel (%p118) target = $region16
      $region15: #{backbone_as_unet_forward.12} parent=11 // pred_region
        _
      $region16: #{backbone_as_unet_forward.12} parent=11 // pred_fallthru
        _
      // Predicated region
      $region17: #{backbone_as_unet_forward.12} parent=11 // pred_check
        %p121 = pneg %p77
      $region18: #{backbone_as_unet_forward.12} parent=11 // pred_check_branch
        %123 = sbr.rel (%p121) target = $region20
      $region19: #{backbone_as_unet_forward.12} parent=11 // pred_region
        _
      $region20: #{backbone_as_unet_forward.12} parent=11 // pred_fallthru
        _
    $region12: #{backbone_as_unet_forward.12} parent=5 // pred_fallthru
      _
    %p124 = scmp.lt.s32.totalorder %s9, 2
    // Predicated region
    $region21: #{backbone_as_unet_forward.12} parent=5 // pred_check
      %p125 = pneg %p124
    $region22: #{backbone_as_unet_forward.12} parent=5 // pred_check_branch
      %127 = sbr.rel (%p125) target = $region24
    $region23: #{backbone_as_unet_forward.12} parent=5 // pred_region
      // Predicated region
      $region25: #{backbone_as_unet_forward.12} parent=23 // pred_check
        %p128 = pneg %p29
      $region26: #{backbone_as_unet_forward.12} parent=23 // pred_check_branch
        %130 = sbr.rel (%p128) target = $region28
      $region27: #{backbone_as_unet_forward.12} parent=23 // pred_region
        %s131 = smul.u32 4, %s9
        %p132 = scmp.lt.s32.totalorder %s131, 7
        %s133 = scalar_select %p132, %s131, 7
        %s134 = smul.addr %s133, 2
        %s135 = smul.addr %s134, 8
        %s136 = scalar_lea.vmem %s0, %s135
        %s137 = smul.u32 4, %s9
      $region28: #{backbone_as_unet_forward.12} parent=23 // pred_fallthru
        _
    $region24: #{backbone_as_unet_forward.12} parent=5 // pred_fallthru
      _
    %p138 = scmp.le.s32.totalorder 1, %s9
    %p139 = scmp.lt.s32.totalorder %s9, 3
    %p140 = pnand %p138, %p139
    %p141 = pneg %p140
    // Predicated region
    $region29: #{backbone_as_unet_forward.12} parent=5 // pred_check
      _
    $region30: #{backbone_as_unet_forward.12} parent=5 // pred_check_branch
      %143 = sbr.rel (%p140) target = $region32
    $region31: #{backbone_as_unet_forward.12} parent=5 // pred_region
      %s144 = ssub.s32 %s9, 1
      %s145 = smul.u32 4, %s14
      %p146 = scmp.lt.s32.totalorder %s145, 7
      %s147 = scalar_select %p146, %s145, 7
      %s148 = smul.addr %s147, 2
      %s149 = smul.addr %s148, 8
      %s150 = scalar_lea.vmem %s0, %s149
      %p151 = pneg %p35
      %p152 = pneg %p32
      %p153 = pneg %p56
      %p154 = pneg %p53
      %p155 = pneg %p77
      %p156 = pneg %p74
      %p157 = pneg %p103
      %p158 = pneg %p100
      %p159 = scmp.lt.s32.totalorder %s14, 1
      %s160 = scalar_select %p159, %s14, 1
      %s161 = smul.addr %s160, 8
      %s162 = scalar_lea.vmem %s3, %s161
      %s163 = smul.u32 4, %s14
      %p164 = scmp.lt.s32.totalorder %s163, 7
      %s165 = scalar_select %p164, %s163, 7
      %s166 = smul.addr %s165, 2
      %s167 = smul.addr %s166, 8
      %s168 = scalar_lea.vmem %s0, %s167
      %s169 = smul.u32 4, %s14
      %p170 = scmp.lt.s32.totalorder %s14, 1
      %s171 = scalar_select %p170, %s14, 1
      %s172 = smul.addr %s171, 8
      %s173 = scalar_lea.vmem %s3, %s172
      %v175 = vld [vmem:[%s168] sm:$0x3f]
      %v176 = vpack.c.bf16 %v175, %v175
      %v177 = vld [vmem:[%s1] sm:$0xf]
      %v178 = vld [vmem:[%s1 + $0x4] sm:$0xf]
      %s179 = scalar_lea.vmem %s168, 16
      %v180 = vld [vmem:[%s179] sm:$0x3f]
      %v181 = vpack.c.bf16 %v180, %v180
      %s182 = scalar_lea.vmem %s1, 8
      %v183 = vld [vmem:[%s182] sm:$0xf]
      %v184 = vld [vmem:[%s182 + $0x4] sm:$0xf]
      %v187 = vunpack.c.l.b16 %v183
      %v188 = vunpack.c.l.b16 %v184
      %v189 = vpack.c.b16 %v188, %v187
      %vm191 = vcmask 130048
      %v193 = vsel %vm191, %v181, 0
      %195 = vmatprep.subr.bf16.mxu0 0
      %196 = vmatpush1.bf16.msra.mxu0 0
      %197 = vmatprep.subr.bf16.mxu0 0
      %198 = vmatpush1.bf16.msra.mxu0 0
      %199 = vmatprep.subr.bf16.mxu0 0
      %200 = vmatpush1.bf16.msra.mxu0 0
      %201 = vmatprep.subr.bf16.mxu0 0
      %202 = vmatpush1.bf16.msra.mxu0 0
      %203 = vmatprep.subr.bf16.mxu0 0
      %204 = vmatpush1.bf16.msra.mxu0 0
      %205 = vmatprep.subr.bf16.mxu0 0
      %206 = vmatpush1.bf16.msra.mxu0 0
      %207 = vmatprep.subr.bf16.mxu0 0
      %208 = vmatpush1.bf16.msra.mxu0 0
      %209 = vmatprep.subr.bf16.mxu0 0
      %210 = vmatpush1.bf16.msra.mxu0 %v189
      %211 = vmatprep.subr.bf16.mxu0 0
      %212 = vmatpush2.bf16.msra.mxu0 0
      %213 = vmatprep.subr.bf16.mxu0 0
      %214 = vmatpush2.bf16.msra.mxu0 0
      %215 = vmatprep.subr.bf16.mxu0 0
      %216 = vmatpush2.bf16.msra.mxu0 0
      %217 = vmatprep.subr.bf16.mxu0 0
      %218 = vmatpush2.bf16.msra.mxu0 0
      %219 = vmatprep.subr.bf16.mxu0 0
      %220 = vmatpush2.bf16.msra.mxu0 0
      %221 = vmatprep.subr.bf16.mxu0 0
      %222 = vmatpush2.bf16.msra.mxu0 0
      %223 = vmatprep.subr.bf16.mxu0 0
      %224 = vmatpush2.bf16.msra.mxu0 0
      %225 = vmatprep.subr.bf16.mxu0 0
      %226 = vmatpush2.bf16.msra.mxu0 0
      %227 = vmatprep.mubr.bf16.mxu0 0
      %228 = vmatmul.mubr.bf16.gmra.mxu0 %v193
      %v229 = vpop.f32.mrf.mxu0
      %v230 = vadd.f32 0.0, %v229
      %v231 = vpop.f32.mrf.mxu0
      %v232 = vpop.f32.mrf.mxu0
      %v233 = vpop.f32.mrf.mxu0
      %234 = vdwg.mxu0
      %v237 = vunpack.c.l.b16 %v177
      %v238 = vunpack.c.l.b16 %v178
      %v239 = vpack.c.b16 %v238, %v237
      %v242 = vsel %vm191, %v176, 0
      %244 = vmatprep.subr.bf16.mxu0 0
      %245 = vmatpush1.bf16.msra.mxu0 0
      %246 = vmatprep.subr.bf16.mxu0 0
      %247 = vmatpush1.bf16.msra.mxu0 0
      %248 = vmatprep.subr.bf16.mxu0 0
      %249 = vmatpush1.bf16.msra.mxu0 0
      %250 = vmatprep.subr.bf16.mxu0 0
      %251 = vmatpush1.bf16.msra.mxu0 0
      %252 = vmatprep.subr.bf16.mxu0 0
      %253 = vmatpush1.bf16.msra.mxu0 0
      %254 = vmatprep.subr.bf16.mxu0 0
      %255 = vmatpush1.bf16.msra.mxu0 0
      %256 = vmatprep.subr.bf16.mxu0 0
      %257 = vmatpush1.bf16.msra.mxu0 0
      %258 = vmatprep.subr.bf16.mxu0 0
      %259 = vmatpush1.bf16.msra.mxu0 %v239
      %260 = vmatprep.subr.bf16.mxu0 0
      %261 = vmatpush2.bf16.msra.mxu0 0
      %262 = vmatprep.subr.bf16.mxu0 0
      %263 = vmatpush2.bf16.msra.mxu0 0
      %264 = vmatprep.subr.bf16.mxu0 0
      %265 = vmatpush2.bf16.msra.mxu0 0
      %266 = vmatprep.subr.bf16.mxu0 0
      %267 = vmatpush2.bf16.msra.mxu0 0
      %268 = vmatprep.subr.bf16.mxu0 0
      %269 = vmatpush2.bf16.msra.mxu0 0
      %270 = vmatprep.subr.bf16.mxu0 0
      %271 = vmatpush2.bf16.msra.mxu0 0
      %272 = vmatprep.subr.bf16.mxu0 0
      %273 = vmatpush2.bf16.msra.mxu0 0
      %274 = vmatprep.subr.bf16.mxu0 0
      %275 = vmatpush2.bf16.msra.mxu0 0
      %276 = vmatprep.mubr.bf16.mxu0 0
      %277 = vmatmul.mubr.bf16.gmra.mxu0 %v242
      %v278 = vpop.f32.mrf.mxu0
      %v279 = vadd.f32 %v230, %v278
      %v280 = vpop.f32.mrf.mxu0
      %v281 = vpop.f32.mrf.mxu0
      %v282 = vpop.f32.mrf.mxu0
      %283 = vdwg.mxu0
      %v284 = vld [vmem:[%s168 + $0x1] sm:$0x3f]
      %v285 = vpack.c.bf16 %v284, %v284
      %s286 = scalar_lea.vmem %s1, 16
      %v287 = vld [vmem:[%s286] sm:$0xf]
      %v288 = vld [vmem:[%s286 + $0x4] sm:$0xf]
      %v291 = vunpack.c.l.b16 %v287
      %v292 = vunpack.c.l.b16 %v288
      %v293 = vpack.c.b16 %v292, %v291
      %v296 = vsel %vm191, %v285, 0
      %298 = vmatprep.subr.bf16.mxu0 0
      %299 = vmatpush1.bf16.msra.mxu0 0
      %300 = vmatprep.subr.bf16.mxu0 0
      %301 = vmatpush1.bf16.msra.mxu0 0
      %302 = vmatprep.subr.bf16.mxu0 0
      %303 = vmatpush1.bf16.msra.mxu0 0
      %304 = vmatprep.subr.bf16.mxu0 0
      %305 = vmatpush1.bf16.msra.mxu0 0
      %306 = vmatprep.subr.bf16.mxu0 0
      %307 = vmatpush1.bf16.msra.mxu0 0
      %308 = vmatprep.subr.bf16.mxu0 0
      %309 = vmatpush1.bf16.msra.mxu0 0
      %310 = vmatprep.subr.bf16.mxu0 0
      %311 = vmatpush1.bf16.msra.mxu0 0
      %312 = vmatprep.subr.bf16.mxu0 0
      %313 = vmatpush1.bf16.msra.mxu0 %v293
      %314 = vmatprep.subr.bf16.mxu0 0
      %315 = vmatpush2.bf16.msra.mxu0 0
      %316 = vmatprep.subr.bf16.mxu0 0
      %317 = vmatpush2.bf16.msra.mxu0 0
      %318 = vmatprep.subr.bf16.mxu0 0
      %319 = vmatpush2.bf16.msra.mxu0 0
      %320 = vmatprep.subr.bf16.mxu0 0
      %321 = vmatpush2.bf16.msra.mxu0 0
      %322 = vmatprep.subr.bf16.mxu0 0
      %323 = vmatpush2.bf16.msra.mxu0 0
      %324 = vmatprep.subr.bf16.mxu0 0
      %325 = vmatpush2.bf16.msra.mxu0 0
      %326 = vmatprep.subr.bf16.mxu0 0
      %327 = vmatpush2.bf16.msra.mxu0 0
      %328 = vmatprep.subr.bf16.mxu0 0
      %329 = vmatpush2.bf16.msra.mxu0 0
      %330 = vmatprep.mubr.bf16.mxu0 0
      %331 = vmatmul.mubr.bf16.gmra.mxu0 %v296
      %v332 = vpop.f32.mrf.mxu0
      %v333 = vadd.f32 0.0, %v332
      %v334 = vpop.f32.mrf.mxu0
      %v335 = vpop.f32.mrf.mxu0
      %v336 = vpop.f32.mrf.mxu0
      %337 = vdwg.mxu0
      %v338 = vadd.f32 %v279, %v333
      %s339 = scalar_lea.vmem %s168, 32
      %v340 = vld [vmem:[%s339] sm:$0x3f]
      %v341 = vpack.c.bf16 %v340, %v340
      %s342 = scalar_lea.vmem %s1, 24
      %v343 = vld [vmem:[%s342] sm:$0xf]
      %v344 = vld [vmem:[%s342 + $0x4] sm:$0xf]
      %v347 = vunpack.c.l.b16 %v343
      %v348 = vunpack.c.l.b16 %v344
      %v349 = vpack.c.b16 %v348, %v347
      %v352 = vsel %vm191, %v341, 0
      %354 = vmatprep.subr.bf16.mxu0 0
      %355 = vmatpush1.bf16.msra.mxu0 0
      %356 = vmatprep.subr.bf16.mxu0 0
      %357 = vmatpush1.bf16.msra.mxu0 0
      %358 = vmatprep.subr.bf16.mxu0 0
      %359 = vmatpush1.bf16.msra.mxu0 0
      %360 = vmatprep.subr.bf16.mxu0 0
      %361 = vmatpush1.bf16.msra.mxu0 0
      %362 = vmatprep.subr.bf16.mxu0 0
      %363 = vmatpush1.bf16.msra.mxu0 0
      %364 = vmatprep.subr.bf16.mxu0 0
      %365 = vmatpush1.bf16.msra.mxu0 0
      %366 = vmatprep.subr.bf16.mxu0 0
      %367 = vmatpush1.bf16.msra.mxu0 0
      %368 = vmatprep.subr.bf16.mxu0 0
      %369 = vmatpush1.bf16.msra.mxu0 %v349
      %370 = vmatprep.subr.bf16.mxu0 0
      %371 = vmatpush2.bf16.msra.mxu0 0
      %372 = vmatprep.subr.bf16.mxu0 0
      %373 = vmatpush2.bf16.msra.mxu0 0
      %374 = vmatprep.subr.bf16.mxu0 0
      %375 = vmatpush2.bf16.msra.mxu0 0
      %376 = vmatprep.subr.bf16.mxu0 0
      %377 = vmatpush2.bf16.msra.mxu0 0
      %378 = vmatprep.subr.bf16.mxu0 0
      %379 = vmatpush2.bf16.msra.mxu0 0
      %380 = vmatprep.subr.bf16.mxu0 0
      %381 = vmatpush2.bf16.msra.mxu0 0
      %382 = vmatprep.subr.bf16.mxu0 0
      %383 = vmatpush2.bf16.msra.mxu0 0
      %384 = vmatprep.subr.bf16.mxu0 0
      %385 = vmatpush2.bf16.msra.mxu0 0
      %386 = vmatprep.mubr.bf16.mxu0 0
      %387 = vmatmul.mubr.bf16.gmra.mxu0 %v352
      %v388 = vpop.f32.mrf.mxu0
      %v389 = vadd.f32 0.0, %v388
      %v390 = vpop.f32.mrf.mxu0
      %v391 = vpop.f32.mrf.mxu0
      %v392 = vpop.f32.mrf.mxu0
      %393 = vdwg.mxu0
      %v394 = vadd.f32 %v338, %v389
      %s395 = scalar_lea.vmem %s168, 48
      %v396 = vld [vmem:[%s395] sm:$0x3f]
      %v397 = vpack.c.bf16 %v396, %v396
      %s398 = scalar_lea.vmem %s1, 32
      %v399 = vld [vmem:[%s398] sm:$0xf]
      %v400 = vld [vmem:[%s398 + $0x4] sm:$0xf]
      %v403 = vunpack.c.l.b16 %v399
      %v404 = vunpack.c.l.b16 %v400
      %v405 = vpack.c.b16 %v404, %v403
      %v408 = vsel %vm191, %v397, 0
      %410 = vmatprep.subr.bf16.mxu0 0
      %411 = vmatpush1.bf16.msra.mxu0 0
      %412 = vmatprep.subr.bf16.mxu0 0
      %413 = vmatpush1.bf16.msra.mxu0 0
      %414 = vmatprep.subr.bf16.mxu0 0
      %415 = vmatpush1.bf16.msra.mxu0 0
      %416 = vmatprep.subr.bf16.mxu0 0
      %417 = vmatpush1.bf16.msra.mxu0 0
      %418 = vmatprep.subr.bf16.mxu0 0
      %419 = vmatpush1.bf16.msra.mxu0 0
      %420 = vmatprep.subr.bf16.mxu0 0
      %421 = vmatpush1.bf16.msra.mxu0 0
      %422 = vmatprep.subr.bf16.mxu0 0
      %423 = vmatpush1.bf16.msra.mxu0 0
      %424 = vmatprep.subr.bf16.mxu0 0
      %425 = vmatpush1.bf16.msra.mxu0 %v405
      %426 = vmatprep.subr.bf16.mxu0 0
      %427 = vmatpush2.bf16.msra.mxu0 0
      %428 = vmatprep.subr.bf16.mxu0 0
      %429 = vmatpush2.bf16.msra.mxu0 0
      %430 = vmatprep.subr.bf16.mxu0 0
      %431 = vmatpush2.bf16.msra.mxu0 0
      %432 = vmatprep.subr.bf16.mxu0 0
      %433 = vmatpush2.bf16.msra.mxu0 0
      %434 = vmatprep.subr.bf16.mxu0 0
      %435 = vmatpush2.bf16.msra.mxu0 0
      %436 = vmatprep.subr.bf16.mxu0 0
      %437 = vmatpush2.bf16.msra.mxu0 0
      %438 = vmatprep.subr.bf16.mxu0 0
      %439 = vmatpush2.bf16.msra.mxu0 0
      %440 = vmatprep.subr.bf16.mxu0 0
      %441 = vmatpush2.bf16.msra.mxu0 0
      %442 = vmatprep.mubr.bf16.mxu0 0
      %443 = vmatmul.mubr.bf16.gmra.mxu0 %v408
      %v444 = vpop.f32.mrf.mxu0
      %v445 = vadd.f32 0.0, %v444
      %v446 = vpop.f32.mrf.mxu0
      %v447 = vpop.f32.mrf.mxu0
      %v448 = vpop.f32.mrf.mxu0
      %449 = vdwg.mxu0
      %v450 = vadd.f32 %v394, %v445
      %v451 = vld [vmem:[%s339 + $0x1] sm:$0x3f]
      %v452 = vpack.c.bf16 %v451, %v451
      %s453 = scalar_lea.vmem %s1, 40
      %v454 = vld [vmem:[%s453] sm:$0xf]
      %v455 = vld [vmem:[%s453 + $0x4] sm:$0xf]
      %v458 = vunpack.c.l.b16 %v454
      %v459 = vunpack.c.l.b16 %v455
      %v460 = vpack.c.b16 %v459, %v458
      %v463 = vsel %vm191, %v452, 0
      %465 = vmatprep.subr.bf16.mxu0 0
      %466 = vmatpush1.bf16.msra.mxu0 0
      %467 = vmatprep.subr.bf16.mxu0 0
      %468 = vmatpush1.bf16.msra.mxu0 0
      %469 = vmatprep.subr.bf16.mxu0 0
      %470 = vmatpush1.bf16.msra.mxu0 0
      %471 = vmatprep.subr.bf16.mxu0 0
      %472 = vmatpush1.bf16.msra.mxu0 0
      %473 = vmatprep.subr.bf16.mxu0 0
      %474 = vmatpush1.bf16.msra.mxu0 0
      %475 = vmatprep.subr.bf16.mxu0 0
      %476 = vmatpush1.bf16.msra.mxu0 0
      %477 = vmatprep.subr.bf16.mxu0 0
      %478 = vmatpush1.bf16.msra.mxu0 0
      %479 = vmatprep.subr.bf16.mxu0 0
      %480 = vmatpush1.bf16.msra.mxu0 %v460
      %481 = vmatprep.subr.bf16.mxu0 0
      %482 = vmatpush2.bf16.msra.mxu0 0
      %483 = vmatprep.subr.bf16.mxu0 0
      %484 = vmatpush2.bf16.msra.mxu0 0
      %485 = vmatprep.subr.bf16.mxu0 0
      %486 = vmatpush2.bf16.msra.mxu0 0
      %487 = vmatprep.subr.bf16.mxu0 0
      %488 = vmatpush2.bf16.msra.mxu0 0
      %489 = vmatprep.subr.bf16.mxu0 0
      %490 = vmatpush2.bf16.msra.mxu0 0
      %491 = vmatprep.subr.bf16.mxu0 0
      %492 = vmatpush2.bf16.msra.mxu0 0
      %493 = vmatprep.subr.bf16.mxu0 0
      %494 = vmatpush2.bf16.msra.mxu0 0
      %495 = vmatprep.subr.bf16.mxu0 0
      %496 = vmatpush2.bf16.msra.mxu0 0
      %497 = vmatprep.mubr.bf16.mxu0 0
      %498 = vmatmul.mubr.bf16.gmra.mxu0 %v463
      %v499 = vpop.f32.mrf.mxu0
      %v500 = vadd.f32 0.0, %v499
      %v501 = vpop.f32.mrf.mxu0
      %v502 = vpop.f32.mrf.mxu0
      %v503 = vpop.f32.mrf.mxu0
      %504 = vdwg.mxu0
      %v505 = vadd.f32 %v450, %v500
      %v506 = vld [vmem:[%s168 + $0x3] sm:$0x3f]
      %v507 = vpack.c.bf16 %v506, %v506
      %s508 = scalar_lea.vmem %s1, 48
      %v509 = vld [vmem:[%s508] sm:$0xf]
      %v510 = vld [vmem:[%s508 + $0x4] sm:$0xf]
      %v513 = vunpack.c.l.b16 %v509
      %v514 = vunpack.c.l.b16 %v510
      %v515 = vpack.c.b16 %v514, %v513
      %v518 = vsel %vm191, %v507, 0
      %520 = vmatprep.subr.bf16.mxu0 0
      %521 = vmatpush1.bf16.msra.mxu0 0
      %522 = vmatprep.subr.bf16.mxu0 0
      %523 = vmatpush1.bf16.msra.mxu0 0
      %524 = vmatprep.subr.bf16.mxu0 0
      %525 = vmatpush1.bf16.msra.mxu0 0
      %526 = vmatprep.subr.bf16.mxu0 0
      %527 = vmatpush1.bf16.msra.mxu0 0
      %528 = vmatprep.subr.bf16.mxu0 0
      %529 = vmatpush1.bf16.msra.mxu0 0
      %530 = vmatprep.subr.bf16.mxu0 0
      %531 = vmatpush1.bf16.msra.mxu0 0
      %532 = vmatprep.subr.bf16.mxu0 0
      %533 = vmatpush1.bf16.msra.mxu0 0
      %534 = vmatprep.subr.bf16.mxu0 0
      %535 = vmatpush1.bf16.msra.mxu0 %v515
      %536 = vmatprep.subr.bf16.mxu0 0
      %537 = vmatpush2.bf16.msra.mxu0 0
      %538 = vmatprep.subr.bf16.mxu0 0
      %539 = vmatpush2.bf16.msra.mxu0 0
      %540 = vmatprep.subr.bf16.mxu0 0
      %541 = vmatpush2.bf16.msra.mxu0 0
      %542 = vmatprep.subr.bf16.mxu0 0
      %543 = vmatpush2.bf16.msra.mxu0 0
      %544 = vmatprep.subr.bf16.mxu0 0
      %545 = vmatpush2.bf16.msra.mxu0 0
      %546 = vmatprep.subr.bf16.mxu0 0
      %547 = vmatpush2.bf16.msra.mxu0 0
      %548 = vmatprep.subr.bf16.mxu0 0
      %549 = vmatpush2.bf16.msra.mxu0 0
      %550 = vmatprep.subr.bf16.mxu0 0
      %551 = vmatpush2.bf16.msra.mxu0 0
      %552 = vmatprep.mubr.bf16.mxu0 0
      %553 = vmatmul.mubr.bf16.gmra.mxu0 %v518
      %v554 = vpop.f32.mrf.mxu0
      %v555 = vadd.f32 0.0, %v554
      %v556 = vpop.f32.mrf.mxu0
      %v557 = vpop.f32.mrf.mxu0
      %v558 = vpop.f32.mrf.mxu0
      %559 = vdwg.mxu0
      %v560 = vadd.f32 %v505, %v555
      %v561 = vld [vmem:[%s179 + $0x3] sm:$0x3f]
      %v562 = vpack.c.bf16 %v561, %v561
      %s563 = scalar_lea.vmem %s1, 56
      %v564 = vld [vmem:[%s563] sm:$0xf]
      %v565 = vld [vmem:[%s563 + $0x4] sm:$0xf]
      %v568 = vunpack.c.l.b16 %v564
      %v569 = vunpack.c.l.b16 %v565
      %v570 = vpack.c.b16 %v569, %v568
      %v573 = vsel %vm191, %v562, 0
      %575 = vmatprep.subr.bf16.mxu0 0
      %576 = vmatpush1.bf16.msra.mxu0 0
      %577 = vmatprep.subr.bf16.mxu0 0
      %578 = vmatpush1.bf16.msra.mxu0 0
      %579 = vmatprep.subr.bf16.mxu0 0
      %580 = vmatpush1.bf16.msra.mxu0 0
      %581 = vmatprep.subr.bf16.mxu0 0
      %582 = vmatpush1.bf16.msra.mxu0 0
      %583 = vmatprep.subr.bf16.mxu0 0
      %584 = vmatpush1.bf16.msra.mxu0 0
      %585 = vmatprep.subr.bf16.mxu0 0
      %586 = vmatpush1.bf16.msra.mxu0 0
      %587 = vmatprep.subr.bf16.mxu0 0
      %588 = vmatpush1.bf16.msra.mxu0 0
      %589 = vmatprep.subr.bf16.mxu0 0
      %590 = vmatpush1.bf16.msra.mxu0 %v570
      %591 = vmatprep.subr.bf16.mxu0 0
      %592 = vmatpush2.bf16.msra.mxu0 0
      %593 = vmatprep.subr.bf16.mxu0 0
      %594 = vmatpush2.bf16.msra.mxu0 0
      %595 = vmatprep.subr.bf16.mxu0 0
      %596 = vmatpush2.bf16.msra.mxu0 0
      %597 = vmatprep.subr.bf16.mxu0 0
      %598 = vmatpush2.bf16.msra.mxu0 0
      %599 = vmatprep.subr.bf16.mxu0 0
      %600 = vmatpush2.bf16.msra.mxu0 0
      %601 = vmatprep.subr.bf16.mxu0 0
      %602 = vmatpush2.bf16.msra.mxu0 0
      %603 = vmatprep.subr.bf16.mxu0 0
      %604 = vmatpush2.bf16.msra.mxu0 0
      %605 = vmatprep.subr.bf16.mxu0 0
      %606 = vmatpush2.bf16.msra.mxu0 0
      %607 = vmatprep.mubr.bf16.mxu0 0
      %608 = vmatmul.mubr.bf16.gmra.mxu0 %v573
      %v609 = vpop.f32.mrf.mxu0
      %v610 = vadd.f32 0.0, %v609
      %v611 = vpop.f32.mrf.mxu0
      %v612 = vpop.f32.mrf.mxu0
      %v613 = vpop.f32.mrf.mxu0
      %614 = vdwg.mxu0
      %v615 = vadd.f32 %v560, %v610
      %v616 = vld [vmem:[%s168 + $0x4] sm:$0x3f]
      %v617 = vpack.c.bf16 %v616, %v616
      %s618 = scalar_lea.vmem %s1, 64
      %v619 = vld [vmem:[%s618] sm:$0xf]
      %v620 = vld [vmem:[%s618 + $0x4] sm:$0xf]
      %v623 = vunpack.c.l.b16 %v619
      %v624 = vunpack.c.l.b16 %v620
      %v625 = vpack.c.b16 %v624, %v623
      %v628 = vsel %vm191, %v617, 0
      %630 = vmatprep.subr.bf16.mxu0 0
      %631 = vmatpush1.bf16.msra.mxu0 0
      %632 = vmatprep.subr.bf16.mxu0 0
      %633 = vmatpush1.bf16.msra.mxu0 0
      %634 = vmatprep.subr.bf16.mxu0 0
      %635 = vmatpush1.bf16.msra.mxu0 0
      %636 = vmatprep.subr.bf16.mxu0 0
      %637 = vmatpush1.bf16.msra.mxu0 0
      %638 = vmatprep.subr.bf16.mxu0 0
      %639 = vmatpush1.bf16.msra.mxu0 0
      %640 = vmatprep.subr.bf16.mxu0 0
      %641 = vmatpush1.bf16.msra.mxu0 0
      %642 = vmatprep.subr.bf16.mxu0 0
      %643 = vmatpush1.bf16.msra.mxu0 0
      %644 = vmatprep.subr.bf16.mxu0 0
      %645 = vmatpush1.bf16.msra.mxu0 %v625
      %646 = vmatprep.subr.bf16.mxu0 0
      %647 = vmatpush2.bf16.msra.mxu0 0
      %648 = vmatprep.subr.bf16.mxu0 0
      %649 = vmatpush2.bf16.msra.mxu0 0
      %650 = vmatprep.subr.bf16.mxu0 0
      %651 = vmatpush2.bf16.msra.mxu0 0
      %652 = vmatprep.subr.bf16.mxu0 0
      %653 = vmatpush2.bf16.msra.mxu0 0
      %654 = vmatprep.subr.bf16.mxu0 0
      %655 = vmatpush2.bf16.msra.mxu0 0
      %656 = vmatprep.subr.bf16.mxu0 0
      %657 = vmatpush2.bf16.msra.mxu0 0
      %658 = vmatprep.subr.bf16.mxu0 0
      %659 = vmatpush2.bf16.msra.mxu0 0
      %660 = vmatprep.subr.bf16.mxu0 0
      %661 = vmatpush2.bf16.msra.mxu0 0
      %662 = vmatprep.mubr.bf16.mxu0 0
      %663 = vmatmul.mubr.bf16.gmra.mxu0 %v628
      %v664 = vpop.f32.mrf.mxu0
      %v665 = vadd.f32 0.0, %v664
      %v666 = vpop.f32.mrf.mxu0
      %v667 = vpop.f32.mrf.mxu0
      %v668 = vpop.f32.mrf.mxu0
      %669 = vdwg.mxu0
      %v670 = vadd.f32 %v615, %v665
      %v671 = vld [vmem:[%s2] sm:$0x1]
      %v673 = vlaneseq
      %v674 = vshrl.u32 %v673, 7
      %v675 = vsub.s32 0, %v674
      %v676 = vrot.slane %v671, %v675
      %v678 = vadd.f32 %v670, %v676
      %v679 = vmax.f32 %v678, 0.0
      %680 = vst [vmem:[%s173] sm:$0x3f] %v679
      %p681 = scmp.lt.s32.totalorder %s14, 1
      %s682 = scalar_select %p681, %s14, 1
      %s683 = smul.addr %s682, 8
      %s684 = scalar_lea.vmem %s3, %s683
      // Predicated region
      $region33: #{backbone_as_unet_forward.12} parent=31 // pred_check
        %p685 = pneg %p100
      $region34: #{backbone_as_unet_forward.12} parent=31 // pred_check_branch
        %687 = sbr.rel (%p685) target = $region36
      $region35: #{backbone_as_unet_forward.12} parent=31 // pred_region
        _
      $region36: #{backbone_as_unet_forward.12} parent=31 // pred_fallthru
        _
    $region32: #{backbone_as_unet_forward.12} parent=5 // pred_fallthru
      _
    %p688 = scmp.le.s32.totalorder 2, %s9
    // Predicated region
    $region37: #{backbone_as_unet_forward.12} parent=5 // pred_check
      %p689 = pneg %p688
    $region38: #{backbone_as_unet_forward.12} parent=5 // pred_check_branch
      %691 = sbr.rel (%p689) target = $region40
    $region39: #{backbone_as_unet_forward.12} parent=5 // pred_region
      %s692 = ssub.s32 %s9, 2
      // Predicated region
      $region41: #{backbone_as_unet_forward.12} parent=39 // pred_check
        %p693 = pneg %p106
      $region42: #{backbone_as_unet_forward.12} parent=39 // pred_check_branch
        %695 = sbr.rel (%p693) target = $region44
      $region43: #{backbone_as_unet_forward.12} parent=39 // pred_region
        %p696 = scmp.lt.s32.totalorder %s15, 1
        %s697 = scalar_select %p696, %s15, 1
        %s698 = smul.addr %s697, 8
        %s699 = scalar_lea.vmem %s3, %s698
      $region44: #{backbone_as_unet_forward.12} parent=39 // pred_fallthru
        _
    $region40: #{backbone_as_unet_forward.12} parent=5 // pred_fallthru
      _
  $region6: #{backbone_as_unet_forward.12} parent=0 // loop_footer
    %s13 = sadd.s32 1, %s9
  $region7: #{backbone_as_unet_forward.12} parent=0 // loop_footer_branch
    %8 = sbr.rel target = $region3
  $region8: #{backbone_as_unet_forward.12} parent=0 // loop_exit
    _

// kernel: backbone_as_unet_forward.13
$region0: #{backbone_as_unet_forward.13}
  #allocation0 [shape = 'u32[]', space=smem, size = 0x4, offset = 0x4, fixed_abs, tag = 'smem constant byte address 0x4 - core index']
  #allocation1 [shape = 'u32[144,128]{1,0:T(1,128)}', space=vmem, size = 0x12000, scoped, tag = 'internal scratch']
  %s0 = inlined_call_operand.vmem [shape: f32[8,32], index: 0, kind: input, shape index: {}]
  %s1 = inlined_call_operand.vmem [shape: bf16[32,128], index: 1, kind: input, shape index: {}]
  %s2 = inlined_call_operand.vmem [shape: f32[1,128], index: 2, kind: input, shape index: {}]
  %s3 = inlined_call_operand.vmem [shape: f32[8,128], index: 3, kind: output, shape index: {}]
  %s4 = sld [smem:[#allocation0]]
  $region22: #{backbone_as_unet_forward.13} parent=0
    _
  %s6 = ssub.s32 1, %s4
  %s7 = scalar_select 0, %s6, %s4
  // Predicated region
  $region2: #{backbone_as_unet_forward.13} parent=0 // pred_check
    _
  $region3: #{backbone_as_unet_forward.13} parent=0 // pred_check_branch
    %9 = sbr.rel (0) target = $region5
  $region4: #{backbone_as_unet_forward.13} parent=0 // pred_region
    _
  $region5: #{backbone_as_unet_forward.13} parent=0 // pred_fallthru
    _
  // Predicated region
  $region6: #{backbone_as_unet_forward.13} parent=0 // pred_check
    _
  $region7: #{backbone_as_unet_forward.13} parent=0 // pred_check_branch
    %11 = sbr.rel (0) target = $region9
  $region8: #{backbone_as_unet_forward.13} parent=0 // pred_region
    _
  $region9: #{backbone_as_unet_forward.13} parent=0 // pred_fallthru
    _
  // Predicated region
  $region10: #{backbone_as_unet_forward.13} parent=0 // pred_check
    _
  $region11: #{backbone_as_unet_forward.13} parent=0 // pred_check_branch
    %13 = sbr.rel (0) target = $region13
  $region12: #{backbone_as_unet_forward.13} parent=0 // pred_region
    _
  $region13: #{backbone_as_unet_forward.13} parent=0 // pred_fallthru
    _
  %v15 = vld [vmem:[%s0] sm:$0xff]
  %v16 = vpack.c.bf16 %v15, %v15
  %v17 = vld [vmem:[%s1] sm:$0xf]
  %v18 = vld [vmem:[%s1 + $0x4] sm:$0xf]
  %v19 = vld [vmem:[%s1 + $0x8] sm:$0xf]
  %v20 = vld [vmem:[%s1 + $0xc] sm:$0xf]
  %v21 = vld [vmem:[%s2] sm:$0x1]
  %v23 = vlaneseq
  %v24 = vshrl.u32 %v23, 7
  %v25 = vsub.s32 0, %v24
  %v26 = vrot.slane %v21, %v25
  %v32 = vunpack.c.l.b16 %v17
  %v33 = vunpack.c.l.b16 %v18
  %v34 = vunpack.c.l.b16 %v19
  %v35 = vunpack.c.l.b16 %v20
  %v36 = vpack.c.b16 %v33, %v32
  %v37 = vpack.c.b16 %v35, %v34
  %vm40 = vcmask 261120
  %v42 = vsel %vm40, %v16, 0
  %44 = vmatprep.subr.bf16.mxu0 0
  %45 = vmatpush1.bf16.msra.mxu0 0
  %46 = vmatprep.subr.bf16.mxu0 0
  %47 = vmatpush1.bf16.msra.mxu0 0
  %48 = vmatprep.subr.bf16.mxu0 0
  %49 = vmatpush1.bf16.msra.mxu0 0
  %50 = vmatprep.subr.bf16.mxu0 0
  %51 = vmatpush1.bf16.msra.mxu0 0
  %52 = vmatprep.subr.bf16.mxu0 0
  %53 = vmatpush1.bf16.msra.mxu0 0
  %54 = vmatprep.subr.bf16.mxu0 0
  %55 = vmatpush1.bf16.msra.mxu0 0
  %56 = vmatprep.subr.bf16.mxu0 0
  %57 = vmatpush1.bf16.msra.mxu0 %v37
  %58 = vmatprep.subr.bf16.mxu0 0
  %59 = vmatpush1.bf16.msra.mxu0 %v36
  %60 = vmatprep.subr.bf16.mxu0 0
  %61 = vmatpush2.bf16.msra.mxu0 0
  %62 = vmatprep.subr.bf16.mxu0 0
  %63 = vmatpush2.bf16.msra.mxu0 0
  %64 = vmatprep.subr.bf16.mxu0 0
  %65 = vmatpush2.bf16.msra.mxu0 0
  %66 = vmatprep.subr.bf16.mxu0 0
  %67 = vmatpush2.bf16.msra.mxu0 0
  %68 = vmatprep.subr.bf16.mxu0 0
  %69 = vmatpush2.bf16.msra.mxu0 0
  %70 = vmatprep.subr.bf16.mxu0 0
  %71 = vmatpush2.bf16.msra.mxu0 0
  %72 = vmatprep.subr.bf16.mxu0 0
  %73 = vmatpush2.bf16.msra.mxu0 0
  %74 = vmatprep.subr.bf16.mxu0 0
  %75 = vmatpush2.bf16.msra.mxu0 0
  %76 = vmatprep.mubr.bf16.mxu0 0
  %77 = vmatmul.mubr.bf16.gmra.mxu0 %v42
  %v78 = vpop.f32.mrf.mxu0
  %v79 = vadd.f32 %v26, %v78
  %v80 = vpop.f32.mrf.mxu0
  %v81 = vpop.f32.mrf.mxu0
  %v82 = vpop.f32.mrf.mxu0
  %83 = vdwg.mxu0
  %84 = vst [vmem:[%s3] sm:$0xff] %v79
  // Predicated region
  $region14: #{backbone_as_unet_forward.13} parent=0 // pred_check
    _
  $region15: #{backbone_as_unet_forward.13} parent=0 // pred_check_branch
    %86 = sbr.rel (0) target = $region17
  $region16: #{backbone_as_unet_forward.13} parent=0 // pred_region
    _
  $region17: #{backbone_as_unet_forward.13} parent=0 // pred_fallthru
    _
  // Predicated region
  $region18: #{backbone_as_unet_forward.13} parent=0 // pred_check
    _
  $region19: #{backbone_as_unet_forward.13} parent=0 // pred_check_branch
    %88 = sbr.rel (0) target = $region21
  $region20: #{backbone_as_unet_forward.13} parent=0 // pred_region
    _
  $region21: #{backbone_as_unet_forward.13} parent=0 // pred_fallthru
    _

// kernel: backbone_as_unet_forward.16
$region0: #{backbone_as_unet_forward.16}
  #allocation0 [shape = 'u32[]', space=smem, size = 0x4, offset = 0x4, fixed_abs, tag = 'smem constant byte address 0x4 - core index']
  #allocation1 [shape = 'u32[144,128]{1,0:T(1,128)}', space=vmem, size = 0x12000, scoped, tag = 'internal scratch']
  %s0 = inlined_call_operand.vmem [shape: f32[32,16], index: 0, kind: input, shape index: {}]
  %s1 = inlined_call_operand.vmem [shape: bf16[16,128], index: 1, kind: input, shape index: {}]
  %s2 = inlined_call_operand.vmem [shape: f32[1,128], index: 2, kind: input, shape index: {}]
  %s3 = inlined_call_operand.vmem [shape: f32[32,128], index: 3, kind: output, shape index: {}]
  %s4 = sld [smem:[#allocation0]]
  $region22: #{backbone_as_unet_forward.16} parent=0
    _
  %s6 = ssub.s32 1, %s4
  %s7 = scalar_select 0, %s6, %s4
  // Predicated region
  $region2: #{backbone_as_unet_forward.16} parent=0 // pred_check
    _
  $region3: #{backbone_as_unet_forward.16} parent=0 // pred_check_branch
    %9 = sbr.rel (0) target = $region5
  $region4: #{backbone_as_unet_forward.16} parent=0 // pred_region
    _
  $region5: #{backbone_as_unet_forward.16} parent=0 // pred_fallthru
    _
  // Predicated region
  $region6: #{backbone_as_unet_forward.16} parent=0 // pred_check
    _
  $region7: #{backbone_as_unet_forward.16} parent=0 // pred_check_branch
    %11 = sbr.rel (0) target = $region9
  $region8: #{backbone_as_unet_forward.16} parent=0 // pred_region
    _
  $region9: #{backbone_as_unet_forward.16} parent=0 // pred_fallthru
    _
  // Predicated region
  $region10: #{backbone_as_unet_forward.16} parent=0 // pred_check
    _
  $region11: #{backbone_as_unet_forward.16} parent=0 // pred_check_branch
    %13 = sbr.rel (0) target = $region13
  $region12: #{backbone_as_unet_forward.16} parent=0 // pred_region
    _
  $region13: #{backbone_as_unet_forward.16} parent=0 // pred_fallthru
    _
  %v15 = vld [vmem:[%s0] sm:$0xff]
  %v16 = vld [vmem:[%s0 + $0x8] sm:$0xff]
  %v17 = vld [vmem:[%s0 + $0x10] sm:$0xff]
  %v18 = vld [vmem:[%s0 + $0x18] sm:$0xff]
  %v19 = vpack.c.bf16 %v16, %v15
  %v20 = vpack.c.bf16 %v18, %v17
  %v21 = vld [vmem:[%s1] sm:$0xf]
  %v22 = vld [vmem:[%s1 + $0x4] sm:$0xf]
  %v23 = vld [vmem:[%s2] sm:$0x1]
  %v25 = vlaneseq
  %v26 = vshrl.u32 %v25, 7
  %v27 = vsub.s32 0, %v26
  %v28 = vrot.slane %v23, %v27
  %v32 = vunpack.c.l.b16 %v21
  %v33 = vunpack.c.l.b16 %v22
  %v34 = vpack.c.b16 %v33, %v32
  %vm36 = vcmask 130048
  %v38 = vsel %vm36, %v19, 0
  %v41 = vsel %vm36, %v20, 0
  %43 = vmatprep.subr.bf16.mxu0 0
  %44 = vmatpush1.bf16.msra.mxu0 0
  %45 = vmatprep.subr.bf16.mxu0 0
  %46 = vmatpush1.bf16.msra.mxu0 0
  %47 = vmatprep.subr.bf16.mxu0 0
  %48 = vmatpush1.bf16.msra.mxu0 0
  %49 = vmatprep.subr.bf16.mxu0 0
  %50 = vmatpush1.bf16.msra.mxu0 0
  %51 = vmatprep.subr.bf16.mxu0 0
  %52 = vmatpush1.bf16.msra.mxu0 0
  %53 = vmatprep.subr.bf16.mxu0 0
  %54 = vmatpush1.bf16.msra.mxu0 0
  %55 = vmatprep.subr.bf16.mxu0 0
  %56 = vmatpush1.bf16.msra.mxu0 0
  %57 = vmatprep.subr.bf16.mxu0 0
  %58 = vmatpush1.bf16.msra.mxu0 %v34
  %59 = vmatprep.subr.bf16.mxu0 0
  %60 = vmatpush2.bf16.msra.mxu0 0
  %61 = vmatprep.subr.bf16.mxu0 0
  %62 = vmatpush2.bf16.msra.mxu0 0
  %63 = vmatprep.subr.bf16.mxu0 0
  %64 = vmatpush2.bf16.msra.mxu0 0
  %65 = vmatprep.subr.bf16.mxu0 0
  %66 = vmatpush2.bf16.msra.mxu0 0
  %67 = vmatprep.subr.bf16.mxu0 0
  %68 = vmatpush2.bf16.msra.mxu0 0
  %69 = vmatprep.subr.bf16.mxu0 0
  %70 = vmatpush2.bf16.msra.mxu0 0
  %71 = vmatprep.subr.bf16.mxu0 0
  %72 = vmatpush2.bf16.msra.mxu0 0
  %73 = vmatprep.subr.bf16.mxu0 0
  %74 = vmatpush2.bf16.msra.mxu0 0
  %75 = vmatprep.mubr.bf16.mxu0 0
  %76 = vmatmul.mubr.bf16.gmra.mxu0 %v38
  %v77 = vpop.f32.mrf.mxu0
  %v78 = vadd.f32 %v28, %v77
  %v79 = vpop.f32.mrf.mxu0
  %v80 = vpop.f32.mrf.mxu0
  %v81 = vadd.f32 %v28, %v80
  %v82 = vpop.f32.mrf.mxu0
  %83 = vmatprep.mubr.bf16.mxu0 0
  %84 = vmatmul.mubr.bf16.gmra.mxu0 %v41
  %v85 = vpop.f32.mrf.mxu0
  %v86 = vadd.f32 %v28, %v85
  %v87 = vpop.f32.mrf.mxu0
  %v88 = vpop.f32.mrf.mxu0
  %v89 = vadd.f32 %v28, %v88
  %v90 = vpop.f32.mrf.mxu0
  %91 = vdwg.mxu0
  %92 = vst [vmem:[%s3] sm:$0xff] %v78
  %93 = vst [vmem:[%s3 + $0x8] sm:$0xff] %v81
  %94 = vst [vmem:[%s3 + $0x10] sm:$0xff] %v86
  %95 = vst [vmem:[%s3 + $0x18] sm:$0xff] %v89
  // Predicated region
  $region14: #{backbone_as_unet_forward.16} parent=0 // pred_check
    _
  $region15: #{backbone_as_unet_forward.16} parent=0 // pred_check_branch
    %97 = sbr.rel (0) target = $region17
  $region16: #{backbone_as_unet_forward.16} parent=0 // pred_region
    _
  $region17: #{backbone_as_unet_forward.16} parent=0 // pred_fallthru
    _
  // Predicated region
  $region18: #{backbone_as_unet_forward.16} parent=0 // pred_check
    _
  $region19: #{backbone_as_unet_forward.16} parent=0 // pred_check_branch
    %99 = sbr.rel (0) target = $region21
  $region20: #{backbone_as_unet_forward.16} parent=0 // pred_region
    _
  $region21: #{backbone_as_unet_forward.16} parent=0 // pred_fallthru
    _

// kernel: backbone_as_unet_forward.14
$region0: #{backbone_as_unet_forward.14}
  #allocation0 [shape = 'u32[]', space=smem, size = 0x4, offset = 0x4, fixed_abs, tag = 'smem constant byte address 0x4 - core index']
  #allocation1 [shape = 'u32[144,128]{1,0:T(1,128)}', space=vmem, size = 0x12000, scoped, tag = 'internal scratch']
  %s0 = inlined_call_operand.vmem [shape: f32[2,38,32], index: 0, kind: input, shape index: {}]
  %s1 = inlined_call_operand.vmem [shape: bf16[9,32,128], index: 1, kind: input, shape index: {}]
  %s2 = inlined_call_operand.vmem [shape: f32[1,128], index: 2, kind: input, shape index: {}]
  %s3 = inlined_call_operand.vmem [shape: f32[2,24,128], index: 3, kind: output, shape index: {}]
  %s4 = sld [smem:[#allocation0]]
  $region45: #{backbone_as_unet_forward.14} parent=0
    _
  %s6 = ssub.s32 1, %s4
  %s7 = scalar_select 0, %s6, %s4
  loop: start=0, step=1, limit=4
  $region2: #{backbone_as_unet_forward.14} parent=0 // loop_pre_header
    _
  $region3: #{backbone_as_unet_forward.14} parent=0 // loop_header
    %s9 = sphi 0, %s13
    %p10 = scmp.ge.s32.totalorder %s9, 4
    %s19 = sphi 0, %s21
    %s22 = sphi 0, %s19
    %s23 = sphi 0, %s22
    %s39 = sphi 0, %s23
    %s43 = sphi 0, %s43
    %s45 = sphi 0, %s43
    %s46 = sphi 0, %s45
    %s60 = sphi 0, %s46
    %s64 = sphi 0, %s64
    %s66 = sphi 0, %s64
    %s67 = sphi 0, %s66
    %s81 = sphi 0, %s67
    %s87 = sphi 0, %s89
    %s90 = sphi 0, %s87
    %s91 = sphi 0, %s90
    %s107 = sphi 0, %s91
  $region4: #{backbone_as_unet_forward.14} parent=0 // loop_header_branch
    %12 = sbr.rel (%p10) target = $region8
  $region5: #{backbone_as_unet_forward.14} parent=0 // loop_body
    %s14 = ssub.s32 %s9, 1
    %s15 = ssub.s32 %s9, 2
    %s16 = sadd.s32 %s9, 1
    %s17 = ssub.s32 %s9, %s16
    %p18 = scmp.eq.s32.totalorder %s17, 0
    %s20 = sadd.s32 %s19, 1
    %s21 = scalar_select %p18, %s19, %s20
    %p24 = pneg %p18
    %p25 = scmp.eq.s32.totalorder %s9, 1
    %p26 = por %p24, %p25
    %p27 = scmp.ne.s32.totalorder %s19, %s22
    %p28 = scmp.eq.s32.totalorder %s9, 0
    %p29 = por %p27, %p28
    %p30 = scmp.ne.s32.totalorder %s19, %s22
    %p31 = scmp.eq.s32.totalorder %s14, 1
    %p32 = por %p30, %p31
    %p33 = scmp.ne.s32.totalorder %s22, %s23
    %p34 = scmp.eq.s32.totalorder %s14, 0
    %p35 = por %p33, %p34
    %p36 = scmp.ne.s32.totalorder %s22, %s23
    %p37 = scmp.eq.s32.totalorder %s15, 1
    %p38 = por %p36, %p37
    %p40 = scmp.ne.s32.totalorder %s23, %s39
    %p41 = scmp.eq.s32.totalorder %s15, 0
    %p42 = por %p40, %p41
    %s44 = sadd.s32 %s43, 1
    %p47 = scmp.eq.s32.totalorder %s9, 1
    %p48 = scmp.ne.s32.totalorder %s43, %s45
    %p49 = scmp.eq.s32.totalorder %s9, 0
    %p50 = por %p48, %p49
    %p51 = scmp.ne.s32.totalorder %s43, %s45
    %p52 = scmp.eq.s32.totalorder %s14, 1
    %p53 = por %p51, %p52
    %p54 = scmp.ne.s32.totalorder %s45, %s46
    %p55 = scmp.eq.s32.totalorder %s14, 0
    %p56 = por %p54, %p55
    %p57 = scmp.ne.s32.totalorder %s45, %s46
    %p58 = scmp.eq.s32.totalorder %s15, 1
    %p59 = por %p57, %p58
    %p61 = scmp.ne.s32.totalorder %s46, %s60
    %p62 = scmp.eq.s32.totalorder %s15, 0
    %p63 = por %p61, %p62
    %s65 = sadd.s32 %s64, 1
    %p68 = scmp.eq.s32.totalorder %s9, 1
    %p69 = scmp.ne.s32.totalorder %s64, %s66
    %p70 = scmp.eq.s32.totalorder %s9, 0
    %p71 = por %p69, %p70
    %p72 = scmp.ne.s32.totalorder %s64, %s66
    %p73 = scmp.eq.s32.totalorder %s14, 1
    %p74 = por %p72, %p73
    %p75 = scmp.ne.s32.totalorder %s66, %s67
    %p76 = scmp.eq.s32.totalorder %s14, 0
    %p77 = por %p75, %p76
    %p78 = scmp.ne.s32.totalorder %s66, %s67
    %p79 = scmp.eq.s32.totalorder %s15, 1
    %p80 = por %p78, %p79
    %p82 = scmp.ne.s32.totalorder %s67, %s81
    %p83 = scmp.eq.s32.totalorder %s15, 0
    %p84 = por %p82, %p83
    %s85 = ssub.s32 %s9, %s16
    %p86 = scmp.eq.s32.totalorder %s85, 0
    %s88 = sadd.s32 %s87, 1
    %s89 = scalar_select %p86, %s87, %s88
    %p92 = pneg %p86
    %p93 = scmp.eq.s32.totalorder %s9, 1
    %p94 = por %p92, %p93
    %p95 = scmp.ne.s32.totalorder %s87, %s90
    %p96 = scmp.eq.s32.totalorder %s9, 0
    %p97 = por %p95, %p96
    %p98 = scmp.ne.s32.totalorder %s87, %s90
    %p99 = scmp.eq.s32.totalorder %s14, 1
    %p100 = por %p98, %p99
    %p101 = scmp.ne.s32.totalorder %s90, %s91
    %p102 = scmp.eq.s32.totalorder %s14, 0
    %p103 = por %p101, %p102
    %p104 = scmp.ne.s32.totalorder %s90, %s91
    %p105 = scmp.eq.s32.totalorder %s15, 1
    %p106 = por %p104, %p105
    %p108 = scmp.ne.s32.totalorder %s91, %s107
    %p109 = scmp.eq.s32.totalorder %s15, 0
    %p110 = por %p108, %p109
    %p111 = scmp.le.s32.totalorder 1, %s9
    %p112 = scmp.lt.s32.totalorder %s9, 3
    %p113 = pnand %p111, %p112
    %p114 = pneg %p113
    // Predicated region
    $region9: #{backbone_as_unet_forward.14} parent=5 // pred_check
      _
    $region10: #{backbone_as_unet_forward.14} parent=5 // pred_check_branch
      %116 = sbr.rel (%p113) target = $region12
    $region11: #{backbone_as_unet_forward.14} parent=5 // pred_region
      %s117 = ssub.s32 %s9, 1
      // Predicated region
      $region13: #{backbone_as_unet_forward.14} parent=11 // pred_check
        %p118 = pneg %p56
      $region14: #{backbone_as_unet_forward.14} parent=11 // pred_check_branch
        %120 = sbr.rel (%p118) target = $region16
      $region15: #{backbone_as_unet_forward.14} parent=11 // pred_region
        _
      $region16: #{backbone_as_unet_forward.14} parent=11 // pred_fallthru
        _
      // Predicated region
      $region17: #{backbone_as_unet_forward.14} parent=11 // pred_check
        %p121 = pneg %p77
      $region18: #{backbone_as_unet_forward.14} parent=11 // pred_check_branch
        %123 = sbr.rel (%p121) target = $region20
      $region19: #{backbone_as_unet_forward.14} parent=11 // pred_region
        _
      $region20: #{backbone_as_unet_forward.14} parent=11 // pred_fallthru
        _
    $region12: #{backbone_as_unet_forward.14} parent=5 // pred_fallthru
      _
    %p124 = scmp.lt.s32.totalorder %s9, 2
    // Predicated region
    $region21: #{backbone_as_unet_forward.14} parent=5 // pred_check
      %p125 = pneg %p124
    $region22: #{backbone_as_unet_forward.14} parent=5 // pred_check_branch
      %127 = sbr.rel (%p125) target = $region24
    $region23: #{backbone_as_unet_forward.14} parent=5 // pred_region
      // Predicated region
      $region25: #{backbone_as_unet_forward.14} parent=23 // pred_check
        %p128 = pneg %p29
      $region26: #{backbone_as_unet_forward.14} parent=23 // pred_check_branch
        %130 = sbr.rel (%p128) target = $region28
      $region27: #{backbone_as_unet_forward.14} parent=23 // pred_region
        %p131 = scmp.lt.s32.totalorder %s9, 1
        %s132 = scalar_select %p131, %s9, 1
        %s133 = smul.addr %s132, 5
        %s134 = smul.addr %s133, 8
        %s135 = scalar_lea.vmem %s0, %s134
      $region28: #{backbone_as_unet_forward.14} parent=23 // pred_fallthru
        _
    $region24: #{backbone_as_unet_forward.14} parent=5 // pred_fallthru
      _
    %p136 = scmp.le.s32.totalorder 1, %s9
    %p137 = scmp.lt.s32.totalorder %s9, 3
    %p138 = pnand %p136, %p137
    %p139 = pneg %p138
    // Predicated region
    $region29: #{backbone_as_unet_forward.14} parent=5 // pred_check
      _
    $region30: #{backbone_as_unet_forward.14} parent=5 // pred_check_branch
      %141 = sbr.rel (%p138) target = $region32
    $region31: #{backbone_as_unet_forward.14} parent=5 // pred_region
      %s142 = ssub.s32 %s9, 1
      %p143 = scmp.lt.s32.totalorder %s14, 1
      %s144 = scalar_select %p143, %s14, 1
      %s145 = smul.addr %s144, 5
      %s146 = smul.addr %s145, 8
      %s147 = scalar_lea.vmem %s0, %s146
      %p148 = pneg %p35
      %p149 = pneg %p32
      %p150 = pneg %p56
      %p151 = pneg %p53
      %p152 = pneg %p77
      %p153 = pneg %p74
      %p154 = pneg %p103
      %p155 = pneg %p100
      %p156 = scmp.lt.s32.totalorder %s14, 1
      %s157 = scalar_select %p156, %s14, 1
      %s158 = smul.addr %s157, 3
      %s159 = smul.addr %s158, 8
      %s160 = scalar_lea.vmem %s3, %s159
      %p161 = scmp.lt.s32.totalorder %s14, 1
      %s162 = scalar_select %p161, %s14, 1
      %s163 = smul.addr %s162, 5
      %s164 = smul.addr %s163, 8
      %s165 = scalar_lea.vmem %s0, %s164
      %p166 = scmp.lt.s32.totalorder %s14, 1
      %s167 = scalar_select %p166, %s14, 1
      %s168 = smul.addr %s167, 3
      %s169 = smul.addr %s168, 8
      %s170 = scalar_lea.vmem %s3, %s169
      %v172 = vld [vmem:[%s165] sm:$0xff]
      %v173 = vld [vmem:[%s165 + $0x8] sm:$0xff]
      %v174 = vld [vmem:[%s165 + $0x10] sm:$0xff]
      %v175 = vpack.c.bf16 %v173, %v172
      %v176 = vpack.c.bf16 %v174, %v174
      %v177 = vld [vmem:[%s1] sm:$0xf]
      %v178 = vld [vmem:[%s1 + $0x4] sm:$0xf]
      %v179 = vld [vmem:[%s1 + $0x8] sm:$0xf]
      %v180 = vld [vmem:[%s1 + $0xc] sm:$0xf]
      %v181 = vld [vmem:[%s165 + $0x1] sm:$0xff]
      %v182 = vld [vmem:[%s165 + $0x9] sm:$0xff]
      %v183 = vld [vmem:[%s165 + $0x11] sm:$0xff]
      %v184 = vpack.c.bf16 %v182, %v181
      %v185 = vpack.c.bf16 %v183, %v183
      %s186 = scalar_lea.vmem %s1, 16
      %v187 = vld [vmem:[%s186] sm:$0xf]
      %v188 = vld [vmem:[%s186 + $0x4] sm:$0xf]
      %v189 = vld [vmem:[%s186 + $0x8] sm:$0xf]
      %v190 = vld [vmem:[%s186 + $0xc] sm:$0xf]
      %v195 = vunpack.c.l.b16 %v187
      %v196 = vunpack.c.l.b16 %v188
      %v197 = vunpack.c.l.b16 %v189
      %v198 = vunpack.c.l.b16 %v190
      %v199 = vpack.c.b16 %v196, %v195
      %v200 = vpack.c.b16 %v198, %v197
      %vm203 = vcmask 261120
      %v205 = vsel %vm203, %v184, 0
      %v208 = vsel %vm203, %v185, 0
      %210 = vmatprep.subr.bf16.mxu0 0
      %211 = vmatpush1.bf16.msra.mxu0 0
      %212 = vmatprep.subr.bf16.mxu0 0
      %213 = vmatpush1.bf16.msra.mxu0 0
      %214 = vmatprep.subr.bf16.mxu0 0
      %215 = vmatpush1.bf16.msra.mxu0 0
      %216 = vmatprep.subr.bf16.mxu0 0
      %217 = vmatpush1.bf16.msra.mxu0 0
      %218 = vmatprep.subr.bf16.mxu0 0
      %219 = vmatpush1.bf16.msra.mxu0 0
      %220 = vmatprep.subr.bf16.mxu0 0
      %221 = vmatpush1.bf16.msra.mxu0 0
      %222 = vmatprep.subr.bf16.mxu0 0
      %223 = vmatpush1.bf16.msra.mxu0 %v200
      %224 = vmatprep.subr.bf16.mxu0 0
      %225 = vmatpush1.bf16.msra.mxu0 %v199
      %226 = vmatprep.subr.bf16.mxu0 0
      %227 = vmatpush2.bf16.msra.mxu0 0
      %228 = vmatprep.subr.bf16.mxu0 0
      %229 = vmatpush2.bf16.msra.mxu0 0
      %230 = vmatprep.subr.bf16.mxu0 0
      %231 = vmatpush2.bf16.msra.mxu0 0
      %232 = vmatprep.subr.bf16.mxu0 0
      %233 = vmatpush2.bf16.msra.mxu0 0
      %234 = vmatprep.subr.bf16.mxu0 0
      %235 = vmatpush2.bf16.msra.mxu0 0
      %236 = vmatprep.subr.bf16.mxu0 0
      %237 = vmatpush2.bf16.msra.mxu0 0
      %238 = vmatprep.subr.bf16.mxu0 0
      %239 = vmatpush2.bf16.msra.mxu0 0
      %240 = vmatprep.subr.bf16.mxu0 0
      %241 = vmatpush2.bf16.msra.mxu0 0
      %242 = vmatprep.mubr.bf16.mxu0 0
      %243 = vmatmul.mubr.bf16.gmra.mxu0 %v205
      %v244 = vpop.f32.mrf.mxu0
      %v245 = vadd.f32 0.0, %v244
      %v246 = vpop.f32.mrf.mxu0
      %v247 = vpop.f32.mrf.mxu0
      %v248 = vadd.f32 0.0, %v247
      %v249 = vpop.f32.mrf.mxu0
      %250 = vmatprep.mubr.bf16.mxu0 0
      %251 = vmatmul.mubr.bf16.gmra.mxu0 %v208
      %v252 = vpop.f32.mrf.mxu0
      %v253 = vadd.f32 0.0, %v252
      %v254 = vpop.f32.mrf.mxu0
      %v255 = vpop.f32.mrf.mxu0
      %v256 = vpop.f32.mrf.mxu0
      %257 = vdwg.mxu0
      %v262 = vunpack.c.l.b16 %v177
      %v263 = vunpack.c.l.b16 %v178
      %v264 = vunpack.c.l.b16 %v179
      %v265 = vunpack.c.l.b16 %v180
      %v266 = vpack.c.b16 %v263, %v262
      %v267 = vpack.c.b16 %v265, %v264
      %v271 = vsel %vm203, %v175, 0
      %v274 = vsel %vm203, %v176, 0
      %276 = vmatprep.subr.bf16.mxu0 0
      %277 = vmatpush1.bf16.msra.mxu0 0
      %278 = vmatprep.subr.bf16.mxu0 0
      %279 = vmatpush1.bf16.msra.mxu0 0
      %280 = vmatprep.subr.bf16.mxu0 0
      %281 = vmatpush1.bf16.msra.mxu0 0
      %282 = vmatprep.subr.bf16.mxu0 0
      %283 = vmatpush1.bf16.msra.mxu0 0
      %284 = vmatprep.subr.bf16.mxu0 0
      %285 = vmatpush1.bf16.msra.mxu0 0
      %286 = vmatprep.subr.bf16.mxu0 0
      %287 = vmatpush1.bf16.msra.mxu0 0
      %288 = vmatprep.subr.bf16.mxu0 0
      %289 = vmatpush1.bf16.msra.mxu0 %v267
      %290 = vmatprep.subr.bf16.mxu0 0
      %291 = vmatpush1.bf16.msra.mxu0 %v266
      %292 = vmatprep.subr.bf16.mxu0 0
      %293 = vmatpush2.bf16.msra.mxu0 0
      %294 = vmatprep.subr.bf16.mxu0 0
      %295 = vmatpush2.bf16.msra.mxu0 0
      %296 = vmatprep.subr.bf16.mxu0 0
      %297 = vmatpush2.bf16.msra.mxu0 0
      %298 = vmatprep.subr.bf16.mxu0 0
      %299 = vmatpush2.bf16.msra.mxu0 0
      %300 = vmatprep.subr.bf16.mxu0 0
      %301 = vmatpush2.bf16.msra.mxu0 0
      %302 = vmatprep.subr.bf16.mxu0 0
      %303 = vmatpush2.bf16.msra.mxu0 0
      %304 = vmatprep.subr.bf16.mxu0 0
      %305 = vmatpush2.bf16.msra.mxu0 0
      %306 = vmatprep.subr.bf16.mxu0 0
      %307 = vmatpush2.bf16.msra.mxu0 0
      %308 = vmatprep.mubr.bf16.mxu0 0
      %309 = vmatmul.mubr.bf16.gmra.mxu0 %v271
      %v310 = vpop.f32.mrf.mxu0
      %v311 = vadd.f32 %v245, %v310
      %v312 = vpop.f32.mrf.mxu0
      %v313 = vpop.f32.mrf.mxu0
      %v314 = vadd.f32 %v248, %v313
      %v315 = vpop.f32.mrf.mxu0
      %316 = vmatprep.mubr.bf16.mxu0 0
      %317 = vmatmul.mubr.bf16.gmra.mxu0 %v274
      %v318 = vpop.f32.mrf.mxu0
      %v319 = vadd.f32 %v253, %v318
      %v320 = vpop.f32.mrf.mxu0
      %v321 = vpop.f32.mrf.mxu0
      %v322 = vpop.f32.mrf.mxu0
      %323 = vdwg.mxu0
      %v324 = vld [vmem:[%s165 + $0x2] sm:$0xff]
      %v325 = vld [vmem:[%s165 + $0xa] sm:$0xff]
      %v326 = vld [vmem:[%s165 + $0x12] sm:$0xff]
      %v327 = vpack.c.bf16 %v325, %v324
      %v328 = vpack.c.bf16 %v326, %v326
      %s329 = scalar_lea.vmem %s1, 32
      %v330 = vld [vmem:[%s329] sm:$0xf]
      %v331 = vld [vmem:[%s329 + $0x4] sm:$0xf]
      %v332 = vld [vmem:[%s329 + $0x8] sm:$0xf]
      %v333 = vld [vmem:[%s329 + $0xc] sm:$0xf]
      %v338 = vunpack.c.l.b16 %v330
      %v339 = vunpack.c.l.b16 %v331
      %v340 = vunpack.c.l.b16 %v332
      %v341 = vunpack.c.l.b16 %v333
      %v342 = vpack.c.b16 %v339, %v338
      %v343 = vpack.c.b16 %v341, %v340
      %v347 = vsel %vm203, %v327, 0
      %v350 = vsel %vm203, %v328, 0
      %352 = vmatprep.subr.bf16.mxu0 0
      %353 = vmatpush1.bf16.msra.mxu0 0
      %354 = vmatprep.subr.bf16.mxu0 0
      %355 = vmatpush1.bf16.msra.mxu0 0
      %356 = vmatprep.subr.bf16.mxu0 0
      %357 = vmatpush1.bf16.msra.mxu0 0
      %358 = vmatprep.subr.bf16.mxu0 0
      %359 = vmatpush1.bf16.msra.mxu0 0
      %360 = vmatprep.subr.bf16.mxu0 0
      %361 = vmatpush1.bf16.msra.mxu0 0
      %362 = vmatprep.subr.bf16.mxu0 0
      %363 = vmatpush1.bf16.msra.mxu0 0
      %364 = vmatprep.subr.bf16.mxu0 0
      %365 = vmatpush1.bf16.msra.mxu0 %v343
      %366 = vmatprep.subr.bf16.mxu0 0
      %367 = vmatpush1.bf16.msra.mxu0 %v342
      %368 = vmatprep.subr.bf16.mxu0 0
      %369 = vmatpush2.bf16.msra.mxu0 0
      %370 = vmatprep.subr.bf16.mxu0 0
      %371 = vmatpush2.bf16.msra.mxu0 0
      %372 = vmatprep.subr.bf16.mxu0 0
      %373 = vmatpush2.bf16.msra.mxu0 0
      %374 = vmatprep.subr.bf16.mxu0 0
      %375 = vmatpush2.bf16.msra.mxu0 0
      %376 = vmatprep.subr.bf16.mxu0 0
      %377 = vmatpush2.bf16.msra.mxu0 0
      %378 = vmatprep.subr.bf16.mxu0 0
      %379 = vmatpush2.bf16.msra.mxu0 0
      %380 = vmatprep.subr.bf16.mxu0 0
      %381 = vmatpush2.bf16.msra.mxu0 0
      %382 = vmatprep.subr.bf16.mxu0 0
      %383 = vmatpush2.bf16.msra.mxu0 0
      %384 = vmatprep.mubr.bf16.mxu0 0
      %385 = vmatmul.mubr.bf16.gmra.mxu0 %v347
      %v386 = vpop.f32.mrf.mxu0
      %v387 = vadd.f32 0.0, %v386
      %v388 = vpop.f32.mrf.mxu0
      %v389 = vpop.f32.mrf.mxu0
      %v390 = vadd.f32 0.0, %v389
      %v391 = vpop.f32.mrf.mxu0
      %392 = vmatprep.mubr.bf16.mxu0 0
      %393 = vmatmul.mubr.bf16.gmra.mxu0 %v350
      %v394 = vpop.f32.mrf.mxu0
      %v395 = vadd.f32 0.0, %v394
      %v396 = vpop.f32.mrf.mxu0
      %v397 = vpop.f32.mrf.mxu0
      %v398 = vpop.f32.mrf.mxu0
      %399 = vdwg.mxu0
      %v400 = vadd.f32 %v311, %v387
      %v401 = vadd.f32 %v314, %v390
      %v402 = vadd.f32 %v319, %v395
      %v403 = vld [vmem:[%s165 + $0x6] sm:$0xff]
      %v404 = vld [vmem:[%s165 + $0xe] sm:$0xff]
      %v405 = vld [vmem:[%s165 + $0x16] sm:$0xff]
      %v406 = vpack.c.bf16 %v404, %v403
      %v407 = vpack.c.bf16 %v405, %v405
      %s408 = scalar_lea.vmem %s1, 48
      %v409 = vld [vmem:[%s408] sm:$0xf]
      %v410 = vld [vmem:[%s408 + $0x4] sm:$0xf]
      %v411 = vld [vmem:[%s408 + $0x8] sm:$0xf]
      %v412 = vld [vmem:[%s408 + $0xc] sm:$0xf]
      %v417 = vunpack.c.l.b16 %v409
      %v418 = vunpack.c.l.b16 %v410
      %v419 = vunpack.c.l.b16 %v411
      %v420 = vunpack.c.l.b16 %v412
      %v421 = vpack.c.b16 %v418, %v417
      %v422 = vpack.c.b16 %v420, %v419
      %v426 = vsel %vm203, %v406, 0
      %v429 = vsel %vm203, %v407, 0
      %431 = vmatprep.subr.bf16.mxu0 0
      %432 = vmatpush1.bf16.msra.mxu0 0
      %433 = vmatprep.subr.bf16.mxu0 0
      %434 = vmatpush1.bf16.msra.mxu0 0
      %435 = vmatprep.subr.bf16.mxu0 0
      %436 = vmatpush1.bf16.msra.mxu0 0
      %437 = vmatprep.subr.bf16.mxu0 0
      %438 = vmatpush1.bf16.msra.mxu0 0
      %439 = vmatprep.subr.bf16.mxu0 0
      %440 = vmatpush1.bf16.msra.mxu0 0
      %441 = vmatprep.subr.bf16.mxu0 0
      %442 = vmatpush1.bf16.msra.mxu0 0
      %443 = vmatprep.subr.bf16.mxu0 0
      %444 = vmatpush1.bf16.msra.mxu0 %v422
      %445 = vmatprep.subr.bf16.mxu0 0
      %446 = vmatpush1.bf16.msra.mxu0 %v421
      %447 = vmatprep.subr.bf16.mxu0 0
      %448 = vmatpush2.bf16.msra.mxu0 0
      %449 = vmatprep.subr.bf16.mxu0 0
      %450 = vmatpush2.bf16.msra.mxu0 0
      %451 = vmatprep.subr.bf16.mxu0 0
      %452 = vmatpush2.bf16.msra.mxu0 0
      %453 = vmatprep.subr.bf16.mxu0 0
      %454 = vmatpush2.bf16.msra.mxu0 0
      %455 = vmatprep.subr.bf16.mxu0 0
      %456 = vmatpush2.bf16.msra.mxu0 0
      %457 = vmatprep.subr.bf16.mxu0 0
      %458 = vmatpush2.bf16.msra.mxu0 0
      %459 = vmatprep.subr.bf16.mxu0 0
      %460 = vmatpush2.bf16.msra.mxu0 0
      %461 = vmatprep.subr.bf16.mxu0 0
      %462 = vmatpush2.bf16.msra.mxu0 0
      %463 = vmatprep.mubr.bf16.mxu0 0
      %464 = vmatmul.mubr.bf16.gmra.mxu0 %v426
      %v465 = vpop.f32.mrf.mxu0
      %v466 = vadd.f32 0.0, %v465
      %v467 = vpop.f32.mrf.mxu0
      %v468 = vpop.f32.mrf.mxu0
      %v469 = vadd.f32 0.0, %v468
      %v470 = vpop.f32.mrf.mxu0
      %471 = vmatprep.mubr.bf16.mxu0 0
      %472 = vmatmul.mubr.bf16.gmra.mxu0 %v429
      %v473 = vpop.f32.mrf.mxu0
      %v474 = vadd.f32 0.0, %v473
      %v475 = vpop.f32.mrf.mxu0
      %v476 = vpop.f32.mrf.mxu0
      %v477 = vpop.f32.mrf.mxu0
      %478 = vdwg.mxu0
      %v479 = vadd.f32 %v400, %v466
      %v480 = vadd.f32 %v401, %v469
      %v481 = vadd.f32 %v402, %v474
      %v482 = vld [vmem:[%s165 + $0x7] sm:$0xff]
      %v483 = vld [vmem:[%s165 + $0xf] sm:$0xff]
      %v484 = vld [vmem:[%s165 + $0x17] sm:$0xff]
      %v485 = vpack.c.bf16 %v483, %v482
      %v486 = vpack.c.bf16 %v484, %v484
      %s487 = scalar_lea.vmem %s1, 64
      %v488 = vld [vmem:[%s487] sm:$0xf]
      %v489 = vld [vmem:[%s487 + $0x4] sm:$0xf]
      %v490 = vld [vmem:[%s487 + $0x8] sm:$0xf]
      %v491 = vld [vmem:[%s487 + $0xc] sm:$0xf]
      %v496 = vunpack.c.l.b16 %v488
      %v497 = vunpack.c.l.b16 %v489
      %v498 = vunpack.c.l.b16 %v490
      %v499 = vunpack.c.l.b16 %v491
      %v500 = vpack.c.b16 %v497, %v496
      %v501 = vpack.c.b16 %v499, %v498
      %v505 = vsel %vm203, %v485, 0
      %v508 = vsel %vm203, %v486, 0
      %510 = vmatprep.subr.bf16.mxu0 0
      %511 = vmatpush1.bf16.msra.mxu0 0
      %512 = vmatprep.subr.bf16.mxu0 0
      %513 = vmatpush1.bf16.msra.mxu0 0
      %514 = vmatprep.subr.bf16.mxu0 0
      %515 = vmatpush1.bf16.msra.mxu0 0
      %516 = vmatprep.subr.bf16.mxu0 0
      %517 = vmatpush1.bf16.msra.mxu0 0
      %518 = vmatprep.subr.bf16.mxu0 0
      %519 = vmatpush1.bf16.msra.mxu0 0
      %520 = vmatprep.subr.bf16.mxu0 0
      %521 = vmatpush1.bf16.msra.mxu0 0
      %522 = vmatprep.subr.bf16.mxu0 0
      %523 = vmatpush1.bf16.msra.mxu0 %v501
      %524 = vmatprep.subr.bf16.mxu0 0
      %525 = vmatpush1.bf16.msra.mxu0 %v500
      %526 = vmatprep.subr.bf16.mxu0 0
      %527 = vmatpush2.bf16.msra.mxu0 0
      %528 = vmatprep.subr.bf16.mxu0 0
      %529 = vmatpush2.bf16.msra.mxu0 0
      %530 = vmatprep.subr.bf16.mxu0 0
      %531 = vmatpush2.bf16.msra.mxu0 0
      %532 = vmatprep.subr.bf16.mxu0 0
      %533 = vmatpush2.bf16.msra.mxu0 0
      %534 = vmatprep.subr.bf16.mxu0 0
      %535 = vmatpush2.bf16.msra.mxu0 0
      %536 = vmatprep.subr.bf16.mxu0 0
      %537 = vmatpush2.bf16.msra.mxu0 0
      %538 = vmatprep.subr.bf16.mxu0 0
      %539 = vmatpush2.bf16.msra.mxu0 0
      %540 = vmatprep.subr.bf16.mxu0 0
      %541 = vmatpush2.bf16.msra.mxu0 0
      %542 = vmatprep.mubr.bf16.mxu0 0
      %543 = vmatmul.mubr.bf16.gmra.mxu0 %v505
      %v544 = vpop.f32.mrf.mxu0
      %v545 = vadd.f32 0.0, %v544
      %v546 = vpop.f32.mrf.mxu0
      %v547 = vpop.f32.mrf.mxu0
      %v548 = vadd.f32 0.0, %v547
      %v549 = vpop.f32.mrf.mxu0
      %550 = vmatprep.mubr.bf16.mxu0 0
      %551 = vmatmul.mubr.bf16.gmra.mxu0 %v508
      %v552 = vpop.f32.mrf.mxu0
      %v553 = vadd.f32 0.0, %v552
      %v554 = vpop.f32.mrf.mxu0
      %v555 = vpop.f32.mrf.mxu0
      %v556 = vpop.f32.mrf.mxu0
      %557 = vdwg.mxu0
      %v558 = vadd.f32 %v479, %v545
      %v559 = vadd.f32 %v480, %v548
      %v560 = vadd.f32 %v481, %v553
      %v561 = vld [vmem:[%s165 + $0x8] sm:$0xff]
      %v562 = vld [vmem:[%s165 + $0x10] sm:$0xff]
      %v563 = vld [vmem:[%s165 + $0x18] sm:$0xff]
      %v564 = vpack.c.bf16 %v562, %v561
      %v565 = vpack.c.bf16 %v563, %v563
      %s566 = scalar_lea.vmem %s1, 80
      %v567 = vld [vmem:[%s566] sm:$0xf]
      %v568 = vld [vmem:[%s566 + $0x4] sm:$0xf]
      %v569 = vld [vmem:[%s566 + $0x8] sm:$0xf]
      %v570 = vld [vmem:[%s566 + $0xc] sm:$0xf]
      %v575 = vunpack.c.l.b16 %v567
      %v576 = vunpack.c.l.b16 %v568
      %v577 = vunpack.c.l.b16 %v569
      %v578 = vunpack.c.l.b16 %v570
      %v579 = vpack.c.b16 %v576, %v575
      %v580 = vpack.c.b16 %v578, %v577
      %v584 = vsel %vm203, %v564, 0
      %v587 = vsel %vm203, %v565, 0
      %589 = vmatprep.subr.bf16.mxu0 0
      %590 = vmatpush1.bf16.msra.mxu0 0
      %591 = vmatprep.subr.bf16.mxu0 0
      %592 = vmatpush1.bf16.msra.mxu0 0
      %593 = vmatprep.subr.bf16.mxu0 0
      %594 = vmatpush1.bf16.msra.mxu0 0
      %595 = vmatprep.subr.bf16.mxu0 0
      %596 = vmatpush1.bf16.msra.mxu0 0
      %597 = vmatprep.subr.bf16.mxu0 0
      %598 = vmatpush1.bf16.msra.mxu0 0
      %599 = vmatprep.subr.bf16.mxu0 0
      %600 = vmatpush1.bf16.msra.mxu0 0
      %601 = vmatprep.subr.bf16.mxu0 0
      %602 = vmatpush1.bf16.msra.mxu0 %v580
      %603 = vmatprep.subr.bf16.mxu0 0
      %604 = vmatpush1.bf16.msra.mxu0 %v579
      %605 = vmatprep.subr.bf16.mxu0 0
      %606 = vmatpush2.bf16.msra.mxu0 0
      %607 = vmatprep.subr.bf16.mxu0 0
      %608 = vmatpush2.bf16.msra.mxu0 0
      %609 = vmatprep.subr.bf16.mxu0 0
      %610 = vmatpush2.bf16.msra.mxu0 0
      %611 = vmatprep.subr.bf16.mxu0 0
      %612 = vmatpush2.bf16.msra.mxu0 0
      %613 = vmatprep.subr.bf16.mxu0 0
      %614 = vmatpush2.bf16.msra.mxu0 0
      %615 = vmatprep.subr.bf16.mxu0 0
      %616 = vmatpush2.bf16.msra.mxu0 0
      %617 = vmatprep.subr.bf16.mxu0 0
      %618 = vmatpush2.bf16.msra.mxu0 0
      %619 = vmatprep.subr.bf16.mxu0 0
      %620 = vmatpush2.bf16.msra.mxu0 0
      %621 = vmatprep.mubr.bf16.mxu0 0
      %622 = vmatmul.mubr.bf16.gmra.mxu0 %v584
      %v623 = vpop.f32.mrf.mxu0
      %v624 = vadd.f32 0.0, %v623
      %v625 = vpop.f32.mrf.mxu0
      %v626 = vpop.f32.mrf.mxu0
      %v627 = vadd.f32 0.0, %v626
      %v628 = vpop.f32.mrf.mxu0
      %629 = vmatprep.mubr.bf16.mxu0 0
      %630 = vmatmul.mubr.bf16.gmra.mxu0 %v587
      %v631 = vpop.f32.mrf.mxu0
      %v632 = vadd.f32 0.0, %v631
      %v633 = vpop.f32.mrf.mxu0
      %v634 = vpop.f32.mrf.mxu0
      %v635 = vpop.f32.mrf.mxu0
      %636 = vdwg.mxu0
      %v637 = vadd.f32 %v558, %v624
      %v638 = vadd.f32 %v559, %v627
      %v639 = vadd.f32 %v560, %v632
      %v640 = vld [vmem:[%s165 + $0xc] sm:$0xff]
      %v641 = vld [vmem:[%s165 + $0x14] sm:$0xff]
      %v642 = vld [vmem:[%s165 + $0x1c] sm:$0xff]
      %v643 = vpack.c.bf16 %v641, %v640
      %v644 = vpack.c.bf16 %v642, %v642
      %s645 = scalar_lea.vmem %s1, 96
      %v646 = vld [vmem:[%s645] sm:$0xf]
      %v647 = vld [vmem:[%s645 + $0x4] sm:$0xf]
      %v648 = vld [vmem:[%s645 + $0x8] sm:$0xf]
      %v649 = vld [vmem:[%s645 + $0xc] sm:$0xf]
      %v654 = vunpack.c.l.b16 %v646
      %v655 = vunpack.c.l.b16 %v647
      %v656 = vunpack.c.l.b16 %v648
      %v657 = vunpack.c.l.b16 %v649
      %v658 = vpack.c.b16 %v655, %v654
      %v659 = vpack.c.b16 %v657, %v656
      %v663 = vsel %vm203, %v643, 0
      %v666 = vsel %vm203, %v644, 0
      %668 = vmatprep.subr.bf16.mxu0 0
      %669 = vmatpush1.bf16.msra.mxu0 0
      %670 = vmatprep.subr.bf16.mxu0 0
      %671 = vmatpush1.bf16.msra.mxu0 0
      %672 = vmatprep.subr.bf16.mxu0 0
      %673 = vmatpush1.bf16.msra.mxu0 0
      %674 = vmatprep.subr.bf16.mxu0 0
      %675 = vmatpush1.bf16.msra.mxu0 0
      %676 = vmatprep.subr.bf16.mxu0 0
      %677 = vmatpush1.bf16.msra.mxu0 0
      %678 = vmatprep.subr.bf16.mxu0 0
      %679 = vmatpush1.bf16.msra.mxu0 0
      %680 = vmatprep.subr.bf16.mxu0 0
      %681 = vmatpush1.bf16.msra.mxu0 %v659
      %682 = vmatprep.subr.bf16.mxu0 0
      %683 = vmatpush1.bf16.msra.mxu0 %v658
      %684 = vmatprep.subr.bf16.mxu0 0
      %685 = vmatpush2.bf16.msra.mxu0 0
      %686 = vmatprep.subr.bf16.mxu0 0
      %687 = vmatpush2.bf16.msra.mxu0 0
      %688 = vmatprep.subr.bf16.mxu0 0
      %689 = vmatpush2.bf16.msra.mxu0 0
      %690 = vmatprep.subr.bf16.mxu0 0
      %691 = vmatpush2.bf16.msra.mxu0 0
      %692 = vmatprep.subr.bf16.mxu0 0
      %693 = vmatpush2.bf16.msra.mxu0 0
      %694 = vmatprep.subr.bf16.mxu0 0
      %695 = vmatpush2.bf16.msra.mxu0 0
      %696 = vmatprep.subr.bf16.mxu0 0
      %697 = vmatpush2.bf16.msra.mxu0 0
      %698 = vmatprep.subr.bf16.mxu0 0
      %699 = vmatpush2.bf16.msra.mxu0 0
      %700 = vmatprep.mubr.bf16.mxu0 0
      %701 = vmatmul.mubr.bf16.gmra.mxu0 %v663
      %v702 = vpop.f32.mrf.mxu0
      %v703 = vadd.f32 0.0, %v702
      %v704 = vpop.f32.mrf.mxu0
      %v705 = vpop.f32.mrf.mxu0
      %v706 = vadd.f32 0.0, %v705
      %v707 = vpop.f32.mrf.mxu0
      %708 = vmatprep.mubr.bf16.mxu0 0
      %709 = vmatmul.mubr.bf16.gmra.mxu0 %v666
      %v710 = vpop.f32.mrf.mxu0
      %v711 = vadd.f32 0.0, %v710
      %v712 = vpop.f32.mrf.mxu0
      %v713 = vpop.f32.mrf.mxu0
      %v714 = vpop.f32.mrf.mxu0
      %715 = vdwg.mxu0
      %v716 = vadd.f32 %v637, %v703
      %v717 = vadd.f32 %v638, %v706
      %v718 = vadd.f32 %v639, %v711
      %v719 = vld [vmem:[%s165 + $0xd] sm:$0xff]
      %v720 = vld [vmem:[%s165 + $0x15] sm:$0xff]
      %v721 = vld [vmem:[%s165 + $0x1d] sm:$0xff]
      %v722 = vpack.c.bf16 %v720, %v719
      %v723 = vpack.c.bf16 %v721, %v721
      %s724 = scalar_lea.vmem %s1, 112
      %v725 = vld [vmem:[%s724] sm:$0xf]
      %v726 = vld [vmem:[%s724 + $0x4] sm:$0xf]
      %v727 = vld [vmem:[%s724 + $0x8] sm:$0xf]
      %v728 = vld [vmem:[%s724 + $0xc] sm:$0xf]
      %v733 = vunpack.c.l.b16 %v725
      %v734 = vunpack.c.l.b16 %v726
      %v735 = vunpack.c.l.b16 %v727
      %v736 = vunpack.c.l.b16 %v728
      %v737 = vpack.c.b16 %v734, %v733
      %v738 = vpack.c.b16 %v736, %v735
      %v742 = vsel %vm203, %v722, 0
      %v745 = vsel %vm203, %v723, 0
      %747 = vmatprep.subr.bf16.mxu0 0
      %748 = vmatpush1.bf16.msra.mxu0 0
      %749 = vmatprep.subr.bf16.mxu0 0
      %750 = vmatpush1.bf16.msra.mxu0 0
      %751 = vmatprep.subr.bf16.mxu0 0
      %752 = vmatpush1.bf16.msra.mxu0 0
      %753 = vmatprep.subr.bf16.mxu0 0
      %754 = vmatpush1.bf16.msra.mxu0 0
      %755 = vmatprep.subr.bf16.mxu0 0
      %756 = vmatpush1.bf16.msra.mxu0 0
      %757 = vmatprep.subr.bf16.mxu0 0
      %758 = vmatpush1.bf16.msra.mxu0 0
      %759 = vmatprep.subr.bf16.mxu0 0
      %760 = vmatpush1.bf16.msra.mxu0 %v738
      %761 = vmatprep.subr.bf16.mxu0 0
      %762 = vmatpush1.bf16.msra.mxu0 %v737
      %763 = vmatprep.subr.bf16.mxu0 0
      %764 = vmatpush2.bf16.msra.mxu0 0
      %765 = vmatprep.subr.bf16.mxu0 0
      %766 = vmatpush2.bf16.msra.mxu0 0
      %767 = vmatprep.subr.bf16.mxu0 0
      %768 = vmatpush2.bf16.msra.mxu0 0
      %769 = vmatprep.subr.bf16.mxu0 0
      %770 = vmatpush2.bf16.msra.mxu0 0
      %771 = vmatprep.subr.bf16.mxu0 0
      %772 = vmatpush2.bf16.msra.mxu0 0
      %773 = vmatprep.subr.bf16.mxu0 0
      %774 = vmatpush2.bf16.msra.mxu0 0
      %775 = vmatprep.subr.bf16.mxu0 0
      %776 = vmatpush2.bf16.msra.mxu0 0
      %777 = vmatprep.subr.bf16.mxu0 0
      %778 = vmatpush2.bf16.msra.mxu0 0
      %779 = vmatprep.mubr.bf16.mxu0 0
      %780 = vmatmul.mubr.bf16.gmra.mxu0 %v742
      %v781 = vpop.f32.mrf.mxu0
      %v782 = vadd.f32 0.0, %v781
      %v783 = vpop.f32.mrf.mxu0
      %v784 = vpop.f32.mrf.mxu0
      %v785 = vadd.f32 0.0, %v784
      %v786 = vpop.f32.mrf.mxu0
      %787 = vmatprep.mubr.bf16.mxu0 0
      %788 = vmatmul.mubr.bf16.gmra.mxu0 %v745
      %v789 = vpop.f32.mrf.mxu0
      %v790 = vadd.f32 0.0, %v789
      %v791 = vpop.f32.mrf.mxu0
      %v792 = vpop.f32.mrf.mxu0
      %v793 = vpop.f32.mrf.mxu0
      %794 = vdwg.mxu0
      %v795 = vadd.f32 %v716, %v782
      %v796 = vadd.f32 %v717, %v785
      %v797 = vadd.f32 %v718, %v790
      %v798 = vld [vmem:[%s165 + $0xe] sm:$0xff]
      %v799 = vld [vmem:[%s165 + $0x16] sm:$0xff]
      %v800 = vld [vmem:[%s165 + $0x1e] sm:$0xff]
      %v801 = vpack.c.bf16 %v799, %v798
      %v802 = vpack.c.bf16 %v800, %v800
      %s803 = scalar_lea.vmem %s1, 128
      %v804 = vld [vmem:[%s803] sm:$0xf]
      %v805 = vld [vmem:[%s803 + $0x4] sm:$0xf]
      %v806 = vld [vmem:[%s803 + $0x8] sm:$0xf]
      %v807 = vld [vmem:[%s803 + $0xc] sm:$0xf]
      %v812 = vunpack.c.l.b16 %v804
      %v813 = vunpack.c.l.b16 %v805
      %v814 = vunpack.c.l.b16 %v806
      %v815 = vunpack.c.l.b16 %v807
      %v816 = vpack.c.b16 %v813, %v812
      %v817 = vpack.c.b16 %v815, %v814
      %v821 = vsel %vm203, %v801, 0
      %v824 = vsel %vm203, %v802, 0
      %826 = vmatprep.subr.bf16.mxu0 0
      %827 = vmatpush1.bf16.msra.mxu0 0
      %828 = vmatprep.subr.bf16.mxu0 0
      %829 = vmatpush1.bf16.msra.mxu0 0
      %830 = vmatprep.subr.bf16.mxu0 0
      %831 = vmatpush1.bf16.msra.mxu0 0
      %832 = vmatprep.subr.bf16.mxu0 0
      %833 = vmatpush1.bf16.msra.mxu0 0
      %834 = vmatprep.subr.bf16.mxu0 0
      %835 = vmatpush1.bf16.msra.mxu0 0
      %836 = vmatprep.subr.bf16.mxu0 0
      %837 = vmatpush1.bf16.msra.mxu0 0
      %838 = vmatprep.subr.bf16.mxu0 0
      %839 = vmatpush1.bf16.msra.mxu0 %v817
      %840 = vmatprep.subr.bf16.mxu0 0
      %841 = vmatpush1.bf16.msra.mxu0 %v816
      %842 = vmatprep.subr.bf16.mxu0 0
      %843 = vmatpush2.bf16.msra.mxu0 0
      %844 = vmatprep.subr.bf16.mxu0 0
      %845 = vmatpush2.bf16.msra.mxu0 0
      %846 = vmatprep.subr.bf16.mxu0 0
      %847 = vmatpush2.bf16.msra.mxu0 0
      %848 = vmatprep.subr.bf16.mxu0 0
      %849 = vmatpush2.bf16.msra.mxu0 0
      %850 = vmatprep.subr.bf16.mxu0 0
      %851 = vmatpush2.bf16.msra.mxu0 0
      %852 = vmatprep.subr.bf16.mxu0 0
      %853 = vmatpush2.bf16.msra.mxu0 0
      %854 = vmatprep.subr.bf16.mxu0 0
      %855 = vmatpush2.bf16.msra.mxu0 0
      %856 = vmatprep.subr.bf16.mxu0 0
      %857 = vmatpush2.bf16.msra.mxu0 0
      %858 = vmatprep.mubr.bf16.mxu0 0
      %859 = vmatmul.mubr.bf16.gmra.mxu0 %v821
      %v860 = vpop.f32.mrf.mxu0
      %v861 = vadd.f32 0.0, %v860
      %v862 = vpop.f32.mrf.mxu0
      %v863 = vpop.f32.mrf.mxu0
      %v864 = vadd.f32 0.0, %v863
      %v865 = vpop.f32.mrf.mxu0
      %866 = vmatprep.mubr.bf16.mxu0 0
      %867 = vmatmul.mubr.bf16.gmra.mxu0 %v824
      %v868 = vpop.f32.mrf.mxu0
      %v869 = vadd.f32 0.0, %v868
      %v870 = vpop.f32.mrf.mxu0
      %v871 = vpop.f32.mrf.mxu0
      %v872 = vpop.f32.mrf.mxu0
      %873 = vdwg.mxu0
      %v874 = vadd.f32 %v795, %v861
      %v875 = vadd.f32 %v796, %v864
      %v876 = vadd.f32 %v797, %v869
      %v877 = vld [vmem:[%s2] sm:$0x1]
      %v879 = vlaneseq
      %v880 = vshrl.u32 %v879, 7
      %v881 = vsub.s32 0, %v880
      %v882 = vrot.slane %v877, %v881
      %v884 = vadd.f32 %v874, %v882
      %v885 = vadd.f32 %v875, %v882
      %v886 = vadd.f32 %v876, %v882
      %v887 = vmax.f32 %v884, 0.0
      %v888 = vmax.f32 %v885, 0.0
      %v889 = vmax.f32 %v886, 0.0
      %890 = vst [vmem:[%s170] sm:$0xff] %v887
      %891 = vst [vmem:[%s170 + $0x8] sm:$0xff] %v888
      %892 = vst [vmem:[%s170 + $0x10] sm:$0xff] %v889
      %p893 = scmp.lt.s32.totalorder %s14, 1
      %s894 = scalar_select %p893, %s14, 1
      %s895 = smul.addr %s894, 3
      %s896 = smul.addr %s895, 8
      %s897 = scalar_lea.vmem %s3, %s896
      // Predicated region
      $region33: #{backbone_as_unet_forward.14} parent=31 // pred_check
        %p898 = pneg %p100
      $region34: #{backbone_as_unet_forward.14} parent=31 // pred_check_branch
        %900 = sbr.rel (%p898) target = $region36
      $region35: #{backbone_as_unet_forward.14} parent=31 // pred_region
        _
      $region36: #{backbone_as_unet_forward.14} parent=31 // pred_fallthru
        _
    $region32: #{backbone_as_unet_forward.14} parent=5 // pred_fallthru
      _
    %p901 = scmp.le.s32.totalorder 2, %s9
    // Predicated region
    $region37: #{backbone_as_unet_forward.14} parent=5 // pred_check
      %p902 = pneg %p901
    $region38: #{backbone_as_unet_forward.14} parent=5 // pred_check_branch
      %904 = sbr.rel (%p902) target = $region40
    $region39: #{backbone_as_unet_forward.14} parent=5 // pred_region
      %s905 = ssub.s32 %s9, 2
      // Predicated region
      $region41: #{backbone_as_unet_forward.14} parent=39 // pred_check
        %p906 = pneg %p106
      $region42: #{backbone_as_unet_forward.14} parent=39 // pred_check_branch
        %908 = sbr.rel (%p906) target = $region44
      $region43: #{backbone_as_unet_forward.14} parent=39 // pred_region
        %p909 = scmp.lt.s32.totalorder %s15, 1
        %s910 = scalar_select %p909, %s15, 1
        %s911 = smul.addr %s910, 3
        %s912 = smul.addr %s911, 8
        %s913 = scalar_lea.vmem %s3, %s912
      $region44: #{backbone_as_unet_forward.14} parent=39 // pred_fallthru
        _
    $region40: #{backbone_as_unet_forward.14} parent=5 // pred_fallthru
      _
  $region6: #{backbone_as_unet_forward.14} parent=0 // loop_footer
    %s13 = sadd.s32 1, %s9
  $region7: #{backbone_as_unet_forward.14} parent=0 // loop_footer_branch
    %8 = sbr.rel target = $region3
  $region8: #{backbone_as_unet_forward.14} parent=0 // loop_exit
    _

// kernel: backbone_as_unet_forward.15
$region0: #{backbone_as_unet_forward.15}
  #allocation0 [shape = 'u32[]', space=smem, size = 0x4, offset = 0x4, fixed_abs, tag = 'smem constant byte address 0x4 - core index']
  #allocation1 [shape = 'u32[144,128]{1,0:T(1,128)}', space=vmem, size = 0x12000, scoped, tag = 'internal scratch']
  %s0 = inlined_call_operand.vmem [shape: f32[2,38,16], index: 0, kind: input, shape index: {}]
  %s1 = inlined_call_operand.vmem [shape: bf16[9,16,128], index: 1, kind: input, shape index: {}]
  %s2 = inlined_call_operand.vmem [shape: f32[1,128], index: 2, kind: input, shape index: {}]
  %s3 = inlined_call_operand.vmem [shape: f32[2,24,128], index: 3, kind: output, shape index: {}]
  %s4 = sld [smem:[#allocation0]]
  $region45: #{backbone_as_unet_forward.15} parent=0
    _
  %s6 = ssub.s32 1, %s4
  %s7 = scalar_select 0, %s6, %s4
  loop: start=0, step=1, limit=4
  $region2: #{backbone_as_unet_forward.15} parent=0 // loop_pre_header
    _
  $region3: #{backbone_as_unet_forward.15} parent=0 // loop_header
    %s9 = sphi 0, %s13
    %p10 = scmp.ge.s32.totalorder %s9, 4
    %s19 = sphi 0, %s21
    %s22 = sphi 0, %s19
    %s23 = sphi 0, %s22
    %s39 = sphi 0, %s23
    %s43 = sphi 0, %s43
    %s45 = sphi 0, %s43
    %s46 = sphi 0, %s45
    %s60 = sphi 0, %s46
    %s64 = sphi 0, %s64
    %s66 = sphi 0, %s64
    %s67 = sphi 0, %s66
    %s81 = sphi 0, %s67
    %s87 = sphi 0, %s89
    %s90 = sphi 0, %s87
    %s91 = sphi 0, %s90
    %s107 = sphi 0, %s91
  $region4: #{backbone_as_unet_forward.15} parent=0 // loop_header_branch
    %12 = sbr.rel (%p10) target = $region8
  $region5: #{backbone_as_unet_forward.15} parent=0 // loop_body
    %s14 = ssub.s32 %s9, 1
    %s15 = ssub.s32 %s9, 2
    %s16 = sadd.s32 %s9, 1
    %s17 = ssub.s32 %s9, %s16
    %p18 = scmp.eq.s32.totalorder %s17, 0
    %s20 = sadd.s32 %s19, 1
    %s21 = scalar_select %p18, %s19, %s20
    %p24 = pneg %p18
    %p25 = scmp.eq.s32.totalorder %s9, 1
    %p26 = por %p24, %p25
    %p27 = scmp.ne.s32.totalorder %s19, %s22
    %p28 = scmp.eq.s32.totalorder %s9, 0
    %p29 = por %p27, %p28
    %p30 = scmp.ne.s32.totalorder %s19, %s22
    %p31 = scmp.eq.s32.totalorder %s14, 1
    %p32 = por %p30, %p31
    %p33 = scmp.ne.s32.totalorder %s22, %s23
    %p34 = scmp.eq.s32.totalorder %s14, 0
    %p35 = por %p33, %p34
    %p36 = scmp.ne.s32.totalorder %s22, %s23
    %p37 = scmp.eq.s32.totalorder %s15, 1
    %p38 = por %p36, %p37
    %p40 = scmp.ne.s32.totalorder %s23, %s39
    %p41 = scmp.eq.s32.totalorder %s15, 0
    %p42 = por %p40, %p41
    %s44 = sadd.s32 %s43, 1
    %p47 = scmp.eq.s32.totalorder %s9, 1
    %p48 = scmp.ne.s32.totalorder %s43, %s45
    %p49 = scmp.eq.s32.totalorder %s9, 0
    %p50 = por %p48, %p49
    %p51 = scmp.ne.s32.totalorder %s43, %s45
    %p52 = scmp.eq.s32.totalorder %s14, 1
    %p53 = por %p51, %p52
    %p54 = scmp.ne.s32.totalorder %s45, %s46
    %p55 = scmp.eq.s32.totalorder %s14, 0
    %p56 = por %p54, %p55
    %p57 = scmp.ne.s32.totalorder %s45, %s46
    %p58 = scmp.eq.s32.totalorder %s15, 1
    %p59 = por %p57, %p58
    %p61 = scmp.ne.s32.totalorder %s46, %s60
    %p62 = scmp.eq.s32.totalorder %s15, 0
    %p63 = por %p61, %p62
    %s65 = sadd.s32 %s64, 1
    %p68 = scmp.eq.s32.totalorder %s9, 1
    %p69 = scmp.ne.s32.totalorder %s64, %s66
    %p70 = scmp.eq.s32.totalorder %s9, 0
    %p71 = por %p69, %p70
    %p72 = scmp.ne.s32.totalorder %s64, %s66
    %p73 = scmp.eq.s32.totalorder %s14, 1
    %p74 = por %p72, %p73
    %p75 = scmp.ne.s32.totalorder %s66, %s67
    %p76 = scmp.eq.s32.totalorder %s14, 0
    %p77 = por %p75, %p76
    %p78 = scmp.ne.s32.totalorder %s66, %s67
    %p79 = scmp.eq.s32.totalorder %s15, 1
    %p80 = por %p78, %p79
    %p82 = scmp.ne.s32.totalorder %s67, %s81
    %p83 = scmp.eq.s32.totalorder %s15, 0
    %p84 = por %p82, %p83
    %s85 = ssub.s32 %s9, %s16
    %p86 = scmp.eq.s32.totalorder %s85, 0
    %s88 = sadd.s32 %s87, 1
    %s89 = scalar_select %p86, %s87, %s88
    %p92 = pneg %p86
    %p93 = scmp.eq.s32.totalorder %s9, 1
    %p94 = por %p92, %p93
    %p95 = scmp.ne.s32.totalorder %s87, %s90
    %p96 = scmp.eq.s32.totalorder %s9, 0
    %p97 = por %p95, %p96
    %p98 = scmp.ne.s32.totalorder %s87, %s90
    %p99 = scmp.eq.s32.totalorder %s14, 1
    %p100 = por %p98, %p99
    %p101 = scmp.ne.s32.totalorder %s90, %s91
    %p102 = scmp.eq.s32.totalorder %s14, 0
    %p103 = por %p101, %p102
    %p104 = scmp.ne.s32.totalorder %s90, %s91
    %p105 = scmp.eq.s32.totalorder %s15, 1
    %p106 = por %p104, %p105
    %p108 = scmp.ne.s32.totalorder %s91, %s107
    %p109 = scmp.eq.s32.totalorder %s15, 0
    %p110 = por %p108, %p109
    %p111 = scmp.le.s32.totalorder 1, %s9
    %p112 = scmp.lt.s32.totalorder %s9, 3
    %p113 = pnand %p111, %p112
    %p114 = pneg %p113
    // Predicated region
    $region9: #{backbone_as_unet_forward.15} parent=5 // pred_check
      _
    $region10: #{backbone_as_unet_forward.15} parent=5 // pred_check_branch
      %116 = sbr.rel (%p113) target = $region12
    $region11: #{backbone_as_unet_forward.15} parent=5 // pred_region
      %s117 = ssub.s32 %s9, 1
      // Predicated region
      $region13: #{backbone_as_unet_forward.15} parent=11 // pred_check
        %p118 = pneg %p56
      $region14: #{backbone_as_unet_forward.15} parent=11 // pred_check_branch
        %120 = sbr.rel (%p118) target = $region16
      $region15: #{backbone_as_unet_forward.15} parent=11 // pred_region
        _
      $region16: #{backbone_as_unet_forward.15} parent=11 // pred_fallthru
        _
      // Predicated region
      $region17: #{backbone_as_unet_forward.15} parent=11 // pred_check
        %p121 = pneg %p77
      $region18: #{backbone_as_unet_forward.15} parent=11 // pred_check_branch
        %123 = sbr.rel (%p121) target = $region20
      $region19: #{backbone_as_unet_forward.15} parent=11 // pred_region
        _
      $region20: #{backbone_as_unet_forward.15} parent=11 // pred_fallthru
        _
    $region12: #{backbone_as_unet_forward.15} parent=5 // pred_fallthru
      _
    %p124 = scmp.lt.s32.totalorder %s9, 2
    // Predicated region
    $region21: #{backbone_as_unet_forward.15} parent=5 // pred_check
      %p125 = pneg %p124
    $region22: #{backbone_as_unet_forward.15} parent=5 // pred_check_branch
      %127 = sbr.rel (%p125) target = $region24
    $region23: #{backbone_as_unet_forward.15} parent=5 // pred_region
      // Predicated region
      $region25: #{backbone_as_unet_forward.15} parent=23 // pred_check
        %p128 = pneg %p29
      $region26: #{backbone_as_unet_forward.15} parent=23 // pred_check_branch
        %130 = sbr.rel (%p128) target = $region28
      $region27: #{backbone_as_unet_forward.15} parent=23 // pred_region
        %p131 = scmp.lt.s32.totalorder %s9, 1
        %s132 = scalar_select %p131, %s9, 1
        %s133 = smul.addr %s132, 5
        %s134 = smul.addr %s133, 8
        %s135 = scalar_lea.vmem %s0, %s134
      $region28: #{backbone_as_unet_forward.15} parent=23 // pred_fallthru
        _
    $region24: #{backbone_as_unet_forward.15} parent=5 // pred_fallthru
      _
    %p136 = scmp.le.s32.totalorder 1, %s9
    %p137 = scmp.lt.s32.totalorder %s9, 3
    %p138 = pnand %p136, %p137
    %p139 = pneg %p138
    // Predicated region
    $region29: #{backbone_as_unet_forward.15} parent=5 // pred_check
      _
    $region30: #{backbone_as_unet_forward.15} parent=5 // pred_check_branch
      %141 = sbr.rel (%p138) target = $region32
    $region31: #{backbone_as_unet_forward.15} parent=5 // pred_region
      %s142 = ssub.s32 %s9, 1
      %p143 = scmp.lt.s32.totalorder %s14, 1
      %s144 = scalar_select %p143, %s14, 1
      %s145 = smul.addr %s144, 5
      %s146 = smul.addr %s145, 8
      %s147 = scalar_lea.vmem %s0, %s146
      %p148 = pneg %p35
      %p149 = pneg %p32
      %p150 = pneg %p56
      %p151 = pneg %p53
      %p152 = pneg %p77
      %p153 = pneg %p74
      %p154 = pneg %p103
      %p155 = pneg %p100
      %p156 = scmp.lt.s32.totalorder %s14, 1
      %s157 = scalar_select %p156, %s14, 1
      %s158 = smul.addr %s157, 3
      %s159 = smul.addr %s158, 8
      %s160 = scalar_lea.vmem %s3, %s159
      %p161 = scmp.lt.s32.totalorder %s14, 1
      %s162 = scalar_select %p161, %s14, 1
      %s163 = smul.addr %s162, 5
      %s164 = smul.addr %s163, 8
      %s165 = scalar_lea.vmem %s0, %s164
      %p166 = scmp.lt.s32.totalorder %s14, 1
      %s167 = scalar_select %p166, %s14, 1
      %s168 = smul.addr %s167, 3
      %s169 = smul.addr %s168, 8
      %s170 = scalar_lea.vmem %s3, %s169
      %v172 = vld [vmem:[%s165] sm:$0xff]
      %v173 = vld [vmem:[%s165 + $0x8] sm:$0xff]
      %v174 = vld [vmem:[%s165 + $0x10] sm:$0xff]
      %v175 = vpack.c.bf16 %v173, %v172
      %v176 = vpack.c.bf16 %v174, %v174
      %v177 = vld [vmem:[%s1] sm:$0xf]
      %v178 = vld [vmem:[%s1 + $0x4] sm:$0xf]
      %v179 = vld [vmem:[%s165 + $0x1] sm:$0xff]
      %v180 = vld [vmem:[%s165 + $0x9] sm:$0xff]
      %v181 = vld [vmem:[%s165 + $0x11] sm:$0xff]
      %v182 = vpack.c.bf16 %v180, %v179
      %v183 = vpack.c.bf16 %v181, %v181
      %s184 = scalar_lea.vmem %s1, 8
      %v185 = vld [vmem:[%s184] sm:$0xf]
      %v186 = vld [vmem:[%s184 + $0x4] sm:$0xf]
      %v189 = vunpack.c.l.b16 %v185
      %v190 = vunpack.c.l.b16 %v186
      %v191 = vpack.c.b16 %v190, %v189
      %vm193 = vcmask 130048
      %v195 = vsel %vm193, %v182, 0
      %v198 = vsel %vm193, %v183, 0
      %200 = vmatprep.subr.bf16.mxu0 0
      %201 = vmatpush1.bf16.msra.mxu0 0
      %202 = vmatprep.subr.bf16.mxu0 0
      %203 = vmatpush1.bf16.msra.mxu0 0
      %204 = vmatprep.subr.bf16.mxu0 0
      %205 = vmatpush1.bf16.msra.mxu0 0
      %206 = vmatprep.subr.bf16.mxu0 0
      %207 = vmatpush1.bf16.msra.mxu0 0
      %208 = vmatprep.subr.bf16.mxu0 0
      %209 = vmatpush1.bf16.msra.mxu0 0
      %210 = vmatprep.subr.bf16.mxu0 0
      %211 = vmatpush1.bf16.msra.mxu0 0
      %212 = vmatprep.subr.bf16.mxu0 0
      %213 = vmatpush1.bf16.msra.mxu0 0
      %214 = vmatprep.subr.bf16.mxu0 0
      %215 = vmatpush1.bf16.msra.mxu0 %v191
      %216 = vmatprep.subr.bf16.mxu0 0
      %217 = vmatpush2.bf16.msra.mxu0 0
      %218 = vmatprep.subr.bf16.mxu0 0
      %219 = vmatpush2.bf16.msra.mxu0 0
      %220 = vmatprep.subr.bf16.mxu0 0
      %221 = vmatpush2.bf16.msra.mxu0 0
      %222 = vmatprep.subr.bf16.mxu0 0
      %223 = vmatpush2.bf16.msra.mxu0 0
      %224 = vmatprep.subr.bf16.mxu0 0
      %225 = vmatpush2.bf16.msra.mxu0 0
      %226 = vmatprep.subr.bf16.mxu0 0
      %227 = vmatpush2.bf16.msra.mxu0 0
      %228 = vmatprep.subr.bf16.mxu0 0
      %229 = vmatpush2.bf16.msra.mxu0 0
      %230 = vmatprep.subr.bf16.mxu0 0
      %231 = vmatpush2.bf16.msra.mxu0 0
      %232 = vmatprep.mubr.bf16.mxu0 0
      %233 = vmatmul.mubr.bf16.gmra.mxu0 %v195
      %v234 = vpop.f32.mrf.mxu0
      %v235 = vadd.f32 0.0, %v234
      %v236 = vpop.f32.mrf.mxu0
      %v237 = vpop.f32.mrf.mxu0
      %v238 = vadd.f32 0.0, %v237
      %v239 = vpop.f32.mrf.mxu0
      %240 = vmatprep.mubr.bf16.mxu0 0
      %241 = vmatmul.mubr.bf16.gmra.mxu0 %v198
      %v242 = vpop.f32.mrf.mxu0
      %v243 = vadd.f32 0.0, %v242
      %v244 = vpop.f32.mrf.mxu0
      %v245 = vpop.f32.mrf.mxu0
      %v246 = vpop.f32.mrf.mxu0
      %247 = vdwg.mxu0
      %v250 = vunpack.c.l.b16 %v177
      %v251 = vunpack.c.l.b16 %v178
      %v252 = vpack.c.b16 %v251, %v250
      %v255 = vsel %vm193, %v175, 0
      %v258 = vsel %vm193, %v176, 0
      %260 = vmatprep.subr.bf16.mxu0 0
      %261 = vmatpush1.bf16.msra.mxu0 0
      %262 = vmatprep.subr.bf16.mxu0 0
      %263 = vmatpush1.bf16.msra.mxu0 0
      %264 = vmatprep.subr.bf16.mxu0 0
      %265 = vmatpush1.bf16.msra.mxu0 0
      %266 = vmatprep.subr.bf16.mxu0 0
      %267 = vmatpush1.bf16.msra.mxu0 0
      %268 = vmatprep.subr.bf16.mxu0 0
      %269 = vmatpush1.bf16.msra.mxu0 0
      %270 = vmatprep.subr.bf16.mxu0 0
      %271 = vmatpush1.bf16.msra.mxu0 0
      %272 = vmatprep.subr.bf16.mxu0 0
      %273 = vmatpush1.bf16.msra.mxu0 0
      %274 = vmatprep.subr.bf16.mxu0 0
      %275 = vmatpush1.bf16.msra.mxu0 %v252
      %276 = vmatprep.subr.bf16.mxu0 0
      %277 = vmatpush2.bf16.msra.mxu0 0
      %278 = vmatprep.subr.bf16.mxu0 0
      %279 = vmatpush2.bf16.msra.mxu0 0
      %280 = vmatprep.subr.bf16.mxu0 0
      %281 = vmatpush2.bf16.msra.mxu0 0
      %282 = vmatprep.subr.bf16.mxu0 0
      %283 = vmatpush2.bf16.msra.mxu0 0
      %284 = vmatprep.subr.bf16.mxu0 0
      %285 = vmatpush2.bf16.msra.mxu0 0
      %286 = vmatprep.subr.bf16.mxu0 0
      %287 = vmatpush2.bf16.msra.mxu0 0
      %288 = vmatprep.subr.bf16.mxu0 0
      %289 = vmatpush2.bf16.msra.mxu0 0
      %290 = vmatprep.subr.bf16.mxu0 0
      %291 = vmatpush2.bf16.msra.mxu0 0
      %292 = vmatprep.mubr.bf16.mxu0 0
      %293 = vmatmul.mubr.bf16.gmra.mxu0 %v255
      %v294 = vpop.f32.mrf.mxu0
      %v295 = vadd.f32 %v235, %v294
      %v296 = vpop.f32.mrf.mxu0
      %v297 = vpop.f32.mrf.mxu0
      %v298 = vadd.f32 %v238, %v297
      %v299 = vpop.f32.mrf.mxu0
      %300 = vmatprep.mubr.bf16.mxu0 0
      %301 = vmatmul.mubr.bf16.gmra.mxu0 %v258
      %v302 = vpop.f32.mrf.mxu0
      %v303 = vadd.f32 %v243, %v302
      %v304 = vpop.f32.mrf.mxu0
      %v305 = vpop.f32.mrf.mxu0
      %v306 = vpop.f32.mrf.mxu0
      %307 = vdwg.mxu0
      %v308 = vld [vmem:[%s165 + $0x2] sm:$0xff]
      %v309 = vld [vmem:[%s165 + $0xa] sm:$0xff]
      %v310 = vld [vmem:[%s165 + $0x12] sm:$0xff]
      %v311 = vpack.c.bf16 %v309, %v308
      %v312 = vpack.c.bf16 %v310, %v310
      %s313 = scalar_lea.vmem %s1, 16
      %v314 = vld [vmem:[%s313] sm:$0xf]
      %v315 = vld [vmem:[%s313 + $0x4] sm:$0xf]
      %v318 = vunpack.c.l.b16 %v314
      %v319 = vunpack.c.l.b16 %v315
      %v320 = vpack.c.b16 %v319, %v318
      %v323 = vsel %vm193, %v311, 0
      %v326 = vsel %vm193, %v312, 0
      %328 = vmatprep.subr.bf16.mxu0 0
      %329 = vmatpush1.bf16.msra.mxu0 0
      %330 = vmatprep.subr.bf16.mxu0 0
      %331 = vmatpush1.bf16.msra.mxu0 0
      %332 = vmatprep.subr.bf16.mxu0 0
      %333 = vmatpush1.bf16.msra.mxu0 0
      %334 = vmatprep.subr.bf16.mxu0 0
      %335 = vmatpush1.bf16.msra.mxu0 0
      %336 = vmatprep.subr.bf16.mxu0 0
      %337 = vmatpush1.bf16.msra.mxu0 0
      %338 = vmatprep.subr.bf16.mxu0 0
      %339 = vmatpush1.bf16.msra.mxu0 0
      %340 = vmatprep.subr.bf16.mxu0 0
      %341 = vmatpush1.bf16.msra.mxu0 0
      %342 = vmatprep.subr.bf16.mxu0 0
      %343 = vmatpush1.bf16.msra.mxu0 %v320
      %344 = vmatprep.subr.bf16.mxu0 0
      %345 = vmatpush2.bf16.msra.mxu0 0
      %346 = vmatprep.subr.bf16.mxu0 0
      %347 = vmatpush2.bf16.msra.mxu0 0
      %348 = vmatprep.subr.bf16.mxu0 0
      %349 = vmatpush2.bf16.msra.mxu0 0
      %350 = vmatprep.subr.bf16.mxu0 0
      %351 = vmatpush2.bf16.msra.mxu0 0
      %352 = vmatprep.subr.bf16.mxu0 0
      %353 = vmatpush2.bf16.msra.mxu0 0
      %354 = vmatprep.subr.bf16.mxu0 0
      %355 = vmatpush2.bf16.msra.mxu0 0
      %356 = vmatprep.subr.bf16.mxu0 0
      %357 = vmatpush2.bf16.msra.mxu0 0
      %358 = vmatprep.subr.bf16.mxu0 0
      %359 = vmatpush2.bf16.msra.mxu0 0
      %360 = vmatprep.mubr.bf16.mxu0 0
      %361 = vmatmul.mubr.bf16.gmra.mxu0 %v323
      %v362 = vpop.f32.mrf.mxu0
      %v363 = vadd.f32 0.0, %v362
      %v364 = vpop.f32.mrf.mxu0
      %v365 = vpop.f32.mrf.mxu0
      %v366 = vadd.f32 0.0, %v365
      %v367 = vpop.f32.mrf.mxu0
      %368 = vmatprep.mubr.bf16.mxu0 0
      %369 = vmatmul.mubr.bf16.gmra.mxu0 %v326
      %v370 = vpop.f32.mrf.mxu0
      %v371 = vadd.f32 0.0, %v370
      %v372 = vpop.f32.mrf.mxu0
      %v373 = vpop.f32.mrf.mxu0
      %v374 = vpop.f32.mrf.mxu0
      %375 = vdwg.mxu0
      %v376 = vadd.f32 %v295, %v363
      %v377 = vadd.f32 %v298, %v366
      %v378 = vadd.f32 %v303, %v371
      %v379 = vld [vmem:[%s165 + $0x6] sm:$0xff]
      %v380 = vld [vmem:[%s165 + $0xe] sm:$0xff]
      %v381 = vld [vmem:[%s165 + $0x16] sm:$0xff]
      %v382 = vpack.c.bf16 %v380, %v379
      %v383 = vpack.c.bf16 %v381, %v381
      %s384 = scalar_lea.vmem %s1, 24
      %v385 = vld [vmem:[%s384] sm:$0xf]
      %v386 = vld [vmem:[%s384 + $0x4] sm:$0xf]
      %v389 = vunpack.c.l.b16 %v385
      %v390 = vunpack.c.l.b16 %v386
      %v391 = vpack.c.b16 %v390, %v389
      %v394 = vsel %vm193, %v382, 0
      %v397 = vsel %vm193, %v383, 0
      %399 = vmatprep.subr.bf16.mxu0 0
      %400 = vmatpush1.bf16.msra.mxu0 0
      %401 = vmatprep.subr.bf16.mxu0 0
      %402 = vmatpush1.bf16.msra.mxu0 0
      %403 = vmatprep.subr.bf16.mxu0 0
      %404 = vmatpush1.bf16.msra.mxu0 0
      %405 = vmatprep.subr.bf16.mxu0 0
      %406 = vmatpush1.bf16.msra.mxu0 0
      %407 = vmatprep.subr.bf16.mxu0 0
      %408 = vmatpush1.bf16.msra.mxu0 0
      %409 = vmatprep.subr.bf16.mxu0 0
      %410 = vmatpush1.bf16.msra.mxu0 0
      %411 = vmatprep.subr.bf16.mxu0 0
      %412 = vmatpush1.bf16.msra.mxu0 0
      %413 = vmatprep.subr.bf16.mxu0 0
      %414 = vmatpush1.bf16.msra.mxu0 %v391
      %415 = vmatprep.subr.bf16.mxu0 0
      %416 = vmatpush2.bf16.msra.mxu0 0
      %417 = vmatprep.subr.bf16.mxu0 0
      %418 = vmatpush2.bf16.msra.mxu0 0
      %419 = vmatprep.subr.bf16.mxu0 0
      %420 = vmatpush2.bf16.msra.mxu0 0
      %421 = vmatprep.subr.bf16.mxu0 0
      %422 = vmatpush2.bf16.msra.mxu0 0
      %423 = vmatprep.subr.bf16.mxu0 0
      %424 = vmatpush2.bf16.msra.mxu0 0
      %425 = vmatprep.subr.bf16.mxu0 0
      %426 = vmatpush2.bf16.msra.mxu0 0
      %427 = vmatprep.subr.bf16.mxu0 0
      %428 = vmatpush2.bf16.msra.mxu0 0
      %429 = vmatprep.subr.bf16.mxu0 0
      %430 = vmatpush2.bf16.msra.mxu0 0
      %431 = vmatprep.mubr.bf16.mxu0 0
      %432 = vmatmul.mubr.bf16.gmra.mxu0 %v394
      %v433 = vpop.f32.mrf.mxu0
      %v434 = vadd.f32 0.0, %v433
      %v435 = vpop.f32.mrf.mxu0
      %v436 = vpop.f32.mrf.mxu0
      %v437 = vadd.f32 0.0, %v436
      %v438 = vpop.f32.mrf.mxu0
      %439 = vmatprep.mubr.bf16.mxu0 0
      %440 = vmatmul.mubr.bf16.gmra.mxu0 %v397
      %v441 = vpop.f32.mrf.mxu0
      %v442 = vadd.f32 0.0, %v441
      %v443 = vpop.f32.mrf.mxu0
      %v444 = vpop.f32.mrf.mxu0
      %v445 = vpop.f32.mrf.mxu0
      %446 = vdwg.mxu0
      %v447 = vadd.f32 %v376, %v434
      %v448 = vadd.f32 %v377, %v437
      %v449 = vadd.f32 %v378, %v442
      %v450 = vld [vmem:[%s165 + $0x7] sm:$0xff]
      %v451 = vld [vmem:[%s165 + $0xf] sm:$0xff]
      %v452 = vld [vmem:[%s165 + $0x17] sm:$0xff]
      %v453 = vpack.c.bf16 %v451, %v450
      %v454 = vpack.c.bf16 %v452, %v452
      %s455 = scalar_lea.vmem %s1, 32
      %v456 = vld [vmem:[%s455] sm:$0xf]
      %v457 = vld [vmem:[%s455 + $0x4] sm:$0xf]
      %v460 = vunpack.c.l.b16 %v456
      %v461 = vunpack.c.l.b16 %v457
      %v462 = vpack.c.b16 %v461, %v460
      %v465 = vsel %vm193, %v453, 0
      %v468 = vsel %vm193, %v454, 0
      %470 = vmatprep.subr.bf16.mxu0 0
      %471 = vmatpush1.bf16.msra.mxu0 0
      %472 = vmatprep.subr.bf16.mxu0 0
      %473 = vmatpush1.bf16.msra.mxu0 0
      %474 = vmatprep.subr.bf16.mxu0 0
      %475 = vmatpush1.bf16.msra.mxu0 0
      %476 = vmatprep.subr.bf16.mxu0 0
      %477 = vmatpush1.bf16.msra.mxu0 0
      %478 = vmatprep.subr.bf16.mxu0 0
      %479 = vmatpush1.bf16.msra.mxu0 0
      %480 = vmatprep.subr.bf16.mxu0 0
      %481 = vmatpush1.bf16.msra.mxu0 0
      %482 = vmatprep.subr.bf16.mxu0 0
      %483 = vmatpush1.bf16.msra.mxu0 0
      %484 = vmatprep.subr.bf16.mxu0 0
      %485 = vmatpush1.bf16.msra.mxu0 %v462
      %486 = vmatprep.subr.bf16.mxu0 0
      %487 = vmatpush2.bf16.msra.mxu0 0
      %488 = vmatprep.subr.bf16.mxu0 0
      %489 = vmatpush2.bf16.msra.mxu0 0
      %490 = vmatprep.subr.bf16.mxu0 0
      %491 = vmatpush2.bf16.msra.mxu0 0
      %492 = vmatprep.subr.bf16.mxu0 0
      %493 = vmatpush2.bf16.msra.mxu0 0
      %494 = vmatprep.subr.bf16.mxu0 0
      %495 = vmatpush2.bf16.msra.mxu0 0
      %496 = vmatprep.subr.bf16.mxu0 0
      %497 = vmatpush2.bf16.msra.mxu0 0
      %498 = vmatprep.subr.bf16.mxu0 0
      %499 = vmatpush2.bf16.msra.mxu0 0
      %500 = vmatprep.subr.bf16.mxu0 0
      %501 = vmatpush2.bf16.msra.mxu0 0
      %502 = vmatprep.mubr.bf16.mxu0 0
      %503 = vmatmul.mubr.bf16.gmra.mxu0 %v465
      %v504 = vpop.f32.mrf.mxu0
      %v505 = vadd.f32 0.0, %v504
      %v506 = vpop.f32.mrf.mxu0
      %v507 = vpop.f32.mrf.mxu0
      %v508 = vadd.f32 0.0, %v507
      %v509 = vpop.f32.mrf.mxu0
      %510 = vmatprep.mubr.bf16.mxu0 0
      %511 = vmatmul.mubr.bf16.gmra.mxu0 %v468
      %v512 = vpop.f32.mrf.mxu0
      %v513 = vadd.f32 0.0, %v512
      %v514 = vpop.f32.mrf.mxu0
      %v515 = vpop.f32.mrf.mxu0
      %v516 = vpop.f32.mrf.mxu0
      %517 = vdwg.mxu0
      %v518 = vadd.f32 %v447, %v505
      %v519 = vadd.f32 %v448, %v508
      %v520 = vadd.f32 %v449, %v513
      %v521 = vld [vmem:[%s165 + $0x8] sm:$0xff]
      %v522 = vld [vmem:[%s165 + $0x10] sm:$0xff]
      %v523 = vld [vmem:[%s165 + $0x18] sm:$0xff]
      %v524 = vpack.c.bf16 %v522, %v521
      %v525 = vpack.c.bf16 %v523, %v523
      %s526 = scalar_lea.vmem %s1, 40
      %v527 = vld [vmem:[%s526] sm:$0xf]
      %v528 = vld [vmem:[%s526 + $0x4] sm:$0xf]
      %v531 = vunpack.c.l.b16 %v527
      %v532 = vunpack.c.l.b16 %v528
      %v533 = vpack.c.b16 %v532, %v531
      %v536 = vsel %vm193, %v524, 0
      %v539 = vsel %vm193, %v525, 0
      %541 = vmatprep.subr.bf16.mxu0 0
      %542 = vmatpush1.bf16.msra.mxu0 0
      %543 = vmatprep.subr.bf16.mxu0 0
      %544 = vmatpush1.bf16.msra.mxu0 0
      %545 = vmatprep.subr.bf16.mxu0 0
      %546 = vmatpush1.bf16.msra.mxu0 0
      %547 = vmatprep.subr.bf16.mxu0 0
      %548 = vmatpush1.bf16.msra.mxu0 0
      %549 = vmatprep.subr.bf16.mxu0 0
      %550 = vmatpush1.bf16.msra.mxu0 0
      %551 = vmatprep.subr.bf16.mxu0 0
      %552 = vmatpush1.bf16.msra.mxu0 0
      %553 = vmatprep.subr.bf16.mxu0 0
      %554 = vmatpush1.bf16.msra.mxu0 0
      %555 = vmatprep.subr.bf16.mxu0 0
      %556 = vmatpush1.bf16.msra.mxu0 %v533
      %557 = vmatprep.subr.bf16.mxu0 0
      %558 = vmatpush2.bf16.msra.mxu0 0
      %559 = vmatprep.subr.bf16.mxu0 0
      %560 = vmatpush2.bf16.msra.mxu0 0
      %561 = vmatprep.subr.bf16.mxu0 0
      %562 = vmatpush2.bf16.msra.mxu0 0
      %563 = vmatprep.subr.bf16.mxu0 0
      %564 = vmatpush2.bf16.msra.mxu0 0
      %565 = vmatprep.subr.bf16.mxu0 0
      %566 = vmatpush2.bf16.msra.mxu0 0
      %567 = vmatprep.subr.bf16.mxu0 0
      %568 = vmatpush2.bf16.msra.mxu0 0
      %569 = vmatprep.subr.bf16.mxu0 0
      %570 = vmatpush2.bf16.msra.mxu0 0
      %571 = vmatprep.subr.bf16.mxu0 0
      %572 = vmatpush2.bf16.msra.mxu0 0
      %573 = vmatprep.mubr.bf16.mxu0 0
      %574 = vmatmul.mubr.bf16.gmra.mxu0 %v536
      %v575 = vpop.f32.mrf.mxu0
      %v576 = vadd.f32 0.0, %v575
      %v577 = vpop.f32.mrf.mxu0
      %v578 = vpop.f32.mrf.mxu0
      %v579 = vadd.f32 0.0, %v578
      %v580 = vpop.f32.mrf.mxu0
      %581 = vmatprep.mubr.bf16.mxu0 0
      %582 = vmatmul.mubr.bf16.gmra.mxu0 %v539
      %v583 = vpop.f32.mrf.mxu0
      %v584 = vadd.f32 0.0, %v583
      %v585 = vpop.f32.mrf.mxu0
      %v586 = vpop.f32.mrf.mxu0
      %v587 = vpop.f32.mrf.mxu0
      %588 = vdwg.mxu0
      %v589 = vadd.f32 %v518, %v576
      %v590 = vadd.f32 %v519, %v579
      %v591 = vadd.f32 %v520, %v584
      %v592 = vld [vmem:[%s165 + $0xc] sm:$0xff]
      %v593 = vld [vmem:[%s165 + $0x14] sm:$0xff]
      %v594 = vld [vmem:[%s165 + $0x1c] sm:$0xff]
      %v595 = vpack.c.bf16 %v593, %v592
      %v596 = vpack.c.bf16 %v594, %v594
      %s597 = scalar_lea.vmem %s1, 48
      %v598 = vld [vmem:[%s597] sm:$0xf]
      %v599 = vld [vmem:[%s597 + $0x4] sm:$0xf]
      %v602 = vunpack.c.l.b16 %v598
      %v603 = vunpack.c.l.b16 %v599
      %v604 = vpack.c.b16 %v603, %v602
      %v607 = vsel %vm193, %v595, 0
      %v610 = vsel %vm193, %v596, 0
      %612 = vmatprep.subr.bf16.mxu0 0
      %613 = vmatpush1.bf16.msra.mxu0 0
      %614 = vmatprep.subr.bf16.mxu0 0
      %615 = vmatpush1.bf16.msra.mxu0 0
      %616 = vmatprep.subr.bf16.mxu0 0
      %617 = vmatpush1.bf16.msra.mxu0 0
      %618 = vmatprep.subr.bf16.mxu0 0
      %619 = vmatpush1.bf16.msra.mxu0 0
      %620 = vmatprep.subr.bf16.mxu0 0
      %621 = vmatpush1.bf16.msra.mxu0 0
      %622 = vmatprep.subr.bf16.mxu0 0
      %623 = vmatpush1.bf16.msra.mxu0 0
      %624 = vmatprep.subr.bf16.mxu0 0
      %625 = vmatpush1.bf16.msra.mxu0 0
      %626 = vmatprep.subr.bf16.mxu0 0
      %627 = vmatpush1.bf16.msra.mxu0 %v604
      %628 = vmatprep.subr.bf16.mxu0 0
      %629 = vmatpush2.bf16.msra.mxu0 0
      %630 = vmatprep.subr.bf16.mxu0 0
      %631 = vmatpush2.bf16.msra.mxu0 0
      %632 = vmatprep.subr.bf16.mxu0 0
      %633 = vmatpush2.bf16.msra.mxu0 0
      %634 = vmatprep.subr.bf16.mxu0 0
      %635 = vmatpush2.bf16.msra.mxu0 0
      %636 = vmatprep.subr.bf16.mxu0 0
      %637 = vmatpush2.bf16.msra.mxu0 0
      %638 = vmatprep.subr.bf16.mxu0 0
      %639 = vmatpush2.bf16.msra.mxu0 0
      %640 = vmatprep.subr.bf16.mxu0 0
      %641 = vmatpush2.bf16.msra.mxu0 0
      %642 = vmatprep.subr.bf16.mxu0 0
      %643 = vmatpush2.bf16.msra.mxu0 0
      %644 = vmatprep.mubr.bf16.mxu0 0
      %645 = vmatmul.mubr.bf16.gmra.mxu0 %v607
      %v646 = vpop.f32.mrf.mxu0
      %v647 = vadd.f32 0.0, %v646
      %v648 = vpop.f32.mrf.mxu0
      %v649 = vpop.f32.mrf.mxu0
      %v650 = vadd.f32 0.0, %v649
      %v651 = vpop.f32.mrf.mxu0
      %652 = vmatprep.mubr.bf16.mxu0 0
      %653 = vmatmul.mubr.bf16.gmra.mxu0 %v610
      %v654 = vpop.f32.mrf.mxu0
      %v655 = vadd.f32 0.0, %v654
      %v656 = vpop.f32.mrf.mxu0
      %v657 = vpop.f32.mrf.mxu0
      %v658 = vpop.f32.mrf.mxu0
      %659 = vdwg.mxu0
      %v660 = vadd.f32 %v589, %v647
      %v661 = vadd.f32 %v590, %v650
      %v662 = vadd.f32 %v591, %v655
      %v663 = vld [vmem:[%s165 + $0xd] sm:$0xff]
      %v664 = vld [vmem:[%s165 + $0x15] sm:$0xff]
      %v665 = vld [vmem:[%s165 + $0x1d] sm:$0xff]
      %v666 = vpack.c.bf16 %v664, %v663
      %v667 = vpack.c.bf16 %v665, %v665
      %s668 = scalar_lea.vmem %s1, 56
      %v669 = vld [vmem:[%s668] sm:$0xf]
      %v670 = vld [vmem:[%s668 + $0x4] sm:$0xf]
      %v673 = vunpack.c.l.b16 %v669
      %v674 = vunpack.c.l.b16 %v670
      %v675 = vpack.c.b16 %v674, %v673
      %v678 = vsel %vm193, %v666, 0
      %v681 = vsel %vm193, %v667, 0
      %683 = vmatprep.subr.bf16.mxu0 0
      %684 = vmatpush1.bf16.msra.mxu0 0
      %685 = vmatprep.subr.bf16.mxu0 0
      %686 = vmatpush1.bf16.msra.mxu0 0
      %687 = vmatprep.subr.bf16.mxu0 0
      %688 = vmatpush1.bf16.msra.mxu0 0
      %689 = vmatprep.subr.bf16.mxu0 0
      %690 = vmatpush1.bf16.msra.mxu0 0
      %691 = vmatprep.subr.bf16.mxu0 0
      %692 = vmatpush1.bf16.msra.mxu0 0
      %693 = vmatprep.subr.bf16.mxu0 0
      %694 = vmatpush1.bf16.msra.mxu0 0
      %695 = vmatprep.subr.bf16.mxu0 0
      %696 = vmatpush1.bf16.msra.mxu0 0
      %697 = vmatprep.subr.bf16.mxu0 0
      %698 = vmatpush1.bf16.msra.mxu0 %v675
      %699 = vmatprep.subr.bf16.mxu0 0
      %700 = vmatpush2.bf16.msra.mxu0 0
      %701 = vmatprep.subr.bf16.mxu0 0
      %702 = vmatpush2.bf16.msra.mxu0 0
      %703 = vmatprep.subr.bf16.mxu0 0
      %704 = vmatpush2.bf16.msra.mxu0 0
      %705 = vmatprep.subr.bf16.mxu0 0
      %706 = vmatpush2.bf16.msra.mxu0 0
      %707 = vmatprep.subr.bf16.mxu0 0
      %708 = vmatpush2.bf16.msra.mxu0 0
      %709 = vmatprep.subr.bf16.mxu0 0
      %710 = vmatpush2.bf16.msra.mxu0 0
      %711 = vmatprep.subr.bf16.mxu0 0
      %712 = vmatpush2.bf16.msra.mxu0 0
      %713 = vmatprep.subr.bf16.mxu0 0
      %714 = vmatpush2.bf16.msra.mxu0 0
      %715 = vmatprep.mubr.bf16.mxu0 0
      %716 = vmatmul.mubr.bf16.gmra.mxu0 %v678
      %v717 = vpop.f32.mrf.mxu0
      %v718 = vadd.f32 0.0, %v717
      %v719 = vpop.f32.mrf.mxu0
      %v720 = vpop.f32.mrf.mxu0
      %v721 = vadd.f32 0.0, %v720
      %v722 = vpop.f32.mrf.mxu0
      %723 = vmatprep.mubr.bf16.mxu0 0
      %724 = vmatmul.mubr.bf16.gmra.mxu0 %v681
      %v725 = vpop.f32.mrf.mxu0
      %v726 = vadd.f32 0.0, %v725
      %v727 = vpop.f32.mrf.mxu0
      %v728 = vpop.f32.mrf.mxu0
      %v729 = vpop.f32.mrf.mxu0
      %730 = vdwg.mxu0
      %v731 = vadd.f32 %v660, %v718
      %v732 = vadd.f32 %v661, %v721
      %v733 = vadd.f32 %v662, %v726
      %v734 = vld [vmem:[%s165 + $0xe] sm:$0xff]
      %v735 = vld [vmem:[%s165 + $0x16] sm:$0xff]
      %v736 = vld [vmem:[%s165 + $0x1e] sm:$0xff]
      %v737 = vpack.c.bf16 %v735, %v734
      %v738 = vpack.c.bf16 %v736, %v736
      %s739 = scalar_lea.vmem %s1, 64
      %v740 = vld [vmem:[%s739] sm:$0xf]
      %v741 = vld [vmem:[%s739 + $0x4] sm:$0xf]
      %v744 = vunpack.c.l.b16 %v740
      %v745 = vunpack.c.l.b16 %v741
      %v746 = vpack.c.b16 %v745, %v744
      %v749 = vsel %vm193, %v737, 0
      %v752 = vsel %vm193, %v738, 0
      %754 = vmatprep.subr.bf16.mxu0 0
      %755 = vmatpush1.bf16.msra.mxu0 0
      %756 = vmatprep.subr.bf16.mxu0 0
      %757 = vmatpush1.bf16.msra.mxu0 0
      %758 = vmatprep.subr.bf16.mxu0 0
      %759 = vmatpush1.bf16.msra.mxu0 0
      %760 = vmatprep.subr.bf16.mxu0 0
      %761 = vmatpush1.bf16.msra.mxu0 0
      %762 = vmatprep.subr.bf16.mxu0 0
      %763 = vmatpush1.bf16.msra.mxu0 0
      %764 = vmatprep.subr.bf16.mxu0 0
      %765 = vmatpush1.bf16.msra.mxu0 0
      %766 = vmatprep.subr.bf16.mxu0 0
      %767 = vmatpush1.bf16.msra.mxu0 0
      %768 = vmatprep.subr.bf16.mxu0 0
      %769 = vmatpush1.bf16.msra.mxu0 %v746
      %770 = vmatprep.subr.bf16.mxu0 0
      %771 = vmatpush2.bf16.msra.mxu0 0
      %772 = vmatprep.subr.bf16.mxu0 0
      %773 = vmatpush2.bf16.msra.mxu0 0
      %774 = vmatprep.subr.bf16.mxu0 0
      %775 = vmatpush2.bf16.msra.mxu0 0
      %776 = vmatprep.subr.bf16.mxu0 0
      %777 = vmatpush2.bf16.msra.mxu0 0
      %778 = vmatprep.subr.bf16.mxu0 0
      %779 = vmatpush2.bf16.msra.mxu0 0
      %780 = vmatprep.subr.bf16.mxu0 0
      %781 = vmatpush2.bf16.msra.mxu0 0
      %782 = vmatprep.subr.bf16.mxu0 0
      %783 = vmatpush2.bf16.msra.mxu0 0
      %784 = vmatprep.subr.bf16.mxu0 0
      %785 = vmatpush2.bf16.msra.mxu0 0
      %786 = vmatprep.mubr.bf16.mxu0 0
      %787 = vmatmul.mubr.bf16.gmra.mxu0 %v749
      %v788 = vpop.f32.mrf.mxu0
      %v789 = vadd.f32 0.0, %v788
      %v790 = vpop.f32.mrf.mxu0
      %v791 = vpop.f32.mrf.mxu0
      %v792 = vadd.f32 0.0, %v791
      %v793 = vpop.f32.mrf.mxu0
      %794 = vmatprep.mubr.bf16.mxu0 0
      %795 = vmatmul.mubr.bf16.gmra.mxu0 %v752
      %v796 = vpop.f32.mrf.mxu0
      %v797 = vadd.f32 0.0, %v796
      %v798 = vpop.f32.mrf.mxu0
      %v799 = vpop.f32.mrf.mxu0
      %v800 = vpop.f32.mrf.mxu0
      %801 = vdwg.mxu0
      %v802 = vadd.f32 %v731, %v789
      %v803 = vadd.f32 %v732, %v792
      %v804 = vadd.f32 %v733, %v797
      %v805 = vld [vmem:[%s2] sm:$0x1]
      %v807 = vlaneseq
      %v808 = vshrl.u32 %v807, 7
      %v809 = vsub.s32 0, %v808
      %v810 = vrot.slane %v805, %v809
      %v812 = vadd.f32 %v802, %v810
      %v813 = vadd.f32 %v803, %v810
      %v814 = vadd.f32 %v804, %v810
      %v815 = vmax.f32 %v812, 0.0
      %v816 = vmax.f32 %v813, 0.0
      %v817 = vmax.f32 %v814, 0.0
      %818 = vst [vmem:[%s170] sm:$0xff] %v815
      %819 = vst [vmem:[%s170 + $0x8] sm:$0xff] %v816
      %820 = vst [vmem:[%s170 + $0x10] sm:$0xff] %v817
      %p821 = scmp.lt.s32.totalorder %s14, 1
      %s822 = scalar_select %p821, %s14, 1
      %s823 = smul.addr %s822, 3
      %s824 = smul.addr %s823, 8
      %s825 = scalar_lea.vmem %s3, %s824
      // Predicated region
      $region33: #{backbone_as_unet_forward.15} parent=31 // pred_check
        %p826 = pneg %p100
      $region34: #{backbone_as_unet_forward.15} parent=31 // pred_check_branch
        %828 = sbr.rel (%p826) target = $region36
      $region35: #{backbone_as_unet_forward.15} parent=31 // pred_region
        _
      $region36: #{backbone_as_unet_forward.15} parent=31 // pred_fallthru
        _
    $region32: #{backbone_as_unet_forward.15} parent=5 // pred_fallthru
      _
    %p829 = scmp.le.s32.totalorder 2, %s9
    // Predicated region
    $region37: #{backbone_as_unet_forward.15} parent=5 // pred_check
      %p830 = pneg %p829
    $region38: #{backbone_as_unet_forward.15} parent=5 // pred_check_branch
      %832 = sbr.rel (%p830) target = $region40
    $region39: #{backbone_as_unet_forward.15} parent=5 // pred_region
      %s833 = ssub.s32 %s9, 2
      // Predicated region
      $region41: #{backbone_as_unet_forward.15} parent=39 // pred_check
        %p834 = pneg %p106
      $region42: #{backbone_as_unet_forward.15} parent=39 // pred_check_branch
        %836 = sbr.rel (%p834) target = $region44
      $region43: #{backbone_as_unet_forward.15} parent=39 // pred_region
        %p837 = scmp.lt.s32.totalorder %s15, 1
        %s838 = scalar_select %p837, %s15, 1
        %s839 = smul.addr %s838, 3
        %s840 = smul.addr %s839, 8
        %s841 = scalar_lea.vmem %s3, %s840
      $region44: #{backbone_as_unet_forward.15} parent=39 // pred_fallthru
        _
    $region40: #{backbone_as_unet_forward.15} parent=5 // pred_fallthru
      _
  $region6: #{backbone_as_unet_forward.15} parent=0 // loop_footer
    %s13 = sadd.s32 1, %s9
  $region7: #{backbone_as_unet_forward.15} parent=0 // loop_footer_branch
    %8 = sbr.rel target = $region3
  $region8: #{backbone_as_unet_forward.15} parent=0 // loop_exit
    _

// kernel: backbone_as_unet_forward.19
$region0: #{backbone_as_unet_forward.19}
  #allocation0 [shape = 'u32[]', space=smem, size = 0x4, offset = 0x4, fixed_abs, tag = 'smem constant byte address 0x4 - core index']
  #allocation1 [shape = 'u32[144,128]{1,0:T(1,128)}', space=vmem, size = 0x12000, scoped, tag = 'internal scratch']
  %s0 = inlined_call_operand.vmem [shape: f32[128,8], index: 0, kind: input, shape index: {}]
  %s1 = inlined_call_operand.vmem [shape: bf16[8,128], index: 1, kind: input, shape index: {}]
  %s2 = inlined_call_operand.vmem [shape: f32[1,128], index: 2, kind: input, shape index: {}]
  %s3 = inlined_call_operand.vmem [shape: f32[128,128], index: 3, kind: output, shape index: {}]
  %s4 = sld [smem:[#allocation0]]
  $region22: #{backbone_as_unet_forward.19} parent=0
    _
  %s6 = ssub.s32 1, %s4
  %s7 = scalar_select 0, %s6, %s4
  // Predicated region
  $region2: #{backbone_as_unet_forward.19} parent=0 // pred_check
    _
  $region3: #{backbone_as_unet_forward.19} parent=0 // pred_check_branch
    %9 = sbr.rel (0) target = $region5
  $region4: #{backbone_as_unet_forward.19} parent=0 // pred_region
    _
  $region5: #{backbone_as_unet_forward.19} parent=0 // pred_fallthru
    _
  // Predicated region
  $region6: #{backbone_as_unet_forward.19} parent=0 // pred_check
    _
  $region7: #{backbone_as_unet_forward.19} parent=0 // pred_check_branch
    %11 = sbr.rel (0) target = $region9
  $region8: #{backbone_as_unet_forward.19} parent=0 // pred_region
    _
  $region9: #{backbone_as_unet_forward.19} parent=0 // pred_fallthru
    _
  // Predicated region
  $region10: #{backbone_as_unet_forward.19} parent=0 // pred_check
    _
  $region11: #{backbone_as_unet_forward.19} parent=0 // pred_check_branch
    %13 = sbr.rel (0) target = $region13
  $region12: #{backbone_as_unet_forward.19} parent=0 // pred_region
    _
  $region13: #{backbone_as_unet_forward.19} parent=0 // pred_fallthru
    _
  %v15 = vld [vmem:[%s0] sm:$0xff]
  %v16 = vld [vmem:[%s0 + $0x8] sm:$0xff]
  %v17 = vld [vmem:[%s0 + $0x10] sm:$0xff]
  %v18 = vld [vmem:[%s0 + $0x18] sm:$0xff]
  %v19 = vld [vmem:[%s0 + $0x20] sm:$0xff]
  %v20 = vld [vmem:[%s0 + $0x28] sm:$0xff]
  %v21 = vld [vmem:[%s0 + $0x30] sm:$0xff]
  %v22 = vld [vmem:[%s0 + $0x38] sm:$0xff]
  %v23 = vld [vmem:[%s0 + $0x40] sm:$0xff]
  %v24 = vld [vmem:[%s0 + $0x48] sm:$0xff]
  %v25 = vld [vmem:[%s0 + $0x50] sm:$0xff]
  %v26 = vld [vmem:[%s0 + $0x58] sm:$0xff]
  %v27 = vld [vmem:[%s0 + $0x60] sm:$0xff]
  %v28 = vld [vmem:[%s0 + $0x68] sm:$0xff]
  %v29 = vld [vmem:[%s0 + $0x70] sm:$0xff]
  %v30 = vld [vmem:[%s0 + $0x78] sm:$0xff]
  %v31 = vpack.c.bf16 %v16, %v15
  %v32 = vpack.c.bf16 %v18, %v17
  %v33 = vpack.c.bf16 %v20, %v19
  %v34 = vpack.c.bf16 %v22, %v21
  %v35 = vpack.c.bf16 %v24, %v23
  %v36 = vpack.c.bf16 %v26, %v25
  %v37 = vpack.c.bf16 %v28, %v27
  %v38 = vpack.c.bf16 %v30, %v29
  %v39 = vld [vmem:[%s1] sm:$0xf]
  %v40 = vld [vmem:[%s2] sm:$0x1]
  %v42 = vlaneseq
  %v43 = vshrl.u32 %v42, 7
  %v44 = vsub.s32 0, %v43
  %v45 = vrot.slane %v40, %v44
  %vm47 = vcmask 64512
  %v49 = vsel %vm47, %v31, 0
  %v52 = vsel %vm47, %v32, 0
  %v55 = vsel %vm47, %v33, 0
  %v58 = vsel %vm47, %v34, 0
  %v61 = vsel %vm47, %v35, 0
  %v64 = vsel %vm47, %v36, 0
  %v67 = vsel %vm47, %v37, 0
  %v70 = vsel %vm47, %v38, 0
  %vm72 = vcmask 1043456
  %v74 = vsel %vm72, %v39, 0
  %76 = vmatprep.subr.bf16.mxu0 0
  %77 = vmatpush1.bf16.msra.mxu0 0
  %78 = vmatprep.subr.bf16.mxu0 0
  %79 = vmatpush1.bf16.msra.mxu0 0
  %80 = vmatprep.subr.bf16.mxu0 0
  %81 = vmatpush1.bf16.msra.mxu0 0
  %82 = vmatprep.subr.bf16.mxu0 0
  %83 = vmatpush1.bf16.msra.mxu0 0
  %84 = vmatprep.subr.bf16.mxu0 0
  %85 = vmatpush1.bf16.msra.mxu0 0
  %86 = vmatprep.subr.bf16.mxu0 0
  %87 = vmatpush1.bf16.msra.mxu0 0
  %88 = vmatprep.subr.bf16.mxu0 0
  %89 = vmatpush1.bf16.msra.mxu0 0
  %90 = vmatprep.subr.bf16.mxu0 0
  %91 = vmatpush1.bf16.msra.mxu0 %v74
  %92 = vmatprep.subr.bf16.mxu0 0
  %93 = vmatpush2.bf16.msra.mxu0 0
  %94 = vmatprep.subr.bf16.mxu0 0
  %95 = vmatpush2.bf16.msra.mxu0 0
  %96 = vmatprep.subr.bf16.mxu0 0
  %97 = vmatpush2.bf16.msra.mxu0 0
  %98 = vmatprep.subr.bf16.mxu0 0
  %99 = vmatpush2.bf16.msra.mxu0 0
  %100 = vmatprep.subr.bf16.mxu0 0
  %101 = vmatpush2.bf16.msra.mxu0 0
  %102 = vmatprep.subr.bf16.mxu0 0
  %103 = vmatpush2.bf16.msra.mxu0 0
  %104 = vmatprep.subr.bf16.mxu0 0
  %105 = vmatpush2.bf16.msra.mxu0 0
  %106 = vmatprep.subr.bf16.mxu0 0
  %107 = vmatpush2.bf16.msra.mxu0 0
  %108 = vmatprep.mubr.bf16.mxu0 0
  %109 = vmatmul.mubr.bf16.gmra.mxu0 %v49
  %v110 = vpop.f32.mrf.mxu0
  %v111 = vadd.f32 %v45, %v110
  %v112 = vpop.f32.mrf.mxu0
  %v113 = vpop.f32.mrf.mxu0
  %v114 = vadd.f32 %v45, %v113
  %v115 = vpop.f32.mrf.mxu0
  %116 = vmatprep.mubr.bf16.mxu0 0
  %117 = vmatmul.mubr.bf16.gmra.mxu0 %v52
  %v118 = vpop.f32.mrf.mxu0
  %v119 = vadd.f32 %v45, %v118
  %v120 = vpop.f32.mrf.mxu0
  %v121 = vpop.f32.mrf.mxu0
  %v122 = vadd.f32 %v45, %v121
  %v123 = vpop.f32.mrf.mxu0
  %124 = vmatprep.mubr.bf16.mxu0 0
  %125 = vmatmul.mubr.bf16.gmra.mxu0 %v55
  %v126 = vpop.f32.mrf.mxu0
  %v127 = vadd.f32 %v45, %v126
  %v128 = vpop.f32.mrf.mxu0
  %v129 = vpop.f32.mrf.mxu0
  %v130 = vadd.f32 %v45, %v129
  %v131 = vpop.f32.mrf.mxu0
  %132 = vmatprep.mubr.bf16.mxu0 0
  %133 = vmatmul.mubr.bf16.gmra.mxu0 %v58
  %v134 = vpop.f32.mrf.mxu0
  %v135 = vadd.f32 %v45, %v134
  %v136 = vpop.f32.mrf.mxu0
  %v137 = vpop.f32.mrf.mxu0
  %v138 = vadd.f32 %v45, %v137
  %v139 = vpop.f32.mrf.mxu0
  %140 = vmatprep.mubr.bf16.mxu0 0
  %141 = vmatmul.mubr.bf16.gmra.mxu0 %v61
  %v142 = vpop.f32.mrf.mxu0
  %v143 = vadd.f32 %v45, %v142
  %v144 = vpop.f32.mrf.mxu0
  %v145 = vpop.f32.mrf.mxu0
  %v146 = vadd.f32 %v45, %v145
  %v147 = vpop.f32.mrf.mxu0
  %148 = vmatprep.mubr.bf16.mxu0 0
  %149 = vmatmul.mubr.bf16.gmra.mxu0 %v64
  %v150 = vpop.f32.mrf.mxu0
  %v151 = vadd.f32 %v45, %v150
  %v152 = vpop.f32.mrf.mxu0
  %v153 = vpop.f32.mrf.mxu0
  %v154 = vadd.f32 %v45, %v153
  %v155 = vpop.f32.mrf.mxu0
  %156 = vmatprep.mubr.bf16.mxu0 0
  %157 = vmatmul.mubr.bf16.gmra.mxu0 %v67
  %v158 = vpop.f32.mrf.mxu0
  %v159 = vadd.f32 %v45, %v158
  %v160 = vpop.f32.mrf.mxu0
  %v161 = vpop.f32.mrf.mxu0
  %v162 = vadd.f32 %v45, %v161
  %v163 = vpop.f32.mrf.mxu0
  %164 = vmatprep.mubr.bf16.mxu0 0
  %165 = vmatmul.mubr.bf16.gmra.mxu0 %v70
  %v166 = vpop.f32.mrf.mxu0
  %v167 = vadd.f32 %v45, %v166
  %v168 = vpop.f32.mrf.mxu0
  %v169 = vpop.f32.mrf.mxu0
  %v170 = vadd.f32 %v45, %v169
  %v171 = vpop.f32.mrf.mxu0
  %172 = vdwg.mxu0
  %173 = vst [vmem:[%s3] sm:$0xff] %v111
  %174 = vst [vmem:[%s3 + $0x8] sm:$0xff] %v114
  %175 = vst [vmem:[%s3 + $0x10] sm:$0xff] %v119
  %176 = vst [vmem:[%s3 + $0x18] sm:$0xff] %v122
  %177 = vst [vmem:[%s3 + $0x20] sm:$0xff] %v127
  %178 = vst [vmem:[%s3 + $0x28] sm:$0xff] %v130
  %179 = vst [vmem:[%s3 + $0x30] sm:$0xff] %v135
  %180 = vst [vmem:[%s3 + $0x38] sm:$0xff] %v138
  %181 = vst [vmem:[%s3 + $0x40] sm:$0xff] %v143
  %182 = vst [vmem:[%s3 + $0x48] sm:$0xff] %v146
  %183 = vst [vmem:[%s3 + $0x50] sm:$0xff] %v151
  %184 = vst [vmem:[%s3 + $0x58] sm:$0xff] %v154
  %185 = vst [vmem:[%s3 + $0x60] sm:$0xff] %v159
  %186 = vst [vmem:[%s3 + $0x68] sm:$0xff] %v162
  %187 = vst [vmem:[%s3 + $0x70] sm:$0xff] %v167
  %188 = vst [vmem:[%s3 + $0x78] sm:$0xff] %v170
  // Predicated region
  $region14: #{backbone_as_unet_forward.19} parent=0 // pred_check
    _
  $region15: #{backbone_as_unet_forward.19} parent=0 // pred_check_branch
    %190 = sbr.rel (0) target = $region17
  $region16: #{backbone_as_unet_forward.19} parent=0 // pred_region
    _
  $region17: #{backbone_as_unet_forward.19} parent=0 // pred_fallthru
    _
  // Predicated region
  $region18: #{backbone_as_unet_forward.19} parent=0 // pred_check
    _
  $region19: #{backbone_as_unet_forward.19} parent=0 // pred_check_branch
    %192 = sbr.rel (0) target = $region21
  $region20: #{backbone_as_unet_forward.19} parent=0 // pred_region
    _
  $region21: #{backbone_as_unet_forward.19} parent=0 // pred_fallthru
    _

// kernel: backbone_as_unet_forward.17
$region0: #{backbone_as_unet_forward.17}
  #allocation0 [shape = 'u32[]', space=smem, size = 0x4, offset = 0x4, fixed_abs, tag = 'smem constant byte address 0x4 - core index']
  #allocation1 [shape = 'u32[144,128]{1,0:T(1,128)}', space=vmem, size = 0x12000, scoped, tag = 'internal scratch']
  %s0 = inlined_call_operand.vmem [shape: f32[2,102,16], index: 0, kind: input, shape index: {}]
  %s1 = inlined_call_operand.vmem [shape: bf16[9,16,128], index: 1, kind: input, shape index: {}]
  %s2 = inlined_call_operand.vmem [shape: f32[1,128], index: 2, kind: input, shape index: {}]
  %s3 = inlined_call_operand.vmem [shape: f32[2,80,128], index: 3, kind: output, shape index: {}]
  %s4 = sld [smem:[#allocation0]]
  $region45: #{backbone_as_unet_forward.17} parent=0
    _
  %s6 = ssub.s32 1, %s4
  %s7 = scalar_select 0, %s6, %s4
  loop: start=0, step=1, limit=4
  $region2: #{backbone_as_unet_forward.17} parent=0 // loop_pre_header
    _
  $region3: #{backbone_as_unet_forward.17} parent=0 // loop_header
    %s9 = sphi 0, %s13
    %p10 = scmp.ge.s32.totalorder %s9, 4
    %s19 = sphi 0, %s21
    %s22 = sphi 0, %s19
    %s23 = sphi 0, %s22
    %s39 = sphi 0, %s23
    %s43 = sphi 0, %s43
    %s45 = sphi 0, %s43
    %s46 = sphi 0, %s45
    %s60 = sphi 0, %s46
    %s64 = sphi 0, %s64
    %s66 = sphi 0, %s64
    %s67 = sphi 0, %s66
    %s81 = sphi 0, %s67
    %s87 = sphi 0, %s89
    %s90 = sphi 0, %s87
    %s91 = sphi 0, %s90
    %s107 = sphi 0, %s91
  $region4: #{backbone_as_unet_forward.17} parent=0 // loop_header_branch
    %12 = sbr.rel (%p10) target = $region8
  $region5: #{backbone_as_unet_forward.17} parent=0 // loop_body
    %s14 = ssub.s32 %s9, 1
    %s15 = ssub.s32 %s9, 2
    %s16 = sadd.s32 %s9, 1
    %s17 = ssub.s32 %s9, %s16
    %p18 = scmp.eq.s32.totalorder %s17, 0
    %s20 = sadd.s32 %s19, 1
    %s21 = scalar_select %p18, %s19, %s20
    %p24 = pneg %p18
    %p25 = scmp.eq.s32.totalorder %s9, 1
    %p26 = por %p24, %p25
    %p27 = scmp.ne.s32.totalorder %s19, %s22
    %p28 = scmp.eq.s32.totalorder %s9, 0
    %p29 = por %p27, %p28
    %p30 = scmp.ne.s32.totalorder %s19, %s22
    %p31 = scmp.eq.s32.totalorder %s14, 1
    %p32 = por %p30, %p31
    %p33 = scmp.ne.s32.totalorder %s22, %s23
    %p34 = scmp.eq.s32.totalorder %s14, 0
    %p35 = por %p33, %p34
    %p36 = scmp.ne.s32.totalorder %s22, %s23
    %p37 = scmp.eq.s32.totalorder %s15, 1
    %p38 = por %p36, %p37
    %p40 = scmp.ne.s32.totalorder %s23, %s39
    %p41 = scmp.eq.s32.totalorder %s15, 0
    %p42 = por %p40, %p41
    %s44 = sadd.s32 %s43, 1
    %p47 = scmp.eq.s32.totalorder %s9, 1
    %p48 = scmp.ne.s32.totalorder %s43, %s45
    %p49 = scmp.eq.s32.totalorder %s9, 0
    %p50 = por %p48, %p49
    %p51 = scmp.ne.s32.totalorder %s43, %s45
    %p52 = scmp.eq.s32.totalorder %s14, 1
    %p53 = por %p51, %p52
    %p54 = scmp.ne.s32.totalorder %s45, %s46
    %p55 = scmp.eq.s32.totalorder %s14, 0
    %p56 = por %p54, %p55
    %p57 = scmp.ne.s32.totalorder %s45, %s46
    %p58 = scmp.eq.s32.totalorder %s15, 1
    %p59 = por %p57, %p58
    %p61 = scmp.ne.s32.totalorder %s46, %s60
    %p62 = scmp.eq.s32.totalorder %s15, 0
    %p63 = por %p61, %p62
    %s65 = sadd.s32 %s64, 1
    %p68 = scmp.eq.s32.totalorder %s9, 1
    %p69 = scmp.ne.s32.totalorder %s64, %s66
    %p70 = scmp.eq.s32.totalorder %s9, 0
    %p71 = por %p69, %p70
    %p72 = scmp.ne.s32.totalorder %s64, %s66
    %p73 = scmp.eq.s32.totalorder %s14, 1
    %p74 = por %p72, %p73
    %p75 = scmp.ne.s32.totalorder %s66, %s67
    %p76 = scmp.eq.s32.totalorder %s14, 0
    %p77 = por %p75, %p76
    %p78 = scmp.ne.s32.totalorder %s66, %s67
    %p79 = scmp.eq.s32.totalorder %s15, 1
    %p80 = por %p78, %p79
    %p82 = scmp.ne.s32.totalorder %s67, %s81
    %p83 = scmp.eq.s32.totalorder %s15, 0
    %p84 = por %p82, %p83
    %s85 = ssub.s32 %s9, %s16
    %p86 = scmp.eq.s32.totalorder %s85, 0
    %s88 = sadd.s32 %s87, 1
    %s89 = scalar_select %p86, %s87, %s88
    %p92 = pneg %p86
    %p93 = scmp.eq.s32.totalorder %s9, 1
    %p94 = por %p92, %p93
    %p95 = scmp.ne.s32.totalorder %s87, %s90
    %p96 = scmp.eq.s32.totalorder %s9, 0
    %p97 = por %p95, %p96
    %p98 = scmp.ne.s32.totalorder %s87, %s90
    %p99 = scmp.eq.s32.totalorder %s14, 1
    %p100 = por %p98, %p99
    %p101 = scmp.ne.s32.totalorder %s90, %s91
    %p102 = scmp.eq.s32.totalorder %s14, 0
    %p103 = por %p101, %p102
    %p104 = scmp.ne.s32.totalorder %s90, %s91
    %p105 = scmp.eq.s32.totalorder %s15, 1
    %p106 = por %p104, %p105
    %p108 = scmp.ne.s32.totalorder %s91, %s107
    %p109 = scmp.eq.s32.totalorder %s15, 0
    %p110 = por %p108, %p109
    %p111 = scmp.le.s32.totalorder 1, %s9
    %p112 = scmp.lt.s32.totalorder %s9, 3
    %p113 = pnand %p111, %p112
    %p114 = pneg %p113
    // Predicated region
    $region9: #{backbone_as_unet_forward.17} parent=5 // pred_check
      _
    $region10: #{backbone_as_unet_forward.17} parent=5 // pred_check_branch
      %116 = sbr.rel (%p113) target = $region12
    $region11: #{backbone_as_unet_forward.17} parent=5 // pred_region
      %s117 = ssub.s32 %s9, 1
      // Predicated region
      $region13: #{backbone_as_unet_forward.17} parent=11 // pred_check
        %p118 = pneg %p56
      $region14: #{backbone_as_unet_forward.17} parent=11 // pred_check_branch
        %120 = sbr.rel (%p118) target = $region16
      $region15: #{backbone_as_unet_forward.17} parent=11 // pred_region
        _
      $region16: #{backbone_as_unet_forward.17} parent=11 // pred_fallthru
        _
      // Predicated region
      $region17: #{backbone_as_unet_forward.17} parent=11 // pred_check
        %p121 = pneg %p77
      $region18: #{backbone_as_unet_forward.17} parent=11 // pred_check_branch
        %123 = sbr.rel (%p121) target = $region20
      $region19: #{backbone_as_unet_forward.17} parent=11 // pred_region
        _
      $region20: #{backbone_as_unet_forward.17} parent=11 // pred_fallthru
        _
    $region12: #{backbone_as_unet_forward.17} parent=5 // pred_fallthru
      _
    %p124 = scmp.lt.s32.totalorder %s9, 2
    // Predicated region
    $region21: #{backbone_as_unet_forward.17} parent=5 // pred_check
      %p125 = pneg %p124
    $region22: #{backbone_as_unet_forward.17} parent=5 // pred_check_branch
      %127 = sbr.rel (%p125) target = $region24
    $region23: #{backbone_as_unet_forward.17} parent=5 // pred_region
      // Predicated region
      $region25: #{backbone_as_unet_forward.17} parent=23 // pred_check
        %p128 = pneg %p29
      $region26: #{backbone_as_unet_forward.17} parent=23 // pred_check_branch
        %130 = sbr.rel (%p128) target = $region28
      $region27: #{backbone_as_unet_forward.17} parent=23 // pred_region
        %p131 = scmp.lt.s32.totalorder %s9, 1
        %s132 = scalar_select %p131, %s9, 1
        %s133 = smul.addr %s132, 13
        %s134 = smul.addr %s133, 8
        %s135 = scalar_lea.vmem %s0, %s134
      $region28: #{backbone_as_unet_forward.17} parent=23 // pred_fallthru
        _
    $region24: #{backbone_as_unet_forward.17} parent=5 // pred_fallthru
      _
    %p136 = scmp.le.s32.totalorder 1, %s9
    %p137 = scmp.lt.s32.totalorder %s9, 3
    %p138 = pnand %p136, %p137
    %p139 = pneg %p138
    // Predicated region
    $region29: #{backbone_as_unet_forward.17} parent=5 // pred_check
      _
    $region30: #{backbone_as_unet_forward.17} parent=5 // pred_check_branch
      %141 = sbr.rel (%p138) target = $region32
    $region31: #{backbone_as_unet_forward.17} parent=5 // pred_region
      %s142 = ssub.s32 %s9, 1
      %p143 = scmp.lt.s32.totalorder %s14, 1
      %s144 = scalar_select %p143, %s14, 1
      %s145 = smul.addr %s144, 13
      %s146 = smul.addr %s145, 8
      %s147 = scalar_lea.vmem %s0, %s146
      %p148 = pneg %p35
      %p149 = pneg %p32
      %p150 = pneg %p56
      %p151 = pneg %p53
      %p152 = pneg %p77
      %p153 = pneg %p74
      %p154 = pneg %p103
      %p155 = pneg %p100
      %p156 = scmp.lt.s32.totalorder %s14, 1
      %s157 = scalar_select %p156, %s14, 1
      %s158 = smul.addr %s157, 10
      %s159 = smul.addr %s158, 8
      %s160 = scalar_lea.vmem %s3, %s159
      %p161 = scmp.lt.s32.totalorder %s14, 1
      %s162 = scalar_select %p161, %s14, 1
      %s163 = smul.addr %s162, 13
      %s164 = smul.addr %s163, 8
      %s165 = scalar_lea.vmem %s0, %s164
      %p166 = scmp.lt.s32.totalorder %s14, 1
      %s167 = scalar_select %p166, %s14, 1
      %s168 = smul.addr %s167, 10
      %s169 = smul.addr %s168, 8
      %s170 = scalar_lea.vmem %s3, %s169
      %v172 = vld [vmem:[%s165] sm:$0xff]
      %v173 = vld [vmem:[%s165 + $0x8] sm:$0xff]
      %v174 = vld [vmem:[%s165 + $0x10] sm:$0xff]
      %v175 = vld [vmem:[%s165 + $0x18] sm:$0xff]
      %v176 = vld [vmem:[%s165 + $0x20] sm:$0xff]
      %v177 = vld [vmem:[%s165 + $0x28] sm:$0xff]
      %v178 = vld [vmem:[%s165 + $0x30] sm:$0xff]
      %v179 = vld [vmem:[%s165 + $0x38] sm:$0xff]
      %v180 = vld [vmem:[%s165 + $0x40] sm:$0xff]
      %v181 = vld [vmem:[%s165 + $0x48] sm:$0xff]
      %v182 = vpack.c.bf16 %v173, %v172
      %v183 = vpack.c.bf16 %v175, %v174
      %v184 = vpack.c.bf16 %v177, %v176
      %v185 = vpack.c.bf16 %v179, %v178
      %v186 = vpack.c.bf16 %v181, %v180
      %v187 = vld [vmem:[%s1] sm:$0xf]
      %v188 = vld [vmem:[%s1 + $0x4] sm:$0xf]
      %v189 = vld [vmem:[%s165 + $0x1] sm:$0xff]
      %v190 = vld [vmem:[%s165 + $0x9] sm:$0xff]
      %v191 = vld [vmem:[%s165 + $0x11] sm:$0xff]
      %v192 = vld [vmem:[%s165 + $0x19] sm:$0xff]
      %v193 = vld [vmem:[%s165 + $0x21] sm:$0xff]
      %v194 = vld [vmem:[%s165 + $0x29] sm:$0xff]
      %v195 = vld [vmem:[%s165 + $0x31] sm:$0xff]
      %v196 = vld [vmem:[%s165 + $0x39] sm:$0xff]
      %v197 = vld [vmem:[%s165 + $0x41] sm:$0xff]
      %v198 = vld [vmem:[%s165 + $0x49] sm:$0xff]
      %v199 = vpack.c.bf16 %v190, %v189
      %v200 = vpack.c.bf16 %v192, %v191
      %v201 = vpack.c.bf16 %v194, %v193
      %v202 = vpack.c.bf16 %v196, %v195
      %v203 = vpack.c.bf16 %v198, %v197
      %s204 = scalar_lea.vmem %s1, 8
      %v205 = vld [vmem:[%s204] sm:$0xf]
      %v206 = vld [vmem:[%s204 + $0x4] sm:$0xf]
      %v209 = vunpack.c.l.b16 %v205
      %v210 = vunpack.c.l.b16 %v206
      %v211 = vpack.c.b16 %v210, %v209
      %vm213 = vcmask 130048
      %v215 = vsel %vm213, %v199, 0
      %v218 = vsel %vm213, %v200, 0
      %v221 = vsel %vm213, %v201, 0
      %v224 = vsel %vm213, %v202, 0
      %v227 = vsel %vm213, %v203, 0
      %229 = vmatprep.subr.bf16.mxu0 0
      %230 = vmatpush1.bf16.msra.mxu0 0
      %231 = vmatprep.subr.bf16.mxu0 0
      %232 = vmatpush1.bf16.msra.mxu0 0
      %233 = vmatprep.subr.bf16.mxu0 0
      %234 = vmatpush1.bf16.msra.mxu0 0
      %235 = vmatprep.subr.bf16.mxu0 0
      %236 = vmatpush1.bf16.msra.mxu0 0
      %237 = vmatprep.subr.bf16.mxu0 0
      %238 = vmatpush1.bf16.msra.mxu0 0
      %239 = vmatprep.subr.bf16.mxu0 0
      %240 = vmatpush1.bf16.msra.mxu0 0
      %241 = vmatprep.subr.bf16.mxu0 0
      %242 = vmatpush1.bf16.msra.mxu0 0
      %243 = vmatprep.subr.bf16.mxu0 0
      %244 = vmatpush1.bf16.msra.mxu0 %v211
      %245 = vmatprep.subr.bf16.mxu0 0
      %246 = vmatpush2.bf16.msra.mxu0 0
      %247 = vmatprep.subr.bf16.mxu0 0
      %248 = vmatpush2.bf16.msra.mxu0 0
      %249 = vmatprep.subr.bf16.mxu0 0
      %250 = vmatpush2.bf16.msra.mxu0 0
      %251 = vmatprep.subr.bf16.mxu0 0
      %252 = vmatpush2.bf16.msra.mxu0 0
      %253 = vmatprep.subr.bf16.mxu0 0
      %254 = vmatpush2.bf16.msra.mxu0 0
      %255 = vmatprep.subr.bf16.mxu0 0
      %256 = vmatpush2.bf16.msra.mxu0 0
      %257 = vmatprep.subr.bf16.mxu0 0
      %258 = vmatpush2.bf16.msra.mxu0 0
      %259 = vmatprep.subr.bf16.mxu0 0
      %260 = vmatpush2.bf16.msra.mxu0 0
      %261 = vmatprep.mubr.bf16.mxu0 0
      %262 = vmatmul.mubr.bf16.gmra.mxu0 %v215
      %v263 = vpop.f32.mrf.mxu0
      %v264 = vadd.f32 0.0, %v263
      %v265 = vpop.f32.mrf.mxu0
      %v266 = vpop.f32.mrf.mxu0
      %v267 = vadd.f32 0.0, %v266
      %v268 = vpop.f32.mrf.mxu0
      %269 = vmatprep.mubr.bf16.mxu0 0
      %270 = vmatmul.mubr.bf16.gmra.mxu0 %v218
      %v271 = vpop.f32.mrf.mxu0
      %v272 = vadd.f32 0.0, %v271
      %v273 = vpop.f32.mrf.mxu0
      %v274 = vpop.f32.mrf.mxu0
      %v275 = vadd.f32 0.0, %v274
      %v276 = vpop.f32.mrf.mxu0
      %277 = vmatprep.mubr.bf16.mxu0 0
      %278 = vmatmul.mubr.bf16.gmra.mxu0 %v221
      %v279 = vpop.f32.mrf.mxu0
      %v280 = vadd.f32 0.0, %v279
      %v281 = vpop.f32.mrf.mxu0
      %v282 = vpop.f32.mrf.mxu0
      %v283 = vadd.f32 0.0, %v282
      %v284 = vpop.f32.mrf.mxu0
      %285 = vmatprep.mubr.bf16.mxu0 0
      %286 = vmatmul.mubr.bf16.gmra.mxu0 %v224
      %v287 = vpop.f32.mrf.mxu0
      %v288 = vadd.f32 0.0, %v287
      %v289 = vpop.f32.mrf.mxu0
      %v290 = vpop.f32.mrf.mxu0
      %v291 = vadd.f32 0.0, %v290
      %v292 = vpop.f32.mrf.mxu0
      %293 = vmatprep.mubr.bf16.mxu0 0
      %294 = vmatmul.mubr.bf16.gmra.mxu0 %v227
      %v295 = vpop.f32.mrf.mxu0
      %v296 = vadd.f32 0.0, %v295
      %v297 = vpop.f32.mrf.mxu0
      %v298 = vpop.f32.mrf.mxu0
      %v299 = vadd.f32 0.0, %v298
      %v300 = vpop.f32.mrf.mxu0
      %301 = vdwg.mxu0
      %v304 = vunpack.c.l.b16 %v187
      %v305 = vunpack.c.l.b16 %v188
      %v306 = vpack.c.b16 %v305, %v304
      %v309 = vsel %vm213, %v182, 0
      %v312 = vsel %vm213, %v183, 0
      %v315 = vsel %vm213, %v184, 0
      %v318 = vsel %vm213, %v185, 0
      %v321 = vsel %vm213, %v186, 0
      %323 = vmatprep.subr.bf16.mxu0 0
      %324 = vmatpush1.bf16.msra.mxu0 0
      %325 = vmatprep.subr.bf16.mxu0 0
      %326 = vmatpush1.bf16.msra.mxu0 0
      %327 = vmatprep.subr.bf16.mxu0 0
      %328 = vmatpush1.bf16.msra.mxu0 0
      %329 = vmatprep.subr.bf16.mxu0 0
      %330 = vmatpush1.bf16.msra.mxu0 0
      %331 = vmatprep.subr.bf16.mxu0 0
      %332 = vmatpush1.bf16.msra.mxu0 0
      %333 = vmatprep.subr.bf16.mxu0 0
      %334 = vmatpush1.bf16.msra.mxu0 0
      %335 = vmatprep.subr.bf16.mxu0 0
      %336 = vmatpush1.bf16.msra.mxu0 0
      %337 = vmatprep.subr.bf16.mxu0 0
      %338 = vmatpush1.bf16.msra.mxu0 %v306
      %339 = vmatprep.subr.bf16.mxu0 0
      %340 = vmatpush2.bf16.msra.mxu0 0
      %341 = vmatprep.subr.bf16.mxu0 0
      %342 = vmatpush2.bf16.msra.mxu0 0
      %343 = vmatprep.subr.bf16.mxu0 0
      %344 = vmatpush2.bf16.msra.mxu0 0
      %345 = vmatprep.subr.bf16.mxu0 0
      %346 = vmatpush2.bf16.msra.mxu0 0
      %347 = vmatprep.subr.bf16.mxu0 0
      %348 = vmatpush2.bf16.msra.mxu0 0
      %349 = vmatprep.subr.bf16.mxu0 0
      %350 = vmatpush2.bf16.msra.mxu0 0
      %351 = vmatprep.subr.bf16.mxu0 0
      %352 = vmatpush2.bf16.msra.mxu0 0
      %353 = vmatprep.subr.bf16.mxu0 0
      %354 = vmatpush2.bf16.msra.mxu0 0
      %355 = vmatprep.mubr.bf16.mxu0 0
      %356 = vmatmul.mubr.bf16.gmra.mxu0 %v309
      %v357 = vpop.f32.mrf.mxu0
      %v358 = vadd.f32 %v264, %v357
      %v359 = vpop.f32.mrf.mxu0
      %v360 = vpop.f32.mrf.mxu0
      %v361 = vadd.f32 %v267, %v360
      %v362 = vpop.f32.mrf.mxu0
      %363 = vmatprep.mubr.bf16.mxu0 0
      %364 = vmatmul.mubr.bf16.gmra.mxu0 %v312
      %v365 = vpop.f32.mrf.mxu0
      %v366 = vadd.f32 %v272, %v365
      %v367 = vpop.f32.mrf.mxu0
      %v368 = vpop.f32.mrf.mxu0
      %v369 = vadd.f32 %v275, %v368
      %v370 = vpop.f32.mrf.mxu0
      %371 = vmatprep.mubr.bf16.mxu0 0
      %372 = vmatmul.mubr.bf16.gmra.mxu0 %v315
      %v373 = vpop.f32.mrf.mxu0
      %v374 = vadd.f32 %v280, %v373
      %v375 = vpop.f32.mrf.mxu0
      %v376 = vpop.f32.mrf.mxu0
      %v377 = vadd.f32 %v283, %v376
      %v378 = vpop.f32.mrf.mxu0
      %379 = vmatprep.mubr.bf16.mxu0 0
      %380 = vmatmul.mubr.bf16.gmra.mxu0 %v318
      %v381 = vpop.f32.mrf.mxu0
      %v382 = vadd.f32 %v288, %v381
      %v383 = vpop.f32.mrf.mxu0
      %v384 = vpop.f32.mrf.mxu0
      %v385 = vadd.f32 %v291, %v384
      %v386 = vpop.f32.mrf.mxu0
      %387 = vmatprep.mubr.bf16.mxu0 0
      %388 = vmatmul.mubr.bf16.gmra.mxu0 %v321
      %v389 = vpop.f32.mrf.mxu0
      %v390 = vadd.f32 %v296, %v389
      %v391 = vpop.f32.mrf.mxu0
      %v392 = vpop.f32.mrf.mxu0
      %v393 = vadd.f32 %v299, %v392
      %v394 = vpop.f32.mrf.mxu0
      %395 = vdwg.mxu0
      %v396 = vld [vmem:[%s165 + $0x2] sm:$0xff]
      %v397 = vld [vmem:[%s165 + $0xa] sm:$0xff]
      %v398 = vld [vmem:[%s165 + $0x12] sm:$0xff]
      %v399 = vld [vmem:[%s165 + $0x1a] sm:$0xff]
      %v400 = vld [vmem:[%s165 + $0x22] sm:$0xff]
      %v401 = vld [vmem:[%s165 + $0x2a] sm:$0xff]
      %v402 = vld [vmem:[%s165 + $0x32] sm:$0xff]
      %v403 = vld [vmem:[%s165 + $0x3a] sm:$0xff]
      %v404 = vld [vmem:[%s165 + $0x42] sm:$0xff]
      %v405 = vld [vmem:[%s165 + $0x4a] sm:$0xff]
      %v406 = vpack.c.bf16 %v397, %v396
      %v407 = vpack.c.bf16 %v399, %v398
      %v408 = vpack.c.bf16 %v401, %v400
      %v409 = vpack.c.bf16 %v403, %v402
      %v410 = vpack.c.bf16 %v405, %v404
      %s411 = scalar_lea.vmem %s1, 16
      %v412 = vld [vmem:[%s411] sm:$0xf]
      %v413 = vld [vmem:[%s411 + $0x4] sm:$0xf]
      %v416 = vunpack.c.l.b16 %v412
      %v417 = vunpack.c.l.b16 %v413
      %v418 = vpack.c.b16 %v417, %v416
      %v421 = vsel %vm213, %v406, 0
      %v424 = vsel %vm213, %v407, 0
      %v427 = vsel %vm213, %v408, 0
      %v430 = vsel %vm213, %v409, 0
      %v433 = vsel %vm213, %v410, 0
      %435 = vmatprep.subr.bf16.mxu0 0
      %436 = vmatpush1.bf16.msra.mxu0 0
      %437 = vmatprep.subr.bf16.mxu0 0
      %438 = vmatpush1.bf16.msra.mxu0 0
      %439 = vmatprep.subr.bf16.mxu0 0
      %440 = vmatpush1.bf16.msra.mxu0 0
      %441 = vmatprep.subr.bf16.mxu0 0
      %442 = vmatpush1.bf16.msra.mxu0 0
      %443 = vmatprep.subr.bf16.mxu0 0
      %444 = vmatpush1.bf16.msra.mxu0 0
      %445 = vmatprep.subr.bf16.mxu0 0
      %446 = vmatpush1.bf16.msra.mxu0 0
      %447 = vmatprep.subr.bf16.mxu0 0
      %448 = vmatpush1.bf16.msra.mxu0 0
      %449 = vmatprep.subr.bf16.mxu0 0
      %450 = vmatpush1.bf16.msra.mxu0 %v418
      %451 = vmatprep.subr.bf16.mxu0 0
      %452 = vmatpush2.bf16.msra.mxu0 0
      %453 = vmatprep.subr.bf16.mxu0 0
      %454 = vmatpush2.bf16.msra.mxu0 0
      %455 = vmatprep.subr.bf16.mxu0 0
      %456 = vmatpush2.bf16.msra.mxu0 0
      %457 = vmatprep.subr.bf16.mxu0 0
      %458 = vmatpush2.bf16.msra.mxu0 0
      %459 = vmatprep.subr.bf16.mxu0 0
      %460 = vmatpush2.bf16.msra.mxu0 0
      %461 = vmatprep.subr.bf16.mxu0 0
      %462 = vmatpush2.bf16.msra.mxu0 0
      %463 = vmatprep.subr.bf16.mxu0 0
      %464 = vmatpush2.bf16.msra.mxu0 0
      %465 = vmatprep.subr.bf16.mxu0 0
      %466 = vmatpush2.bf16.msra.mxu0 0
      %467 = vmatprep.mubr.bf16.mxu0 0
      %468 = vmatmul.mubr.bf16.gmra.mxu0 %v421
      %v469 = vpop.f32.mrf.mxu0
      %v470 = vadd.f32 0.0, %v469
      %v471 = vpop.f32.mrf.mxu0
      %v472 = vpop.f32.mrf.mxu0
      %v473 = vadd.f32 0.0, %v472
      %v474 = vpop.f32.mrf.mxu0
      %475 = vmatprep.mubr.bf16.mxu0 0
      %476 = vmatmul.mubr.bf16.gmra.mxu0 %v424
      %v477 = vpop.f32.mrf.mxu0
      %v478 = vadd.f32 0.0, %v477
      %v479 = vpop.f32.mrf.mxu0
      %v480 = vpop.f32.mrf.mxu0
      %v481 = vadd.f32 0.0, %v480
      %v482 = vpop.f32.mrf.mxu0
      %483 = vmatprep.mubr.bf16.mxu0 0
      %484 = vmatmul.mubr.bf16.gmra.mxu0 %v427
      %v485 = vpop.f32.mrf.mxu0
      %v486 = vadd.f32 0.0, %v485
      %v487 = vpop.f32.mrf.mxu0
      %v488 = vpop.f32.mrf.mxu0
      %v489 = vadd.f32 0.0, %v488
      %v490 = vpop.f32.mrf.mxu0
      %491 = vmatprep.mubr.bf16.mxu0 0
      %492 = vmatmul.mubr.bf16.gmra.mxu0 %v430
      %v493 = vpop.f32.mrf.mxu0
      %v494 = vadd.f32 0.0, %v493
      %v495 = vpop.f32.mrf.mxu0
      %v496 = vpop.f32.mrf.mxu0
      %v497 = vadd.f32 0.0, %v496
      %v498 = vpop.f32.mrf.mxu0
      %499 = vmatprep.mubr.bf16.mxu0 0
      %500 = vmatmul.mubr.bf16.gmra.mxu0 %v433
      %v501 = vpop.f32.mrf.mxu0
      %v502 = vadd.f32 0.0, %v501
      %v503 = vpop.f32.mrf.mxu0
      %v504 = vpop.f32.mrf.mxu0
      %v505 = vadd.f32 0.0, %v504
      %v506 = vpop.f32.mrf.mxu0
      %507 = vdwg.mxu0
      %v508 = vadd.f32 %v358, %v470
      %v509 = vadd.f32 %v361, %v473
      %v510 = vadd.f32 %v366, %v478
      %v511 = vadd.f32 %v369, %v481
      %v512 = vadd.f32 %v374, %v486
      %v513 = vadd.f32 %v377, %v489
      %v514 = vadd.f32 %v382, %v494
      %v515 = vadd.f32 %v385, %v497
      %v516 = vadd.f32 %v390, %v502
      %v517 = vadd.f32 %v393, %v505
      %v518 = vld [vmem:[%s165 + $0xa] sm:$0xff]
      %v519 = vld [vmem:[%s165 + $0x12] sm:$0xff]
      %v520 = vld [vmem:[%s165 + $0x1a] sm:$0xff]
      %v521 = vld [vmem:[%s165 + $0x22] sm:$0xff]
      %v522 = vld [vmem:[%s165 + $0x2a] sm:$0xff]
      %v523 = vld [vmem:[%s165 + $0x32] sm:$0xff]
      %v524 = vld [vmem:[%s165 + $0x3a] sm:$0xff]
      %v525 = vld [vmem:[%s165 + $0x42] sm:$0xff]
      %v526 = vld [vmem:[%s165 + $0x4a] sm:$0xff]
      %v527 = vld [vmem:[%s165 + $0x52] sm:$0xff]
      %v528 = vpack.c.bf16 %v519, %v518
      %v529 = vpack.c.bf16 %v521, %v520
      %v530 = vpack.c.bf16 %v523, %v522
      %v531 = vpack.c.bf16 %v525, %v524
      %v532 = vpack.c.bf16 %v527, %v526
      %s533 = scalar_lea.vmem %s1, 24
      %v534 = vld [vmem:[%s533] sm:$0xf]
      %v535 = vld [vmem:[%s533 + $0x4] sm:$0xf]
      %v538 = vunpack.c.l.b16 %v534
      %v539 = vunpack.c.l.b16 %v535
      %v540 = vpack.c.b16 %v539, %v538
      %v543 = vsel %vm213, %v528, 0
      %v546 = vsel %vm213, %v529, 0
      %v549 = vsel %vm213, %v530, 0
      %v552 = vsel %vm213, %v531, 0
      %v555 = vsel %vm213, %v532, 0
      %557 = vmatprep.subr.bf16.mxu0 0
      %558 = vmatpush1.bf16.msra.mxu0 0
      %559 = vmatprep.subr.bf16.mxu0 0
      %560 = vmatpush1.bf16.msra.mxu0 0
      %561 = vmatprep.subr.bf16.mxu0 0
      %562 = vmatpush1.bf16.msra.mxu0 0
      %563 = vmatprep.subr.bf16.mxu0 0
      %564 = vmatpush1.bf16.msra.mxu0 0
      %565 = vmatprep.subr.bf16.mxu0 0
      %566 = vmatpush1.bf16.msra.mxu0 0
      %567 = vmatprep.subr.bf16.mxu0 0
      %568 = vmatpush1.bf16.msra.mxu0 0
      %569 = vmatprep.subr.bf16.mxu0 0
      %570 = vmatpush1.bf16.msra.mxu0 0
      %571 = vmatprep.subr.bf16.mxu0 0
      %572 = vmatpush1.bf16.msra.mxu0 %v540
      %573 = vmatprep.subr.bf16.mxu0 0
      %574 = vmatpush2.bf16.msra.mxu0 0
      %575 = vmatprep.subr.bf16.mxu0 0
      %576 = vmatpush2.bf16.msra.mxu0 0
      %577 = vmatprep.subr.bf16.mxu0 0
      %578 = vmatpush2.bf16.msra.mxu0 0
      %579 = vmatprep.subr.bf16.mxu0 0
      %580 = vmatpush2.bf16.msra.mxu0 0
      %581 = vmatprep.subr.bf16.mxu0 0
      %582 = vmatpush2.bf16.msra.mxu0 0
      %583 = vmatprep.subr.bf16.mxu0 0
      %584 = vmatpush2.bf16.msra.mxu0 0
      %585 = vmatprep.subr.bf16.mxu0 0
      %586 = vmatpush2.bf16.msra.mxu0 0
      %587 = vmatprep.subr.bf16.mxu0 0
      %588 = vmatpush2.bf16.msra.mxu0 0
      %589 = vmatprep.mubr.bf16.mxu0 0
      %590 = vmatmul.mubr.bf16.gmra.mxu0 %v543
      %v591 = vpop.f32.mrf.mxu0
      %v592 = vadd.f32 0.0, %v591
      %v593 = vpop.f32.mrf.mxu0
      %v594 = vpop.f32.mrf.mxu0
      %v595 = vadd.f32 0.0, %v594
      %v596 = vpop.f32.mrf.mxu0
      %597 = vmatprep.mubr.bf16.mxu0 0
      %598 = vmatmul.mubr.bf16.gmra.mxu0 %v546
      %v599 = vpop.f32.mrf.mxu0
      %v600 = vadd.f32 0.0, %v599
      %v601 = vpop.f32.mrf.mxu0
      %v602 = vpop.f32.mrf.mxu0
      %v603 = vadd.f32 0.0, %v602
      %v604 = vpop.f32.mrf.mxu0
      %605 = vmatprep.mubr.bf16.mxu0 0
      %606 = vmatmul.mubr.bf16.gmra.mxu0 %v549
      %v607 = vpop.f32.mrf.mxu0
      %v608 = vadd.f32 0.0, %v607
      %v609 = vpop.f32.mrf.mxu0
      %v610 = vpop.f32.mrf.mxu0
      %v611 = vadd.f32 0.0, %v610
      %v612 = vpop.f32.mrf.mxu0
      %613 = vmatprep.mubr.bf16.mxu0 0
      %614 = vmatmul.mubr.bf16.gmra.mxu0 %v552
      %v615 = vpop.f32.mrf.mxu0
      %v616 = vadd.f32 0.0, %v615
      %v617 = vpop.f32.mrf.mxu0
      %v618 = vpop.f32.mrf.mxu0
      %v619 = vadd.f32 0.0, %v618
      %v620 = vpop.f32.mrf.mxu0
      %621 = vmatprep.mubr.bf16.mxu0 0
      %622 = vmatmul.mubr.bf16.gmra.mxu0 %v555
      %v623 = vpop.f32.mrf.mxu0
      %v624 = vadd.f32 0.0, %v623
      %v625 = vpop.f32.mrf.mxu0
      %v626 = vpop.f32.mrf.mxu0
      %v627 = vadd.f32 0.0, %v626
      %v628 = vpop.f32.mrf.mxu0
      %629 = vdwg.mxu0
      %v630 = vadd.f32 %v508, %v592
      %v631 = vadd.f32 %v509, %v595
      %v632 = vadd.f32 %v510, %v600
      %v633 = vadd.f32 %v511, %v603
      %v634 = vadd.f32 %v512, %v608
      %v635 = vadd.f32 %v513, %v611
      %v636 = vadd.f32 %v514, %v616
      %v637 = vadd.f32 %v515, %v619
      %v638 = vadd.f32 %v516, %v624
      %v639 = vadd.f32 %v517, %v627
      %v640 = vld [vmem:[%s165 + $0xb] sm:$0xff]
      %v641 = vld [vmem:[%s165 + $0x13] sm:$0xff]
      %v642 = vld [vmem:[%s165 + $0x1b] sm:$0xff]
      %v643 = vld [vmem:[%s165 + $0x23] sm:$0xff]
      %v644 = vld [vmem:[%s165 + $0x2b] sm:$0xff]
      %v645 = vld [vmem:[%s165 + $0x33] sm:$0xff]
      %v646 = vld [vmem:[%s165 + $0x3b] sm:$0xff]
      %v647 = vld [vmem:[%s165 + $0x43] sm:$0xff]
      %v648 = vld [vmem:[%s165 + $0x4b] sm:$0xff]
      %v649 = vld [vmem:[%s165 + $0x53] sm:$0xff]
      %v650 = vpack.c.bf16 %v641, %v640
      %v651 = vpack.c.bf16 %v643, %v642
      %v652 = vpack.c.bf16 %v645, %v644
      %v653 = vpack.c.bf16 %v647, %v646
      %v654 = vpack.c.bf16 %v649, %v648
      %s655 = scalar_lea.vmem %s1, 32
      %v656 = vld [vmem:[%s655] sm:$0xf]
      %v657 = vld [vmem:[%s655 + $0x4] sm:$0xf]
      %v660 = vunpack.c.l.b16 %v656
      %v661 = vunpack.c.l.b16 %v657
      %v662 = vpack.c.b16 %v661, %v660
      %v665 = vsel %vm213, %v650, 0
      %v668 = vsel %vm213, %v651, 0
      %v671 = vsel %vm213, %v652, 0
      %v674 = vsel %vm213, %v653, 0
      %v677 = vsel %vm213, %v654, 0
      %679 = vmatprep.subr.bf16.mxu0 0
      %680 = vmatpush1.bf16.msra.mxu0 0
      %681 = vmatprep.subr.bf16.mxu0 0
      %682 = vmatpush1.bf16.msra.mxu0 0
      %683 = vmatprep.subr.bf16.mxu0 0
      %684 = vmatpush1.bf16.msra.mxu0 0
      %685 = vmatprep.subr.bf16.mxu0 0
      %686 = vmatpush1.bf16.msra.mxu0 0
      %687 = vmatprep.subr.bf16.mxu0 0
      %688 = vmatpush1.bf16.msra.mxu0 0
      %689 = vmatprep.subr.bf16.mxu0 0
      %690 = vmatpush1.bf16.msra.mxu0 0
      %691 = vmatprep.subr.bf16.mxu0 0
      %692 = vmatpush1.bf16.msra.mxu0 0
      %693 = vmatprep.subr.bf16.mxu0 0
      %694 = vmatpush1.bf16.msra.mxu0 %v662
      %695 = vmatprep.subr.bf16.mxu0 0
      %696 = vmatpush2.bf16.msra.mxu0 0
      %697 = vmatprep.subr.bf16.mxu0 0
      %698 = vmatpush2.bf16.msra.mxu0 0
      %699 = vmatprep.subr.bf16.mxu0 0
      %700 = vmatpush2.bf16.msra.mxu0 0
      %701 = vmatprep.subr.bf16.mxu0 0
      %702 = vmatpush2.bf16.msra.mxu0 0
      %703 = vmatprep.subr.bf16.mxu0 0
      %704 = vmatpush2.bf16.msra.mxu0 0
      %705 = vmatprep.subr.bf16.mxu0 0
      %706 = vmatpush2.bf16.msra.mxu0 0
      %707 = vmatprep.subr.bf16.mxu0 0
      %708 = vmatpush2.bf16.msra.mxu0 0
      %709 = vmatprep.subr.bf16.mxu0 0
      %710 = vmatpush2.bf16.msra.mxu0 0
      %711 = vmatprep.mubr.bf16.mxu0 0
      %712 = vmatmul.mubr.bf16.gmra.mxu0 %v665
      %v713 = vpop.f32.mrf.mxu0
      %v714 = vadd.f32 0.0, %v713
      %v715 = vpop.f32.mrf.mxu0
      %v716 = vpop.f32.mrf.mxu0
      %v717 = vadd.f32 0.0, %v716
      %v718 = vpop.f32.mrf.mxu0
      %719 = vmatprep.mubr.bf16.mxu0 0
      %720 = vmatmul.mubr.bf16.gmra.mxu0 %v668
      %v721 = vpop.f32.mrf.mxu0
      %v722 = vadd.f32 0.0, %v721
      %v723 = vpop.f32.mrf.mxu0
      %v724 = vpop.f32.mrf.mxu0
      %v725 = vadd.f32 0.0, %v724
      %v726 = vpop.f32.mrf.mxu0
      %727 = vmatprep.mubr.bf16.mxu0 0
      %728 = vmatmul.mubr.bf16.gmra.mxu0 %v671
      %v729 = vpop.f32.mrf.mxu0
      %v730 = vadd.f32 0.0, %v729
      %v731 = vpop.f32.mrf.mxu0
      %v732 = vpop.f32.mrf.mxu0
      %v733 = vadd.f32 0.0, %v732
      %v734 = vpop.f32.mrf.mxu0
      %735 = vmatprep.mubr.bf16.mxu0 0
      %736 = vmatmul.mubr.bf16.gmra.mxu0 %v674
      %v737 = vpop.f32.mrf.mxu0
      %v738 = vadd.f32 0.0, %v737
      %v739 = vpop.f32.mrf.mxu0
      %v740 = vpop.f32.mrf.mxu0
      %v741 = vadd.f32 0.0, %v740
      %v742 = vpop.f32.mrf.mxu0
      %743 = vmatprep.mubr.bf16.mxu0 0
      %744 = vmatmul.mubr.bf16.gmra.mxu0 %v677
      %v745 = vpop.f32.mrf.mxu0
      %v746 = vadd.f32 0.0, %v745
      %v747 = vpop.f32.mrf.mxu0
      %v748 = vpop.f32.mrf.mxu0
      %v749 = vadd.f32 0.0, %v748
      %v750 = vpop.f32.mrf.mxu0
      %751 = vdwg.mxu0
      %v752 = vadd.f32 %v630, %v714
      %v753 = vadd.f32 %v631, %v717
      %v754 = vadd.f32 %v632, %v722
      %v755 = vadd.f32 %v633, %v725
      %v756 = vadd.f32 %v634, %v730
      %v757 = vadd.f32 %v635, %v733
      %v758 = vadd.f32 %v636, %v738
      %v759 = vadd.f32 %v637, %v741
      %v760 = vadd.f32 %v638, %v746
      %v761 = vadd.f32 %v639, %v749
      %v762 = vld [vmem:[%s165 + $0xc] sm:$0xff]
      %v763 = vld [vmem:[%s165 + $0x14] sm:$0xff]
      %v764 = vld [vmem:[%s165 + $0x1c] sm:$0xff]
      %v765 = vld [vmem:[%s165 + $0x24] sm:$0xff]
      %v766 = vld [vmem:[%s165 + $0x2c] sm:$0xff]
      %v767 = vld [vmem:[%s165 + $0x34] sm:$0xff]
      %v768 = vld [vmem:[%s165 + $0x3c] sm:$0xff]
      %v769 = vld [vmem:[%s165 + $0x44] sm:$0xff]
      %v770 = vld [vmem:[%s165 + $0x4c] sm:$0xff]
      %v771 = vld [vmem:[%s165 + $0x54] sm:$0xff]
      %v772 = vpack.c.bf16 %v763, %v762
      %v773 = vpack.c.bf16 %v765, %v764
      %v774 = vpack.c.bf16 %v767, %v766
      %v775 = vpack.c.bf16 %v769, %v768
      %v776 = vpack.c.bf16 %v771, %v770
      %s777 = scalar_lea.vmem %s1, 40
      %v778 = vld [vmem:[%s777] sm:$0xf]
      %v779 = vld [vmem:[%s777 + $0x4] sm:$0xf]
      %v782 = vunpack.c.l.b16 %v778
      %v783 = vunpack.c.l.b16 %v779
      %v784 = vpack.c.b16 %v783, %v782
      %v787 = vsel %vm213, %v772, 0
      %v790 = vsel %vm213, %v773, 0
      %v793 = vsel %vm213, %v774, 0
      %v796 = vsel %vm213, %v775, 0
      %v799 = vsel %vm213, %v776, 0
      %801 = vmatprep.subr.bf16.mxu0 0
      %802 = vmatpush1.bf16.msra.mxu0 0
      %803 = vmatprep.subr.bf16.mxu0 0
      %804 = vmatpush1.bf16.msra.mxu0 0
      %805 = vmatprep.subr.bf16.mxu0 0
      %806 = vmatpush1.bf16.msra.mxu0 0
      %807 = vmatprep.subr.bf16.mxu0 0
      %808 = vmatpush1.bf16.msra.mxu0 0
      %809 = vmatprep.subr.bf16.mxu0 0
      %810 = vmatpush1.bf16.msra.mxu0 0
      %811 = vmatprep.subr.bf16.mxu0 0
      %812 = vmatpush1.bf16.msra.mxu0 0
      %813 = vmatprep.subr.bf16.mxu0 0
      %814 = vmatpush1.bf16.msra.mxu0 0
      %815 = vmatprep.subr.bf16.mxu0 0
      %816 = vmatpush1.bf16.msra.mxu0 %v784
      %817 = vmatprep.subr.bf16.mxu0 0
      %818 = vmatpush2.bf16.msra.mxu0 0
      %819 = vmatprep.subr.bf16.mxu0 0
      %820 = vmatpush2.bf16.msra.mxu0 0
      %821 = vmatprep.subr.bf16.mxu0 0
      %822 = vmatpush2.bf16.msra.mxu0 0
      %823 = vmatprep.subr.bf16.mxu0 0
      %824 = vmatpush2.bf16.msra.mxu0 0
      %825 = vmatprep.subr.bf16.mxu0 0
      %826 = vmatpush2.bf16.msra.mxu0 0
      %827 = vmatprep.subr.bf16.mxu0 0
      %828 = vmatpush2.bf16.msra.mxu0 0
      %829 = vmatprep.subr.bf16.mxu0 0
      %830 = vmatpush2.bf16.msra.mxu0 0
      %831 = vmatprep.subr.bf16.mxu0 0
      %832 = vmatpush2.bf16.msra.mxu0 0
      %833 = vmatprep.mubr.bf16.mxu0 0
      %834 = vmatmul.mubr.bf16.gmra.mxu0 %v787
      %v835 = vpop.f32.mrf.mxu0
      %v836 = vadd.f32 0.0, %v835
      %v837 = vpop.f32.mrf.mxu0
      %v838 = vpop.f32.mrf.mxu0
      %v839 = vadd.f32 0.0, %v838
      %v840 = vpop.f32.mrf.mxu0
      %841 = vmatprep.mubr.bf16.mxu0 0
      %842 = vmatmul.mubr.bf16.gmra.mxu0 %v790
      %v843 = vpop.f32.mrf.mxu0
      %v844 = vadd.f32 0.0, %v843
      %v845 = vpop.f32.mrf.mxu0
      %v846 = vpop.f32.mrf.mxu0
      %v847 = vadd.f32 0.0, %v846
      %v848 = vpop.f32.mrf.mxu0
      %849 = vmatprep.mubr.bf16.mxu0 0
      %850 = vmatmul.mubr.bf16.gmra.mxu0 %v793
      %v851 = vpop.f32.mrf.mxu0
      %v852 = vadd.f32 0.0, %v851
      %v853 = vpop.f32.mrf.mxu0
      %v854 = vpop.f32.mrf.mxu0
      %v855 = vadd.f32 0.0, %v854
      %v856 = vpop.f32.mrf.mxu0
      %857 = vmatprep.mubr.bf16.mxu0 0
      %858 = vmatmul.mubr.bf16.gmra.mxu0 %v796
      %v859 = vpop.f32.mrf.mxu0
      %v860 = vadd.f32 0.0, %v859
      %v861 = vpop.f32.mrf.mxu0
      %v862 = vpop.f32.mrf.mxu0
      %v863 = vadd.f32 0.0, %v862
      %v864 = vpop.f32.mrf.mxu0
      %865 = vmatprep.mubr.bf16.mxu0 0
      %866 = vmatmul.mubr.bf16.gmra.mxu0 %v799
      %v867 = vpop.f32.mrf.mxu0
      %v868 = vadd.f32 0.0, %v867
      %v869 = vpop.f32.mrf.mxu0
      %v870 = vpop.f32.mrf.mxu0
      %v871 = vadd.f32 0.0, %v870
      %v872 = vpop.f32.mrf.mxu0
      %873 = vdwg.mxu0
      %v874 = vadd.f32 %v752, %v836
      %v875 = vadd.f32 %v753, %v839
      %v876 = vadd.f32 %v754, %v844
      %v877 = vadd.f32 %v755, %v847
      %v878 = vadd.f32 %v756, %v852
      %v879 = vadd.f32 %v757, %v855
      %v880 = vadd.f32 %v758, %v860
      %v881 = vadd.f32 %v759, %v863
      %v882 = vadd.f32 %v760, %v868
      %v883 = vadd.f32 %v761, %v871
      %v884 = vld [vmem:[%s165 + $0x14] sm:$0xff]
      %v885 = vld [vmem:[%s165 + $0x1c] sm:$0xff]
      %v886 = vld [vmem:[%s165 + $0x24] sm:$0xff]
      %v887 = vld [vmem:[%s165 + $0x2c] sm:$0xff]
      %v888 = vld [vmem:[%s165 + $0x34] sm:$0xff]
      %v889 = vld [vmem:[%s165 + $0x3c] sm:$0xff]
      %v890 = vld [vmem:[%s165 + $0x44] sm:$0xff]
      %v891 = vld [vmem:[%s165 + $0x4c] sm:$0xff]
      %v892 = vld [vmem:[%s165 + $0x54] sm:$0xff]
      %v893 = vld [vmem:[%s165 + $0x5c] sm:$0xff]
      %v894 = vpack.c.bf16 %v885, %v884
      %v895 = vpack.c.bf16 %v887, %v886
      %v896 = vpack.c.bf16 %v889, %v888
      %v897 = vpack.c.bf16 %v891, %v890
      %v898 = vpack.c.bf16 %v893, %v892
      %s899 = scalar_lea.vmem %s1, 48
      %v900 = vld [vmem:[%s899] sm:$0xf]
      %v901 = vld [vmem:[%s899 + $0x4] sm:$0xf]
      %v904 = vunpack.c.l.b16 %v900
      %v905 = vunpack.c.l.b16 %v901
      %v906 = vpack.c.b16 %v905, %v904
      %v909 = vsel %vm213, %v894, 0
      %v912 = vsel %vm213, %v895, 0
      %v915 = vsel %vm213, %v896, 0
      %v918 = vsel %vm213, %v897, 0
      %v921 = vsel %vm213, %v898, 0
      %923 = vmatprep.subr.bf16.mxu0 0
      %924 = vmatpush1.bf16.msra.mxu0 0
      %925 = vmatprep.subr.bf16.mxu0 0
      %926 = vmatpush1.bf16.msra.mxu0 0
      %927 = vmatprep.subr.bf16.mxu0 0
      %928 = vmatpush1.bf16.msra.mxu0 0
      %929 = vmatprep.subr.bf16.mxu0 0
      %930 = vmatpush1.bf16.msra.mxu0 0
      %931 = vmatprep.subr.bf16.mxu0 0
      %932 = vmatpush1.bf16.msra.mxu0 0
      %933 = vmatprep.subr.bf16.mxu0 0
      %934 = vmatpush1.bf16.msra.mxu0 0
      %935 = vmatprep.subr.bf16.mxu0 0
      %936 = vmatpush1.bf16.msra.mxu0 0
      %937 = vmatprep.subr.bf16.mxu0 0
      %938 = vmatpush1.bf16.msra.mxu0 %v906
      %939 = vmatprep.subr.bf16.mxu0 0
      %940 = vmatpush2.bf16.msra.mxu0 0
      %941 = vmatprep.subr.bf16.mxu0 0
      %942 = vmatpush2.bf16.msra.mxu0 0
      %943 = vmatprep.subr.bf16.mxu0 0
      %944 = vmatpush2.bf16.msra.mxu0 0
      %945 = vmatprep.subr.bf16.mxu0 0
      %946 = vmatpush2.bf16.msra.mxu0 0
      %947 = vmatprep.subr.bf16.mxu0 0
      %948 = vmatpush2.bf16.msra.mxu0 0
      %949 = vmatprep.subr.bf16.mxu0 0
      %950 = vmatpush2.bf16.msra.mxu0 0
      %951 = vmatprep.subr.bf16.mxu0 0
      %952 = vmatpush2.bf16.msra.mxu0 0
      %953 = vmatprep.subr.bf16.mxu0 0
      %954 = vmatpush2.bf16.msra.mxu0 0
      %955 = vmatprep.mubr.bf16.mxu0 0
      %956 = vmatmul.mubr.bf16.gmra.mxu0 %v909
      %v957 = vpop.f32.mrf.mxu0
      %v958 = vadd.f32 0.0, %v957
      %v959 = vpop.f32.mrf.mxu0
      %v960 = vpop.f32.mrf.mxu0
      %v961 = vadd.f32 0.0, %v960
      %v962 = vpop.f32.mrf.mxu0
      %963 = vmatprep.mubr.bf16.mxu0 0
      %964 = vmatmul.mubr.bf16.gmra.mxu0 %v912
      %v965 = vpop.f32.mrf.mxu0
      %v966 = vadd.f32 0.0, %v965
      %v967 = vpop.f32.mrf.mxu0
      %v968 = vpop.f32.mrf.mxu0
      %v969 = vadd.f32 0.0, %v968
      %v970 = vpop.f32.mrf.mxu0
      %971 = vmatprep.mubr.bf16.mxu0 0
      %972 = vmatmul.mubr.bf16.gmra.mxu0 %v915
      %v973 = vpop.f32.mrf.mxu0
      %v974 = vadd.f32 0.0, %v973
      %v975 = vpop.f32.mrf.mxu0
      %v976 = vpop.f32.mrf.mxu0
      %v977 = vadd.f32 0.0, %v976
      %v978 = vpop.f32.mrf.mxu0
      %979 = vmatprep.mubr.bf16.mxu0 0
      %980 = vmatmul.mubr.bf16.gmra.mxu0 %v918
      %v981 = vpop.f32.mrf.mxu0
      %v982 = vadd.f32 0.0, %v981
      %v983 = vpop.f32.mrf.mxu0
      %v984 = vpop.f32.mrf.mxu0
      %v985 = vadd.f32 0.0, %v984
      %v986 = vpop.f32.mrf.mxu0
      %987 = vmatprep.mubr.bf16.mxu0 0
      %988 = vmatmul.mubr.bf16.gmra.mxu0 %v921
      %v989 = vpop.f32.mrf.mxu0
      %v990 = vadd.f32 0.0, %v989
      %v991 = vpop.f32.mrf.mxu0
      %v992 = vpop.f32.mrf.mxu0
      %v993 = vadd.f32 0.0, %v992
      %v994 = vpop.f32.mrf.mxu0
      %995 = vdwg.mxu0
      %v996 = vadd.f32 %v874, %v958
      %v997 = vadd.f32 %v875, %v961
      %v998 = vadd.f32 %v876, %v966
      %v999 = vadd.f32 %v877, %v969
      %v1000 = vadd.f32 %v878, %v974
      %v1001 = vadd.f32 %v879, %v977
      %v1002 = vadd.f32 %v880, %v982
      %v1003 = vadd.f32 %v881, %v985
      %v1004 = vadd.f32 %v882, %v990
      %v1005 = vadd.f32 %v883, %v993
      %v1006 = vld [vmem:[%s165 + $0x15] sm:$0xff]
      %v1007 = vld [vmem:[%s165 + $0x1d] sm:$0xff]
      %v1008 = vld [vmem:[%s165 + $0x25] sm:$0xff]
      %v1009 = vld [vmem:[%s165 + $0x2d] sm:$0xff]
      %v1010 = vld [vmem:[%s165 + $0x35] sm:$0xff]
      %v1011 = vld [vmem:[%s165 + $0x3d] sm:$0xff]
      %v1012 = vld [vmem:[%s165 + $0x45] sm:$0xff]
      %v1013 = vld [vmem:[%s165 + $0x4d] sm:$0xff]
      %v1014 = vld [vmem:[%s165 + $0x55] sm:$0xff]
      %v1015 = vld [vmem:[%s165 + $0x5d] sm:$0xff]
      %v1016 = vpack.c.bf16 %v1007, %v1006
      %v1017 = vpack.c.bf16 %v1009, %v1008
      %v1018 = vpack.c.bf16 %v1011, %v1010
      %v1019 = vpack.c.bf16 %v1013, %v1012
      %v1020 = vpack.c.bf16 %v1015, %v1014
      %s1021 = scalar_lea.vmem %s1, 56
      %v1022 = vld [vmem:[%s1021] sm:$0xf]
      %v1023 = vld [vmem:[%s1021 + $0x4] sm:$0xf]
      %v1026 = vunpack.c.l.b16 %v1022
      %v1027 = vunpack.c.l.b16 %v1023
      %v1028 = vpack.c.b16 %v1027, %v1026
      %v1031 = vsel %vm213, %v1016, 0
      %v1034 = vsel %vm213, %v1017, 0
      %v1037 = vsel %vm213, %v1018, 0
      %v1040 = vsel %vm213, %v1019, 0
      %v1043 = vsel %vm213, %v1020, 0
      %1045 = vmatprep.subr.bf16.mxu0 0
      %1046 = vmatpush1.bf16.msra.mxu0 0
      %1047 = vmatprep.subr.bf16.mxu0 0
      %1048 = vmatpush1.bf16.msra.mxu0 0
      %1049 = vmatprep.subr.bf16.mxu0 0
      %1050 = vmatpush1.bf16.msra.mxu0 0
      %1051 = vmatprep.subr.bf16.mxu0 0
      %1052 = vmatpush1.bf16.msra.mxu0 0
      %1053 = vmatprep.subr.bf16.mxu0 0
      %1054 = vmatpush1.bf16.msra.mxu0 0
      %1055 = vmatprep.subr.bf16.mxu0 0
      %1056 = vmatpush1.bf16.msra.mxu0 0
      %1057 = vmatprep.subr.bf16.mxu0 0
      %1058 = vmatpush1.bf16.msra.mxu0 0
      %1059 = vmatprep.subr.bf16.mxu0 0
      %1060 = vmatpush1.bf16.msra.mxu0 %v1028
      %1061 = vmatprep.subr.bf16.mxu0 0
      %1062 = vmatpush2.bf16.msra.mxu0 0
      %1063 = vmatprep.subr.bf16.mxu0 0
      %1064 = vmatpush2.bf16.msra.mxu0 0
      %1065 = vmatprep.subr.bf16.mxu0 0
      %1066 = vmatpush2.bf16.msra.mxu0 0
      %1067 = vmatprep.subr.bf16.mxu0 0
      %1068 = vmatpush2.bf16.msra.mxu0 0
      %1069 = vmatprep.subr.bf16.mxu0 0
      %1070 = vmatpush2.bf16.msra.mxu0 0
      %1071 = vmatprep.subr.bf16.mxu0 0
      %1072 = vmatpush2.bf16.msra.mxu0 0
      %1073 = vmatprep.subr.bf16.mxu0 0
      %1074 = vmatpush2.bf16.msra.mxu0 0
      %1075 = vmatprep.subr.bf16.mxu0 0
      %1076 = vmatpush2.bf16.msra.mxu0 0
      %1077 = vmatprep.mubr.bf16.mxu0 0
      %1078 = vmatmul.mubr.bf16.gmra.mxu0 %v1031
      %v1079 = vpop.f32.mrf.mxu0
      %v1080 = vadd.f32 0.0, %v1079
      %v1081 = vpop.f32.mrf.mxu0
      %v1082 = vpop.f32.mrf.mxu0
      %v1083 = vadd.f32 0.0, %v1082
      %v1084 = vpop.f32.mrf.mxu0
      %1085 = vmatprep.mubr.bf16.mxu0 0
      %1086 = vmatmul.mubr.bf16.gmra.mxu0 %v1034
      %v1087 = vpop.f32.mrf.mxu0
      %v1088 = vadd.f32 0.0, %v1087
      %v1089 = vpop.f32.mrf.mxu0
      %v1090 = vpop.f32.mrf.mxu0
      %v1091 = vadd.f32 0.0, %v1090
      %v1092 = vpop.f32.mrf.mxu0
      %1093 = vmatprep.mubr.bf16.mxu0 0
      %1094 = vmatmul.mubr.bf16.gmra.mxu0 %v1037
      %v1095 = vpop.f32.mrf.mxu0
      %v1096 = vadd.f32 0.0, %v1095
      %v1097 = vpop.f32.mrf.mxu0
      %v1098 = vpop.f32.mrf.mxu0
      %v1099 = vadd.f32 0.0, %v1098
      %v1100 = vpop.f32.mrf.mxu0
      %1101 = vmatprep.mubr.bf16.mxu0 0
      %1102 = vmatmul.mubr.bf16.gmra.mxu0 %v1040
      %v1103 = vpop.f32.mrf.mxu0
      %v1104 = vadd.f32 0.0, %v1103
      %v1105 = vpop.f32.mrf.mxu0
      %v1106 = vpop.f32.mrf.mxu0
      %v1107 = vadd.f32 0.0, %v1106
      %v1108 = vpop.f32.mrf.mxu0
      %1109 = vmatprep.mubr.bf16.mxu0 0
      %1110 = vmatmul.mubr.bf16.gmra.mxu0 %v1043
      %v1111 = vpop.f32.mrf.mxu0
      %v1112 = vadd.f32 0.0, %v1111
      %v1113 = vpop.f32.mrf.mxu0
      %v1114 = vpop.f32.mrf.mxu0
      %v1115 = vadd.f32 0.0, %v1114
      %v1116 = vpop.f32.mrf.mxu0
      %1117 = vdwg.mxu0
      %v1118 = vadd.f32 %v996, %v1080
      %v1119 = vadd.f32 %v997, %v1083
      %v1120 = vadd.f32 %v998, %v1088
      %v1121 = vadd.f32 %v999, %v1091
      %v1122 = vadd.f32 %v1000, %v1096
      %v1123 = vadd.f32 %v1001, %v1099
      %v1124 = vadd.f32 %v1002, %v1104
      %v1125 = vadd.f32 %v1003, %v1107
      %v1126 = vadd.f32 %v1004, %v1112
      %v1127 = vadd.f32 %v1005, %v1115
      %v1128 = vld [vmem:[%s165 + $0x16] sm:$0xff]
      %v1129 = vld [vmem:[%s165 + $0x1e] sm:$0xff]
      %v1130 = vld [vmem:[%s165 + $0x26] sm:$0xff]
      %v1131 = vld [vmem:[%s165 + $0x2e] sm:$0xff]
      %v1132 = vld [vmem:[%s165 + $0x36] sm:$0xff]
      %v1133 = vld [vmem:[%s165 + $0x3e] sm:$0xff]
      %v1134 = vld [vmem:[%s165 + $0x46] sm:$0xff]
      %v1135 = vld [vmem:[%s165 + $0x4e] sm:$0xff]
      %v1136 = vld [vmem:[%s165 + $0x56] sm:$0xff]
      %v1137 = vld [vmem:[%s165 + $0x5e] sm:$0xff]
      %v1138 = vpack.c.bf16 %v1129, %v1128
      %v1139 = vpack.c.bf16 %v1131, %v1130
      %v1140 = vpack.c.bf16 %v1133, %v1132
      %v1141 = vpack.c.bf16 %v1135, %v1134
      %v1142 = vpack.c.bf16 %v1137, %v1136
      %s1143 = scalar_lea.vmem %s1, 64
      %v1144 = vld [vmem:[%s1143] sm:$0xf]
      %v1145 = vld [vmem:[%s1143 + $0x4] sm:$0xf]
      %v1148 = vunpack.c.l.b16 %v1144
      %v1149 = vunpack.c.l.b16 %v1145
      %v1150 = vpack.c.b16 %v1149, %v1148
      %v1153 = vsel %vm213, %v1138, 0
      %v1156 = vsel %vm213, %v1139, 0
      %v1159 = vsel %vm213, %v1140, 0
      %v1162 = vsel %vm213, %v1141, 0
      %v1165 = vsel %vm213, %v1142, 0
      %1167 = vmatprep.subr.bf16.mxu0 0
      %1168 = vmatpush1.bf16.msra.mxu0 0
      %1169 = vmatprep.subr.bf16.mxu0 0
      %1170 = vmatpush1.bf16.msra.mxu0 0
      %1171 = vmatprep.subr.bf16.mxu0 0
      %1172 = vmatpush1.bf16.msra.mxu0 0
      %1173 = vmatprep.subr.bf16.mxu0 0
      %1174 = vmatpush1.bf16.msra.mxu0 0
      %1175 = vmatprep.subr.bf16.mxu0 0
      %1176 = vmatpush1.bf16.msra.mxu0 0
      %1177 = vmatprep.subr.bf16.mxu0 0
      %1178 = vmatpush1.bf16.msra.mxu0 0
      %1179 = vmatprep.subr.bf16.mxu0 0
      %1180 = vmatpush1.bf16.msra.mxu0 0
      %1181 = vmatprep.subr.bf16.mxu0 0
      %1182 = vmatpush1.bf16.msra.mxu0 %v1150
      %1183 = vmatprep.subr.bf16.mxu0 0
      %1184 = vmatpush2.bf16.msra.mxu0 0
      %1185 = vmatprep.subr.bf16.mxu0 0
      %1186 = vmatpush2.bf16.msra.mxu0 0
      %1187 = vmatprep.subr.bf16.mxu0 0
      %1188 = vmatpush2.bf16.msra.mxu0 0
      %1189 = vmatprep.subr.bf16.mxu0 0
      %1190 = vmatpush2.bf16.msra.mxu0 0
      %1191 = vmatprep.subr.bf16.mxu0 0
      %1192 = vmatpush2.bf16.msra.mxu0 0
      %1193 = vmatprep.subr.bf16.mxu0 0
      %1194 = vmatpush2.bf16.msra.mxu0 0
      %1195 = vmatprep.subr.bf16.mxu0 0
      %1196 = vmatpush2.bf16.msra.mxu0 0
      %1197 = vmatprep.subr.bf16.mxu0 0
      %1198 = vmatpush2.bf16.msra.mxu0 0
      %1199 = vmatprep.mubr.bf16.mxu0 0
      %1200 = vmatmul.mubr.bf16.gmra.mxu0 %v1153
      %v1201 = vpop.f32.mrf.mxu0
      %v1202 = vadd.f32 0.0, %v1201
      %v1203 = vpop.f32.mrf.mxu0
      %v1204 = vpop.f32.mrf.mxu0
      %v1205 = vadd.f32 0.0, %v1204
      %v1206 = vpop.f32.mrf.mxu0
      %1207 = vmatprep.mubr.bf16.mxu0 0
      %1208 = vmatmul.mubr.bf16.gmra.mxu0 %v1156
      %v1209 = vpop.f32.mrf.mxu0
      %v1210 = vadd.f32 0.0, %v1209
      %v1211 = vpop.f32.mrf.mxu0
      %v1212 = vpop.f32.mrf.mxu0
      %v1213 = vadd.f32 0.0, %v1212
      %v1214 = vpop.f32.mrf.mxu0
      %1215 = vmatprep.mubr.bf16.mxu0 0
      %1216 = vmatmul.mubr.bf16.gmra.mxu0 %v1159
      %v1217 = vpop.f32.mrf.mxu0
      %v1218 = vadd.f32 0.0, %v1217
      %v1219 = vpop.f32.mrf.mxu0
      %v1220 = vpop.f32.mrf.mxu0
      %v1221 = vadd.f32 0.0, %v1220
      %v1222 = vpop.f32.mrf.mxu0
      %1223 = vmatprep.mubr.bf16.mxu0 0
      %1224 = vmatmul.mubr.bf16.gmra.mxu0 %v1162
      %v1225 = vpop.f32.mrf.mxu0
      %v1226 = vadd.f32 0.0, %v1225
      %v1227 = vpop.f32.mrf.mxu0
      %v1228 = vpop.f32.mrf.mxu0
      %v1229 = vadd.f32 0.0, %v1228
      %v1230 = vpop.f32.mrf.mxu0
      %1231 = vmatprep.mubr.bf16.mxu0 0
      %1232 = vmatmul.mubr.bf16.gmra.mxu0 %v1165
      %v1233 = vpop.f32.mrf.mxu0
      %v1234 = vadd.f32 0.0, %v1233
      %v1235 = vpop.f32.mrf.mxu0
      %v1236 = vpop.f32.mrf.mxu0
      %v1237 = vadd.f32 0.0, %v1236
      %v1238 = vpop.f32.mrf.mxu0
      %1239 = vdwg.mxu0
      %v1240 = vadd.f32 %v1118, %v1202
      %v1241 = vadd.f32 %v1119, %v1205
      %v1242 = vadd.f32 %v1120, %v1210
      %v1243 = vadd.f32 %v1121, %v1213
      %v1244 = vadd.f32 %v1122, %v1218
      %v1245 = vadd.f32 %v1123, %v1221
      %v1246 = vadd.f32 %v1124, %v1226
      %v1247 = vadd.f32 %v1125, %v1229
      %v1248 = vadd.f32 %v1126, %v1234
      %v1249 = vadd.f32 %v1127, %v1237
      %v1250 = vld [vmem:[%s2] sm:$0x1]
      %v1252 = vlaneseq
      %v1253 = vshrl.u32 %v1252, 7
      %v1254 = vsub.s32 0, %v1253
      %v1255 = vrot.slane %v1250, %v1254
      %v1257 = vadd.f32 %v1240, %v1255
      %v1258 = vadd.f32 %v1241, %v1255
      %v1259 = vadd.f32 %v1242, %v1255
      %v1260 = vadd.f32 %v1243, %v1255
      %v1261 = vadd.f32 %v1244, %v1255
      %v1262 = vadd.f32 %v1245, %v1255
      %v1263 = vadd.f32 %v1246, %v1255
      %v1264 = vadd.f32 %v1247, %v1255
      %v1265 = vadd.f32 %v1248, %v1255
      %v1266 = vadd.f32 %v1249, %v1255
      %v1267 = vmax.f32 %v1257, 0.0
      %v1268 = vmax.f32 %v1258, 0.0
      %v1269 = vmax.f32 %v1259, 0.0
      %v1270 = vmax.f32 %v1260, 0.0
      %v1271 = vmax.f32 %v1261, 0.0
      %v1272 = vmax.f32 %v1262, 0.0
      %v1273 = vmax.f32 %v1263, 0.0
      %v1274 = vmax.f32 %v1264, 0.0
      %v1275 = vmax.f32 %v1265, 0.0
      %v1276 = vmax.f32 %v1266, 0.0
      %1277 = vst [vmem:[%s170] sm:$0xff] %v1267
      %1278 = vst [vmem:[%s170 + $0x8] sm:$0xff] %v1268
      %1279 = vst [vmem:[%s170 + $0x10] sm:$0xff] %v1269
      %1280 = vst [vmem:[%s170 + $0x18] sm:$0xff] %v1270
      %1281 = vst [vmem:[%s170 + $0x20] sm:$0xff] %v1271
      %1282 = vst [vmem:[%s170 + $0x28] sm:$0xff] %v1272
      %1283 = vst [vmem:[%s170 + $0x30] sm:$0xff] %v1273
      %1284 = vst [vmem:[%s170 + $0x38] sm:$0xff] %v1274
      %1285 = vst [vmem:[%s170 + $0x40] sm:$0xff] %v1275
      %1286 = vst [vmem:[%s170 + $0x48] sm:$0xff] %v1276
      %p1287 = scmp.lt.s32.totalorder %s14, 1
      %s1288 = scalar_select %p1287, %s14, 1
      %s1289 = smul.addr %s1288, 10
      %s1290 = smul.addr %s1289, 8
      %s1291 = scalar_lea.vmem %s3, %s1290
      // Predicated region
      $region33: #{backbone_as_unet_forward.17} parent=31 // pred_check
        %p1292 = pneg %p100
      $region34: #{backbone_as_unet_forward.17} parent=31 // pred_check_branch
        %1294 = sbr.rel (%p1292) target = $region36
      $region35: #{backbone_as_unet_forward.17} parent=31 // pred_region
        _
      $region36: #{backbone_as_unet_forward.17} parent=31 // pred_fallthru
        _
    $region32: #{backbone_as_unet_forward.17} parent=5 // pred_fallthru
      _
    %p1295 = scmp.le.s32.totalorder 2, %s9
    // Predicated region
    $region37: #{backbone_as_unet_forward.17} parent=5 // pred_check
      %p1296 = pneg %p1295
    $region38: #{backbone_as_unet_forward.17} parent=5 // pred_check_branch
      %1298 = sbr.rel (%p1296) target = $region40
    $region39: #{backbone_as_unet_forward.17} parent=5 // pred_region
      %s1299 = ssub.s32 %s9, 2
      // Predicated region
      $region41: #{backbone_as_unet_forward.17} parent=39 // pred_check
        %p1300 = pneg %p106
      $region42: #{backbone_as_unet_forward.17} parent=39 // pred_check_branch
        %1302 = sbr.rel (%p1300) target = $region44
      $region43: #{backbone_as_unet_forward.17} parent=39 // pred_region
        %p1303 = scmp.lt.s32.totalorder %s15, 1
        %s1304 = scalar_select %p1303, %s15, 1
        %s1305 = smul.addr %s1304, 10
        %s1306 = smul.addr %s1305, 8
        %s1307 = scalar_lea.vmem %s3, %s1306
      $region44: #{backbone_as_unet_forward.17} parent=39 // pred_fallthru
        _
    $region40: #{backbone_as_unet_forward.17} parent=5 // pred_fallthru
      _
  $region6: #{backbone_as_unet_forward.17} parent=0 // loop_footer
    %s13 = sadd.s32 1, %s9
  $region7: #{backbone_as_unet_forward.17} parent=0 // loop_footer_branch
    %8 = sbr.rel target = $region3
  $region8: #{backbone_as_unet_forward.17} parent=0 // loop_exit
    _

// kernel: backbone_as_unet_forward.18
$region0: #{backbone_as_unet_forward.18}
  #allocation0 [shape = 'u32[]', space=smem, size = 0x4, offset = 0x4, fixed_abs, tag = 'smem constant byte address 0x4 - core index']
  #allocation1 [shape = 'u32[144,128]{1,0:T(1,128)}', space=vmem, size = 0x12000, scoped, tag = 'internal scratch']
  %s0 = inlined_call_operand.vmem [shape: f32[2,102,8], index: 0, kind: input, shape index: {}]
  %s1 = inlined_call_operand.vmem [shape: bf16[9,8,128], index: 1, kind: input, shape index: {}]
  %s2 = inlined_call_operand.vmem [shape: f32[1,128], index: 2, kind: input, shape index: {}]
  %s3 = inlined_call_operand.vmem [shape: f32[2,80,128], index: 3, kind: output, shape index: {}]
  %s4 = sld [smem:[#allocation0]]
  $region45: #{backbone_as_unet_forward.18} parent=0
    _
  %s6 = ssub.s32 1, %s4
  %s7 = scalar_select 0, %s6, %s4
  loop: start=0, step=1, limit=4
  $region2: #{backbone_as_unet_forward.18} parent=0 // loop_pre_header
    _
  $region3: #{backbone_as_unet_forward.18} parent=0 // loop_header
    %s9 = sphi 0, %s13
    %p10 = scmp.ge.s32.totalorder %s9, 4
    %s19 = sphi 0, %s21
    %s22 = sphi 0, %s19
    %s23 = sphi 0, %s22
    %s39 = sphi 0, %s23
    %s43 = sphi 0, %s43
    %s45 = sphi 0, %s43
    %s46 = sphi 0, %s45
    %s60 = sphi 0, %s46
    %s64 = sphi 0, %s64
    %s66 = sphi 0, %s64
    %s67 = sphi 0, %s66
    %s81 = sphi 0, %s67
    %s87 = sphi 0, %s89
    %s90 = sphi 0, %s87
    %s91 = sphi 0, %s90
    %s107 = sphi 0, %s91
  $region4: #{backbone_as_unet_forward.18} parent=0 // loop_header_branch
    %12 = sbr.rel (%p10) target = $region8
  $region5: #{backbone_as_unet_forward.18} parent=0 // loop_body
    %s14 = ssub.s32 %s9, 1
    %s15 = ssub.s32 %s9, 2
    %s16 = sadd.s32 %s9, 1
    %s17 = ssub.s32 %s9, %s16
    %p18 = scmp.eq.s32.totalorder %s17, 0
    %s20 = sadd.s32 %s19, 1
    %s21 = scalar_select %p18, %s19, %s20
    %p24 = pneg %p18
    %p25 = scmp.eq.s32.totalorder %s9, 1
    %p26 = por %p24, %p25
    %p27 = scmp.ne.s32.totalorder %s19, %s22
    %p28 = scmp.eq.s32.totalorder %s9, 0
    %p29 = por %p27, %p28
    %p30 = scmp.ne.s32.totalorder %s19, %s22
    %p31 = scmp.eq.s32.totalorder %s14, 1
    %p32 = por %p30, %p31
    %p33 = scmp.ne.s32.totalorder %s22, %s23
    %p34 = scmp.eq.s32.totalorder %s14, 0
    %p35 = por %p33, %p34
    %p36 = scmp.ne.s32.totalorder %s22, %s23
    %p37 = scmp.eq.s32.totalorder %s15, 1
    %p38 = por %p36, %p37
    %p40 = scmp.ne.s32.totalorder %s23, %s39
    %p41 = scmp.eq.s32.totalorder %s15, 0
    %p42 = por %p40, %p41
    %s44 = sadd.s32 %s43, 1
    %p47 = scmp.eq.s32.totalorder %s9, 1
    %p48 = scmp.ne.s32.totalorder %s43, %s45
    %p49 = scmp.eq.s32.totalorder %s9, 0
    %p50 = por %p48, %p49
    %p51 = scmp.ne.s32.totalorder %s43, %s45
    %p52 = scmp.eq.s32.totalorder %s14, 1
    %p53 = por %p51, %p52
    %p54 = scmp.ne.s32.totalorder %s45, %s46
    %p55 = scmp.eq.s32.totalorder %s14, 0
    %p56 = por %p54, %p55
    %p57 = scmp.ne.s32.totalorder %s45, %s46
    %p58 = scmp.eq.s32.totalorder %s15, 1
    %p59 = por %p57, %p58
    %p61 = scmp.ne.s32.totalorder %s46, %s60
    %p62 = scmp.eq.s32.totalorder %s15, 0
    %p63 = por %p61, %p62
    %s65 = sadd.s32 %s64, 1
    %p68 = scmp.eq.s32.totalorder %s9, 1
    %p69 = scmp.ne.s32.totalorder %s64, %s66
    %p70 = scmp.eq.s32.totalorder %s9, 0
    %p71 = por %p69, %p70
    %p72 = scmp.ne.s32.totalorder %s64, %s66
    %p73 = scmp.eq.s32.totalorder %s14, 1
    %p74 = por %p72, %p73
    %p75 = scmp.ne.s32.totalorder %s66, %s67
    %p76 = scmp.eq.s32.totalorder %s14, 0
    %p77 = por %p75, %p76
    %p78 = scmp.ne.s32.totalorder %s66, %s67
    %p79 = scmp.eq.s32.totalorder %s15, 1
    %p80 = por %p78, %p79
    %p82 = scmp.ne.s32.totalorder %s67, %s81
    %p83 = scmp.eq.s32.totalorder %s15, 0
    %p84 = por %p82, %p83
    %s85 = ssub.s32 %s9, %s16
    %p86 = scmp.eq.s32.totalorder %s85, 0
    %s88 = sadd.s32 %s87, 1
    %s89 = scalar_select %p86, %s87, %s88
    %p92 = pneg %p86
    %p93 = scmp.eq.s32.totalorder %s9, 1
    %p94 = por %p92, %p93
    %p95 = scmp.ne.s32.totalorder %s87, %s90
    %p96 = scmp.eq.s32.totalorder %s9, 0
    %p97 = por %p95, %p96
    %p98 = scmp.ne.s32.totalorder %s87, %s90
    %p99 = scmp.eq.s32.totalorder %s14, 1
    %p100 = por %p98, %p99
    %p101 = scmp.ne.s32.totalorder %s90, %s91
    %p102 = scmp.eq.s32.totalorder %s14, 0
    %p103 = por %p101, %p102
    %p104 = scmp.ne.s32.totalorder %s90, %s91
    %p105 = scmp.eq.s32.totalorder %s15, 1
    %p106 = por %p104, %p105
    %p108 = scmp.ne.s32.totalorder %s91, %s107
    %p109 = scmp.eq.s32.totalorder %s15, 0
    %p110 = por %p108, %p109
    %p111 = scmp.le.s32.totalorder 1, %s9
    %p112 = scmp.lt.s32.totalorder %s9, 3
    %p113 = pnand %p111, %p112
    %p114 = pneg %p113
    // Predicated region
    $region9: #{backbone_as_unet_forward.18} parent=5 // pred_check
      _
    $region10: #{backbone_as_unet_forward.18} parent=5 // pred_check_branch
      %116 = sbr.rel (%p113) target = $region12
    $region11: #{backbone_as_unet_forward.18} parent=5 // pred_region
      %s117 = ssub.s32 %s9, 1
      // Predicated region
      $region13: #{backbone_as_unet_forward.18} parent=11 // pred_check
        %p118 = pneg %p56
      $region14: #{backbone_as_unet_forward.18} parent=11 // pred_check_branch
        %120 = sbr.rel (%p118) target = $region16
      $region15: #{backbone_as_unet_forward.18} parent=11 // pred_region
        _
      $region16: #{backbone_as_unet_forward.18} parent=11 // pred_fallthru
        _
      // Predicated region
      $region17: #{backbone_as_unet_forward.18} parent=11 // pred_check
        %p121 = pneg %p77
      $region18: #{backbone_as_unet_forward.18} parent=11 // pred_check_branch
        %123 = sbr.rel (%p121) target = $region20
      $region19: #{backbone_as_unet_forward.18} parent=11 // pred_region
        _
      $region20: #{backbone_as_unet_forward.18} parent=11 // pred_fallthru
        _
    $region12: #{backbone_as_unet_forward.18} parent=5 // pred_fallthru
      _
    %p124 = scmp.lt.s32.totalorder %s9, 2
    // Predicated region
    $region21: #{backbone_as_unet_forward.18} parent=5 // pred_check
      %p125 = pneg %p124
    $region22: #{backbone_as_unet_forward.18} parent=5 // pred_check_branch
      %127 = sbr.rel (%p125) target = $region24
    $region23: #{backbone_as_unet_forward.18} parent=5 // pred_region
      // Predicated region
      $region25: #{backbone_as_unet_forward.18} parent=23 // pred_check
        %p128 = pneg %p29
      $region26: #{backbone_as_unet_forward.18} parent=23 // pred_check_branch
        %130 = sbr.rel (%p128) target = $region28
      $region27: #{backbone_as_unet_forward.18} parent=23 // pred_region
        %p131 = scmp.lt.s32.totalorder %s9, 1
        %s132 = scalar_select %p131, %s9, 1
        %s133 = smul.addr %s132, 13
        %s134 = smul.addr %s133, 8
        %s135 = scalar_lea.vmem %s0, %s134
      $region28: #{backbone_as_unet_forward.18} parent=23 // pred_fallthru
        _
    $region24: #{backbone_as_unet_forward.18} parent=5 // pred_fallthru
      _
    %p136 = scmp.le.s32.totalorder 1, %s9
    %p137 = scmp.lt.s32.totalorder %s9, 3
    %p138 = pnand %p136, %p137
    %p139 = pneg %p138
    // Predicated region
    $region29: #{backbone_as_unet_forward.18} parent=5 // pred_check
      _
    $region30: #{backbone_as_unet_forward.18} parent=5 // pred_check_branch
      %141 = sbr.rel (%p138) target = $region32
    $region31: #{backbone_as_unet_forward.18} parent=5 // pred_region
      %s142 = ssub.s32 %s9, 1
      %p143 = scmp.lt.s32.totalorder %s14, 1
      %s144 = scalar_select %p143, %s14, 1
      %s145 = smul.addr %s144, 13
      %s146 = smul.addr %s145, 8
      %s147 = scalar_lea.vmem %s0, %s146
      %p148 = pneg %p35
      %p149 = pneg %p32
      %p150 = pneg %p56
      %p151 = pneg %p53
      %p152 = pneg %p77
      %p153 = pneg %p74
      %p154 = pneg %p103
      %p155 = pneg %p100
      %p156 = scmp.lt.s32.totalorder %s14, 1
      %s157 = scalar_select %p156, %s14, 1
      %s158 = smul.addr %s157, 10
      %s159 = smul.addr %s158, 8
      %s160 = scalar_lea.vmem %s3, %s159
      %p161 = scmp.lt.s32.totalorder %s14, 1
      %s162 = scalar_select %p161, %s14, 1
      %s163 = smul.addr %s162, 13
      %s164 = smul.addr %s163, 8
      %s165 = scalar_lea.vmem %s0, %s164
      %p166 = scmp.lt.s32.totalorder %s14, 1
      %s167 = scalar_select %p166, %s14, 1
      %s168 = smul.addr %s167, 10
      %s169 = smul.addr %s168, 8
      %s170 = scalar_lea.vmem %s3, %s169
      %v172 = vld [vmem:[%s165] sm:$0xff]
      %v173 = vld [vmem:[%s165 + $0x8] sm:$0xff]
      %v174 = vld [vmem:[%s165 + $0x10] sm:$0xff]
      %v175 = vld [vmem:[%s165 + $0x18] sm:$0xff]
      %v176 = vld [vmem:[%s165 + $0x20] sm:$0xff]
      %v177 = vld [vmem:[%s165 + $0x28] sm:$0xff]
      %v178 = vld [vmem:[%s165 + $0x30] sm:$0xff]
      %v179 = vld [vmem:[%s165 + $0x38] sm:$0xff]
      %v180 = vld [vmem:[%s165 + $0x40] sm:$0xff]
      %v181 = vld [vmem:[%s165 + $0x48] sm:$0xff]
      %v182 = vpack.c.bf16 %v173, %v172
      %v183 = vpack.c.bf16 %v175, %v174
      %v184 = vpack.c.bf16 %v177, %v176
      %v185 = vpack.c.bf16 %v179, %v178
      %v186 = vpack.c.bf16 %v181, %v180
      %v187 = vld [vmem:[%s1] sm:$0xf]
      %v188 = vld [vmem:[%s165 + $0x1] sm:$0xff]
      %v189 = vld [vmem:[%s165 + $0x9] sm:$0xff]
      %v190 = vld [vmem:[%s165 + $0x11] sm:$0xff]
      %v191 = vld [vmem:[%s165 + $0x19] sm:$0xff]
      %v192 = vld [vmem:[%s165 + $0x21] sm:$0xff]
      %v193 = vld [vmem:[%s165 + $0x29] sm:$0xff]
      %v194 = vld [vmem:[%s165 + $0x31] sm:$0xff]
      %v195 = vld [vmem:[%s165 + $0x39] sm:$0xff]
      %v196 = vld [vmem:[%s165 + $0x41] sm:$0xff]
      %v197 = vld [vmem:[%s165 + $0x49] sm:$0xff]
      %v198 = vpack.c.bf16 %v189, %v188
      %v199 = vpack.c.bf16 %v191, %v190
      %v200 = vpack.c.bf16 %v193, %v192
      %v201 = vpack.c.bf16 %v195, %v194
      %v202 = vpack.c.bf16 %v197, %v196
      %s203 = scalar_lea.vmem %s1, 4
      %v204 = vld [vmem:[%s203] sm:$0xf]
      %vm205 = vcmask 64512
      %v207 = vsel %vm205, %v198, 0
      %v210 = vsel %vm205, %v199, 0
      %v213 = vsel %vm205, %v200, 0
      %v216 = vsel %vm205, %v201, 0
      %v219 = vsel %vm205, %v202, 0
      %vm221 = vcmask 1043456
      %v223 = vsel %vm221, %v204, 0
      %225 = vmatprep.subr.bf16.mxu0 0
      %226 = vmatpush1.bf16.msra.mxu0 0
      %227 = vmatprep.subr.bf16.mxu0 0
      %228 = vmatpush1.bf16.msra.mxu0 0
      %229 = vmatprep.subr.bf16.mxu0 0
      %230 = vmatpush1.bf16.msra.mxu0 0
      %231 = vmatprep.subr.bf16.mxu0 0
      %232 = vmatpush1.bf16.msra.mxu0 0
      %233 = vmatprep.subr.bf16.mxu0 0
      %234 = vmatpush1.bf16.msra.mxu0 0
      %235 = vmatprep.subr.bf16.mxu0 0
      %236 = vmatpush1.bf16.msra.mxu0 0
      %237 = vmatprep.subr.bf16.mxu0 0
      %238 = vmatpush1.bf16.msra.mxu0 0
      %239 = vmatprep.subr.bf16.mxu0 0
      %240 = vmatpush1.bf16.msra.mxu0 %v223
      %241 = vmatprep.subr.bf16.mxu0 0
      %242 = vmatpush2.bf16.msra.mxu0 0
      %243 = vmatprep.subr.bf16.mxu0 0
      %244 = vmatpush2.bf16.msra.mxu0 0
      %245 = vmatprep.subr.bf16.mxu0 0
      %246 = vmatpush2.bf16.msra.mxu0 0
      %247 = vmatprep.subr.bf16.mxu0 0
      %248 = vmatpush2.bf16.msra.mxu0 0
      %249 = vmatprep.subr.bf16.mxu0 0
      %250 = vmatpush2.bf16.msra.mxu0 0
      %251 = vmatprep.subr.bf16.mxu0 0
      %252 = vmatpush2.bf16.msra.mxu0 0
      %253 = vmatprep.subr.bf16.mxu0 0
      %254 = vmatpush2.bf16.msra.mxu0 0
      %255 = vmatprep.subr.bf16.mxu0 0
      %256 = vmatpush2.bf16.msra.mxu0 0
      %257 = vmatprep.mubr.bf16.mxu0 0
      %258 = vmatmul.mubr.bf16.gmra.mxu0 %v207
      %v259 = vpop.f32.mrf.mxu0
      %v260 = vadd.f32 0.0, %v259
      %v261 = vpop.f32.mrf.mxu0
      %v262 = vpop.f32.mrf.mxu0
      %v263 = vadd.f32 0.0, %v262
      %v264 = vpop.f32.mrf.mxu0
      %265 = vmatprep.mubr.bf16.mxu0 0
      %266 = vmatmul.mubr.bf16.gmra.mxu0 %v210
      %v267 = vpop.f32.mrf.mxu0
      %v268 = vadd.f32 0.0, %v267
      %v269 = vpop.f32.mrf.mxu0
      %v270 = vpop.f32.mrf.mxu0
      %v271 = vadd.f32 0.0, %v270
      %v272 = vpop.f32.mrf.mxu0
      %273 = vmatprep.mubr.bf16.mxu0 0
      %274 = vmatmul.mubr.bf16.gmra.mxu0 %v213
      %v275 = vpop.f32.mrf.mxu0
      %v276 = vadd.f32 0.0, %v275
      %v277 = vpop.f32.mrf.mxu0
      %v278 = vpop.f32.mrf.mxu0
      %v279 = vadd.f32 0.0, %v278
      %v280 = vpop.f32.mrf.mxu0
      %281 = vmatprep.mubr.bf16.mxu0 0
      %282 = vmatmul.mubr.bf16.gmra.mxu0 %v216
      %v283 = vpop.f32.mrf.mxu0
      %v284 = vadd.f32 0.0, %v283
      %v285 = vpop.f32.mrf.mxu0
      %v286 = vpop.f32.mrf.mxu0
      %v287 = vadd.f32 0.0, %v286
      %v288 = vpop.f32.mrf.mxu0
      %289 = vmatprep.mubr.bf16.mxu0 0
      %290 = vmatmul.mubr.bf16.gmra.mxu0 %v219
      %v291 = vpop.f32.mrf.mxu0
      %v292 = vadd.f32 0.0, %v291
      %v293 = vpop.f32.mrf.mxu0
      %v294 = vpop.f32.mrf.mxu0
      %v295 = vadd.f32 0.0, %v294
      %v296 = vpop.f32.mrf.mxu0
      %297 = vdwg.mxu0
      %v299 = vsel %vm205, %v182, 0
      %v302 = vsel %vm205, %v183, 0
      %v305 = vsel %vm205, %v184, 0
      %v308 = vsel %vm205, %v185, 0
      %v311 = vsel %vm205, %v186, 0
      %v314 = vsel %vm221, %v187, 0
      %316 = vmatprep.subr.bf16.mxu0 0
      %317 = vmatpush1.bf16.msra.mxu0 0
      %318 = vmatprep.subr.bf16.mxu0 0
      %319 = vmatpush1.bf16.msra.mxu0 0
      %320 = vmatprep.subr.bf16.mxu0 0
      %321 = vmatpush1.bf16.msra.mxu0 0
      %322 = vmatprep.subr.bf16.mxu0 0
      %323 = vmatpush1.bf16.msra.mxu0 0
      %324 = vmatprep.subr.bf16.mxu0 0
      %325 = vmatpush1.bf16.msra.mxu0 0
      %326 = vmatprep.subr.bf16.mxu0 0
      %327 = vmatpush1.bf16.msra.mxu0 0
      %328 = vmatprep.subr.bf16.mxu0 0
      %329 = vmatpush1.bf16.msra.mxu0 0
      %330 = vmatprep.subr.bf16.mxu0 0
      %331 = vmatpush1.bf16.msra.mxu0 %v314
      %332 = vmatprep.subr.bf16.mxu0 0
      %333 = vmatpush2.bf16.msra.mxu0 0
      %334 = vmatprep.subr.bf16.mxu0 0
      %335 = vmatpush2.bf16.msra.mxu0 0
      %336 = vmatprep.subr.bf16.mxu0 0
      %337 = vmatpush2.bf16.msra.mxu0 0
      %338 = vmatprep.subr.bf16.mxu0 0
      %339 = vmatpush2.bf16.msra.mxu0 0
      %340 = vmatprep.subr.bf16.mxu0 0
      %341 = vmatpush2.bf16.msra.mxu0 0
      %342 = vmatprep.subr.bf16.mxu0 0
      %343 = vmatpush2.bf16.msra.mxu0 0
      %344 = vmatprep.subr.bf16.mxu0 0
      %345 = vmatpush2.bf16.msra.mxu0 0
      %346 = vmatprep.subr.bf16.mxu0 0
      %347 = vmatpush2.bf16.msra.mxu0 0
      %348 = vmatprep.mubr.bf16.mxu0 0
      %349 = vmatmul.mubr.bf16.gmra.mxu0 %v299
      %v350 = vpop.f32.mrf.mxu0
      %v351 = vadd.f32 %v260, %v350
      %v352 = vpop.f32.mrf.mxu0
      %v353 = vpop.f32.mrf.mxu0
      %v354 = vadd.f32 %v263, %v353
      %v355 = vpop.f32.mrf.mxu0
      %356 = vmatprep.mubr.bf16.mxu0 0
      %357 = vmatmul.mubr.bf16.gmra.mxu0 %v302
      %v358 = vpop.f32.mrf.mxu0
      %v359 = vadd.f32 %v268, %v358
      %v360 = vpop.f32.mrf.mxu0
      %v361 = vpop.f32.mrf.mxu0
      %v362 = vadd.f32 %v271, %v361
      %v363 = vpop.f32.mrf.mxu0
      %364 = vmatprep.mubr.bf16.mxu0 0
      %365 = vmatmul.mubr.bf16.gmra.mxu0 %v305
      %v366 = vpop.f32.mrf.mxu0
      %v367 = vadd.f32 %v276, %v366
      %v368 = vpop.f32.mrf.mxu0
      %v369 = vpop.f32.mrf.mxu0
      %v370 = vadd.f32 %v279, %v369
      %v371 = vpop.f32.mrf.mxu0
      %372 = vmatprep.mubr.bf16.mxu0 0
      %373 = vmatmul.mubr.bf16.gmra.mxu0 %v308
      %v374 = vpop.f32.mrf.mxu0
      %v375 = vadd.f32 %v284, %v374
      %v376 = vpop.f32.mrf.mxu0
      %v377 = vpop.f32.mrf.mxu0
      %v378 = vadd.f32 %v287, %v377
      %v379 = vpop.f32.mrf.mxu0
      %380 = vmatprep.mubr.bf16.mxu0 0
      %381 = vmatmul.mubr.bf16.gmra.mxu0 %v311
      %v382 = vpop.f32.mrf.mxu0
      %v383 = vadd.f32 %v292, %v382
      %v384 = vpop.f32.mrf.mxu0
      %v385 = vpop.f32.mrf.mxu0
      %v386 = vadd.f32 %v295, %v385
      %v387 = vpop.f32.mrf.mxu0
      %388 = vdwg.mxu0
      %v389 = vld [vmem:[%s165 + $0x2] sm:$0xff]
      %v390 = vld [vmem:[%s165 + $0xa] sm:$0xff]
      %v391 = vld [vmem:[%s165 + $0x12] sm:$0xff]
      %v392 = vld [vmem:[%s165 + $0x1a] sm:$0xff]
      %v393 = vld [vmem:[%s165 + $0x22] sm:$0xff]
      %v394 = vld [vmem:[%s165 + $0x2a] sm:$0xff]
      %v395 = vld [vmem:[%s165 + $0x32] sm:$0xff]
      %v396 = vld [vmem:[%s165 + $0x3a] sm:$0xff]
      %v397 = vld [vmem:[%s165 + $0x42] sm:$0xff]
      %v398 = vld [vmem:[%s165 + $0x4a] sm:$0xff]
      %v399 = vpack.c.bf16 %v390, %v389
      %v400 = vpack.c.bf16 %v392, %v391
      %v401 = vpack.c.bf16 %v394, %v393
      %v402 = vpack.c.bf16 %v396, %v395
      %v403 = vpack.c.bf16 %v398, %v397
      %s404 = scalar_lea.vmem %s1, 8
      %v405 = vld [vmem:[%s404] sm:$0xf]
      %v407 = vsel %vm205, %v399, 0
      %v410 = vsel %vm205, %v400, 0
      %v413 = vsel %vm205, %v401, 0
      %v416 = vsel %vm205, %v402, 0
      %v419 = vsel %vm205, %v403, 0
      %v422 = vsel %vm221, %v405, 0
      %424 = vmatprep.subr.bf16.mxu0 0
      %425 = vmatpush1.bf16.msra.mxu0 0
      %426 = vmatprep.subr.bf16.mxu0 0
      %427 = vmatpush1.bf16.msra.mxu0 0
      %428 = vmatprep.subr.bf16.mxu0 0
      %429 = vmatpush1.bf16.msra.mxu0 0
      %430 = vmatprep.subr.bf16.mxu0 0
      %431 = vmatpush1.bf16.msra.mxu0 0
      %432 = vmatprep.subr.bf16.mxu0 0
      %433 = vmatpush1.bf16.msra.mxu0 0
      %434 = vmatprep.subr.bf16.mxu0 0
      %435 = vmatpush1.bf16.msra.mxu0 0
      %436 = vmatprep.subr.bf16.mxu0 0
      %437 = vmatpush1.bf16.msra.mxu0 0
      %438 = vmatprep.subr.bf16.mxu0 0
      %439 = vmatpush1.bf16.msra.mxu0 %v422
      %440 = vmatprep.subr.bf16.mxu0 0
      %441 = vmatpush2.bf16.msra.mxu0 0
      %442 = vmatprep.subr.bf16.mxu0 0
      %443 = vmatpush2.bf16.msra.mxu0 0
      %444 = vmatprep.subr.bf16.mxu0 0
      %445 = vmatpush2.bf16.msra.mxu0 0
      %446 = vmatprep.subr.bf16.mxu0 0
      %447 = vmatpush2.bf16.msra.mxu0 0
      %448 = vmatprep.subr.bf16.mxu0 0
      %449 = vmatpush2.bf16.msra.mxu0 0
      %450 = vmatprep.subr.bf16.mxu0 0
      %451 = vmatpush2.bf16.msra.mxu0 0
      %452 = vmatprep.subr.bf16.mxu0 0
      %453 = vmatpush2.bf16.msra.mxu0 0
      %454 = vmatprep.subr.bf16.mxu0 0
      %455 = vmatpush2.bf16.msra.mxu0 0
      %456 = vmatprep.mubr.bf16.mxu0 0
      %457 = vmatmul.mubr.bf16.gmra.mxu0 %v407
      %v458 = vpop.f32.mrf.mxu0
      %v459 = vadd.f32 0.0, %v458
      %v460 = vpop.f32.mrf.mxu0
      %v461 = vpop.f32.mrf.mxu0
      %v462 = vadd.f32 0.0, %v461
      %v463 = vpop.f32.mrf.mxu0
      %464 = vmatprep.mubr.bf16.mxu0 0
      %465 = vmatmul.mubr.bf16.gmra.mxu0 %v410
      %v466 = vpop.f32.mrf.mxu0
      %v467 = vadd.f32 0.0, %v466
      %v468 = vpop.f32.mrf.mxu0
      %v469 = vpop.f32.mrf.mxu0
      %v470 = vadd.f32 0.0, %v469
      %v471 = vpop.f32.mrf.mxu0
      %472 = vmatprep.mubr.bf16.mxu0 0
      %473 = vmatmul.mubr.bf16.gmra.mxu0 %v413
      %v474 = vpop.f32.mrf.mxu0
      %v475 = vadd.f32 0.0, %v474
      %v476 = vpop.f32.mrf.mxu0
      %v477 = vpop.f32.mrf.mxu0
      %v478 = vadd.f32 0.0, %v477
      %v479 = vpop.f32.mrf.mxu0
      %480 = vmatprep.mubr.bf16.mxu0 0
      %481 = vmatmul.mubr.bf16.gmra.mxu0 %v416
      %v482 = vpop.f32.mrf.mxu0
      %v483 = vadd.f32 0.0, %v482
      %v484 = vpop.f32.mrf.mxu0
      %v485 = vpop.f32.mrf.mxu0
      %v486 = vadd.f32 0.0, %v485
      %v487 = vpop.f32.mrf.mxu0
      %488 = vmatprep.mubr.bf16.mxu0 0
      %489 = vmatmul.mubr.bf16.gmra.mxu0 %v419
      %v490 = vpop.f32.mrf.mxu0
      %v491 = vadd.f32 0.0, %v490
      %v492 = vpop.f32.mrf.mxu0
      %v493 = vpop.f32.mrf.mxu0
      %v494 = vadd.f32 0.0, %v493
      %v495 = vpop.f32.mrf.mxu0
      %496 = vdwg.mxu0
      %v497 = vadd.f32 %v351, %v459
      %v498 = vadd.f32 %v354, %v462
      %v499 = vadd.f32 %v359, %v467
      %v500 = vadd.f32 %v362, %v470
      %v501 = vadd.f32 %v367, %v475
      %v502 = vadd.f32 %v370, %v478
      %v503 = vadd.f32 %v375, %v483
      %v504 = vadd.f32 %v378, %v486
      %v505 = vadd.f32 %v383, %v491
      %v506 = vadd.f32 %v386, %v494
      %v507 = vld [vmem:[%s165 + $0xa] sm:$0xff]
      %v508 = vld [vmem:[%s165 + $0x12] sm:$0xff]
      %v509 = vld [vmem:[%s165 + $0x1a] sm:$0xff]
      %v510 = vld [vmem:[%s165 + $0x22] sm:$0xff]
      %v511 = vld [vmem:[%s165 + $0x2a] sm:$0xff]
      %v512 = vld [vmem:[%s165 + $0x32] sm:$0xff]
      %v513 = vld [vmem:[%s165 + $0x3a] sm:$0xff]
      %v514 = vld [vmem:[%s165 + $0x42] sm:$0xff]
      %v515 = vld [vmem:[%s165 + $0x4a] sm:$0xff]
      %v516 = vld [vmem:[%s165 + $0x52] sm:$0xff]
      %v517 = vpack.c.bf16 %v508, %v507
      %v518 = vpack.c.bf16 %v510, %v509
      %v519 = vpack.c.bf16 %v512, %v511
      %v520 = vpack.c.bf16 %v514, %v513
      %v521 = vpack.c.bf16 %v516, %v515
      %s522 = scalar_lea.vmem %s1, 12
      %v523 = vld [vmem:[%s522] sm:$0xf]
      %v525 = vsel %vm205, %v517, 0
      %v528 = vsel %vm205, %v518, 0
      %v531 = vsel %vm205, %v519, 0
      %v534 = vsel %vm205, %v520, 0
      %v537 = vsel %vm205, %v521, 0
      %v540 = vsel %vm221, %v523, 0
      %542 = vmatprep.subr.bf16.mxu0 0
      %543 = vmatpush1.bf16.msra.mxu0 0
      %544 = vmatprep.subr.bf16.mxu0 0
      %545 = vmatpush1.bf16.msra.mxu0 0
      %546 = vmatprep.subr.bf16.mxu0 0
      %547 = vmatpush1.bf16.msra.mxu0 0
      %548 = vmatprep.subr.bf16.mxu0 0
      %549 = vmatpush1.bf16.msra.mxu0 0
      %550 = vmatprep.subr.bf16.mxu0 0
      %551 = vmatpush1.bf16.msra.mxu0 0
      %552 = vmatprep.subr.bf16.mxu0 0
      %553 = vmatpush1.bf16.msra.mxu0 0
      %554 = vmatprep.subr.bf16.mxu0 0
      %555 = vmatpush1.bf16.msra.mxu0 0
      %556 = vmatprep.subr.bf16.mxu0 0
      %557 = vmatpush1.bf16.msra.mxu0 %v540
      %558 = vmatprep.subr.bf16.mxu0 0
      %559 = vmatpush2.bf16.msra.mxu0 0
      %560 = vmatprep.subr.bf16.mxu0 0
      %561 = vmatpush2.bf16.msra.mxu0 0
      %562 = vmatprep.subr.bf16.mxu0 0
      %563 = vmatpush2.bf16.msra.mxu0 0
      %564 = vmatprep.subr.bf16.mxu0 0
      %565 = vmatpush2.bf16.msra.mxu0 0
      %566 = vmatprep.subr.bf16.mxu0 0
      %567 = vmatpush2.bf16.msra.mxu0 0
      %568 = vmatprep.subr.bf16.mxu0 0
      %569 = vmatpush2.bf16.msra.mxu0 0
      %570 = vmatprep.subr.bf16.mxu0 0
      %571 = vmatpush2.bf16.msra.mxu0 0
      %572 = vmatprep.subr.bf16.mxu0 0
      %573 = vmatpush2.bf16.msra.mxu0 0
      %574 = vmatprep.mubr.bf16.mxu0 0
      %575 = vmatmul.mubr.bf16.gmra.mxu0 %v525
      %v576 = vpop.f32.mrf.mxu0
      %v577 = vadd.f32 0.0, %v576
      %v578 = vpop.f32.mrf.mxu0
      %v579 = vpop.f32.mrf.mxu0
      %v580 = vadd.f32 0.0, %v579
      %v581 = vpop.f32.mrf.mxu0
      %582 = vmatprep.mubr.bf16.mxu0 0
      %583 = vmatmul.mubr.bf16.gmra.mxu0 %v528
      %v584 = vpop.f32.mrf.mxu0
      %v585 = vadd.f32 0.0, %v584
      %v586 = vpop.f32.mrf.mxu0
      %v587 = vpop.f32.mrf.mxu0
      %v588 = vadd.f32 0.0, %v587
      %v589 = vpop.f32.mrf.mxu0
      %590 = vmatprep.mubr.bf16.mxu0 0
      %591 = vmatmul.mubr.bf16.gmra.mxu0 %v531
      %v592 = vpop.f32.mrf.mxu0
      %v593 = vadd.f32 0.0, %v592
      %v594 = vpop.f32.mrf.mxu0
      %v595 = vpop.f32.mrf.mxu0
      %v596 = vadd.f32 0.0, %v595
      %v597 = vpop.f32.mrf.mxu0
      %598 = vmatprep.mubr.bf16.mxu0 0
      %599 = vmatmul.mubr.bf16.gmra.mxu0 %v534
      %v600 = vpop.f32.mrf.mxu0
      %v601 = vadd.f32 0.0, %v600
      %v602 = vpop.f32.mrf.mxu0
      %v603 = vpop.f32.mrf.mxu0
      %v604 = vadd.f32 0.0, %v603
      %v605 = vpop.f32.mrf.mxu0
      %606 = vmatprep.mubr.bf16.mxu0 0
      %607 = vmatmul.mubr.bf16.gmra.mxu0 %v537
      %v608 = vpop.f32.mrf.mxu0
      %v609 = vadd.f32 0.0, %v608
      %v610 = vpop.f32.mrf.mxu0
      %v611 = vpop.f32.mrf.mxu0
      %v612 = vadd.f32 0.0, %v611
      %v613 = vpop.f32.mrf.mxu0
      %614 = vdwg.mxu0
      %v615 = vadd.f32 %v497, %v577
      %v616 = vadd.f32 %v498, %v580
      %v617 = vadd.f32 %v499, %v585
      %v618 = vadd.f32 %v500, %v588
      %v619 = vadd.f32 %v501, %v593
      %v620 = vadd.f32 %v502, %v596
      %v621 = vadd.f32 %v503, %v601
      %v622 = vadd.f32 %v504, %v604
      %v623 = vadd.f32 %v505, %v609
      %v624 = vadd.f32 %v506, %v612
      %v625 = vld [vmem:[%s165 + $0xb] sm:$0xff]
      %v626 = vld [vmem:[%s165 + $0x13] sm:$0xff]
      %v627 = vld [vmem:[%s165 + $0x1b] sm:$0xff]
      %v628 = vld [vmem:[%s165 + $0x23] sm:$0xff]
      %v629 = vld [vmem:[%s165 + $0x2b] sm:$0xff]
      %v630 = vld [vmem:[%s165 + $0x33] sm:$0xff]
      %v631 = vld [vmem:[%s165 + $0x3b] sm:$0xff]
      %v632 = vld [vmem:[%s165 + $0x43] sm:$0xff]
      %v633 = vld [vmem:[%s165 + $0x4b] sm:$0xff]
      %v634 = vld [vmem:[%s165 + $0x53] sm:$0xff]
      %v635 = vpack.c.bf16 %v626, %v625
      %v636 = vpack.c.bf16 %v628, %v627
      %v637 = vpack.c.bf16 %v630, %v629
      %v638 = vpack.c.bf16 %v632, %v631
      %v639 = vpack.c.bf16 %v634, %v633
      %s640 = scalar_lea.vmem %s1, 16
      %v641 = vld [vmem:[%s640] sm:$0xf]
      %v643 = vsel %vm205, %v635, 0
      %v646 = vsel %vm205, %v636, 0
      %v649 = vsel %vm205, %v637, 0
      %v652 = vsel %vm205, %v638, 0
      %v655 = vsel %vm205, %v639, 0
      %v658 = vsel %vm221, %v641, 0
      %660 = vmatprep.subr.bf16.mxu0 0
      %661 = vmatpush1.bf16.msra.mxu0 0
      %662 = vmatprep.subr.bf16.mxu0 0
      %663 = vmatpush1.bf16.msra.mxu0 0
      %664 = vmatprep.subr.bf16.mxu0 0
      %665 = vmatpush1.bf16.msra.mxu0 0
      %666 = vmatprep.subr.bf16.mxu0 0
      %667 = vmatpush1.bf16.msra.mxu0 0
      %668 = vmatprep.subr.bf16.mxu0 0
      %669 = vmatpush1.bf16.msra.mxu0 0
      %670 = vmatprep.subr.bf16.mxu0 0
      %671 = vmatpush1.bf16.msra.mxu0 0
      %672 = vmatprep.subr.bf16.mxu0 0
      %673 = vmatpush1.bf16.msra.mxu0 0
      %674 = vmatprep.subr.bf16.mxu0 0
      %675 = vmatpush1.bf16.msra.mxu0 %v658
      %676 = vmatprep.subr.bf16.mxu0 0
      %677 = vmatpush2.bf16.msra.mxu0 0
      %678 = vmatprep.subr.bf16.mxu0 0
      %679 = vmatpush2.bf16.msra.mxu0 0
      %680 = vmatprep.subr.bf16.mxu0 0
      %681 = vmatpush2.bf16.msra.mxu0 0
      %682 = vmatprep.subr.bf16.mxu0 0
      %683 = vmatpush2.bf16.msra.mxu0 0
      %684 = vmatprep.subr.bf16.mxu0 0
      %685 = vmatpush2.bf16.msra.mxu0 0
      %686 = vmatprep.subr.bf16.mxu0 0
      %687 = vmatpush2.bf16.msra.mxu0 0
      %688 = vmatprep.subr.bf16.mxu0 0
      %689 = vmatpush2.bf16.msra.mxu0 0
      %690 = vmatprep.subr.bf16.mxu0 0
      %691 = vmatpush2.bf16.msra.mxu0 0
      %692 = vmatprep.mubr.bf16.mxu0 0
      %693 = vmatmul.mubr.bf16.gmra.mxu0 %v643
      %v694 = vpop.f32.mrf.mxu0
      %v695 = vadd.f32 0.0, %v694
      %v696 = vpop.f32.mrf.mxu0
      %v697 = vpop.f32.mrf.mxu0
      %v698 = vadd.f32 0.0, %v697
      %v699 = vpop.f32.mrf.mxu0
      %700 = vmatprep.mubr.bf16.mxu0 0
      %701 = vmatmul.mubr.bf16.gmra.mxu0 %v646
      %v702 = vpop.f32.mrf.mxu0
      %v703 = vadd.f32 0.0, %v702
      %v704 = vpop.f32.mrf.mxu0
      %v705 = vpop.f32.mrf.mxu0
      %v706 = vadd.f32 0.0, %v705
      %v707 = vpop.f32.mrf.mxu0
      %708 = vmatprep.mubr.bf16.mxu0 0
      %709 = vmatmul.mubr.bf16.gmra.mxu0 %v649
      %v710 = vpop.f32.mrf.mxu0
      %v711 = vadd.f32 0.0, %v710
      %v712 = vpop.f32.mrf.mxu0
      %v713 = vpop.f32.mrf.mxu0
      %v714 = vadd.f32 0.0, %v713
      %v715 = vpop.f32.mrf.mxu0
      %716 = vmatprep.mubr.bf16.mxu0 0
      %717 = vmatmul.mubr.bf16.gmra.mxu0 %v652
      %v718 = vpop.f32.mrf.mxu0
      %v719 = vadd.f32 0.0, %v718
      %v720 = vpop.f32.mrf.mxu0
      %v721 = vpop.f32.mrf.mxu0
      %v722 = vadd.f32 0.0, %v721
      %v723 = vpop.f32.mrf.mxu0
      %724 = vmatprep.mubr.bf16.mxu0 0
      %725 = vmatmul.mubr.bf16.gmra.mxu0 %v655
      %v726 = vpop.f32.mrf.mxu0
      %v727 = vadd.f32 0.0, %v726
      %v728 = vpop.f32.mrf.mxu0
      %v729 = vpop.f32.mrf.mxu0
      %v730 = vadd.f32 0.0, %v729
      %v731 = vpop.f32.mrf.mxu0
      %732 = vdwg.mxu0
      %v733 = vadd.f32 %v615, %v695
      %v734 = vadd.f32 %v616, %v698
      %v735 = vadd.f32 %v617, %v703
      %v736 = vadd.f32 %v618, %v706
      %v737 = vadd.f32 %v619, %v711
      %v738 = vadd.f32 %v620, %v714
      %v739 = vadd.f32 %v621, %v719
      %v740 = vadd.f32 %v622, %v722
      %v741 = vadd.f32 %v623, %v727
      %v742 = vadd.f32 %v624, %v730
      %v743 = vld [vmem:[%s165 + $0xc] sm:$0xff]
      %v744 = vld [vmem:[%s165 + $0x14] sm:$0xff]
      %v745 = vld [vmem:[%s165 + $0x1c] sm:$0xff]
      %v746 = vld [vmem:[%s165 + $0x24] sm:$0xff]
      %v747 = vld [vmem:[%s165 + $0x2c] sm:$0xff]
      %v748 = vld [vmem:[%s165 + $0x34] sm:$0xff]
      %v749 = vld [vmem:[%s165 + $0x3c] sm:$0xff]
      %v750 = vld [vmem:[%s165 + $0x44] sm:$0xff]
      %v751 = vld [vmem:[%s165 + $0x4c] sm:$0xff]
      %v752 = vld [vmem:[%s165 + $0x54] sm:$0xff]
      %v753 = vpack.c.bf16 %v744, %v743
      %v754 = vpack.c.bf16 %v746, %v745
      %v755 = vpack.c.bf16 %v748, %v747
      %v756 = vpack.c.bf16 %v750, %v749
      %v757 = vpack.c.bf16 %v752, %v751
      %s758 = scalar_lea.vmem %s1, 20
      %v759 = vld [vmem:[%s758] sm:$0xf]
      %v761 = vsel %vm205, %v753, 0
      %v764 = vsel %vm205, %v754, 0
      %v767 = vsel %vm205, %v755, 0
      %v770 = vsel %vm205, %v756, 0
      %v773 = vsel %vm205, %v757, 0
      %v776 = vsel %vm221, %v759, 0
      %778 = vmatprep.subr.bf16.mxu0 0
      %779 = vmatpush1.bf16.msra.mxu0 0
      %780 = vmatprep.subr.bf16.mxu0 0
      %781 = vmatpush1.bf16.msra.mxu0 0
      %782 = vmatprep.subr.bf16.mxu0 0
      %783 = vmatpush1.bf16.msra.mxu0 0
      %784 = vmatprep.subr.bf16.mxu0 0
      %785 = vmatpush1.bf16.msra.mxu0 0
      %786 = vmatprep.subr.bf16.mxu0 0
      %787 = vmatpush1.bf16.msra.mxu0 0
      %788 = vmatprep.subr.bf16.mxu0 0
      %789 = vmatpush1.bf16.msra.mxu0 0
      %790 = vmatprep.subr.bf16.mxu0 0
      %791 = vmatpush1.bf16.msra.mxu0 0
      %792 = vmatprep.subr.bf16.mxu0 0
      %793 = vmatpush1.bf16.msra.mxu0 %v776
      %794 = vmatprep.subr.bf16.mxu0 0
      %795 = vmatpush2.bf16.msra.mxu0 0
      %796 = vmatprep.subr.bf16.mxu0 0
      %797 = vmatpush2.bf16.msra.mxu0 0
      %798 = vmatprep.subr.bf16.mxu0 0
      %799 = vmatpush2.bf16.msra.mxu0 0
      %800 = vmatprep.subr.bf16.mxu0 0
      %801 = vmatpush2.bf16.msra.mxu0 0
      %802 = vmatprep.subr.bf16.mxu0 0
      %803 = vmatpush2.bf16.msra.mxu0 0
      %804 = vmatprep.subr.bf16.mxu0 0
      %805 = vmatpush2.bf16.msra.mxu0 0
      %806 = vmatprep.subr.bf16.mxu0 0
      %807 = vmatpush2.bf16.msra.mxu0 0
      %808 = vmatprep.subr.bf16.mxu0 0
      %809 = vmatpush2.bf16.msra.mxu0 0
      %810 = vmatprep.mubr.bf16.mxu0 0
      %811 = vmatmul.mubr.bf16.gmra.mxu0 %v761
      %v812 = vpop.f32.mrf.mxu0
      %v813 = vadd.f32 0.0, %v812
      %v814 = vpop.f32.mrf.mxu0
      %v815 = vpop.f32.mrf.mxu0
      %v816 = vadd.f32 0.0, %v815
      %v817 = vpop.f32.mrf.mxu0
      %818 = vmatprep.mubr.bf16.mxu0 0
      %819 = vmatmul.mubr.bf16.gmra.mxu0 %v764
      %v820 = vpop.f32.mrf.mxu0
      %v821 = vadd.f32 0.0, %v820
      %v822 = vpop.f32.mrf.mxu0
      %v823 = vpop.f32.mrf.mxu0
      %v824 = vadd.f32 0.0, %v823
      %v825 = vpop.f32.mrf.mxu0
      %826 = vmatprep.mubr.bf16.mxu0 0
      %827 = vmatmul.mubr.bf16.gmra.mxu0 %v767
      %v828 = vpop.f32.mrf.mxu0
      %v829 = vadd.f32 0.0, %v828
      %v830 = vpop.f32.mrf.mxu0
      %v831 = vpop.f32.mrf.mxu0
      %v832 = vadd.f32 0.0, %v831
      %v833 = vpop.f32.mrf.mxu0
      %834 = vmatprep.mubr.bf16.mxu0 0
      %835 = vmatmul.mubr.bf16.gmra.mxu0 %v770
      %v836 = vpop.f32.mrf.mxu0
      %v837 = vadd.f32 0.0, %v836
      %v838 = vpop.f32.mrf.mxu0
      %v839 = vpop.f32.mrf.mxu0
      %v840 = vadd.f32 0.0, %v839
      %v841 = vpop.f32.mrf.mxu0
      %842 = vmatprep.mubr.bf16.mxu0 0
      %843 = vmatmul.mubr.bf16.gmra.mxu0 %v773
      %v844 = vpop.f32.mrf.mxu0
      %v845 = vadd.f32 0.0, %v844
      %v846 = vpop.f32.mrf.mxu0
      %v847 = vpop.f32.mrf.mxu0
      %v848 = vadd.f32 0.0, %v847
      %v849 = vpop.f32.mrf.mxu0
      %850 = vdwg.mxu0
      %v851 = vadd.f32 %v733, %v813
      %v852 = vadd.f32 %v734, %v816
      %v853 = vadd.f32 %v735, %v821
      %v854 = vadd.f32 %v736, %v824
      %v855 = vadd.f32 %v737, %v829
      %v856 = vadd.f32 %v738, %v832
      %v857 = vadd.f32 %v739, %v837
      %v858 = vadd.f32 %v740, %v840
      %v859 = vadd.f32 %v741, %v845
      %v860 = vadd.f32 %v742, %v848
      %v861 = vld [vmem:[%s165 + $0x14] sm:$0xff]
      %v862 = vld [vmem:[%s165 + $0x1c] sm:$0xff]
      %v863 = vld [vmem:[%s165 + $0x24] sm:$0xff]
      %v864 = vld [vmem:[%s165 + $0x2c] sm:$0xff]
      %v865 = vld [vmem:[%s165 + $0x34] sm:$0xff]
      %v866 = vld [vmem:[%s165 + $0x3c] sm:$0xff]
      %v867 = vld [vmem:[%s165 + $0x44] sm:$0xff]
      %v868 = vld [vmem:[%s165 + $0x4c] sm:$0xff]
      %v869 = vld [vmem:[%s165 + $0x54] sm:$0xff]
      %v870 = vld [vmem:[%s165 + $0x5c] sm:$0xff]
      %v871 = vpack.c.bf16 %v862, %v861
      %v872 = vpack.c.bf16 %v864, %v863
      %v873 = vpack.c.bf16 %v866, %v865
      %v874 = vpack.c.bf16 %v868, %v867
      %v875 = vpack.c.bf16 %v870, %v869
      %s876 = scalar_lea.vmem %s1, 24
      %v877 = vld [vmem:[%s876] sm:$0xf]
      %v879 = vsel %vm205, %v871, 0
      %v882 = vsel %vm205, %v872, 0
      %v885 = vsel %vm205, %v873, 0
      %v888 = vsel %vm205, %v874, 0
      %v891 = vsel %vm205, %v875, 0
      %v894 = vsel %vm221, %v877, 0
      %896 = vmatprep.subr.bf16.mxu0 0
      %897 = vmatpush1.bf16.msra.mxu0 0
      %898 = vmatprep.subr.bf16.mxu0 0
      %899 = vmatpush1.bf16.msra.mxu0 0
      %900 = vmatprep.subr.bf16.mxu0 0
      %901 = vmatpush1.bf16.msra.mxu0 0
      %902 = vmatprep.subr.bf16.mxu0 0
      %903 = vmatpush1.bf16.msra.mxu0 0
      %904 = vmatprep.subr.bf16.mxu0 0
      %905 = vmatpush1.bf16.msra.mxu0 0
      %906 = vmatprep.subr.bf16.mxu0 0
      %907 = vmatpush1.bf16.msra.mxu0 0
      %908 = vmatprep.subr.bf16.mxu0 0
      %909 = vmatpush1.bf16.msra.mxu0 0
      %910 = vmatprep.subr.bf16.mxu0 0
      %911 = vmatpush1.bf16.msra.mxu0 %v894
      %912 = vmatprep.subr.bf16.mxu0 0
      %913 = vmatpush2.bf16.msra.mxu0 0
      %914 = vmatprep.subr.bf16.mxu0 0
      %915 = vmatpush2.bf16.msra.mxu0 0
      %916 = vmatprep.subr.bf16.mxu0 0
      %917 = vmatpush2.bf16.msra.mxu0 0
      %918 = vmatprep.subr.bf16.mxu0 0
      %919 = vmatpush2.bf16.msra.mxu0 0
      %920 = vmatprep.subr.bf16.mxu0 0
      %921 = vmatpush2.bf16.msra.mxu0 0
      %922 = vmatprep.subr.bf16.mxu0 0
      %923 = vmatpush2.bf16.msra.mxu0 0
      %924 = vmatprep.subr.bf16.mxu0 0
      %925 = vmatpush2.bf16.msra.mxu0 0
      %926 = vmatprep.subr.bf16.mxu0 0
      %927 = vmatpush2.bf16.msra.mxu0 0
      %928 = vmatprep.mubr.bf16.mxu0 0
      %929 = vmatmul.mubr.bf16.gmra.mxu0 %v879
      %v930 = vpop.f32.mrf.mxu0
      %v931 = vadd.f32 0.0, %v930
      %v932 = vpop.f32.mrf.mxu0
      %v933 = vpop.f32.mrf.mxu0
      %v934 = vadd.f32 0.0, %v933
      %v935 = vpop.f32.mrf.mxu0
      %936 = vmatprep.mubr.bf16.mxu0 0
      %937 = vmatmul.mubr.bf16.gmra.mxu0 %v882
      %v938 = vpop.f32.mrf.mxu0
      %v939 = vadd.f32 0.0, %v938
      %v940 = vpop.f32.mrf.mxu0
      %v941 = vpop.f32.mrf.mxu0
      %v942 = vadd.f32 0.0, %v941
      %v943 = vpop.f32.mrf.mxu0
      %944 = vmatprep.mubr.bf16.mxu0 0
      %945 = vmatmul.mubr.bf16.gmra.mxu0 %v885
      %v946 = vpop.f32.mrf.mxu0
      %v947 = vadd.f32 0.0, %v946
      %v948 = vpop.f32.mrf.mxu0
      %v949 = vpop.f32.mrf.mxu0
      %v950 = vadd.f32 0.0, %v949
      %v951 = vpop.f32.mrf.mxu0
      %952 = vmatprep.mubr.bf16.mxu0 0
      %953 = vmatmul.mubr.bf16.gmra.mxu0 %v888
      %v954 = vpop.f32.mrf.mxu0
      %v955 = vadd.f32 0.0, %v954
      %v956 = vpop.f32.mrf.mxu0
      %v957 = vpop.f32.mrf.mxu0
      %v958 = vadd.f32 0.0, %v957
      %v959 = vpop.f32.mrf.mxu0
      %960 = vmatprep.mubr.bf16.mxu0 0
      %961 = vmatmul.mubr.bf16.gmra.mxu0 %v891
      %v962 = vpop.f32.mrf.mxu0
      %v963 = vadd.f32 0.0, %v962
      %v964 = vpop.f32.mrf.mxu0
      %v965 = vpop.f32.mrf.mxu0
      %v966 = vadd.f32 0.0, %v965
      %v967 = vpop.f32.mrf.mxu0
      %968 = vdwg.mxu0
      %v969 = vadd.f32 %v851, %v931
      %v970 = vadd.f32 %v852, %v934
      %v971 = vadd.f32 %v853, %v939
      %v972 = vadd.f32 %v854, %v942
      %v973 = vadd.f32 %v855, %v947
      %v974 = vadd.f32 %v856, %v950
      %v975 = vadd.f32 %v857, %v955
      %v976 = vadd.f32 %v858, %v958
      %v977 = vadd.f32 %v859, %v963
      %v978 = vadd.f32 %v860, %v966
      %v979 = vld [vmem:[%s165 + $0x15] sm:$0xff]
      %v980 = vld [vmem:[%s165 + $0x1d] sm:$0xff]
      %v981 = vld [vmem:[%s165 + $0x25] sm:$0xff]
      %v982 = vld [vmem:[%s165 + $0x2d] sm:$0xff]
      %v983 = vld [vmem:[%s165 + $0x35] sm:$0xff]
      %v984 = vld [vmem:[%s165 + $0x3d] sm:$0xff]
      %v985 = vld [vmem:[%s165 + $0x45] sm:$0xff]
      %v986 = vld [vmem:[%s165 + $0x4d] sm:$0xff]
      %v987 = vld [vmem:[%s165 + $0x55] sm:$0xff]
      %v988 = vld [vmem:[%s165 + $0x5d] sm:$0xff]
      %v989 = vpack.c.bf16 %v980, %v979
      %v990 = vpack.c.bf16 %v982, %v981
      %v991 = vpack.c.bf16 %v984, %v983
      %v992 = vpack.c.bf16 %v986, %v985
      %v993 = vpack.c.bf16 %v988, %v987
      %s994 = scalar_lea.vmem %s1, 28
      %v995 = vld [vmem:[%s994] sm:$0xf]
      %v997 = vsel %vm205, %v989, 0
      %v1000 = vsel %vm205, %v990, 0
      %v1003 = vsel %vm205, %v991, 0
      %v1006 = vsel %vm205, %v992, 0
      %v1009 = vsel %vm205, %v993, 0
      %v1012 = vsel %vm221, %v995, 0
      %1014 = vmatprep.subr.bf16.mxu0 0
      %1015 = vmatpush1.bf16.msra.mxu0 0
      %1016 = vmatprep.subr.bf16.mxu0 0
      %1017 = vmatpush1.bf16.msra.mxu0 0
      %1018 = vmatprep.subr.bf16.mxu0 0
      %1019 = vmatpush1.bf16.msra.mxu0 0
      %1020 = vmatprep.subr.bf16.mxu0 0
      %1021 = vmatpush1.bf16.msra.mxu0 0
      %1022 = vmatprep.subr.bf16.mxu0 0
      %1023 = vmatpush1.bf16.msra.mxu0 0
      %1024 = vmatprep.subr.bf16.mxu0 0
      %1025 = vmatpush1.bf16.msra.mxu0 0
      %1026 = vmatprep.subr.bf16.mxu0 0
      %1027 = vmatpush1.bf16.msra.mxu0 0
      %1028 = vmatprep.subr.bf16.mxu0 0
      %1029 = vmatpush1.bf16.msra.mxu0 %v1012
      %1030 = vmatprep.subr.bf16.mxu0 0
      %1031 = vmatpush2.bf16.msra.mxu0 0
      %1032 = vmatprep.subr.bf16.mxu0 0
      %1033 = vmatpush2.bf16.msra.mxu0 0
      %1034 = vmatprep.subr.bf16.mxu0 0
      %1035 = vmatpush2.bf16.msra.mxu0 0
      %1036 = vmatprep.subr.bf16.mxu0 0
      %1037 = vmatpush2.bf16.msra.mxu0 0
      %1038 = vmatprep.subr.bf16.mxu0 0
      %1039 = vmatpush2.bf16.msra.mxu0 0
      %1040 = vmatprep.subr.bf16.mxu0 0
      %1041 = vmatpush2.bf16.msra.mxu0 0
      %1042 = vmatprep.subr.bf16.mxu0 0
      %1043 = vmatpush2.bf16.msra.mxu0 0
      %1044 = vmatprep.subr.bf16.mxu0 0
      %1045 = vmatpush2.bf16.msra.mxu0 0
      %1046 = vmatprep.mubr.bf16.mxu0 0
      %1047 = vmatmul.mubr.bf16.gmra.mxu0 %v997
      %v1048 = vpop.f32.mrf.mxu0
      %v1049 = vadd.f32 0.0, %v1048
      %v1050 = vpop.f32.mrf.mxu0
      %v1051 = vpop.f32.mrf.mxu0
      %v1052 = vadd.f32 0.0, %v1051
      %v1053 = vpop.f32.mrf.mxu0
      %1054 = vmatprep.mubr.bf16.mxu0 0
      %1055 = vmatmul.mubr.bf16.gmra.mxu0 %v1000
      %v1056 = vpop.f32.mrf.mxu0
      %v1057 = vadd.f32 0.0, %v1056
      %v1058 = vpop.f32.mrf.mxu0
      %v1059 = vpop.f32.mrf.mxu0
      %v1060 = vadd.f32 0.0, %v1059
      %v1061 = vpop.f32.mrf.mxu0
      %1062 = vmatprep.mubr.bf16.mxu0 0
      %1063 = vmatmul.mubr.bf16.gmra.mxu0 %v1003
      %v1064 = vpop.f32.mrf.mxu0
      %v1065 = vadd.f32 0.0, %v1064
      %v1066 = vpop.f32.mrf.mxu0
      %v1067 = vpop.f32.mrf.mxu0
      %v1068 = vadd.f32 0.0, %v1067
      %v1069 = vpop.f32.mrf.mxu0
      %1070 = vmatprep.mubr.bf16.mxu0 0
      %1071 = vmatmul.mubr.bf16.gmra.mxu0 %v1006
      %v1072 = vpop.f32.mrf.mxu0
      %v1073 = vadd.f32 0.0, %v1072
      %v1074 = vpop.f32.mrf.mxu0
      %v1075 = vpop.f32.mrf.mxu0
      %v1076 = vadd.f32 0.0, %v1075
      %v1077 = vpop.f32.mrf.mxu0
      %1078 = vmatprep.mubr.bf16.mxu0 0
      %1079 = vmatmul.mubr.bf16.gmra.mxu0 %v1009
      %v1080 = vpop.f32.mrf.mxu0
      %v1081 = vadd.f32 0.0, %v1080
      %v1082 = vpop.f32.mrf.mxu0
      %v1083 = vpop.f32.mrf.mxu0
      %v1084 = vadd.f32 0.0, %v1083
      %v1085 = vpop.f32.mrf.mxu0
      %1086 = vdwg.mxu0
      %v1087 = vadd.f32 %v969, %v1049
      %v1088 = vadd.f32 %v970, %v1052
      %v1089 = vadd.f32 %v971, %v1057
      %v1090 = vadd.f32 %v972, %v1060
      %v1091 = vadd.f32 %v973, %v1065
      %v1092 = vadd.f32 %v974, %v1068
      %v1093 = vadd.f32 %v975, %v1073
      %v1094 = vadd.f32 %v976, %v1076
      %v1095 = vadd.f32 %v977, %v1081
      %v1096 = vadd.f32 %v978, %v1084
      %v1097 = vld [vmem:[%s165 + $0x16] sm:$0xff]
      %v1098 = vld [vmem:[%s165 + $0x1e] sm:$0xff]
      %v1099 = vld [vmem:[%s165 + $0x26] sm:$0xff]
      %v1100 = vld [vmem:[%s165 + $0x2e] sm:$0xff]
      %v1101 = vld [vmem:[%s165 + $0x36] sm:$0xff]
      %v1102 = vld [vmem:[%s165 + $0x3e] sm:$0xff]
      %v1103 = vld [vmem:[%s165 + $0x46] sm:$0xff]
      %v1104 = vld [vmem:[%s165 + $0x4e] sm:$0xff]
      %v1105 = vld [vmem:[%s165 + $0x56] sm:$0xff]
      %v1106 = vld [vmem:[%s165 + $0x5e] sm:$0xff]
      %v1107 = vpack.c.bf16 %v1098, %v1097
      %v1108 = vpack.c.bf16 %v1100, %v1099
      %v1109 = vpack.c.bf16 %v1102, %v1101
      %v1110 = vpack.c.bf16 %v1104, %v1103
      %v1111 = vpack.c.bf16 %v1106, %v1105
      %s1112 = scalar_lea.vmem %s1, 32
      %v1113 = vld [vmem:[%s1112] sm:$0xf]
      %v1115 = vsel %vm205, %v1107, 0
      %v1118 = vsel %vm205, %v1108, 0
      %v1121 = vsel %vm205, %v1109, 0
      %v1124 = vsel %vm205, %v1110, 0
      %v1127 = vsel %vm205, %v1111, 0
      %v1130 = vsel %vm221, %v1113, 0
      %1132 = vmatprep.subr.bf16.mxu0 0
      %1133 = vmatpush1.bf16.msra.mxu0 0
      %1134 = vmatprep.subr.bf16.mxu0 0
      %1135 = vmatpush1.bf16.msra.mxu0 0
      %1136 = vmatprep.subr.bf16.mxu0 0
      %1137 = vmatpush1.bf16.msra.mxu0 0
      %1138 = vmatprep.subr.bf16.mxu0 0
      %1139 = vmatpush1.bf16.msra.mxu0 0
      %1140 = vmatprep.subr.bf16.mxu0 0
      %1141 = vmatpush1.bf16.msra.mxu0 0
      %1142 = vmatprep.subr.bf16.mxu0 0
      %1143 = vmatpush1.bf16.msra.mxu0 0
      %1144 = vmatprep.subr.bf16.mxu0 0
      %1145 = vmatpush1.bf16.msra.mxu0 0
      %1146 = vmatprep.subr.bf16.mxu0 0
      %1147 = vmatpush1.bf16.msra.mxu0 %v1130
      %1148 = vmatprep.subr.bf16.mxu0 0
      %1149 = vmatpush2.bf16.msra.mxu0 0
      %1150 = vmatprep.subr.bf16.mxu0 0
      %1151 = vmatpush2.bf16.msra.mxu0 0
      %1152 = vmatprep.subr.bf16.mxu0 0
      %1153 = vmatpush2.bf16.msra.mxu0 0
      %1154 = vmatprep.subr.bf16.mxu0 0
      %1155 = vmatpush2.bf16.msra.mxu0 0
      %1156 = vmatprep.subr.bf16.mxu0 0
      %1157 = vmatpush2.bf16.msra.mxu0 0
      %1158 = vmatprep.subr.bf16.mxu0 0
      %1159 = vmatpush2.bf16.msra.mxu0 0
      %1160 = vmatprep.subr.bf16.mxu0 0
      %1161 = vmatpush2.bf16.msra.mxu0 0
      %1162 = vmatprep.subr.bf16.mxu0 0
      %1163 = vmatpush2.bf16.msra.mxu0 0
      %1164 = vmatprep.mubr.bf16.mxu0 0
      %1165 = vmatmul.mubr.bf16.gmra.mxu0 %v1115
      %v1166 = vpop.f32.mrf.mxu0
      %v1167 = vadd.f32 0.0, %v1166
      %v1168 = vpop.f32.mrf.mxu0
      %v1169 = vpop.f32.mrf.mxu0
      %v1170 = vadd.f32 0.0, %v1169
      %v1171 = vpop.f32.mrf.mxu0
      %1172 = vmatprep.mubr.bf16.mxu0 0
      %1173 = vmatmul.mubr.bf16.gmra.mxu0 %v1118
      %v1174 = vpop.f32.mrf.mxu0
      %v1175 = vadd.f32 0.0, %v1174
      %v1176 = vpop.f32.mrf.mxu0
      %v1177 = vpop.f32.mrf.mxu0
      %v1178 = vadd.f32 0.0, %v1177
      %v1179 = vpop.f32.mrf.mxu0
      %1180 = vmatprep.mubr.bf16.mxu0 0
      %1181 = vmatmul.mubr.bf16.gmra.mxu0 %v1121
      %v1182 = vpop.f32.mrf.mxu0
      %v1183 = vadd.f32 0.0, %v1182
      %v1184 = vpop.f32.mrf.mxu0
      %v1185 = vpop.f32.mrf.mxu0
      %v1186 = vadd.f32 0.0, %v1185
      %v1187 = vpop.f32.mrf.mxu0
      %1188 = vmatprep.mubr.bf16.mxu0 0
      %1189 = vmatmul.mubr.bf16.gmra.mxu0 %v1124
      %v1190 = vpop.f32.mrf.mxu0
      %v1191 = vadd.f32 0.0, %v1190
      %v1192 = vpop.f32.mrf.mxu0
      %v1193 = vpop.f32.mrf.mxu0
      %v1194 = vadd.f32 0.0, %v1193
      %v1195 = vpop.f32.mrf.mxu0
      %1196 = vmatprep.mubr.bf16.mxu0 0
      %1197 = vmatmul.mubr.bf16.gmra.mxu0 %v1127
      %v1198 = vpop.f32.mrf.mxu0
      %v1199 = vadd.f32 0.0, %v1198
      %v1200 = vpop.f32.mrf.mxu0
      %v1201 = vpop.f32.mrf.mxu0
      %v1202 = vadd.f32 0.0, %v1201
      %v1203 = vpop.f32.mrf.mxu0
      %1204 = vdwg.mxu0
      %v1205 = vadd.f32 %v1087, %v1167
      %v1206 = vadd.f32 %v1088, %v1170
      %v1207 = vadd.f32 %v1089, %v1175
      %v1208 = vadd.f32 %v1090, %v1178
      %v1209 = vadd.f32 %v1091, %v1183
      %v1210 = vadd.f32 %v1092, %v1186
      %v1211 = vadd.f32 %v1093, %v1191
      %v1212 = vadd.f32 %v1094, %v1194
      %v1213 = vadd.f32 %v1095, %v1199
      %v1214 = vadd.f32 %v1096, %v1202
      %v1215 = vld [vmem:[%s2] sm:$0x1]
      %v1217 = vlaneseq
      %v1218 = vshrl.u32 %v1217, 7
      %v1219 = vsub.s32 0, %v1218
      %v1220 = vrot.slane %v1215, %v1219
      %v1222 = vadd.f32 %v1205, %v1220
      %v1223 = vadd.f32 %v1206, %v1220
      %v1224 = vadd.f32 %v1207, %v1220
      %v1225 = vadd.f32 %v1208, %v1220
      %v1226 = vadd.f32 %v1209, %v1220
      %v1227 = vadd.f32 %v1210, %v1220
      %v1228 = vadd.f32 %v1211, %v1220
      %v1229 = vadd.f32 %v1212, %v1220
      %v1230 = vadd.f32 %v1213, %v1220
      %v1231 = vadd.f32 %v1214, %v1220
      %v1232 = vmax.f32 %v1222, 0.0
      %v1233 = vmax.f32 %v1223, 0.0
      %v1234 = vmax.f32 %v1224, 0.0
      %v1235 = vmax.f32 %v1225, 0.0
      %v1236 = vmax.f32 %v1226, 0.0
      %v1237 = vmax.f32 %v1227, 0.0
      %v1238 = vmax.f32 %v1228, 0.0
      %v1239 = vmax.f32 %v1229, 0.0
      %v1240 = vmax.f32 %v1230, 0.0
      %v1241 = vmax.f32 %v1231, 0.0
      %1242 = vst [vmem:[%s170] sm:$0xff] %v1232
      %1243 = vst [vmem:[%s170 + $0x8] sm:$0xff] %v1233
      %1244 = vst [vmem:[%s170 + $0x10] sm:$0xff] %v1234
      %1245 = vst [vmem:[%s170 + $0x18] sm:$0xff] %v1235
      %1246 = vst [vmem:[%s170 + $0x20] sm:$0xff] %v1236
      %1247 = vst [vmem:[%s170 + $0x28] sm:$0xff] %v1237
      %1248 = vst [vmem:[%s170 + $0x30] sm:$0xff] %v1238
      %1249 = vst [vmem:[%s170 + $0x38] sm:$0xff] %v1239
      %1250 = vst [vmem:[%s170 + $0x40] sm:$0xff] %v1240
      %1251 = vst [vmem:[%s170 + $0x48] sm:$0xff] %v1241
      %p1252 = scmp.lt.s32.totalorder %s14, 1
      %s1253 = scalar_select %p1252, %s14, 1
      %s1254 = smul.addr %s1253, 10
      %s1255 = smul.addr %s1254, 8
      %s1256 = scalar_lea.vmem %s3, %s1255
      // Predicated region
      $region33: #{backbone_as_unet_forward.18} parent=31 // pred_check
        %p1257 = pneg %p100
      $region34: #{backbone_as_unet_forward.18} parent=31 // pred_check_branch
        %1259 = sbr.rel (%p1257) target = $region36
      $region35: #{backbone_as_unet_forward.18} parent=31 // pred_region
        _
      $region36: #{backbone_as_unet_forward.18} parent=31 // pred_fallthru
        _
    $region32: #{backbone_as_unet_forward.18} parent=5 // pred_fallthru
      _
    %p1260 = scmp.le.s32.totalorder 2, %s9
    // Predicated region
    $region37: #{backbone_as_unet_forward.18} parent=5 // pred_check
      %p1261 = pneg %p1260
    $region38: #{backbone_as_unet_forward.18} parent=5 // pred_check_branch
      %1263 = sbr.rel (%p1261) target = $region40
    $region39: #{backbone_as_unet_forward.18} parent=5 // pred_region
      %s1264 = ssub.s32 %s9, 2
      // Predicated region
      $region41: #{backbone_as_unet_forward.18} parent=39 // pred_check
        %p1265 = pneg %p106
      $region42: #{backbone_as_unet_forward.18} parent=39 // pred_check_branch
        %1267 = sbr.rel (%p1265) target = $region44
      $region43: #{backbone_as_unet_forward.18} parent=39 // pred_region
        %p1268 = scmp.lt.s32.totalorder %s15, 1
        %s1269 = scalar_select %p1268, %s15, 1
        %s1270 = smul.addr %s1269, 10
        %s1271 = smul.addr %s1270, 8
        %s1272 = scalar_lea.vmem %s3, %s1271
      $region44: #{backbone_as_unet_forward.18} parent=39 // pred_fallthru
        _
    $region40: #{backbone_as_unet_forward.18} parent=5 // pred_fallthru
      _
  $region6: #{backbone_as_unet_forward.18} parent=0 // loop_footer
    %s13 = sadd.s32 1, %s9
  $region7: #{backbone_as_unet_forward.18} parent=0 // loop_footer_branch
    %8 = sbr.rel target = $region3
  $region8: #{backbone_as_unet_forward.18} parent=0 // loop_exit
    _

</llo_original>
